<compile_context>
chip_gen: v5e
topology: v5e:2x2
jax: 0.10.0
libtpu: 0.0.40
codegen_flags: <defaults>
</compile_context>

<pallas_src>
import functools
import math

import jax
import jax.numpy as jnp
from jax.experimental import pallas as pl
from jax.experimental.pallas import tpu as pltpu


def _vdsr_kernel(xp_ref, w0_ref, w_ref, wout_ref, o_ref, act_ref, pat_ref,
                 *, H, W, C, n_res):
    # xp_ref:   (1, H+2, W+2)     f32   zero-padded input image
    # w0_ref:   (9, C)            bf16  input conv weights (Cin=1), tap-major
    # w_ref:    (n_res, 9*C, C)   bf16  stacked residual conv weights (K-major)
    # wout_ref: (9, C)            bf16  output conv weights (Cout=1)
    # o_ref:    (1, H, W)         f32
    # act_ref:  (H+2, W+2, C)     bf16  padded VMEM-resident activation
    # pat_ref:  (H, W, 9*C)       bf16  im2col staging buffer (K = 576)

    # ---- zero ONLY the 1-pixel border (cheap, done per image so it is safe
    # ---- even when the batch grid axis is sharded across TensorCores).
    zrow = jnp.zeros((1, W + 2, C), jnp.bfloat16)
    act_ref[0:1, :, :] = zrow
    act_ref[H + 1:H + 2, :, :] = zrow
    zcol = jnp.zeros((H + 2, 1, C), jnp.bfloat16)
    act_ref[:, 0:1, :] = zcol
    act_ref[:, W + 1:W + 2, :] = zcol

    # ---- layer 0: input conv (1 -> 64) + ReLU on the VPU (9 broadcast FMAs).
    # bf16-round x first to match the reference numerics, accumulate in f32.
    xb = xp_ref[0].astype(jnp.bfloat16).astype(jnp.float32)      # (H+2, W+2)
    w0 = w0_ref[...].astype(jnp.float32)                         # (9, C)
    acc0 = jnp.zeros((H, W, C), jnp.float32)
    for t in range(9):
        ky, kx = divmod(t, 3)
        acc0 = acc0 + xb[ky:ky + H, kx:kx + W][:, :, None] * w0[t][None, None, :]
    act_ref[1:H + 1, 1:W + 1, :] = jnp.maximum(acc0, 0.0).astype(jnp.bfloat16)

    # ---- 18 residual (3x3 conv 64->64 + ReLU) layers, one K=576 MXU matmul
    # ---- each; the activation never leaves VMEM.
    def layer_body(layer, carry):
        # Stage the 9 shifted windows into the im2col buffer (tap-major K).
        for t in range(9):
            ky, kx = divmod(t, 3)
            pat_ref[:, :, t * C:(t + 1) * C] = act_ref[ky:ky + H, kx:kx + W, :]
        patches = pat_ref[...].reshape(H * W, 9 * C)              # bf16
        w_l = w_ref[layer]                                        # (576, C) bf16
        y = jnp.dot(patches, w_l, preferred_element_type=jnp.float32)
        y = jnp.maximum(y, 0.0).astype(jnp.bfloat16).reshape(H, W, C)
        # All reads of act_ref above precede this in-place interior store.
        act_ref[1:H + 1, 1:W + 1, :] = y
        return carry

    jax.lax.fori_loop(0, n_res, layer_body, 0)

    # ---- output conv (64 -> 1), no ReLU: per-channel f32 accumulation over
    # ---- the 9 taps, ONE cross-lane reduction, fused with the residual add.
    wl = wout_ref[...].astype(jnp.float32)                        # (9, C)
    accc = jnp.zeros((H, W, C), jnp.float32)
    for t in range(9):
        ky, kx = divmod(t, 3)
        accc = accc + (act_ref[ky:ky + H, kx:kx + W, :].astype(jnp.float32)
                       * wl[t][None, None, :])
    out = jnp.sum(accc, axis=-1) + xp_ref[0, 1:H + 1, 1:W + 1]    # residual (f32)
    o_ref[0] = out.astype(o_ref.dtype)


def vdsr_forward(x_nchw, w_in, w_res, w_out):
    """Net.forward: relu(input(x)) -> 18x Conv_ReLU_Block -> output(.) + x.

    x_nchw: (N, 1, H, W) f32.  Weights are tap-major (9, Cin, Cout) f32.
    """
    N, cin, H, W = x_nchw.shape
    assert cin == 1
    C = 64
    n_res = len(w_res)                                            # 18

    x = x_nchw[:, 0, :, :].astype(jnp.float32)                    # (N, H, W)
    xp = jnp.pad(x, ((0, 0), (1, 1), (1, 1)))                     # (N, H+2, W+2)

    w0 = w_in[:, 0, :].astype(jnp.bfloat16)                       # (9, 64)
    # Stack residual weights K-major so taps concatenate along K: (18, 576, 64)
    w_big = jnp.stack([w.reshape(9 * C, C) for w in w_res],
                      axis=0).astype(jnp.bfloat16)
    w_last = w_out[:, :, 0].astype(jnp.bfloat16)                  # (9, 64)

    # Explicit VMEM budget: activation + im2col buffer + f32 temps + weights
    # (double-buffered) + in/out blocks, with 2x headroom.
    bf16, f32 = 2, 4
    est = ((H + 2) * (W + 2) * C * bf16           # act scratch
           + H * W * 9 * C * bf16                 # im2col scratch
           + 3 * H * W * C * f32                  # f32 accumulators / temps
           + 2 * (n_res * 9 * C * C + 2 * 9 * C) * bf16   # weights (2 bufs)
           + 2 * ((H + 2) * (W + 2) + H * W) * f32)       # in/out blocks
    vmem_limit = int(min(max(2 * est, 32 * 1024 * 1024), 64 * 1024 * 1024))

    kernel = functools.partial(_vdsr_kernel, H=H, W=W, C=C, n_res=n_res)
    out = pl.pallas_call(
        kernel,
        out_shape=jax.ShapeDtypeStruct((N, H, W), jnp.float32),
        grid_spec=pltpu.PrefetchScalarGridSpec(
            num_scalar_prefetch=0,
            grid=(N,),                            # one grid step per image
            in_specs=[
                pl.BlockSpec((1, H + 2, W + 2), lambda n: (n, 0, 0)),
                pl.BlockSpec((9, C), lambda n: (0, 0)),
                # Constant index_map => weights DMA'd to VMEM once, resident.
                pl.BlockSpec((n_res, 9 * C, C), lambda n: (0, 0, 0)),
                pl.BlockSpec((9, C), lambda n: (0, 0)),
            ],
            out_specs=pl.BlockSpec((1, H, W), lambda n: (n, 0, 0)),
            scratch_shapes=[
                pltpu.VMEM((H + 2, W + 2, C), jnp.bfloat16),   # activation
                pltpu.VMEM((H, W, 9 * C), jnp.bfloat16),       # im2col buffer
            ],
        ),
        compiler_params=pltpu.CompilerParams(
            dimension_semantics=("parallel",),    # batch -> both TCs on v7x
            vmem_limit_bytes=vmem_limit),
    )(xp, w0, w_big, w_last)
    return out[:, None, :, :]                                     # (N, 1, H, W)


def make_vdsr_weights(key):
    """Deterministic weights matching Net.__init__: N(0, sqrt(2/(k*k*out)))."""
    ks = jax.random.split(key, 20)

    def init(k, cin, cout):
        std = math.sqrt(2.0 / (3 * 3 * cout))
        w_oihw = std * jax.random.normal(k, (cout, cin, 3, 3), jnp.float32)
        # OIHW -> HWIO -> (9, Cin, Cout), tap-major (ky*3 + kx)
        return jnp.transpose(w_oihw, (2, 3, 1, 0)).reshape(9, cin, cout)

    w_in = init(ks[0], 1, 64)                              # self.input
    w_res = [init(ks[1 + i], 64, 64) for i in range(18)]   # residual_layer
    w_out = init(ks[19], 64, 1)                            # self.output
    return w_in, w_res, w_out


# ---------------- pure-JAX reference (for correctness check) -----------------
# Matches the kernel's numerics: bf16 activations/weights, f32 accumulation,
# bf16 re-quantization of the activation between layers, f32 residual add.
def vdsr_forward_ref(x_nchw, w_in, w_res, w_out):
    x_nhwc = jnp.transpose(x_nchw, (0, 2, 3, 1)).astype(jnp.float32)  # (N,H,W,1)

    def conv(a, w9, relu):
        cin, cout = w9.shape[1], w9.shape[2]
        w_hwio = w9.reshape(3, 3, cin, cout).astype(jnp.bfloat16)
        y = jax.lax.conv_general_dilated(
            a.astype(jnp.bfloat16), w_hwio, window_strides=(1, 1),
            padding="SAME", dimension_numbers=("NHWC", "HWIO", "NHWC"),
            preferred_element_type=jnp.float32)
        return jnp.maximum(y, 0.0) if relu else y

    act = conv(x_nhwc, w_in, True).astype(jnp.bfloat16)
    for w in w_res:
        act = conv(act, w, True).astype(jnp.bfloat16)
    out = conv(act, w_out, False) + x_nhwc
    return jnp.transpose(out, (0, 3, 1, 2))


if __name__ == "__main__":
    key = jax.random.PRNGKey(0)
    k_x, k_w = jax.random.split(key)

    # Small shapes consistent with the module: batch=2, 1 input channel, 16x16.
    x = jax.random.normal(k_x, (2, 1, 16, 16), jnp.float32)
    w_in, w_res, w_out = make_vdsr_weights(k_w)

    fwd = jax.jit(vdsr_forward)
    y = jax.block_until_ready(fwd(x, w_in, w_res, w_out))

    y_ref = jax.block_until_ready(
        jax.jit(vdsr_forward_ref)(x, w_in, w_res, w_out))

    assert y.shape == x.shape and y.dtype == x.dtype
    assert jnp.allclose(y, y_ref, rtol=2e-2, atol=2e-2), float(
        jnp.max(jnp.abs(y - y_ref)))

    print("KERNEL_OK")
</pallas_src>

<mosaic_0001>
module attributes {stable_mosaic.version = 11 : i64} {
  func.func @_vdsr_kernel(%arg0: i32, %arg1: memref<1x18x18xf32, #tpu.memory_space<vmem>>, %arg2: memref<9x64xbf16, #tpu.memory_space<vmem>>, %arg3: memref<18x576x64xbf16, #tpu.memory_space<vmem>>, %arg4: memref<9x64xbf16, #tpu.memory_space<vmem>>, %arg5: memref<1x16x16xf32, #tpu.memory_space<vmem>>, %arg6: memref<18x18x64xbf16, #tpu.memory_space<vmem>>, %arg7: memref<16x16x576xbf16, #tpu.memory_space<vmem>>) attributes {dimension_semantics = [#tpu.dimension_semantics<parallel>], iteration_bounds = array<i64: 2>, scalar_prefetch = 0 : i64, scratch_operands = 2 : i64, tpu.core_type = #tpu.core_type<tc>, window_params = [{transform_indices = @transform_0, window_bounds = array<i64: 1, 18, 18>}, {pipeline_mode = #tpu.pipeline_mode<synchronous>, transform_indices = @transform_1, window_bounds = array<i64: 9, 64>}, {pipeline_mode = #tpu.pipeline_mode<synchronous>, transform_indices = @transform_2, window_bounds = array<i64: 18, 576, 64>}, {pipeline_mode = #tpu.pipeline_mode<synchronous>, transform_indices = @transform_3, window_bounds = array<i64: 9, 64>}, {transform_indices = @transform_4, window_bounds = array<i64: 1, 16, 16>}]} {
    %cst = arith.constant 0.000000e+00 : bf16
    %0 = vector.broadcast %cst : bf16 to vector<1x18x64xbf16>
    %c0 = arith.constant 0 : index
    %c0_0 = arith.constant 0 : index
    %c0_1 = arith.constant 0 : index
    %1 = vector.load %arg6[%c0, %c0_0, %c0_1] : memref<18x18x64xbf16, #tpu.memory_space<vmem>>, vector<1x18x64xbf16>
    tpu.vector_store %arg6[%c0, %c0_0, %c0_1], %0 {strides = array<i32>} : memref<18x18x64xbf16, #tpu.memory_space<vmem>>, vector<1x18x64xbf16>,
    %c17 = arith.constant 17 : index
    %c0_2 = arith.constant 0 : index
    %c0_3 = arith.constant 0 : index
    %2 = vector.load %arg6[%c17, %c0_2, %c0_3] : memref<18x18x64xbf16, #tpu.memory_space<vmem>>, vector<1x18x64xbf16>
    tpu.vector_store %arg6[%c17, %c0_2, %c0_3], %0 {strides = array<i32>} : memref<18x18x64xbf16, #tpu.memory_space<vmem>>, vector<1x18x64xbf16>,
    %cst_4 = arith.constant 0.000000e+00 : bf16
    %3 = vector.broadcast %cst_4 : bf16 to vector<18x1x64xbf16>
    %c0_5 = arith.constant 0 : index
    %c0_6 = arith.constant 0 : index
    %c0_7 = arith.constant 0 : index
    %4 = vector.load %arg6[%c0_5, %c0_6, %c0_7] : memref<18x18x64xbf16, #tpu.memory_space<vmem>>, vector<18x1x64xbf16>
    tpu.vector_store %arg6[%c0_5, %c0_6, %c0_7], %3 {strides = array<i32>} : memref<18x18x64xbf16, #tpu.memory_space<vmem>>, vector<18x1x64xbf16>,
    %c0_8 = arith.constant 0 : index
    %c17_9 = arith.constant 17 : index
    %c0_10 = arith.constant 0 : index
    %5 = vector.load %arg6[%c0_8, %c17_9, %c0_10] : memref<18x18x64xbf16, #tpu.memory_space<vmem>>, vector<18x1x64xbf16>
    tpu.vector_store %arg6[%c0_8, %c17_9, %c0_10], %3 {strides = array<i32>} : memref<18x18x64xbf16, #tpu.memory_space<vmem>>, vector<18x1x64xbf16>,
    %c0_11 = arith.constant 0 : index
    %c0_12 = arith.constant 0 : index
    %c0_13 = arith.constant 0 : index
    %6 = vector.load %arg1[%c0_11, %c0_12, %c0_13] : memref<1x18x18xf32, #tpu.memory_space<vmem>>, vector<1x18x18xf32>
    %7 = vector.shape_cast %6 : vector<1x18x18xf32> to vector<18x18xf32>
    %8 = arith.truncf %7 : vector<18x18xf32> to vector<18x18xbf16>
    %9 = arith.extf %8 : vector<18x18xbf16> to vector<18x18xf32>
    %c0_14 = arith.constant 0 : index
    %c0_15 = arith.constant 0 : index
    %10 = vector.load %arg2[%c0_14, %c0_15] : memref<9x64xbf16, #tpu.memory_space<vmem>>, vector<9x64xbf16>
    %11 = arith.extf %10 : vector<9x64xbf16> to vector<9x64xf32>
    %cst_16 = arith.constant 0.000000e+00 : f32
    %12 = vector.broadcast %cst_16 : f32 to vector<16x16x64xf32>
    %13 = vector.extract_strided_slice %9 {offsets = [0, 0], sizes = [16, 16], strides = [1, 1]} : vector<18x18xf32> to vector<16x16xf32>
    %14 = vector.shape_cast %13 : vector<16x16xf32> to vector<16x16x1xf32>
    %15 = vector.extract_strided_slice %11 {offsets = [0, 0], sizes = [1, 64], strides = [1, 1]} : vector<9x64xf32> to vector<1x64xf32>
    %16 = vector.shape_cast %15 : vector<1x64xf32> to vector<64xf32>
    %17 = vector.shape_cast %16 : vector<64xf32> to vector<1x1x64xf32>
    %18 = vector.broadcast %14 : vector<16x16x1xf32> to vector<16x16x64xf32>
    %19 = vector.broadcast %17 : vector<1x1x64xf32> to vector<16x16x64xf32>
    %20 = arith.mulf %18, %19 : vector<16x16x64xf32>
    %21 = arith.addf %12, %20 : vector<16x16x64xf32>
    %22 = vector.extract_strided_slice %9 {offsets = [0, 1], sizes = [16, 16], strides = [1, 1]} : vector<18x18xf32> to vector<16x16xf32>
    %23 = vector.shape_cast %22 : vector<16x16xf32> to vector<16x16x1xf32>
    %24 = vector.extract_strided_slice %11 {offsets = [1, 0], sizes = [1, 64], strides = [1, 1]} : vector<9x64xf32> to vector<1x64xf32>
    %25 = vector.shape_cast %24 : vector<1x64xf32> to vector<64xf32>
    %26 = vector.shape_cast %25 : vector<64xf32> to vector<1x1x64xf32>
    %27 = vector.broadcast %23 : vector<16x16x1xf32> to vector<16x16x64xf32>
    %28 = vector.broadcast %26 : vector<1x1x64xf32> to vector<16x16x64xf32>
    %29 = arith.mulf %27, %28 : vector<16x16x64xf32>
    %30 = arith.addf %21, %29 : vector<16x16x64xf32>
    %31 = vector.extract_strided_slice %9 {offsets = [0, 2], sizes = [16, 16], strides = [1, 1]} : vector<18x18xf32> to vector<16x16xf32>
    %32 = vector.shape_cast %31 : vector<16x16xf32> to vector<16x16x1xf32>
    %33 = vector.extract_strided_slice %11 {offsets = [2, 0], sizes = [1, 64], strides = [1, 1]} : vector<9x64xf32> to vector<1x64xf32>
    %34 = vector.shape_cast %33 : vector<1x64xf32> to vector<64xf32>
    %35 = vector.shape_cast %34 : vector<64xf32> to vector<1x1x64xf32>
    %36 = vector.broadcast %32 : vector<16x16x1xf32> to vector<16x16x64xf32>
    %37 = vector.broadcast %35 : vector<1x1x64xf32> to vector<16x16x64xf32>
    %38 = arith.mulf %36, %37 : vector<16x16x64xf32>
    %39 = arith.addf %30, %38 : vector<16x16x64xf32>
    %40 = vector.extract_strided_slice %9 {offsets = [1, 0], sizes = [16, 16], strides = [1, 1]} : vector<18x18xf32> to vector<16x16xf32>
    %41 = vector.shape_cast %40 : vector<16x16xf32> to vector<16x16x1xf32>
    %42 = vector.extract_strided_slice %11 {offsets = [3, 0], sizes = [1, 64], strides = [1, 1]} : vector<9x64xf32> to vector<1x64xf32>
    %43 = vector.shape_cast %42 : vector<1x64xf32> to vector<64xf32>
    %44 = vector.shape_cast %43 : vector<64xf32> to vector<1x1x64xf32>
    %45 = vector.broadcast %41 : vector<16x16x1xf32> to vector<16x16x64xf32>
    %46 = vector.broadcast %44 : vector<1x1x64xf32> to vector<16x16x64xf32>
    %47 = arith.mulf %45, %46 : vector<16x16x64xf32>
    %48 = arith.addf %39, %47 : vector<16x16x64xf32>
    %49 = vector.extract_strided_slice %9 {offsets = [1, 1], sizes = [16, 16], strides = [1, 1]} : vector<18x18xf32> to vector<16x16xf32>
    %50 = vector.shape_cast %49 : vector<16x16xf32> to vector<16x16x1xf32>
    %51 = vector.extract_strided_slice %11 {offsets = [4, 0], sizes = [1, 64], strides = [1, 1]} : vector<9x64xf32> to vector<1x64xf32>
    %52 = vector.shape_cast %51 : vector<1x64xf32> to vector<64xf32>
    %53 = vector.shape_cast %52 : vector<64xf32> to vector<1x1x64xf32>
    %54 = vector.broadcast %50 : vector<16x16x1xf32> to vector<16x16x64xf32>
    %55 = vector.broadcast %53 : vector<1x1x64xf32> to vector<16x16x64xf32>
    %56 = arith.mulf %54, %55 : vector<16x16x64xf32>
    %57 = arith.addf %48, %56 : vector<16x16x64xf32>
    %58 = vector.extract_strided_slice %9 {offsets = [1, 2], sizes = [16, 16], strides = [1, 1]} : vector<18x18xf32> to vector<16x16xf32>
    %59 = vector.shape_cast %58 : vector<16x16xf32> to vector<16x16x1xf32>
    %60 = vector.extract_strided_slice %11 {offsets = [5, 0], sizes = [1, 64], strides = [1, 1]} : vector<9x64xf32> to vector<1x64xf32>
    %61 = vector.shape_cast %60 : vector<1x64xf32> to vector<64xf32>
    %62 = vector.shape_cast %61 : vector<64xf32> to vector<1x1x64xf32>
    %63 = vector.broadcast %59 : vector<16x16x1xf32> to vector<16x16x64xf32>
    %64 = vector.broadcast %62 : vector<1x1x64xf32> to vector<16x16x64xf32>
    %65 = arith.mulf %63, %64 : vector<16x16x64xf32>
    %66 = arith.addf %57, %65 : vector<16x16x64xf32>
    %67 = vector.extract_strided_slice %9 {offsets = [2, 0], sizes = [16, 16], strides = [1, 1]} : vector<18x18xf32> to vector<16x16xf32>
    %68 = vector.shape_cast %67 : vector<16x16xf32> to vector<16x16x1xf32>
    %69 = vector.extract_strided_slice %11 {offsets = [6, 0], sizes = [1, 64], strides = [1, 1]} : vector<9x64xf32> to vector<1x64xf32>
    %70 = vector.shape_cast %69 : vector<1x64xf32> to vector<64xf32>
    %71 = vector.shape_cast %70 : vector<64xf32> to vector<1x1x64xf32>
    %72 = vector.broadcast %68 : vector<16x16x1xf32> to vector<16x16x64xf32>
    %73 = vector.broadcast %71 : vector<1x1x64xf32> to vector<16x16x64xf32>
    %74 = arith.mulf %72, %73 : vector<16x16x64xf32>
    %75 = arith.addf %66, %74 : vector<16x16x64xf32>
    %76 = vector.extract_strided_slice %9 {offsets = [2, 1], sizes = [16, 16], strides = [1, 1]} : vector<18x18xf32> to vector<16x16xf32>
    %77 = vector.shape_cast %76 : vector<16x16xf32> to vector<16x16x1xf32>
    %78 = vector.extract_strided_slice %11 {offsets = [7, 0], sizes = [1, 64], strides = [1, 1]} : vector<9x64xf32> to vector<1x64xf32>
    %79 = vector.shape_cast %78 : vector<1x64xf32> to vector<64xf32>
    %80 = vector.shape_cast %79 : vector<64xf32> to vector<1x1x64xf32>
    %81 = vector.broadcast %77 : vector<16x16x1xf32> to vector<16x16x64xf32>
    %82 = vector.broadcast %80 : vector<1x1x64xf32> to vector<16x16x64xf32>
    %83 = arith.mulf %81, %82 : vector<16x16x64xf32>
    %84 = arith.addf %75, %83 : vector<16x16x64xf32>
    %85 = vector.extract_strided_slice %9 {offsets = [2, 2], sizes = [16, 16], strides = [1, 1]} : vector<18x18xf32> to vector<16x16xf32>
    %86 = vector.shape_cast %85 : vector<16x16xf32> to vector<16x16x1xf32>
    %87 = vector.extract_strided_slice %11 {offsets = [8, 0], sizes = [1, 64], strides = [1, 1]} : vector<9x64xf32> to vector<1x64xf32>
    %88 = vector.shape_cast %87 : vector<1x64xf32> to vector<64xf32>
    %89 = vector.shape_cast %88 : vector<64xf32> to vector<1x1x64xf32>
    %90 = vector.broadcast %86 : vector<16x16x1xf32> to vector<16x16x64xf32>
    %91 = vector.broadcast %89 : vector<1x1x64xf32> to vector<16x16x64xf32>
    %92 = arith.mulf %90, %91 : vector<16x16x64xf32>
    %93 = arith.addf %84, %92 : vector<16x16x64xf32>
    %cst_17 = arith.constant 0.000000e+00 : f32
    %94 = vector.broadcast %cst_17 : f32 to vector<16x16x64xf32>
    %95 = arith.maximumf %93, %94 : vector<16x16x64xf32>
    %96 = arith.truncf %95 : vector<16x16x64xf32> to vector<16x16x64xbf16>
    %c1 = arith.constant 1 : index
    %c1_18 = arith.constant 1 : index
    %c0_19 = arith.constant 0 : index
    %97 = vector.load %arg6[%c1, %c1_18, %c0_19] : memref<18x18x64xbf16, #tpu.memory_space<vmem>>, vector<16x16x64xbf16>
    tpu.vector_store %arg6[%c1, %c1_18, %c0_19], %96 {strides = array<i32>} : memref<18x18x64xbf16, #tpu.memory_space<vmem>>, vector<16x16x64xbf16>,
    %c0_i32 = arith.constant 0 : i32
    %c18_i32 = arith.constant 18 : i32
    %98 = arith.addi %c0_i32, %c18_i32 : i32
    %c1_i32 = arith.constant 1 : i32
    scf.for %arg8 = %c0_i32 to %98 step %c1_i32  : i32 {
      %c0_57 = arith.constant 0 : index
      %c0_58 = arith.constant 0 : index
      %c0_59 = arith.constant 0 : index
      %181 = vector.load %arg6[%c0_57, %c0_58, %c0_59] : memref<18x18x64xbf16, #tpu.memory_space<vmem>>, vector<16x16x64xbf16>
      %c0_60 = arith.constant 0 : index
      %c0_61 = arith.constant 0 : index
      %c0_62 = arith.constant 0 : index
      %182 = vector.load %arg7[%c0_60, %c0_61, %c0_62] : memref<16x16x576xbf16, #tpu.memory_space<vmem>>, vector<16x16x64xbf16>
      tpu.vector_store %arg7[%c0_60, %c0_61, %c0_62], %181 {strides = array<i32>} : memref<16x16x576xbf16, #tpu.memory_space<vmem>>, vector<16x16x64xbf16>,
      %c0_63 = arith.constant 0 : index
      %c1_64 = arith.constant 1 : index
      %c0_65 = arith.constant 0 : index
      %183 = vector.load %arg6[%c0_63, %c1_64, %c0_65] : memref<18x18x64xbf16, #tpu.memory_space<vmem>>, vector<16x16x64xbf16>
      %c0_66 = arith.constant 0 : index
      %c0_67 = arith.constant 0 : index
      %c64 = arith.constant 64 : index
      %184 = vector.load %arg7[%c0_66, %c0_67, %c64] : memref<16x16x576xbf16, #tpu.memory_space<vmem>>, vector<16x16x64xbf16>
      tpu.vector_store %arg7[%c0_66, %c0_67, %c64], %183 {strides = array<i32>} : memref<16x16x576xbf16, #tpu.memory_space<vmem>>, vector<16x16x64xbf16>,
      %c0_68 = arith.constant 0 : index
      %c2_69 = arith.constant 2 : index
      %c0_70 = arith.constant 0 : index
      %185 = vector.load %arg6[%c0_68, %c2_69, %c0_70] : memref<18x18x64xbf16, #tpu.memory_space<vmem>>, vector<16x16x64xbf16>
      %c0_71 = arith.constant 0 : index
      %c0_72 = arith.constant 0 : index
      %c128 = arith.constant 128 : index
      %186 = vector.load %arg7[%c0_71, %c0_72, %c128] : memref<16x16x576xbf16, #tpu.memory_space<vmem>>, vector<16x16x64xbf16>
      tpu.vector_store %arg7[%c0_71, %c0_72, %c128], %185 {strides = array<i32>} : memref<16x16x576xbf16, #tpu.memory_space<vmem>>, vector<16x16x64xbf16>,
      %c1_73 = arith.constant 1 : index
      %c0_74 = arith.constant 0 : index
      %c0_75 = arith.constant 0 : index
      %187 = vector.load %arg6[%c1_73, %c0_74, %c0_75] : memref<18x18x64xbf16, #tpu.memory_space<vmem>>, vector<16x16x64xbf16>
      %c0_76 = arith.constant 0 : index
      %c0_77 = arith.constant 0 : index
      %c192 = arith.constant 192 : index
      %188 = vector.load %arg7[%c0_76, %c0_77, %c192] : memref<16x16x576xbf16, #tpu.memory_space<vmem>>, vector<16x16x64xbf16>
      tpu.vector_store %arg7[%c0_76, %c0_77, %c192], %187 {strides = array<i32>} : memref<16x16x576xbf16, #tpu.memory_space<vmem>>, vector<16x16x64xbf16>,
      %c1_78 = arith.constant 1 : index
      %c1_79 = arith.constant 1 : index
      %c0_80 = arith.constant 0 : index
      %189 = vector.load %arg6[%c1_78, %c1_79, %c0_80] : memref<18x18x64xbf16, #tpu.memory_space<vmem>>, vector<16x16x64xbf16>
      %c0_81 = arith.constant 0 : index
      %c0_82 = arith.constant 0 : index
      %c256 = arith.constant 256 : index
      %190 = vector.load %arg7[%c0_81, %c0_82, %c256] : memref<16x16x576xbf16, #tpu.memory_space<vmem>>, vector<16x16x64xbf16>
      tpu.vector_store %arg7[%c0_81, %c0_82, %c256], %189 {strides = array<i32>} : memref<16x16x576xbf16, #tpu.memory_space<vmem>>, vector<16x16x64xbf16>,
      %c1_83 = arith.constant 1 : index
      %c2_84 = arith.constant 2 : index
      %c0_85 = arith.constant 0 : index
      %191 = vector.load %arg6[%c1_83, %c2_84, %c0_85] : memref<18x18x64xbf16, #tpu.memory_space<vmem>>, vector<16x16x64xbf16>
      %c0_86 = arith.constant 0 : index
      %c0_87 = arith.constant 0 : index
      %c320 = arith.constant 320 : index
      %192 = vector.load %arg7[%c0_86, %c0_87, %c320] : memref<16x16x576xbf16, #tpu.memory_space<vmem>>, vector<16x16x64xbf16>
      tpu.vector_store %arg7[%c0_86, %c0_87, %c320], %191 {strides = array<i32>} : memref<16x16x576xbf16, #tpu.memory_space<vmem>>, vector<16x16x64xbf16>,
      %c2_88 = arith.constant 2 : index
      %c0_89 = arith.constant 0 : index
      %c0_90 = arith.constant 0 : index
      %193 = vector.load %arg6[%c2_88, %c0_89, %c0_90] : memref<18x18x64xbf16, #tpu.memory_space<vmem>>, vector<16x16x64xbf16>
      %c0_91 = arith.constant 0 : index
      %c0_92 = arith.constant 0 : index
      %c384 = arith.constant 384 : index
      %194 = vector.load %arg7[%c0_91, %c0_92, %c384] : memref<16x16x576xbf16, #tpu.memory_space<vmem>>, vector<16x16x64xbf16>
      tpu.vector_store %arg7[%c0_91, %c0_92, %c384], %193 {strides = array<i32>} : memref<16x16x576xbf16, #tpu.memory_space<vmem>>, vector<16x16x64xbf16>,
      %c2_93 = arith.constant 2 : index
      %c1_94 = arith.constant 1 : index
      %c0_95 = arith.constant 0 : index
      %195 = vector.load %arg6[%c2_93, %c1_94, %c0_95] : memref<18x18x64xbf16, #tpu.memory_space<vmem>>, vector<16x16x64xbf16>
      %c0_96 = arith.constant 0 : index
      %c0_97 = arith.constant 0 : index
      %c448 = arith.constant 448 : index
      %196 = vector.load %arg7[%c0_96, %c0_97, %c448] : memref<16x16x576xbf16, #tpu.memory_space<vmem>>, vector<16x16x64xbf16>
      tpu.vector_store %arg7[%c0_96, %c0_97, %c448], %195 {strides = array<i32>} : memref<16x16x576xbf16, #tpu.memory_space<vmem>>, vector<16x16x64xbf16>,
      %c2_98 = arith.constant 2 : index
      %c2_99 = arith.constant 2 : index
      %c0_100 = arith.constant 0 : index
      %197 = vector.load %arg6[%c2_98, %c2_99, %c0_100] : memref<18x18x64xbf16, #tpu.memory_space<vmem>>, vector<16x16x64xbf16>
      %c0_101 = arith.constant 0 : index
      %c0_102 = arith.constant 0 : index
      %c512 = arith.constant 512 : index
      %198 = vector.load %arg7[%c0_101, %c0_102, %c512] : memref<16x16x576xbf16, #tpu.memory_space<vmem>>, vector<16x16x64xbf16>
      tpu.vector_store %arg7[%c0_101, %c0_102, %c512], %197 {strides = array<i32>} : memref<16x16x576xbf16, #tpu.memory_space<vmem>>, vector<16x16x64xbf16>,
      %c0_103 = arith.constant 0 : index
      %c0_104 = arith.constant 0 : index
      %c0_105 = arith.constant 0 : index
      %199 = vector.load %arg7[%c0_103, %c0_104, %c0_105] : memref<16x16x576xbf16, #tpu.memory_space<vmem>>, vector<16x16x576xbf16>
      %200 = vector.shape_cast %199 : vector<16x16x576xbf16> to vector<256x576xbf16>
      %201 = arith.index_cast %arg8 : i32 to index
      %c0_106 = arith.constant 0 : index
      %c0_107 = arith.constant 0 : index
      %202 = vector.load %arg3[%201, %c0_106, %c0_107] : memref<18x576x64xbf16, #tpu.memory_space<vmem>>, vector<1x576x64xbf16>
      %203 = vector.shape_cast %202 : vector<1x576x64xbf16> to vector<576x64xbf16>
      %cst_108 = arith.constant dense<0.000000e+00> : vector<256x64xf32>
      %204 = tpu.matmul %200, %203, %cst_108 {dimension_numbers = #tpu.dot_dimension_numbers<[1], [0], [0], [1], [0, 0, 1, 1], [], []>} : vector<256x576xbf16>, vector<576x64xbf16>, vector<256x64xf32> -> vector<256x64xf32>
      %cst_109 = arith.constant 0.000000e+00 : f32
      %205 = vector.broadcast %cst_109 : f32 to vector<256x64xf32>
      %206 = arith.maximumf %204, %205 : vector<256x64xf32>
      %207 = arith.truncf %206 : vector<256x64xf32> to vector<256x64xbf16>
      %208 = vector.shape_cast %207 : vector<256x64xbf16> to vector<16x16x64xbf16>
      %c1_110 = arith.constant 1 : index
      %c1_111 = arith.constant 1 : index
      %c0_112 = arith.constant 0 : index
      %209 = vector.load %arg6[%c1_110, %c1_111, %c0_112] : memref<18x18x64xbf16, #tpu.memory_space<vmem>>, vector<16x16x64xbf16>
      tpu.vector_store %arg6[%c1_110, %c1_111, %c0_112], %208 {strides = array<i32>} : memref<18x18x64xbf16, #tpu.memory_space<vmem>>, vector<16x16x64xbf16>,
    }
    %c18_i32_20 = arith.constant 18 : i32
    %c0_21 = arith.constant 0 : index
    %c0_22 = arith.constant 0 : index
    %99 = vector.load %arg4[%c0_21, %c0_22] : memref<9x64xbf16, #tpu.memory_space<vmem>>, vector<9x64xbf16>
    %100 = arith.extf %99 : vector<9x64xbf16> to vector<9x64xf32>
    %cst_23 = arith.constant 0.000000e+00 : f32
    %101 = vector.broadcast %cst_23 : f32 to vector<16x16x64xf32>
    %c0_24 = arith.constant 0 : index
    %c0_25 = arith.constant 0 : index
    %c0_26 = arith.constant 0 : index
    %102 = vector.load %arg6[%c0_24, %c0_25, %c0_26] : memref<18x18x64xbf16, #tpu.memory_space<vmem>>, vector<16x16x64xbf16>
    %103 = arith.extf %102 : vector<16x16x64xbf16> to vector<16x16x64xf32>
    %104 = vector.extract_strided_slice %100 {offsets = [0, 0], sizes = [1, 64], strides = [1, 1]} : vector<9x64xf32> to vector<1x64xf32>
    %105 = vector.shape_cast %104 : vector<1x64xf32> to vector<64xf32>
    %106 = vector.shape_cast %105 : vector<64xf32> to vector<1x1x64xf32>
    %107 = vector.broadcast %106 : vector<1x1x64xf32> to vector<16x16x64xf32>
    %108 = arith.mulf %103, %107 : vector<16x16x64xf32>
    %109 = arith.addf %101, %108 : vector<16x16x64xf32>
    %c0_27 = arith.constant 0 : index
    %c1_28 = arith.constant 1 : index
    %c0_29 = arith.constant 0 : index
    %110 = vector.load %arg6[%c0_27, %c1_28, %c0_29] : memref<18x18x64xbf16, #tpu.memory_space<vmem>>, vector<16x16x64xbf16>
    %111 = arith.extf %110 : vector<16x16x64xbf16> to vector<16x16x64xf32>
    %112 = vector.extract_strided_slice %100 {offsets = [1, 0], sizes = [1, 64], strides = [1, 1]} : vector<9x64xf32> to vector<1x64xf32>
    %113 = vector.shape_cast %112 : vector<1x64xf32> to vector<64xf32>
    %114 = vector.shape_cast %113 : vector<64xf32> to vector<1x1x64xf32>
    %115 = vector.broadcast %114 : vector<1x1x64xf32> to vector<16x16x64xf32>
    %116 = arith.mulf %111, %115 : vector<16x16x64xf32>
    %117 = arith.addf %109, %116 : vector<16x16x64xf32>
    %c0_30 = arith.constant 0 : index
    %c2 = arith.constant 2 : index
    %c0_31 = arith.constant 0 : index
    %118 = vector.load %arg6[%c0_30, %c2, %c0_31] : memref<18x18x64xbf16, #tpu.memory_space<vmem>>, vector<16x16x64xbf16>
    %119 = arith.extf %118 : vector<16x16x64xbf16> to vector<16x16x64xf32>
    %120 = vector.extract_strided_slice %100 {offsets = [2, 0], sizes = [1, 64], strides = [1, 1]} : vector<9x64xf32> to vector<1x64xf32>
    %121 = vector.shape_cast %120 : vector<1x64xf32> to vector<64xf32>
    %122 = vector.shape_cast %121 : vector<64xf32> to vector<1x1x64xf32>
    %123 = vector.broadcast %122 : vector<1x1x64xf32> to vector<16x16x64xf32>
    %124 = arith.mulf %119, %123 : vector<16x16x64xf32>
    %125 = arith.addf %117, %124 : vector<16x16x64xf32>
    %c1_32 = arith.constant 1 : index
    %c0_33 = arith.constant 0 : index
    %c0_34 = arith.constant 0 : index
    %126 = vector.load %arg6[%c1_32, %c0_33, %c0_34] : memref<18x18x64xbf16, #tpu.memory_space<vmem>>, vector<16x16x64xbf16>
    %127 = arith.extf %126 : vector<16x16x64xbf16> to vector<16x16x64xf32>
    %128 = vector.extract_strided_slice %100 {offsets = [3, 0], sizes = [1, 64], strides = [1, 1]} : vector<9x64xf32> to vector<1x64xf32>
    %129 = vector.shape_cast %128 : vector<1x64xf32> to vector<64xf32>
    %130 = vector.shape_cast %129 : vector<64xf32> to vector<1x1x64xf32>
    %131 = vector.broadcast %130 : vector<1x1x64xf32> to vector<16x16x64xf32>
    %132 = arith.mulf %127, %131 : vector<16x16x64xf32>
    %133 = arith.addf %125, %132 : vector<16x16x64xf32>
    %c1_35 = arith.constant 1 : index
    %c1_36 = arith.constant 1 : index
    %c0_37 = arith.constant 0 : index
    %134 = vector.load %arg6[%c1_35, %c1_36, %c0_37] : memref<18x18x64xbf16, #tpu.memory_space<vmem>>, vector<16x16x64xbf16>
    %135 = arith.extf %134 : vector<16x16x64xbf16> to vector<16x16x64xf32>
    %136 = vector.extract_strided_slice %100 {offsets = [4, 0], sizes = [1, 64], strides = [1, 1]} : vector<9x64xf32> to vector<1x64xf32>
    %137 = vector.shape_cast %136 : vector<1x64xf32> to vector<64xf32>
    %138 = vector.shape_cast %137 : vector<64xf32> to vector<1x1x64xf32>
    %139 = vector.broadcast %138 : vector<1x1x64xf32> to vector<16x16x64xf32>
    %140 = arith.mulf %135, %139 : vector<16x16x64xf32>
    %141 = arith.addf %133, %140 : vector<16x16x64xf32>
    %c1_38 = arith.constant 1 : index
    %c2_39 = arith.constant 2 : index
    %c0_40 = arith.constant 0 : index
    %142 = vector.load %arg6[%c1_38, %c2_39, %c0_40] : memref<18x18x64xbf16, #tpu.memory_space<vmem>>, vector<16x16x64xbf16>
    %143 = arith.extf %142 : vector<16x16x64xbf16> to vector<16x16x64xf32>
    %144 = vector.extract_strided_slice %100 {offsets = [5, 0], sizes = [1, 64], strides = [1, 1]} : vector<9x64xf32> to vector<1x64xf32>
    %145 = vector.shape_cast %144 : vector<1x64xf32> to vector<64xf32>
    %146 = vector.shape_cast %145 : vector<64xf32> to vector<1x1x64xf32>
    %147 = vector.broadcast %146 : vector<1x1x64xf32> to vector<16x16x64xf32>
    %148 = arith.mulf %143, %147 : vector<16x16x64xf32>
    %149 = arith.addf %141, %148 : vector<16x16x64xf32>
    %c2_41 = arith.constant 2 : index
    %c0_42 = arith.constant 0 : index
    %c0_43 = arith.constant 0 : index
    %150 = vector.load %arg6[%c2_41, %c0_42, %c0_43] : memref<18x18x64xbf16, #tpu.memory_space<vmem>>, vector<16x16x64xbf16>
    %151 = arith.extf %150 : vector<16x16x64xbf16> to vector<16x16x64xf32>
    %152 = vector.extract_strided_slice %100 {offsets = [6, 0], sizes = [1, 64], strides = [1, 1]} : vector<9x64xf32> to vector<1x64xf32>
    %153 = vector.shape_cast %152 : vector<1x64xf32> to vector<64xf32>
    %154 = vector.shape_cast %153 : vector<64xf32> to vector<1x1x64xf32>
    %155 = vector.broadcast %154 : vector<1x1x64xf32> to vector<16x16x64xf32>
    %156 = arith.mulf %151, %155 : vector<16x16x64xf32>
    %157 = arith.addf %149, %156 : vector<16x16x64xf32>
    %c2_44 = arith.constant 2 : index
    %c1_45 = arith.constant 1 : index
    %c0_46 = arith.constant 0 : index
    %158 = vector.load %arg6[%c2_44, %c1_45, %c0_46] : memref<18x18x64xbf16, #tpu.memory_space<vmem>>, vector<16x16x64xbf16>
    %159 = arith.extf %158 : vector<16x16x64xbf16> to vector<16x16x64xf32>
    %160 = vector.extract_strided_slice %100 {offsets = [7, 0], sizes = [1, 64], strides = [1, 1]} : vector<9x64xf32> to vector<1x64xf32>
    %161 = vector.shape_cast %160 : vector<1x64xf32> to vector<64xf32>
    %162 = vector.shape_cast %161 : vector<64xf32> to vector<1x1x64xf32>
    %163 = vector.broadcast %162 : vector<1x1x64xf32> to vector<16x16x64xf32>
    %164 = arith.mulf %159, %163 : vector<16x16x64xf32>
    %165 = arith.addf %157, %164 : vector<16x16x64xf32>
    %c2_47 = arith.constant 2 : index
    %c2_48 = arith.constant 2 : index
    %c0_49 = arith.constant 0 : index
    %166 = vector.load %arg6[%c2_47, %c2_48, %c0_49] : memref<18x18x64xbf16, #tpu.memory_space<vmem>>, vector<16x16x64xbf16>
    %167 = arith.extf %166 : vector<16x16x64xbf16> to vector<16x16x64xf32>
    %168 = vector.extract_strided_slice %100 {offsets = [8, 0], sizes = [1, 64], strides = [1, 1]} : vector<9x64xf32> to vector<1x64xf32>
    %169 = vector.shape_cast %168 : vector<1x64xf32> to vector<64xf32>
    %170 = vector.shape_cast %169 : vector<64xf32> to vector<1x1x64xf32>
    %171 = vector.broadcast %170 : vector<1x1x64xf32> to vector<16x16x64xf32>
    %172 = arith.mulf %167, %171 : vector<16x16x64xf32>
    %173 = arith.addf %165, %172 : vector<16x16x64xf32>
    %cst_50 = arith.constant dense<0.000000e+00> : vector<16x16xf32>
    %174 = vector.multi_reduction <add>, %173, %cst_50 [2] : vector<16x16x64xf32> to vector<16x16xf32>
    %c0_51 = arith.constant 0 : index
    %c1_52 = arith.constant 1 : index
    %c1_53 = arith.constant 1 : index
    %175 = vector.load %arg1[%c0_51, %c1_52, %c1_53] : memref<1x18x18xf32, #tpu.memory_space<vmem>>, vector<1x16x16xf32>
    %176 = vector.shape_cast %175 : vector<1x16x16xf32> to vector<16x16xf32>
    %177 = arith.addf %174, %176 : vector<16x16xf32>
    %c0_54 = arith.constant 0 : index
    %c0_55 = arith.constant 0 : index
    %c0_56 = arith.constant 0 : index
    %178 = vector.load %arg5[%c0_54, %c0_55, %c0_56] : memref<1x16x16xf32, #tpu.memory_space<vmem>>, vector<1x16x16xf32>
    %179 = vector.shape_cast %178 : vector<1x16x16xf32> to vector<16x16xf32>
    %180 = vector.shape_cast %177 : vector<16x16xf32> to vector<1x16x16xf32>
    tpu.vector_store %arg5[%c0_54, %c0_55, %c0_56], %180 {strides = array<i32>} : memref<1x16x16xf32, #tpu.memory_space<vmem>>, vector<1x16x16xf32>,
    return
  }
  func.func @transform_0(%arg0: i32) -> (i32, i32, i32) {
    %c0_i32 = arith.constant 0 : i32
    %c0_i32_0 = arith.constant 0 : i32
    %c0_i32_1 = arith.constant 0 : i32
    return %arg0, %c0_i32, %c0_i32_0 : i32, i32, i32
  }
  func.func @transform_1(%arg0: i32) -> (i32, i32) {
    %c0_i32 = arith.constant 0 : i32
    %c0_i32_0 = arith.constant 0 : i32
    %c0_i32_1 = arith.constant 0 : i32
    return %c0_i32, %c0_i32_0 : i32, i32
  }
  func.func @transform_2(%arg0: i32) -> (i32, i32, i32) {
    %c0_i32 = arith.constant 0 : i32
    %c0_i32_0 = arith.constant 0 : i32
    %c0_i32_1 = arith.constant 0 : i32
    %c0_i32_2 = arith.constant 0 : i32
    return %c0_i32, %c0_i32_0, %c0_i32_1 : i32, i32, i32
  }
  func.func @transform_3(%arg0: i32) -> (i32, i32) {
    %c0_i32 = arith.constant 0 : i32
    %c0_i32_0 = arith.constant 0 : i32
    %c0_i32_1 = arith.constant 0 : i32
    return %c0_i32, %c0_i32_0 : i32, i32
  }
  func.func @transform_4(%arg0: i32) -> (i32, i32, i32) {
    %c0_i32 = arith.constant 0 : i32
    %c0_i32_0 = arith.constant 0 : i32
    %c0_i32_1 = arith.constant 0 : i32
    return %arg0, %c0_i32, %c0_i32_0 : i32, i32, i32
  }
}

</mosaic_0001>

<llo_original>
// kernel: vdsr_forward.1
$region0: #{vdsr_forward.1}
  #allocation0 [shape = 'u32[]', space=smem, size = 0x4, offset = 0x4, fixed_abs, tag = 'smem constant byte address 0x4 - core index']
  #allocation1 [shape = 'u32[72,128]{1,0:T(1,128)}', space=vmem, size = 0x9000, scoped, tag = 'internal scratch']
  #allocation2 [shape = 'bf16[18,18,64]{2,1,0:T(8,128)(2,1)}', space=vmem, size = 0x1b000, scoped, tag = 'scratch operand']
  #allocation3 [shape = 'bf16[16,16,576]{2,1,0:T(8,128)(2,1)}', space=vmem, size = 0x50000, scoped, tag = 'scratch operand']
  %s0 = inlined_call_operand.vmem [shape: f32[2,18,18], index: 0, kind: input, shape index: {}]
  %s1 = inlined_call_operand.vmem [shape: bf16[9,64], index: 1, kind: input, shape index: {}]
  %s2 = inlined_call_operand.vmem [shape: bf16[18,576,64], index: 2, kind: input, shape index: {}]
  %s3 = inlined_call_operand.vmem [shape: bf16[9,64], index: 3, kind: input, shape index: {}]
  %s4 = inlined_call_operand.hbm [shape: f32[2,16,16], index: 4, kind: output, shape index: {}]
  %s5 = sld [smem:[#allocation0]]
  $region56: #{vdsr_forward.1} parent=0
    _
  %s7 = ssub.s32 1, %s5
  %s8 = scalar_select 0, %s7, %s5
  $region1: #{vdsr_forward.1} parent=0
    #allocation4 [shape = 'u8[16384]{0}', space=vmem, size = 0x4000, scoped, tag = 'output window, operand 0']
    #allocation5 [shape = 's32[2]{0}', space=sflag, size = 0x8, scoped, tag = 'scoped memory for vdsr_forward.1']
    %9 = vsyncpa [#allocation5], 0
    %s10 = scalar_lea.sflag [#allocation5], 1
    %11 = vsyncpa %s10, 0
    loop: start=0, step=1, limit=4
    $region2: #{vdsr_forward.1} parent=1 // loop_pre_header
      _
    $region3: #{vdsr_forward.1} parent=1 // loop_header
      %s13 = sphi 0, %s17
      %p14 = scmp.ge.s32.totalorder %s13, 4
      %s23 = sphi 0, %s25
      %s26 = sphi 0, %s23
      %s27 = sphi 0, %s26
      %s43 = sphi 0, %s27
      %s47 = sphi 0, %s47
      %s49 = sphi 0, %s47
      %s50 = sphi 0, %s49
      %s64 = sphi 0, %s50
      %s68 = sphi 0, %s68
      %s70 = sphi 0, %s68
      %s71 = sphi 0, %s70
      %s85 = sphi 0, %s71
      %s89 = sphi 0, %s89
      %s91 = sphi 0, %s89
      %s92 = sphi 0, %s91
      %s106 = sphi 0, %s92
      %s112 = sphi 0, %s114
      %s115 = sphi 0, %s112
      %s116 = sphi 0, %s115
      %s132 = sphi 0, %s116
    $region4: #{vdsr_forward.1} parent=1 // loop_header_branch
      %16 = sbr.rel (%p14) target = $region8
    $region5: #{vdsr_forward.1} parent=1 // loop_body
      %s18 = ssub.s32 %s13, 1
      %s19 = ssub.s32 %s13, 2
      %s20 = sadd.s32 %s13, 1
      %s21 = ssub.s32 %s13, %s20
      %p22 = scmp.eq.s32.totalorder %s21, 0
      %s24 = sadd.s32 %s23, 1
      %s25 = scalar_select %p22, %s23, %s24
      %p28 = pneg %p22
      %p29 = scmp.eq.s32.totalorder %s13, 1
      %p30 = por %p28, %p29
      %p31 = scmp.ne.s32.totalorder %s23, %s26
      %p32 = scmp.eq.s32.totalorder %s13, 0
      %p33 = por %p31, %p32
      %p34 = scmp.ne.s32.totalorder %s23, %s26
      %p35 = scmp.eq.s32.totalorder %s18, 1
      %p36 = por %p34, %p35
      %p37 = scmp.ne.s32.totalorder %s26, %s27
      %p38 = scmp.eq.s32.totalorder %s18, 0
      %p39 = por %p37, %p38
      %p40 = scmp.ne.s32.totalorder %s26, %s27
      %p41 = scmp.eq.s32.totalorder %s19, 1
      %p42 = por %p40, %p41
      %p44 = scmp.ne.s32.totalorder %s27, %s43
      %p45 = scmp.eq.s32.totalorder %s19, 0
      %p46 = por %p44, %p45
      %s48 = sadd.s32 %s47, 1
      %p51 = scmp.eq.s32.totalorder %s13, 1
      %p52 = scmp.ne.s32.totalorder %s47, %s49
      %p53 = scmp.eq.s32.totalorder %s13, 0
      %p54 = por %p52, %p53
      %p55 = scmp.ne.s32.totalorder %s47, %s49
      %p56 = scmp.eq.s32.totalorder %s18, 1
      %p57 = por %p55, %p56
      %p58 = scmp.ne.s32.totalorder %s49, %s50
      %p59 = scmp.eq.s32.totalorder %s18, 0
      %p60 = por %p58, %p59
      %p61 = scmp.ne.s32.totalorder %s49, %s50
      %p62 = scmp.eq.s32.totalorder %s19, 1
      %p63 = por %p61, %p62
      %p65 = scmp.ne.s32.totalorder %s50, %s64
      %p66 = scmp.eq.s32.totalorder %s19, 0
      %p67 = por %p65, %p66
      %s69 = sadd.s32 %s68, 1
      %p72 = scmp.eq.s32.totalorder %s13, 1
      %p73 = scmp.ne.s32.totalorder %s68, %s70
      %p74 = scmp.eq.s32.totalorder %s13, 0
      %p75 = por %p73, %p74
      %p76 = scmp.ne.s32.totalorder %s68, %s70
      %p77 = scmp.eq.s32.totalorder %s18, 1
      %p78 = por %p76, %p77
      %p79 = scmp.ne.s32.totalorder %s70, %s71
      %p80 = scmp.eq.s32.totalorder %s18, 0
      %p81 = por %p79, %p80
      %p82 = scmp.ne.s32.totalorder %s70, %s71
      %p83 = scmp.eq.s32.totalorder %s19, 1
      %p84 = por %p82, %p83
      %p86 = scmp.ne.s32.totalorder %s71, %s85
      %p87 = scmp.eq.s32.totalorder %s19, 0
      %p88 = por %p86, %p87
      %s90 = sadd.s32 %s89, 1
      %p93 = scmp.eq.s32.totalorder %s13, 1
      %p94 = scmp.ne.s32.totalorder %s89, %s91
      %p95 = scmp.eq.s32.totalorder %s13, 0
      %p96 = por %p94, %p95
      %p97 = scmp.ne.s32.totalorder %s89, %s91
      %p98 = scmp.eq.s32.totalorder %s18, 1
      %p99 = por %p97, %p98
      %p100 = scmp.ne.s32.totalorder %s91, %s92
      %p101 = scmp.eq.s32.totalorder %s18, 0
      %p102 = por %p100, %p101
      %p103 = scmp.ne.s32.totalorder %s91, %s92
      %p104 = scmp.eq.s32.totalorder %s19, 1
      %p105 = por %p103, %p104
      %p107 = scmp.ne.s32.totalorder %s92, %s106
      %p108 = scmp.eq.s32.totalorder %s19, 0
      %p109 = por %p107, %p108
      %s110 = ssub.s32 %s13, %s20
      %p111 = scmp.eq.s32.totalorder %s110, 0
      %s113 = sadd.s32 %s112, 1
      %s114 = scalar_select %p111, %s112, %s113
      %p117 = pneg %p111
      %p118 = scmp.eq.s32.totalorder %s13, 1
      %p119 = por %p117, %p118
      %p120 = scmp.ne.s32.totalorder %s112, %s115
      %p121 = scmp.eq.s32.totalorder %s13, 0
      %p122 = por %p120, %p121
      %p123 = scmp.ne.s32.totalorder %s112, %s115
      %p124 = scmp.eq.s32.totalorder %s18, 1
      %p125 = por %p123, %p124
      %p126 = scmp.ne.s32.totalorder %s115, %s116
      %p127 = scmp.eq.s32.totalorder %s18, 0
      %p128 = por %p126, %p127
      %p129 = scmp.ne.s32.totalorder %s115, %s116
      %p130 = scmp.eq.s32.totalorder %s19, 1
      %p131 = por %p129, %p130
      %p133 = scmp.ne.s32.totalorder %s116, %s132
      %p134 = scmp.eq.s32.totalorder %s19, 0
      %p135 = por %p133, %p134
      %p136 = scmp.le.s32.totalorder 1, %s13
      %p137 = scmp.lt.s32.totalorder %s13, 3
      %p138 = pnand %p136, %p137
      %p139 = pneg %p138
      // Predicated region
      $region9: #{vdsr_forward.1} parent=5 // pred_check
        _
      $region10: #{vdsr_forward.1} parent=5 // pred_check_branch
        %141 = sbr.rel (%p138) target = $region12
      $region11: #{vdsr_forward.1} parent=5 // pred_region
        %s142 = ssub.s32 %s13, 1
        // Predicated region
        $region13: #{vdsr_forward.1} parent=11 // pred_check
          %p143 = pneg %p60
        $region14: #{vdsr_forward.1} parent=11 // pred_check_branch
          %145 = sbr.rel (%p143) target = $region16
        $region15: #{vdsr_forward.1} parent=11 // pred_region
          _
        $region16: #{vdsr_forward.1} parent=11 // pred_fallthru
          _
        // Predicated region
        $region17: #{vdsr_forward.1} parent=11 // pred_check
          %p146 = pneg %p81
        $region18: #{vdsr_forward.1} parent=11 // pred_check_branch
          %148 = sbr.rel (%p146) target = $region20
        $region19: #{vdsr_forward.1} parent=11 // pred_region
          _
        $region20: #{vdsr_forward.1} parent=11 // pred_fallthru
          _
        // Predicated region
        $region21: #{vdsr_forward.1} parent=11 // pred_check
          %p149 = pneg %p102
        $region22: #{vdsr_forward.1} parent=11 // pred_check_branch
          %151 = sbr.rel (%p149) target = $region24
        $region23: #{vdsr_forward.1} parent=11 // pred_region
          _
        $region24: #{vdsr_forward.1} parent=11 // pred_fallthru
          _
      $region12: #{vdsr_forward.1} parent=5 // pred_fallthru
        _
      %p152 = scmp.lt.s32.totalorder %s13, 2
      // Predicated region
      $region25: #{vdsr_forward.1} parent=5 // pred_check
        %p153 = pneg %p152
      $region26: #{vdsr_forward.1} parent=5 // pred_check_branch
        %155 = sbr.rel (%p153) target = $region28
      $region27: #{vdsr_forward.1} parent=5 // pred_region
        // Predicated region
        $region29: #{vdsr_forward.1} parent=27 // pred_check
          %p156 = pneg %p33
        $region30: #{vdsr_forward.1} parent=27 // pred_check_branch
          %158 = sbr.rel (%p156) target = $region32
        $region31: #{vdsr_forward.1} parent=27 // pred_region
          %p159 = scmp.lt.s32.totalorder %s13, 1
          %s160 = scalar_select %p159, %s13, 1
          %s161 = smul.addr %s160, 3
          %s162 = smul.addr %s161, 8
          %s163 = scalar_lea.vmem %s0, %s162
        $region32: #{vdsr_forward.1} parent=27 // pred_fallthru
          _
      $region28: #{vdsr_forward.1} parent=5 // pred_fallthru
        _
      %p164 = scmp.le.s32.totalorder 1, %s13
      %p165 = scmp.lt.s32.totalorder %s13, 3
      %p166 = pnand %p164, %p165
      %p167 = pneg %p166
      // Predicated region
      $region33: #{vdsr_forward.1} parent=5 // pred_check
        _
      $region34: #{vdsr_forward.1} parent=5 // pred_check_branch
        %169 = sbr.rel (%p166) target = $region36
      $region35: #{vdsr_forward.1} parent=5 // pred_region
        %s170 = ssub.s32 %s13, 1
        %p171 = scmp.lt.s32.totalorder %s18, 1
        %s172 = scalar_select %p171, %s18, 1
        %s173 = smul.addr %s172, 3
        %s174 = smul.addr %s173, 8
        %s175 = scalar_lea.vmem %s0, %s174
        %p176 = pneg %p39
        %p177 = pneg %p36
        %p178 = pneg %p60
        %p179 = pneg %p57
        %p180 = pneg %p81
        %p181 = pneg %p78
        %p182 = pneg %p102
        %p183 = pneg %p99
        %p184 = pneg %p128
        %p185 = pneg %p125
        %s186 = sand.u32 %s115, 1
        %s187 = scalar_lea.sflag [#allocation5], %s186
        %s188 = sand.u32 %s115, 1
        %s189 = smul.addr %s188, 16
        %s190 = scalar_lea.vmem [#allocation4], %s189
        %p191 = scmp.lt.s32.totalorder %s18, 1
        %s192 = scalar_select %p191, %s18, 1
        %s193 = smul.addr %s192, 3
        %s194 = smul.addr %s193, 8
        %s195 = scalar_lea.vmem %s0, %s194
        %vm197 = vcmask 519168
        %198 = vst.msk [vmem:[#allocation2] sm:$0xf] %vm197, 0
        %199 = vst.msk [vmem:[#allocation2 + $0x4] sm:$0xf] %vm197, 0
        %vm200 = vcmask 516096
        %201 = vst.msk [vmem:[#allocation2 + $0x8] sm:$0x1] %vm200, 0
        %s202 = scalar_lea.vmem [#allocation2], 204
        %203 = vst.msk [vmem:[%s202] sm:$0xf] %vm197, 0
        %204 = vst.msk [vmem:[%s202 + $0x4] sm:$0xf] %vm197, 0
        %205 = vst.msk [vmem:[%s202 + $0x8] sm:$0x1] %vm200, 0
        %vm206 = vcmask 516096
        %vm207 = vsmask.f32 256
        %vm208 = vmand %vm206, %vm207
        %v209 = vld [vmem:[#allocation2] sm:$0x1]
        %v210 = vsel %vm208, 0, %v209
        %211 = vst [vmem:[#allocation2] sm:$0x1] %v210
        %v212 = vld [vmem:[#allocation2 + $0xc] sm:$0x1]
        %v213 = vsel %vm208, 0, %v212
        %214 = vst [vmem:[#allocation2 + $0xc] sm:$0x1] %v213
        %v215 = vld [vmem:[#allocation2 + $0x18] sm:$0x1]
        %v216 = vsel %vm208, 0, %v215
        %217 = vst [vmem:[#allocation2 + $0x18] sm:$0x1] %v216
        %v218 = vld [vmem:[#allocation2 + $0x24] sm:$0x1]
        %v219 = vsel %vm208, 0, %v218
        %220 = vst [vmem:[#allocation2 + $0x24] sm:$0x1] %v219
        %v221 = vld [vmem:[#allocation2 + $0x30] sm:$0x1]
        %v222 = vsel %vm208, 0, %v221
        %223 = vst [vmem:[#allocation2 + $0x30] sm:$0x1] %v222
        %v224 = vld [vmem:[#allocation2 + $0x3c] sm:$0x1]
        %v225 = vsel %vm208, 0, %v224
        %226 = vst [vmem:[#allocation2 + $0x3c] sm:$0x1] %v225
        %v227 = vld [vmem:[#allocation2 + $0x48] sm:$0x1]
        %v228 = vsel %vm208, 0, %v227
        %229 = vst [vmem:[#allocation2 + $0x48] sm:$0x1] %v228
        %v230 = vld [vmem:[#allocation2 + $0x54] sm:$0x1]
        %v231 = vsel %vm208, 0, %v230
        %232 = vst [vmem:[#allocation2 + $0x54] sm:$0x1] %v231
        %v233 = vld [vmem:[#allocation2 + $0x60] sm:$0x1]
        %v234 = vsel %vm208, 0, %v233
        %235 = vst [vmem:[#allocation2 + $0x60] sm:$0x1] %v234
        %v236 = vld [vmem:[#allocation2 + $0x6c] sm:$0x1]
        %v237 = vsel %vm208, 0, %v236
        %238 = vst [vmem:[#allocation2 + $0x6c] sm:$0x1] %v237
        %v239 = vld [vmem:[#allocation2 + $0x78] sm:$0x1]
        %v240 = vsel %vm208, 0, %v239
        %241 = vst [vmem:[#allocation2 + $0x78] sm:$0x1] %v240
        %v242 = vld [vmem:[#allocation2 + $0x84] sm:$0x1]
        %v243 = vsel %vm208, 0, %v242
        %244 = vst [vmem:[#allocation2 + $0x84] sm:$0x1] %v243
        %v245 = vld [vmem:[#allocation2 + $0x90] sm:$0x1]
        %v246 = vsel %vm208, 0, %v245
        %247 = vst [vmem:[#allocation2 + $0x90] sm:$0x1] %v246
        %v248 = vld [vmem:[#allocation2 + $0x9c] sm:$0x1]
        %v249 = vsel %vm208, 0, %v248
        %250 = vst [vmem:[#allocation2 + $0x9c] sm:$0x1] %v249
        %v251 = vld [vmem:[#allocation2 + $0xa8] sm:$0x1]
        %v252 = vsel %vm208, 0, %v251
        %253 = vst [vmem:[#allocation2 + $0xa8] sm:$0x1] %v252
        %v254 = vld [vmem:[#allocation2 + $0xb4] sm:$0x1]
        %v255 = vsel %vm208, 0, %v254
        %256 = vst [vmem:[#allocation2 + $0xb4] sm:$0x1] %v255
        %v257 = vld [vmem:[#allocation2 + $0xc0] sm:$0x1]
        %v258 = vsel %vm208, 0, %v257
        %259 = vst [vmem:[#allocation2 + $0xc0] sm:$0x1] %v258
        %v260 = vld [vmem:[#allocation2 + $0xcc] sm:$0x1]
        %v261 = vsel %vm208, 0, %v260
        %262 = vst [vmem:[#allocation2 + $0xcc] sm:$0x1] %v261
        %vm263 = vsmask.f32 7938
        %vm264 = vmand %vm206, %vm263
        %v265 = vld [vmem:[#allocation2 + $0x8] sm:$0x1]
        %v266 = vsel %vm264, 0, %v265
        %267 = vst [vmem:[#allocation2 + $0x8] sm:$0x1] %v266
        %v268 = vld [vmem:[#allocation2 + $0x14] sm:$0x1]
        %v269 = vsel %vm264, 0, %v268
        %270 = vst [vmem:[#allocation2 + $0x14] sm:$0x1] %v269
        %v271 = vld [vmem:[#allocation2 + $0x20] sm:$0x1]
        %v272 = vsel %vm264, 0, %v271
        %273 = vst [vmem:[#allocation2 + $0x20] sm:$0x1] %v272
        %v274 = vld [vmem:[#allocation2 + $0x2c] sm:$0x1]
        %v275 = vsel %vm264, 0, %v274
        %276 = vst [vmem:[#allocation2 + $0x2c] sm:$0x1] %v275
        %v277 = vld [vmem:[#allocation2 + $0x38] sm:$0x1]
        %v278 = vsel %vm264, 0, %v277
        %279 = vst [vmem:[#allocation2 + $0x38] sm:$0x1] %v278
        %v280 = vld [vmem:[#allocation2 + $0x44] sm:$0x1]
        %v281 = vsel %vm264, 0, %v280
        %282 = vst [vmem:[#allocation2 + $0x44] sm:$0x1] %v281
        %v283 = vld [vmem:[#allocation2 + $0x50] sm:$0x1]
        %v284 = vsel %vm264, 0, %v283
        %285 = vst [vmem:[#allocation2 + $0x50] sm:$0x1] %v284
        %v286 = vld [vmem:[#allocation2 + $0x5c] sm:$0x1]
        %v287 = vsel %vm264, 0, %v286
        %288 = vst [vmem:[#allocation2 + $0x5c] sm:$0x1] %v287
        %v289 = vld [vmem:[#allocation2 + $0x68] sm:$0x1]
        %v290 = vsel %vm264, 0, %v289
        %291 = vst [vmem:[#allocation2 + $0x68] sm:$0x1] %v290
        %v292 = vld [vmem:[#allocation2 + $0x74] sm:$0x1]
        %v293 = vsel %vm264, 0, %v292
        %294 = vst [vmem:[#allocation2 + $0x74] sm:$0x1] %v293
        %v295 = vld [vmem:[#allocation2 + $0x80] sm:$0x1]
        %v296 = vsel %vm264, 0, %v295
        %297 = vst [vmem:[#allocation2 + $0x80] sm:$0x1] %v296
        %v298 = vld [vmem:[#allocation2 + $0x8c] sm:$0x1]
        %v299 = vsel %vm264, 0, %v298
        %300 = vst [vmem:[#allocation2 + $0x8c] sm:$0x1] %v299
        %v301 = vld [vmem:[#allocation2 + $0x98] sm:$0x1]
        %v302 = vsel %vm264, 0, %v301
        %303 = vst [vmem:[#allocation2 + $0x98] sm:$0x1] %v302
        %v304 = vld [vmem:[#allocation2 + $0xa4] sm:$0x1]
        %v305 = vsel %vm264, 0, %v304
        %306 = vst [vmem:[#allocation2 + $0xa4] sm:$0x1] %v305
        %v307 = vld [vmem:[#allocation2 + $0xb0] sm:$0x1]
        %v308 = vsel %vm264, 0, %v307
        %309 = vst [vmem:[#allocation2 + $0xb0] sm:$0x1] %v308
        %v310 = vld [vmem:[#allocation2 + $0xbc] sm:$0x1]
        %v311 = vsel %vm264, 0, %v310
        %312 = vst [vmem:[#allocation2 + $0xbc] sm:$0x1] %v311
        %v313 = vld [vmem:[#allocation2 + $0xc8] sm:$0x1]
        %v314 = vsel %vm264, 0, %v313
        %315 = vst [vmem:[#allocation2 + $0xc8] sm:$0x1] %v314
        %v316 = vld [vmem:[#allocation2 + $0xd4] sm:$0x1]
        %v317 = vsel %vm264, 0, %v316
        %318 = vst [vmem:[#allocation2 + $0xd4] sm:$0x1] %v317
        %v319 = vld [vmem:[%s195] sm:$0xff]
        %v320 = vld [vmem:[%s195 + $0x8] sm:$0xff]
        %v321 = vld [vmem:[%s195 + $0x10] sm:$0x3]
        %v322 = vpack.c.bf16 %v319, %v319
        %v323 = vpack.c.bf16 %v320, %v320
        %v324 = vpack.c.bf16 %v321, %v321
        %v325 = vunpack.c.l.bf16 %v322
        %v326 = vunpack.c.l.bf16 %v323
        %v327 = vunpack.c.l.bf16 %v324
        %v328 = vld [vmem:[%s1] sm:$0xf]
        %v329 = vld [vmem:[%s1 + $0x4] sm:$0x1]
        %v330 = vunpack.c.l.bf16 %v328
        %v331 = vunpack.c.l.bf16 %v329
        %v332 = vperm.slane %v325, 0
        %v333 = vlaneseq
        %v334 = vshrl.u32 %v333, 7
        %336 = vset.pattern.permute.xlu0 %v334
        %337 = vperm.xlu0 %336, %v332
        %v338 = vpop.permute.xlu0 %337
        %v339 = vlaneseq
        %v340 = vshrl.u32 %v339, 7
        %v341 = vadd.s32 %v340, 8
        %342 = vset.pattern.permute.xlu0 %v341
        %343 = vperm.xlu0 %342, %v332
        %v344 = vpop.permute.xlu0 %343
        %v345 = vperm.slane %v325, 1
        %v346 = vlaneseq
        %v347 = vshrl.u32 %v346, 7
        %349 = vset.pattern.permute.xlu0 %v347
        %350 = vperm.xlu0 %349, %v345
        %v351 = vpop.permute.xlu0 %350
        %v352 = vlaneseq
        %v353 = vshrl.u32 %v352, 7
        %v354 = vadd.s32 %v353, 8
        %355 = vset.pattern.permute.xlu0 %v354
        %356 = vperm.xlu0 %355, %v345
        %v357 = vpop.permute.xlu0 %356
        %v358 = vperm.slane %v325, 2
        %v359 = vlaneseq
        %v360 = vshrl.u32 %v359, 7
        %362 = vset.pattern.permute.xlu0 %v360
        %363 = vperm.xlu0 %362, %v358
        %v364 = vpop.permute.xlu0 %363
        %v365 = vlaneseq
        %v366 = vshrl.u32 %v365, 7
        %v367 = vadd.s32 %v366, 8
        %368 = vset.pattern.permute.xlu0 %v367
        %369 = vperm.xlu0 %368, %v358
        %v370 = vpop.permute.xlu0 %369
        %v371 = vperm.slane %v325, 3
        %v372 = vlaneseq
        %v373 = vshrl.u32 %v372, 7
        %375 = vset.pattern.permute.xlu0 %v373
        %376 = vperm.xlu0 %375, %v371
        %v377 = vpop.permute.xlu0 %376
        %v378 = vlaneseq
        %v379 = vshrl.u32 %v378, 7
        %v380 = vadd.s32 %v379, 8
        %381 = vset.pattern.permute.xlu0 %v380
        %382 = vperm.xlu0 %381, %v371
        %v383 = vpop.permute.xlu0 %382
        %v384 = vperm.slane %v325, 4
        %v385 = vlaneseq
        %v386 = vshrl.u32 %v385, 7
        %388 = vset.pattern.permute.xlu0 %v386
        %389 = vperm.xlu0 %388, %v384
        %v390 = vpop.permute.xlu0 %389
        %v391 = vlaneseq
        %v392 = vshrl.u32 %v391, 7
        %v393 = vadd.s32 %v392, 8
        %394 = vset.pattern.permute.xlu0 %v393
        %395 = vperm.xlu0 %394, %v384
        %v396 = vpop.permute.xlu0 %395
        %v397 = vperm.slane %v325, 5
        %v398 = vlaneseq
        %v399 = vshrl.u32 %v398, 7
        %401 = vset.pattern.permute.xlu0 %v399
        %402 = vperm.xlu0 %401, %v397
        %v403 = vpop.permute.xlu0 %402
        %v404 = vlaneseq
        %v405 = vshrl.u32 %v404, 7
        %v406 = vadd.s32 %v405, 8
        %407 = vset.pattern.permute.xlu0 %v406
        %408 = vperm.xlu0 %407, %v397
        %v409 = vpop.permute.xlu0 %408
        %v410 = vperm.slane %v325, 6
        %v411 = vlaneseq
        %v412 = vshrl.u32 %v411, 7
        %414 = vset.pattern.permute.xlu0 %v412
        %415 = vperm.xlu0 %414, %v410
        %v416 = vpop.permute.xlu0 %415
        %v417 = vlaneseq
        %v418 = vshrl.u32 %v417, 7
        %v419 = vadd.s32 %v418, 8
        %420 = vset.pattern.permute.xlu0 %v419
        %421 = vperm.xlu0 %420, %v410
        %v422 = vpop.permute.xlu0 %421
        %v423 = vperm.slane %v325, 7
        %v424 = vlaneseq
        %v425 = vshrl.u32 %v424, 7
        %427 = vset.pattern.permute.xlu0 %v425
        %428 = vperm.xlu0 %427, %v423
        %v429 = vpop.permute.xlu0 %428
        %v430 = vlaneseq
        %v431 = vshrl.u32 %v430, 7
        %v432 = vadd.s32 %v431, 8
        %433 = vset.pattern.permute.xlu0 %v432
        %434 = vperm.xlu0 %433, %v423
        %v435 = vpop.permute.xlu0 %434
        %v436 = vperm.slane %v326, 0
        %v437 = vlaneseq
        %v438 = vshrl.u32 %v437, 7
        %440 = vset.pattern.permute.xlu0 %v438
        %441 = vperm.xlu0 %440, %v436
        %v442 = vpop.permute.xlu0 %441
        %v443 = vlaneseq
        %v444 = vshrl.u32 %v443, 7
        %v445 = vadd.s32 %v444, 8
        %446 = vset.pattern.permute.xlu0 %v445
        %447 = vperm.xlu0 %446, %v436
        %v448 = vpop.permute.xlu0 %447
        %v449 = vperm.slane %v326, 1
        %v450 = vlaneseq
        %v451 = vshrl.u32 %v450, 7
        %453 = vset.pattern.permute.xlu0 %v451
        %454 = vperm.xlu0 %453, %v449
        %v455 = vpop.permute.xlu0 %454
        %v456 = vlaneseq
        %v457 = vshrl.u32 %v456, 7
        %v458 = vadd.s32 %v457, 8
        %459 = vset.pattern.permute.xlu0 %v458
        %460 = vperm.xlu0 %459, %v449
        %v461 = vpop.permute.xlu0 %460
        %v462 = vperm.slane %v326, 2
        %v463 = vlaneseq
        %v464 = vshrl.u32 %v463, 7
        %466 = vset.pattern.permute.xlu0 %v464
        %467 = vperm.xlu0 %466, %v462
        %v468 = vpop.permute.xlu0 %467
        %v469 = vlaneseq
        %v470 = vshrl.u32 %v469, 7
        %v471 = vadd.s32 %v470, 8
        %472 = vset.pattern.permute.xlu0 %v471
        %473 = vperm.xlu0 %472, %v462
        %v474 = vpop.permute.xlu0 %473
        %v475 = vperm.slane %v326, 3
        %v476 = vlaneseq
        %v477 = vshrl.u32 %v476, 7
        %479 = vset.pattern.permute.xlu0 %v477
        %480 = vperm.xlu0 %479, %v475
        %v481 = vpop.permute.xlu0 %480
        %v482 = vlaneseq
        %v483 = vshrl.u32 %v482, 7
        %v484 = vadd.s32 %v483, 8
        %485 = vset.pattern.permute.xlu0 %v484
        %486 = vperm.xlu0 %485, %v475
        %v487 = vpop.permute.xlu0 %486
        %v488 = vperm.slane %v326, 4
        %v489 = vlaneseq
        %v490 = vshrl.u32 %v489, 7
        %492 = vset.pattern.permute.xlu0 %v490
        %493 = vperm.xlu0 %492, %v488
        %v494 = vpop.permute.xlu0 %493
        %v495 = vlaneseq
        %v496 = vshrl.u32 %v495, 7
        %v497 = vadd.s32 %v496, 8
        %498 = vset.pattern.permute.xlu0 %v497
        %499 = vperm.xlu0 %498, %v488
        %v500 = vpop.permute.xlu0 %499
        %v501 = vperm.slane %v326, 5
        %v502 = vlaneseq
        %v503 = vshrl.u32 %v502, 7
        %505 = vset.pattern.permute.xlu0 %v503
        %506 = vperm.xlu0 %505, %v501
        %v507 = vpop.permute.xlu0 %506
        %v508 = vlaneseq
        %v509 = vshrl.u32 %v508, 7
        %v510 = vadd.s32 %v509, 8
        %511 = vset.pattern.permute.xlu0 %v510
        %512 = vperm.xlu0 %511, %v501
        %v513 = vpop.permute.xlu0 %512
        %v514 = vperm.slane %v326, 6
        %v515 = vlaneseq
        %v516 = vshrl.u32 %v515, 7
        %518 = vset.pattern.permute.xlu0 %v516
        %519 = vperm.xlu0 %518, %v514
        %v520 = vpop.permute.xlu0 %519
        %v521 = vlaneseq
        %v522 = vshrl.u32 %v521, 7
        %v523 = vadd.s32 %v522, 8
        %524 = vset.pattern.permute.xlu0 %v523
        %525 = vperm.xlu0 %524, %v514
        %v526 = vpop.permute.xlu0 %525
        %v527 = vperm.slane %v326, 7
        %v528 = vlaneseq
        %v529 = vshrl.u32 %v528, 7
        %531 = vset.pattern.permute.xlu0 %v529
        %532 = vperm.xlu0 %531, %v527
        %v533 = vpop.permute.xlu0 %532
        %v534 = vlaneseq
        %v535 = vshrl.u32 %v534, 7
        %v536 = vadd.s32 %v535, 8
        %537 = vset.pattern.permute.xlu0 %v536
        %538 = vperm.xlu0 %537, %v527
        %v539 = vpop.permute.xlu0 %538
        %v540 = vperm.slane %v330, 0
        %v541 = vmul.f32 %v338, %v540
        %v542 = vmul.f32 %v344, %v540
        %v543 = vmul.f32 %v351, %v540
        %v544 = vmul.f32 %v357, %v540
        %v545 = vmul.f32 %v364, %v540
        %v546 = vmul.f32 %v370, %v540
        %v547 = vmul.f32 %v377, %v540
        %v548 = vmul.f32 %v383, %v540
        %v549 = vmul.f32 %v390, %v540
        %v550 = vmul.f32 %v396, %v540
        %v551 = vmul.f32 %v403, %v540
        %v552 = vmul.f32 %v409, %v540
        %v553 = vmul.f32 %v416, %v540
        %v554 = vmul.f32 %v422, %v540
        %v555 = vmul.f32 %v429, %v540
        %v556 = vmul.f32 %v435, %v540
        %v557 = vmul.f32 %v442, %v540
        %v558 = vmul.f32 %v448, %v540
        %v559 = vmul.f32 %v455, %v540
        %v560 = vmul.f32 %v461, %v540
        %v561 = vmul.f32 %v468, %v540
        %v562 = vmul.f32 %v474, %v540
        %v563 = vmul.f32 %v481, %v540
        %v564 = vmul.f32 %v487, %v540
        %v565 = vmul.f32 %v494, %v540
        %v566 = vmul.f32 %v500, %v540
        %v567 = vmul.f32 %v507, %v540
        %v568 = vmul.f32 %v513, %v540
        %v569 = vmul.f32 %v520, %v540
        %v570 = vmul.f32 %v526, %v540
        %v571 = vmul.f32 %v533, %v540
        %v572 = vmul.f32 %v539, %v540
        %v573 = vadd.f32 %v541, 0.0
        %v574 = vadd.f32 %v542, 0.0
        %v575 = vadd.f32 %v543, 0.0
        %v576 = vadd.f32 %v544, 0.0
        %v577 = vadd.f32 %v545, 0.0
        %v578 = vadd.f32 %v546, 0.0
        %v579 = vadd.f32 %v547, 0.0
        %v580 = vadd.f32 %v548, 0.0
        %v581 = vadd.f32 %v549, 0.0
        %v582 = vadd.f32 %v550, 0.0
        %v583 = vadd.f32 %v551, 0.0
        %v584 = vadd.f32 %v552, 0.0
        %v585 = vadd.f32 %v553, 0.0
        %v586 = vadd.f32 %v554, 0.0
        %v587 = vadd.f32 %v555, 0.0
        %v588 = vadd.f32 %v556, 0.0
        %v589 = vadd.f32 %v557, 0.0
        %v590 = vadd.f32 %v558, 0.0
        %v591 = vadd.f32 %v559, 0.0
        %v592 = vadd.f32 %v560, 0.0
        %v593 = vadd.f32 %v561, 0.0
        %v594 = vadd.f32 %v562, 0.0
        %v595 = vadd.f32 %v563, 0.0
        %v596 = vadd.f32 %v564, 0.0
        %v597 = vadd.f32 %v565, 0.0
        %v598 = vadd.f32 %v566, 0.0
        %v599 = vadd.f32 %v567, 0.0
        %v600 = vadd.f32 %v568, 0.0
        %v601 = vadd.f32 %v569, 0.0
        %v602 = vadd.f32 %v570, 0.0
        %v603 = vadd.f32 %v571, 0.0
        %v604 = vadd.f32 %v572, 0.0
        %v605 = vlaneseq
        %v606 = vshrl.u32 %v605, 7
        %v607 = vadd.s32 %v606, 1
        %608 = vset.pattern.permute.xlu0 %v607
        %609 = vperm.xlu0 %608, %v332
        %v610 = vpop.permute.xlu0 %609
        %v611 = vlaneseq
        %v612 = vshrl.u32 %v611, 7
        %v613 = vadd.s32 %v612, 9
        %614 = vset.pattern.permute.xlu0 %v613
        %615 = vperm.xlu0 %614, %v332
        %v616 = vpop.permute.xlu0 %615
        %v617 = vlaneseq
        %v618 = vshrl.u32 %v617, 7
        %v619 = vadd.s32 %v618, 1
        %620 = vset.pattern.permute.xlu0 %v619
        %621 = vperm.xlu0 %620, %v345
        %v622 = vpop.permute.xlu0 %621
        %v623 = vlaneseq
        %v624 = vshrl.u32 %v623, 7
        %v625 = vadd.s32 %v624, 9
        %626 = vset.pattern.permute.xlu0 %v625
        %627 = vperm.xlu0 %626, %v345
        %v628 = vpop.permute.xlu0 %627
        %v629 = vlaneseq
        %v630 = vshrl.u32 %v629, 7
        %v631 = vadd.s32 %v630, 1
        %632 = vset.pattern.permute.xlu0 %v631
        %633 = vperm.xlu0 %632, %v358
        %v634 = vpop.permute.xlu0 %633
        %v635 = vlaneseq
        %v636 = vshrl.u32 %v635, 7
        %v637 = vadd.s32 %v636, 9
        %638 = vset.pattern.permute.xlu0 %v637
        %639 = vperm.xlu0 %638, %v358
        %v640 = vpop.permute.xlu0 %639
        %v641 = vlaneseq
        %v642 = vshrl.u32 %v641, 7
        %v643 = vadd.s32 %v642, 1
        %644 = vset.pattern.permute.xlu0 %v643
        %645 = vperm.xlu0 %644, %v371
        %v646 = vpop.permute.xlu0 %645
        %v647 = vlaneseq
        %v648 = vshrl.u32 %v647, 7
        %v649 = vadd.s32 %v648, 9
        %650 = vset.pattern.permute.xlu0 %v649
        %651 = vperm.xlu0 %650, %v371
        %v652 = vpop.permute.xlu0 %651
        %v653 = vlaneseq
        %v654 = vshrl.u32 %v653, 7
        %v655 = vadd.s32 %v654, 1
        %656 = vset.pattern.permute.xlu0 %v655
        %657 = vperm.xlu0 %656, %v384
        %v658 = vpop.permute.xlu0 %657
        %v659 = vlaneseq
        %v660 = vshrl.u32 %v659, 7
        %v661 = vadd.s32 %v660, 9
        %662 = vset.pattern.permute.xlu0 %v661
        %663 = vperm.xlu0 %662, %v384
        %v664 = vpop.permute.xlu0 %663
        %v665 = vlaneseq
        %v666 = vshrl.u32 %v665, 7
        %v667 = vadd.s32 %v666, 1
        %668 = vset.pattern.permute.xlu0 %v667
        %669 = vperm.xlu0 %668, %v397
        %v670 = vpop.permute.xlu0 %669
        %v671 = vlaneseq
        %v672 = vshrl.u32 %v671, 7
        %v673 = vadd.s32 %v672, 9
        %674 = vset.pattern.permute.xlu0 %v673
        %675 = vperm.xlu0 %674, %v397
        %v676 = vpop.permute.xlu0 %675
        %v677 = vlaneseq
        %v678 = vshrl.u32 %v677, 7
        %v679 = vadd.s32 %v678, 1
        %680 = vset.pattern.permute.xlu0 %v679
        %681 = vperm.xlu0 %680, %v410
        %v682 = vpop.permute.xlu0 %681
        %v683 = vlaneseq
        %v684 = vshrl.u32 %v683, 7
        %v685 = vadd.s32 %v684, 9
        %686 = vset.pattern.permute.xlu0 %v685
        %687 = vperm.xlu0 %686, %v410
        %v688 = vpop.permute.xlu0 %687
        %v689 = vlaneseq
        %v690 = vshrl.u32 %v689, 7
        %v691 = vadd.s32 %v690, 1
        %692 = vset.pattern.permute.xlu0 %v691
        %693 = vperm.xlu0 %692, %v423
        %v694 = vpop.permute.xlu0 %693
        %v695 = vlaneseq
        %v696 = vshrl.u32 %v695, 7
        %v697 = vadd.s32 %v696, 9
        %698 = vset.pattern.permute.xlu0 %v697
        %699 = vperm.xlu0 %698, %v423
        %v700 = vpop.permute.xlu0 %699
        %v701 = vlaneseq
        %v702 = vshrl.u32 %v701, 7
        %v703 = vadd.s32 %v702, 1
        %704 = vset.pattern.permute.xlu0 %v703
        %705 = vperm.xlu0 %704, %v436
        %v706 = vpop.permute.xlu0 %705
        %v707 = vlaneseq
        %v708 = vshrl.u32 %v707, 7
        %v709 = vadd.s32 %v708, 9
        %710 = vset.pattern.permute.xlu0 %v709
        %711 = vperm.xlu0 %710, %v436
        %v712 = vpop.permute.xlu0 %711
        %v713 = vlaneseq
        %v714 = vshrl.u32 %v713, 7
        %v715 = vadd.s32 %v714, 1
        %716 = vset.pattern.permute.xlu0 %v715
        %717 = vperm.xlu0 %716, %v449
        %v718 = vpop.permute.xlu0 %717
        %v719 = vlaneseq
        %v720 = vshrl.u32 %v719, 7
        %v721 = vadd.s32 %v720, 9
        %722 = vset.pattern.permute.xlu0 %v721
        %723 = vperm.xlu0 %722, %v449
        %v724 = vpop.permute.xlu0 %723
        %v725 = vlaneseq
        %v726 = vshrl.u32 %v725, 7
        %v727 = vadd.s32 %v726, 1
        %728 = vset.pattern.permute.xlu0 %v727
        %729 = vperm.xlu0 %728, %v462
        %v730 = vpop.permute.xlu0 %729
        %v731 = vlaneseq
        %v732 = vshrl.u32 %v731, 7
        %v733 = vadd.s32 %v732, 9
        %734 = vset.pattern.permute.xlu0 %v733
        %735 = vperm.xlu0 %734, %v462
        %v736 = vpop.permute.xlu0 %735
        %v737 = vlaneseq
        %v738 = vshrl.u32 %v737, 7
        %v739 = vadd.s32 %v738, 1
        %740 = vset.pattern.permute.xlu0 %v739
        %741 = vperm.xlu0 %740, %v475
        %v742 = vpop.permute.xlu0 %741
        %v743 = vlaneseq
        %v744 = vshrl.u32 %v743, 7
        %v745 = vadd.s32 %v744, 9
        %746 = vset.pattern.permute.xlu0 %v745
        %747 = vperm.xlu0 %746, %v475
        %v748 = vpop.permute.xlu0 %747
        %v749 = vlaneseq
        %v750 = vshrl.u32 %v749, 7
        %v751 = vadd.s32 %v750, 1
        %752 = vset.pattern.permute.xlu0 %v751
        %753 = vperm.xlu0 %752, %v488
        %v754 = vpop.permute.xlu0 %753
        %v755 = vlaneseq
        %v756 = vshrl.u32 %v755, 7
        %v757 = vadd.s32 %v756, 9
        %758 = vset.pattern.permute.xlu0 %v757
        %759 = vperm.xlu0 %758, %v488
        %v760 = vpop.permute.xlu0 %759
        %v761 = vlaneseq
        %v762 = vshrl.u32 %v761, 7
        %v763 = vadd.s32 %v762, 1
        %764 = vset.pattern.permute.xlu0 %v763
        %765 = vperm.xlu0 %764, %v501
        %v766 = vpop.permute.xlu0 %765
        %v767 = vlaneseq
        %v768 = vshrl.u32 %v767, 7
        %v769 = vadd.s32 %v768, 9
        %770 = vset.pattern.permute.xlu0 %v769
        %771 = vperm.xlu0 %770, %v501
        %v772 = vpop.permute.xlu0 %771
        %v773 = vlaneseq
        %v774 = vshrl.u32 %v773, 7
        %v775 = vadd.s32 %v774, 1
        %776 = vset.pattern.permute.xlu0 %v775
        %777 = vperm.xlu0 %776, %v514
        %v778 = vpop.permute.xlu0 %777
        %v779 = vlaneseq
        %v780 = vshrl.u32 %v779, 7
        %v781 = vadd.s32 %v780, 9
        %782 = vset.pattern.permute.xlu0 %v781
        %783 = vperm.xlu0 %782, %v514
        %v784 = vpop.permute.xlu0 %783
        %v785 = vlaneseq
        %v786 = vshrl.u32 %v785, 7
        %v787 = vadd.s32 %v786, 1
        %788 = vset.pattern.permute.xlu0 %v787
        %789 = vperm.xlu0 %788, %v527
        %v790 = vpop.permute.xlu0 %789
        %v791 = vlaneseq
        %v792 = vshrl.u32 %v791, 7
        %v793 = vadd.s32 %v792, 9
        %794 = vset.pattern.permute.xlu0 %v793
        %795 = vperm.xlu0 %794, %v527
        %v796 = vpop.permute.xlu0 %795
        %v797 = vperm.slane %v330, 1
        %v798 = vmul.f32 %v610, %v797
        %v799 = vmul.f32 %v616, %v797
        %v800 = vmul.f32 %v622, %v797
        %v801 = vmul.f32 %v628, %v797
        %v802 = vmul.f32 %v634, %v797
        %v803 = vmul.f32 %v640, %v797
        %v804 = vmul.f32 %v646, %v797
        %v805 = vmul.f32 %v652, %v797
        %v806 = vmul.f32 %v658, %v797
        %v807 = vmul.f32 %v664, %v797
        %v808 = vmul.f32 %v670, %v797
        %v809 = vmul.f32 %v676, %v797
        %v810 = vmul.f32 %v682, %v797
        %v811 = vmul.f32 %v688, %v797
        %v812 = vmul.f32 %v694, %v797
        %v813 = vmul.f32 %v700, %v797
        %v814 = vmul.f32 %v706, %v797
        %v815 = vmul.f32 %v712, %v797
        %v816 = vmul.f32 %v718, %v797
        %v817 = vmul.f32 %v724, %v797
        %v818 = vmul.f32 %v730, %v797
        %v819 = vmul.f32 %v736, %v797
        %v820 = vmul.f32 %v742, %v797
        %v821 = vmul.f32 %v748, %v797
        %v822 = vmul.f32 %v754, %v797
        %v823 = vmul.f32 %v760, %v797
        %v824 = vmul.f32 %v766, %v797
        %v825 = vmul.f32 %v772, %v797
        %v826 = vmul.f32 %v778, %v797
        %v827 = vmul.f32 %v784, %v797
        %v828 = vmul.f32 %v790, %v797
        %v829 = vmul.f32 %v796, %v797
        %v830 = vadd.f32 %v573, %v798
        %v831 = vadd.f32 %v574, %v799
        %v832 = vadd.f32 %v575, %v800
        %v833 = vadd.f32 %v576, %v801
        %v834 = vadd.f32 %v577, %v802
        %v835 = vadd.f32 %v578, %v803
        %v836 = vadd.f32 %v579, %v804
        %v837 = vadd.f32 %v580, %v805
        %v838 = vadd.f32 %v581, %v806
        %v839 = vadd.f32 %v582, %v807
        %v840 = vadd.f32 %v583, %v808
        %v841 = vadd.f32 %v584, %v809
        %v842 = vadd.f32 %v585, %v810
        %v843 = vadd.f32 %v586, %v811
        %v844 = vadd.f32 %v587, %v812
        %v845 = vadd.f32 %v588, %v813
        %v846 = vadd.f32 %v589, %v814
        %v847 = vadd.f32 %v590, %v815
        %v848 = vadd.f32 %v591, %v816
        %v849 = vadd.f32 %v592, %v817
        %v850 = vadd.f32 %v593, %v818
        %v851 = vadd.f32 %v594, %v819
        %v852 = vadd.f32 %v595, %v820
        %v853 = vadd.f32 %v596, %v821
        %v854 = vadd.f32 %v597, %v822
        %v855 = vadd.f32 %v598, %v823
        %v856 = vadd.f32 %v599, %v824
        %v857 = vadd.f32 %v600, %v825
        %v858 = vadd.f32 %v601, %v826
        %v859 = vadd.f32 %v602, %v827
        %v860 = vadd.f32 %v603, %v828
        %v861 = vadd.f32 %v604, %v829
        %v862 = vlaneseq
        %v863 = vshrl.u32 %v862, 7
        %v864 = vadd.s32 %v863, 2
        %865 = vset.pattern.permute.xlu0 %v864
        %866 = vperm.xlu0 %865, %v332
        %v867 = vpop.permute.xlu0 %866
        %v868 = vlaneseq
        %v869 = vshrl.u32 %v868, 7
        %v870 = vadd.s32 %v869, 10
        %871 = vset.pattern.permute.xlu0 %v870
        %872 = vperm.xlu0 %871, %v332
        %v873 = vpop.permute.xlu0 %872
        %v874 = vlaneseq
        %v875 = vshrl.u32 %v874, 7
        %v876 = vadd.s32 %v875, 2
        %877 = vset.pattern.permute.xlu0 %v876
        %878 = vperm.xlu0 %877, %v345
        %v879 = vpop.permute.xlu0 %878
        %v880 = vlaneseq
        %v881 = vshrl.u32 %v880, 7
        %v882 = vadd.s32 %v881, 10
        %883 = vset.pattern.permute.xlu0 %v882
        %884 = vperm.xlu0 %883, %v345
        %v885 = vpop.permute.xlu0 %884
        %v886 = vlaneseq
        %v887 = vshrl.u32 %v886, 7
        %v888 = vadd.s32 %v887, 2
        %889 = vset.pattern.permute.xlu0 %v888
        %890 = vperm.xlu0 %889, %v358
        %v891 = vpop.permute.xlu0 %890
        %v892 = vlaneseq
        %v893 = vshrl.u32 %v892, 7
        %v894 = vadd.s32 %v893, 10
        %895 = vset.pattern.permute.xlu0 %v894
        %896 = vperm.xlu0 %895, %v358
        %v897 = vpop.permute.xlu0 %896
        %v898 = vlaneseq
        %v899 = vshrl.u32 %v898, 7
        %v900 = vadd.s32 %v899, 2
        %901 = vset.pattern.permute.xlu0 %v900
        %902 = vperm.xlu0 %901, %v371
        %v903 = vpop.permute.xlu0 %902
        %v904 = vlaneseq
        %v905 = vshrl.u32 %v904, 7
        %v906 = vadd.s32 %v905, 10
        %907 = vset.pattern.permute.xlu0 %v906
        %908 = vperm.xlu0 %907, %v371
        %v909 = vpop.permute.xlu0 %908
        %v910 = vlaneseq
        %v911 = vshrl.u32 %v910, 7
        %v912 = vadd.s32 %v911, 2
        %913 = vset.pattern.permute.xlu0 %v912
        %914 = vperm.xlu0 %913, %v384
        %v915 = vpop.permute.xlu0 %914
        %v916 = vlaneseq
        %v917 = vshrl.u32 %v916, 7
        %v918 = vadd.s32 %v917, 10
        %919 = vset.pattern.permute.xlu0 %v918
        %920 = vperm.xlu0 %919, %v384
        %v921 = vpop.permute.xlu0 %920
        %v922 = vlaneseq
        %v923 = vshrl.u32 %v922, 7
        %v924 = vadd.s32 %v923, 2
        %925 = vset.pattern.permute.xlu0 %v924
        %926 = vperm.xlu0 %925, %v397
        %v927 = vpop.permute.xlu0 %926
        %v928 = vlaneseq
        %v929 = vshrl.u32 %v928, 7
        %v930 = vadd.s32 %v929, 10
        %931 = vset.pattern.permute.xlu0 %v930
        %932 = vperm.xlu0 %931, %v397
        %v933 = vpop.permute.xlu0 %932
        %v934 = vlaneseq
        %v935 = vshrl.u32 %v934, 7
        %v936 = vadd.s32 %v935, 2
        %937 = vset.pattern.permute.xlu0 %v936
        %938 = vperm.xlu0 %937, %v410
        %v939 = vpop.permute.xlu0 %938
        %v940 = vlaneseq
        %v941 = vshrl.u32 %v940, 7
        %v942 = vadd.s32 %v941, 10
        %943 = vset.pattern.permute.xlu0 %v942
        %944 = vperm.xlu0 %943, %v410
        %v945 = vpop.permute.xlu0 %944
        %v946 = vlaneseq
        %v947 = vshrl.u32 %v946, 7
        %v948 = vadd.s32 %v947, 2
        %949 = vset.pattern.permute.xlu0 %v948
        %950 = vperm.xlu0 %949, %v423
        %v951 = vpop.permute.xlu0 %950
        %v952 = vlaneseq
        %v953 = vshrl.u32 %v952, 7
        %v954 = vadd.s32 %v953, 10
        %955 = vset.pattern.permute.xlu0 %v954
        %956 = vperm.xlu0 %955, %v423
        %v957 = vpop.permute.xlu0 %956
        %v958 = vlaneseq
        %v959 = vshrl.u32 %v958, 7
        %v960 = vadd.s32 %v959, 2
        %961 = vset.pattern.permute.xlu0 %v960
        %962 = vperm.xlu0 %961, %v436
        %v963 = vpop.permute.xlu0 %962
        %v964 = vlaneseq
        %v965 = vshrl.u32 %v964, 7
        %v966 = vadd.s32 %v965, 10
        %967 = vset.pattern.permute.xlu0 %v966
        %968 = vperm.xlu0 %967, %v436
        %v969 = vpop.permute.xlu0 %968
        %v970 = vlaneseq
        %v971 = vshrl.u32 %v970, 7
        %v972 = vadd.s32 %v971, 2
        %973 = vset.pattern.permute.xlu0 %v972
        %974 = vperm.xlu0 %973, %v449
        %v975 = vpop.permute.xlu0 %974
        %v976 = vlaneseq
        %v977 = vshrl.u32 %v976, 7
        %v978 = vadd.s32 %v977, 10
        %979 = vset.pattern.permute.xlu0 %v978
        %980 = vperm.xlu0 %979, %v449
        %v981 = vpop.permute.xlu0 %980
        %v982 = vlaneseq
        %v983 = vshrl.u32 %v982, 7
        %v984 = vadd.s32 %v983, 2
        %985 = vset.pattern.permute.xlu0 %v984
        %986 = vperm.xlu0 %985, %v462
        %v987 = vpop.permute.xlu0 %986
        %v988 = vlaneseq
        %v989 = vshrl.u32 %v988, 7
        %v990 = vadd.s32 %v989, 10
        %991 = vset.pattern.permute.xlu0 %v990
        %992 = vperm.xlu0 %991, %v462
        %v993 = vpop.permute.xlu0 %992
        %v994 = vlaneseq
        %v995 = vshrl.u32 %v994, 7
        %v996 = vadd.s32 %v995, 2
        %997 = vset.pattern.permute.xlu0 %v996
        %998 = vperm.xlu0 %997, %v475
        %v999 = vpop.permute.xlu0 %998
        %v1000 = vlaneseq
        %v1001 = vshrl.u32 %v1000, 7
        %v1002 = vadd.s32 %v1001, 10
        %1003 = vset.pattern.permute.xlu0 %v1002
        %1004 = vperm.xlu0 %1003, %v475
        %v1005 = vpop.permute.xlu0 %1004
        %v1006 = vlaneseq
        %v1007 = vshrl.u32 %v1006, 7
        %v1008 = vadd.s32 %v1007, 2
        %1009 = vset.pattern.permute.xlu0 %v1008
        %1010 = vperm.xlu0 %1009, %v488
        %v1011 = vpop.permute.xlu0 %1010
        %v1012 = vlaneseq
        %v1013 = vshrl.u32 %v1012, 7
        %v1014 = vadd.s32 %v1013, 10
        %1015 = vset.pattern.permute.xlu0 %v1014
        %1016 = vperm.xlu0 %1015, %v488
        %v1017 = vpop.permute.xlu0 %1016
        %v1018 = vlaneseq
        %v1019 = vshrl.u32 %v1018, 7
        %v1020 = vadd.s32 %v1019, 2
        %1021 = vset.pattern.permute.xlu0 %v1020
        %1022 = vperm.xlu0 %1021, %v501
        %v1023 = vpop.permute.xlu0 %1022
        %v1024 = vlaneseq
        %v1025 = vshrl.u32 %v1024, 7
        %v1026 = vadd.s32 %v1025, 10
        %1027 = vset.pattern.permute.xlu0 %v1026
        %1028 = vperm.xlu0 %1027, %v501
        %v1029 = vpop.permute.xlu0 %1028
        %v1030 = vlaneseq
        %v1031 = vshrl.u32 %v1030, 7
        %v1032 = vadd.s32 %v1031, 2
        %1033 = vset.pattern.permute.xlu0 %v1032
        %1034 = vperm.xlu0 %1033, %v514
        %v1035 = vpop.permute.xlu0 %1034
        %v1036 = vlaneseq
        %v1037 = vshrl.u32 %v1036, 7
        %v1038 = vadd.s32 %v1037, 10
        %1039 = vset.pattern.permute.xlu0 %v1038
        %1040 = vperm.xlu0 %1039, %v514
        %v1041 = vpop.permute.xlu0 %1040
        %v1042 = vlaneseq
        %v1043 = vshrl.u32 %v1042, 7
        %v1044 = vadd.s32 %v1043, 2
        %1045 = vset.pattern.permute.xlu0 %v1044
        %1046 = vperm.xlu0 %1045, %v527
        %v1047 = vpop.permute.xlu0 %1046
        %v1048 = vlaneseq
        %v1049 = vshrl.u32 %v1048, 7
        %v1050 = vadd.s32 %v1049, 10
        %1051 = vset.pattern.permute.xlu0 %v1050
        %1052 = vperm.xlu0 %1051, %v527
        %v1053 = vpop.permute.xlu0 %1052
        %v1054 = vperm.slane %v330, 2
        %v1055 = vmul.f32 %v867, %v1054
        %v1056 = vmul.f32 %v873, %v1054
        %v1057 = vmul.f32 %v879, %v1054
        %v1058 = vmul.f32 %v885, %v1054
        %v1059 = vmul.f32 %v891, %v1054
        %v1060 = vmul.f32 %v897, %v1054
        %v1061 = vmul.f32 %v903, %v1054
        %v1062 = vmul.f32 %v909, %v1054
        %v1063 = vmul.f32 %v915, %v1054
        %v1064 = vmul.f32 %v921, %v1054
        %v1065 = vmul.f32 %v927, %v1054
        %v1066 = vmul.f32 %v933, %v1054
        %v1067 = vmul.f32 %v939, %v1054
        %v1068 = vmul.f32 %v945, %v1054
        %v1069 = vmul.f32 %v951, %v1054
        %v1070 = vmul.f32 %v957, %v1054
        %v1071 = vmul.f32 %v963, %v1054
        %v1072 = vmul.f32 %v969, %v1054
        %v1073 = vmul.f32 %v975, %v1054
        %v1074 = vmul.f32 %v981, %v1054
        %v1075 = vmul.f32 %v987, %v1054
        %v1076 = vmul.f32 %v993, %v1054
        %v1077 = vmul.f32 %v999, %v1054
        %v1078 = vmul.f32 %v1005, %v1054
        %v1079 = vmul.f32 %v1011, %v1054
        %v1080 = vmul.f32 %v1017, %v1054
        %v1081 = vmul.f32 %v1023, %v1054
        %v1082 = vmul.f32 %v1029, %v1054
        %v1083 = vmul.f32 %v1035, %v1054
        %v1084 = vmul.f32 %v1041, %v1054
        %v1085 = vmul.f32 %v1047, %v1054
        %v1086 = vmul.f32 %v1053, %v1054
        %v1087 = vadd.f32 %v830, %v1055
        %v1088 = vadd.f32 %v831, %v1056
        %v1089 = vadd.f32 %v832, %v1057
        %v1090 = vadd.f32 %v833, %v1058
        %v1091 = vadd.f32 %v834, %v1059
        %v1092 = vadd.f32 %v835, %v1060
        %v1093 = vadd.f32 %v836, %v1061
        %v1094 = vadd.f32 %v837, %v1062
        %v1095 = vadd.f32 %v838, %v1063
        %v1096 = vadd.f32 %v839, %v1064
        %v1097 = vadd.f32 %v840, %v1065
        %v1098 = vadd.f32 %v841, %v1066
        %v1099 = vadd.f32 %v842, %v1067
        %v1100 = vadd.f32 %v843, %v1068
        %v1101 = vadd.f32 %v844, %v1069
        %v1102 = vadd.f32 %v845, %v1070
        %v1103 = vadd.f32 %v846, %v1071
        %v1104 = vadd.f32 %v847, %v1072
        %v1105 = vadd.f32 %v848, %v1073
        %v1106 = vadd.f32 %v849, %v1074
        %v1107 = vadd.f32 %v850, %v1075
        %v1108 = vadd.f32 %v851, %v1076
        %v1109 = vadd.f32 %v852, %v1077
        %v1110 = vadd.f32 %v853, %v1078
        %v1111 = vadd.f32 %v854, %v1079
        %v1112 = vadd.f32 %v855, %v1080
        %v1113 = vadd.f32 %v856, %v1081
        %v1114 = vadd.f32 %v857, %v1082
        %v1115 = vadd.f32 %v858, %v1083
        %v1116 = vadd.f32 %v859, %v1084
        %v1117 = vadd.f32 %v860, %v1085
        %v1118 = vadd.f32 %v861, %v1086
        %v1119 = vperm.slane %v327, 0
        %v1120 = vlaneseq
        %v1121 = vshrl.u32 %v1120, 7
        %1123 = vset.pattern.permute.xlu0 %v1121
        %1124 = vperm.xlu0 %1123, %v1119
        %v1125 = vpop.permute.xlu0 %1124
        %v1126 = vlaneseq
        %v1127 = vshrl.u32 %v1126, 7
        %v1128 = vadd.s32 %v1127, 8
        %1129 = vset.pattern.permute.xlu0 %v1128
        %1130 = vperm.xlu0 %1129, %v1119
        %v1131 = vpop.permute.xlu0 %1130
        %v1132 = vperm.slane %v330, 3
        %v1133 = vmul.f32 %v351, %v1132
        %v1134 = vmul.f32 %v357, %v1132
        %v1135 = vmul.f32 %v364, %v1132
        %v1136 = vmul.f32 %v370, %v1132
        %v1137 = vmul.f32 %v377, %v1132
        %v1138 = vmul.f32 %v383, %v1132
        %v1139 = vmul.f32 %v390, %v1132
        %v1140 = vmul.f32 %v396, %v1132
        %v1141 = vmul.f32 %v403, %v1132
        %v1142 = vmul.f32 %v409, %v1132
        %v1143 = vmul.f32 %v416, %v1132
        %v1144 = vmul.f32 %v422, %v1132
        %v1145 = vmul.f32 %v429, %v1132
        %v1146 = vmul.f32 %v435, %v1132
        %v1147 = vmul.f32 %v442, %v1132
        %v1148 = vmul.f32 %v448, %v1132
        %v1149 = vmul.f32 %v455, %v1132
        %v1150 = vmul.f32 %v461, %v1132
        %v1151 = vmul.f32 %v468, %v1132
        %v1152 = vmul.f32 %v474, %v1132
        %v1153 = vmul.f32 %v481, %v1132
        %v1154 = vmul.f32 %v487, %v1132
        %v1155 = vmul.f32 %v494, %v1132
        %v1156 = vmul.f32 %v500, %v1132
        %v1157 = vmul.f32 %v507, %v1132
        %v1158 = vmul.f32 %v513, %v1132
        %v1159 = vmul.f32 %v520, %v1132
        %v1160 = vmul.f32 %v526, %v1132
        %v1161 = vmul.f32 %v533, %v1132
        %v1162 = vmul.f32 %v539, %v1132
        %v1163 = vmul.f32 %v1125, %v1132
        %v1164 = vmul.f32 %v1131, %v1132
        %v1165 = vadd.f32 %v1087, %v1133
        %v1166 = vadd.f32 %v1088, %v1134
        %v1167 = vadd.f32 %v1089, %v1135
        %v1168 = vadd.f32 %v1090, %v1136
        %v1169 = vadd.f32 %v1091, %v1137
        %v1170 = vadd.f32 %v1092, %v1138
        %v1171 = vadd.f32 %v1093, %v1139
        %v1172 = vadd.f32 %v1094, %v1140
        %v1173 = vadd.f32 %v1095, %v1141
        %v1174 = vadd.f32 %v1096, %v1142
        %v1175 = vadd.f32 %v1097, %v1143
        %v1176 = vadd.f32 %v1098, %v1144
        %v1177 = vadd.f32 %v1099, %v1145
        %v1178 = vadd.f32 %v1100, %v1146
        %v1179 = vadd.f32 %v1101, %v1147
        %v1180 = vadd.f32 %v1102, %v1148
        %v1181 = vadd.f32 %v1103, %v1149
        %v1182 = vadd.f32 %v1104, %v1150
        %v1183 = vadd.f32 %v1105, %v1151
        %v1184 = vadd.f32 %v1106, %v1152
        %v1185 = vadd.f32 %v1107, %v1153
        %v1186 = vadd.f32 %v1108, %v1154
        %v1187 = vadd.f32 %v1109, %v1155
        %v1188 = vadd.f32 %v1110, %v1156
        %v1189 = vadd.f32 %v1111, %v1157
        %v1190 = vadd.f32 %v1112, %v1158
        %v1191 = vadd.f32 %v1113, %v1159
        %v1192 = vadd.f32 %v1114, %v1160
        %v1193 = vadd.f32 %v1115, %v1161
        %v1194 = vadd.f32 %v1116, %v1162
        %v1195 = vadd.f32 %v1117, %v1163
        %v1196 = vadd.f32 %v1118, %v1164
        %v1197 = vlaneseq
        %v1198 = vshrl.u32 %v1197, 7
        %v1199 = vadd.s32 %v1198, 1
        %1200 = vset.pattern.permute.xlu0 %v1199
        %1201 = vperm.xlu0 %1200, %v1119
        %v1202 = vpop.permute.xlu0 %1201
        %v1203 = vlaneseq
        %v1204 = vshrl.u32 %v1203, 7
        %v1205 = vadd.s32 %v1204, 9
        %1206 = vset.pattern.permute.xlu0 %v1205
        %1207 = vperm.xlu0 %1206, %v1119
        %v1208 = vpop.permute.xlu0 %1207
        %v1209 = vperm.slane %v330, 4
        %v1210 = vmul.f32 %v622, %v1209
        %v1211 = vmul.f32 %v628, %v1209
        %v1212 = vmul.f32 %v634, %v1209
        %v1213 = vmul.f32 %v640, %v1209
        %v1214 = vmul.f32 %v646, %v1209
        %v1215 = vmul.f32 %v652, %v1209
        %v1216 = vmul.f32 %v658, %v1209
        %v1217 = vmul.f32 %v664, %v1209
        %v1218 = vmul.f32 %v670, %v1209
        %v1219 = vmul.f32 %v676, %v1209
        %v1220 = vmul.f32 %v682, %v1209
        %v1221 = vmul.f32 %v688, %v1209
        %v1222 = vmul.f32 %v694, %v1209
        %v1223 = vmul.f32 %v700, %v1209
        %v1224 = vmul.f32 %v706, %v1209
        %v1225 = vmul.f32 %v712, %v1209
        %v1226 = vmul.f32 %v718, %v1209
        %v1227 = vmul.f32 %v724, %v1209
        %v1228 = vmul.f32 %v730, %v1209
        %v1229 = vmul.f32 %v736, %v1209
        %v1230 = vmul.f32 %v742, %v1209
        %v1231 = vmul.f32 %v748, %v1209
        %v1232 = vmul.f32 %v754, %v1209
        %v1233 = vmul.f32 %v760, %v1209
        %v1234 = vmul.f32 %v766, %v1209
        %v1235 = vmul.f32 %v772, %v1209
        %v1236 = vmul.f32 %v778, %v1209
        %v1237 = vmul.f32 %v784, %v1209
        %v1238 = vmul.f32 %v790, %v1209
        %v1239 = vmul.f32 %v796, %v1209
        %v1240 = vmul.f32 %v1202, %v1209
        %v1241 = vmul.f32 %v1208, %v1209
        %v1242 = vadd.f32 %v1165, %v1210
        %v1243 = vadd.f32 %v1166, %v1211
        %v1244 = vadd.f32 %v1167, %v1212
        %v1245 = vadd.f32 %v1168, %v1213
        %v1246 = vadd.f32 %v1169, %v1214
        %v1247 = vadd.f32 %v1170, %v1215
        %v1248 = vadd.f32 %v1171, %v1216
        %v1249 = vadd.f32 %v1172, %v1217
        %v1250 = vadd.f32 %v1173, %v1218
        %v1251 = vadd.f32 %v1174, %v1219
        %v1252 = vadd.f32 %v1175, %v1220
        %v1253 = vadd.f32 %v1176, %v1221
        %v1254 = vadd.f32 %v1177, %v1222
        %v1255 = vadd.f32 %v1178, %v1223
        %v1256 = vadd.f32 %v1179, %v1224
        %v1257 = vadd.f32 %v1180, %v1225
        %v1258 = vadd.f32 %v1181, %v1226
        %v1259 = vadd.f32 %v1182, %v1227
        %v1260 = vadd.f32 %v1183, %v1228
        %v1261 = vadd.f32 %v1184, %v1229
        %v1262 = vadd.f32 %v1185, %v1230
        %v1263 = vadd.f32 %v1186, %v1231
        %v1264 = vadd.f32 %v1187, %v1232
        %v1265 = vadd.f32 %v1188, %v1233
        %v1266 = vadd.f32 %v1189, %v1234
        %v1267 = vadd.f32 %v1190, %v1235
        %v1268 = vadd.f32 %v1191, %v1236
        %v1269 = vadd.f32 %v1192, %v1237
        %v1270 = vadd.f32 %v1193, %v1238
        %v1271 = vadd.f32 %v1194, %v1239
        %v1272 = vadd.f32 %v1195, %v1240
        %v1273 = vadd.f32 %v1196, %v1241
        %v1274 = vlaneseq
        %v1275 = vshrl.u32 %v1274, 7
        %v1276 = vadd.s32 %v1275, 2
        %1277 = vset.pattern.permute.xlu0 %v1276
        %1278 = vperm.xlu0 %1277, %v1119
        %v1279 = vpop.permute.xlu0 %1278
        %v1280 = vlaneseq
        %v1281 = vshrl.u32 %v1280, 7
        %v1282 = vadd.s32 %v1281, 10
        %1283 = vset.pattern.permute.xlu0 %v1282
        %1284 = vperm.xlu0 %1283, %v1119
        %v1285 = vpop.permute.xlu0 %1284
        %v1286 = vperm.slane %v330, 5
        %v1287 = vmul.f32 %v879, %v1286
        %v1288 = vmul.f32 %v885, %v1286
        %v1289 = vmul.f32 %v891, %v1286
        %v1290 = vmul.f32 %v897, %v1286
        %v1291 = vmul.f32 %v903, %v1286
        %v1292 = vmul.f32 %v909, %v1286
        %v1293 = vmul.f32 %v915, %v1286
        %v1294 = vmul.f32 %v921, %v1286
        %v1295 = vmul.f32 %v927, %v1286
        %v1296 = vmul.f32 %v933, %v1286
        %v1297 = vmul.f32 %v939, %v1286
        %v1298 = vmul.f32 %v945, %v1286
        %v1299 = vmul.f32 %v951, %v1286
        %v1300 = vmul.f32 %v957, %v1286
        %v1301 = vmul.f32 %v963, %v1286
        %v1302 = vmul.f32 %v969, %v1286
        %v1303 = vmul.f32 %v975, %v1286
        %v1304 = vmul.f32 %v981, %v1286
        %v1305 = vmul.f32 %v987, %v1286
        %v1306 = vmul.f32 %v993, %v1286
        %v1307 = vmul.f32 %v999, %v1286
        %v1308 = vmul.f32 %v1005, %v1286
        %v1309 = vmul.f32 %v1011, %v1286
        %v1310 = vmul.f32 %v1017, %v1286
        %v1311 = vmul.f32 %v1023, %v1286
        %v1312 = vmul.f32 %v1029, %v1286
        %v1313 = vmul.f32 %v1035, %v1286
        %v1314 = vmul.f32 %v1041, %v1286
        %v1315 = vmul.f32 %v1047, %v1286
        %v1316 = vmul.f32 %v1053, %v1286
        %v1317 = vmul.f32 %v1279, %v1286
        %v1318 = vmul.f32 %v1285, %v1286
        %v1319 = vadd.f32 %v1242, %v1287
        %v1320 = vadd.f32 %v1243, %v1288
        %v1321 = vadd.f32 %v1244, %v1289
        %v1322 = vadd.f32 %v1245, %v1290
        %v1323 = vadd.f32 %v1246, %v1291
        %v1324 = vadd.f32 %v1247, %v1292
        %v1325 = vadd.f32 %v1248, %v1293
        %v1326 = vadd.f32 %v1249, %v1294
        %v1327 = vadd.f32 %v1250, %v1295
        %v1328 = vadd.f32 %v1251, %v1296
        %v1329 = vadd.f32 %v1252, %v1297
        %v1330 = vadd.f32 %v1253, %v1298
        %v1331 = vadd.f32 %v1254, %v1299
        %v1332 = vadd.f32 %v1255, %v1300
        %v1333 = vadd.f32 %v1256, %v1301
        %v1334 = vadd.f32 %v1257, %v1302
        %v1335 = vadd.f32 %v1258, %v1303
        %v1336 = vadd.f32 %v1259, %v1304
        %v1337 = vadd.f32 %v1260, %v1305
        %v1338 = vadd.f32 %v1261, %v1306
        %v1339 = vadd.f32 %v1262, %v1307
        %v1340 = vadd.f32 %v1263, %v1308
        %v1341 = vadd.f32 %v1264, %v1309
        %v1342 = vadd.f32 %v1265, %v1310
        %v1343 = vadd.f32 %v1266, %v1311
        %v1344 = vadd.f32 %v1267, %v1312
        %v1345 = vadd.f32 %v1268, %v1313
        %v1346 = vadd.f32 %v1269, %v1314
        %v1347 = vadd.f32 %v1270, %v1315
        %v1348 = vadd.f32 %v1271, %v1316
        %v1349 = vadd.f32 %v1272, %v1317
        %v1350 = vadd.f32 %v1273, %v1318
        %v1351 = vperm.slane %v327, 1
        %v1352 = vlaneseq
        %v1353 = vshrl.u32 %v1352, 7
        %1355 = vset.pattern.permute.xlu0 %v1353
        %1356 = vperm.xlu0 %1355, %v1351
        %v1357 = vpop.permute.xlu0 %1356
        %v1358 = vlaneseq
        %v1359 = vshrl.u32 %v1358, 7
        %v1360 = vadd.s32 %v1359, 8
        %1361 = vset.pattern.permute.xlu0 %v1360
        %1362 = vperm.xlu0 %1361, %v1351
        %v1363 = vpop.permute.xlu0 %1362
        %v1364 = vperm.slane %v330, 6
        %v1365 = vmul.f32 %v364, %v1364
        %v1366 = vmul.f32 %v370, %v1364
        %v1367 = vmul.f32 %v377, %v1364
        %v1368 = vmul.f32 %v383, %v1364
        %v1369 = vmul.f32 %v390, %v1364
        %v1370 = vmul.f32 %v396, %v1364
        %v1371 = vmul.f32 %v403, %v1364
        %v1372 = vmul.f32 %v409, %v1364
        %v1373 = vmul.f32 %v416, %v1364
        %v1374 = vmul.f32 %v422, %v1364
        %v1375 = vmul.f32 %v429, %v1364
        %v1376 = vmul.f32 %v435, %v1364
        %v1377 = vmul.f32 %v442, %v1364
        %v1378 = vmul.f32 %v448, %v1364
        %v1379 = vmul.f32 %v455, %v1364
        %v1380 = vmul.f32 %v461, %v1364
        %v1381 = vmul.f32 %v468, %v1364
        %v1382 = vmul.f32 %v474, %v1364
        %v1383 = vmul.f32 %v481, %v1364
        %v1384 = vmul.f32 %v487, %v1364
        %v1385 = vmul.f32 %v494, %v1364
        %v1386 = vmul.f32 %v500, %v1364
        %v1387 = vmul.f32 %v507, %v1364
        %v1388 = vmul.f32 %v513, %v1364
        %v1389 = vmul.f32 %v520, %v1364
        %v1390 = vmul.f32 %v526, %v1364
        %v1391 = vmul.f32 %v533, %v1364
        %v1392 = vmul.f32 %v539, %v1364
        %v1393 = vmul.f32 %v1125, %v1364
        %v1394 = vmul.f32 %v1131, %v1364
        %v1395 = vmul.f32 %v1357, %v1364
        %v1396 = vmul.f32 %v1363, %v1364
        %v1397 = vadd.f32 %v1319, %v1365
        %v1398 = vadd.f32 %v1320, %v1366
        %v1399 = vadd.f32 %v1321, %v1367
        %v1400 = vadd.f32 %v1322, %v1368
        %v1401 = vadd.f32 %v1323, %v1369
        %v1402 = vadd.f32 %v1324, %v1370
        %v1403 = vadd.f32 %v1325, %v1371
        %v1404 = vadd.f32 %v1326, %v1372
        %v1405 = vadd.f32 %v1327, %v1373
        %v1406 = vadd.f32 %v1328, %v1374
        %v1407 = vadd.f32 %v1329, %v1375
        %v1408 = vadd.f32 %v1330, %v1376
        %v1409 = vadd.f32 %v1331, %v1377
        %v1410 = vadd.f32 %v1332, %v1378
        %v1411 = vadd.f32 %v1333, %v1379
        %v1412 = vadd.f32 %v1334, %v1380
        %v1413 = vadd.f32 %v1335, %v1381
        %v1414 = vadd.f32 %v1336, %v1382
        %v1415 = vadd.f32 %v1337, %v1383
        %v1416 = vadd.f32 %v1338, %v1384
        %v1417 = vadd.f32 %v1339, %v1385
        %v1418 = vadd.f32 %v1340, %v1386
        %v1419 = vadd.f32 %v1341, %v1387
        %v1420 = vadd.f32 %v1342, %v1388
        %v1421 = vadd.f32 %v1343, %v1389
        %v1422 = vadd.f32 %v1344, %v1390
        %v1423 = vadd.f32 %v1345, %v1391
        %v1424 = vadd.f32 %v1346, %v1392
        %v1425 = vadd.f32 %v1347, %v1393
        %v1426 = vadd.f32 %v1348, %v1394
        %v1427 = vadd.f32 %v1349, %v1395
        %v1428 = vadd.f32 %v1350, %v1396
        %v1429 = vlaneseq
        %v1430 = vshrl.u32 %v1429, 7
        %v1431 = vadd.s32 %v1430, 1
        %1432 = vset.pattern.permute.xlu0 %v1431
        %1433 = vperm.xlu0 %1432, %v1351
        %v1434 = vpop.permute.xlu0 %1433
        %v1435 = vlaneseq
        %v1436 = vshrl.u32 %v1435, 7
        %v1437 = vadd.s32 %v1436, 9
        %1438 = vset.pattern.permute.xlu0 %v1437
        %1439 = vperm.xlu0 %1438, %v1351
        %v1440 = vpop.permute.xlu0 %1439
        %v1441 = vperm.slane %v330, 7
        %v1442 = vmul.f32 %v634, %v1441
        %v1443 = vmul.f32 %v640, %v1441
        %v1444 = vmul.f32 %v646, %v1441
        %v1445 = vmul.f32 %v652, %v1441
        %v1446 = vmul.f32 %v658, %v1441
        %v1447 = vmul.f32 %v664, %v1441
        %v1448 = vmul.f32 %v670, %v1441
        %v1449 = vmul.f32 %v676, %v1441
        %v1450 = vmul.f32 %v682, %v1441
        %v1451 = vmul.f32 %v688, %v1441
        %v1452 = vmul.f32 %v694, %v1441
        %v1453 = vmul.f32 %v700, %v1441
        %v1454 = vmul.f32 %v706, %v1441
        %v1455 = vmul.f32 %v712, %v1441
        %v1456 = vmul.f32 %v718, %v1441
        %v1457 = vmul.f32 %v724, %v1441
        %v1458 = vmul.f32 %v730, %v1441
        %v1459 = vmul.f32 %v736, %v1441
        %v1460 = vmul.f32 %v742, %v1441
        %v1461 = vmul.f32 %v748, %v1441
        %v1462 = vmul.f32 %v754, %v1441
        %v1463 = vmul.f32 %v760, %v1441
        %v1464 = vmul.f32 %v766, %v1441
        %v1465 = vmul.f32 %v772, %v1441
        %v1466 = vmul.f32 %v778, %v1441
        %v1467 = vmul.f32 %v784, %v1441
        %v1468 = vmul.f32 %v790, %v1441
        %v1469 = vmul.f32 %v796, %v1441
        %v1470 = vmul.f32 %v1202, %v1441
        %v1471 = vmul.f32 %v1208, %v1441
        %v1472 = vmul.f32 %v1434, %v1441
        %v1473 = vmul.f32 %v1440, %v1441
        %v1474 = vadd.f32 %v1397, %v1442
        %v1475 = vadd.f32 %v1398, %v1443
        %v1476 = vadd.f32 %v1399, %v1444
        %v1477 = vadd.f32 %v1400, %v1445
        %v1478 = vadd.f32 %v1401, %v1446
        %v1479 = vadd.f32 %v1402, %v1447
        %v1480 = vadd.f32 %v1403, %v1448
        %v1481 = vadd.f32 %v1404, %v1449
        %v1482 = vadd.f32 %v1405, %v1450
        %v1483 = vadd.f32 %v1406, %v1451
        %v1484 = vadd.f32 %v1407, %v1452
        %v1485 = vadd.f32 %v1408, %v1453
        %v1486 = vadd.f32 %v1409, %v1454
        %v1487 = vadd.f32 %v1410, %v1455
        %v1488 = vadd.f32 %v1411, %v1456
        %v1489 = vadd.f32 %v1412, %v1457
        %v1490 = vadd.f32 %v1413, %v1458
        %v1491 = vadd.f32 %v1414, %v1459
        %v1492 = vadd.f32 %v1415, %v1460
        %v1493 = vadd.f32 %v1416, %v1461
        %v1494 = vadd.f32 %v1417, %v1462
        %v1495 = vadd.f32 %v1418, %v1463
        %v1496 = vadd.f32 %v1419, %v1464
        %v1497 = vadd.f32 %v1420, %v1465
        %v1498 = vadd.f32 %v1421, %v1466
        %v1499 = vadd.f32 %v1422, %v1467
        %v1500 = vadd.f32 %v1423, %v1468
        %v1501 = vadd.f32 %v1424, %v1469
        %v1502 = vadd.f32 %v1425, %v1470
        %v1503 = vadd.f32 %v1426, %v1471
        %v1504 = vadd.f32 %v1427, %v1472
        %v1505 = vadd.f32 %v1428, %v1473
        %v1506 = vlaneseq
        %v1507 = vshrl.u32 %v1506, 7
        %v1508 = vadd.s32 %v1507, 2
        %1509 = vset.pattern.permute.xlu0 %v1508
        %1510 = vperm.xlu0 %1509, %v1351
        %v1511 = vpop.permute.xlu0 %1510
        %v1512 = vlaneseq
        %v1513 = vshrl.u32 %v1512, 7
        %v1514 = vadd.s32 %v1513, 10
        %1515 = vset.pattern.permute.xlu0 %v1514
        %1516 = vperm.xlu0 %1515, %v1351
        %v1517 = vpop.permute.xlu0 %1516
        %v1518 = vperm.slane %v331, 0
        %v1519 = vmul.f32 %v891, %v1518
        %v1520 = vmul.f32 %v897, %v1518
        %v1521 = vmul.f32 %v903, %v1518
        %v1522 = vmul.f32 %v909, %v1518
        %v1523 = vmul.f32 %v915, %v1518
        %v1524 = vmul.f32 %v921, %v1518
        %v1525 = vmul.f32 %v927, %v1518
        %v1526 = vmul.f32 %v933, %v1518
        %v1527 = vmul.f32 %v939, %v1518
        %v1528 = vmul.f32 %v945, %v1518
        %v1529 = vmul.f32 %v951, %v1518
        %v1530 = vmul.f32 %v957, %v1518
        %v1531 = vmul.f32 %v963, %v1518
        %v1532 = vmul.f32 %v969, %v1518
        %v1533 = vmul.f32 %v975, %v1518
        %v1534 = vmul.f32 %v981, %v1518
        %v1535 = vmul.f32 %v987, %v1518
        %v1536 = vmul.f32 %v993, %v1518
        %v1537 = vmul.f32 %v999, %v1518
        %v1538 = vmul.f32 %v1005, %v1518
        %v1539 = vmul.f32 %v1011, %v1518
        %v1540 = vmul.f32 %v1017, %v1518
        %v1541 = vmul.f32 %v1023, %v1518
        %v1542 = vmul.f32 %v1029, %v1518
        %v1543 = vmul.f32 %v1035, %v1518
        %v1544 = vmul.f32 %v1041, %v1518
        %v1545 = vmul.f32 %v1047, %v1518
        %v1546 = vmul.f32 %v1053, %v1518
        %v1547 = vmul.f32 %v1279, %v1518
        %v1548 = vmul.f32 %v1285, %v1518
        %v1549 = vmul.f32 %v1511, %v1518
        %v1550 = vmul.f32 %v1517, %v1518
        %v1551 = vadd.f32 %v1474, %v1519
        %v1552 = vadd.f32 %v1475, %v1520
        %v1553 = vadd.f32 %v1476, %v1521
        %v1554 = vadd.f32 %v1477, %v1522
        %v1555 = vadd.f32 %v1478, %v1523
        %v1556 = vadd.f32 %v1479, %v1524
        %v1557 = vadd.f32 %v1480, %v1525
        %v1558 = vadd.f32 %v1481, %v1526
        %v1559 = vadd.f32 %v1482, %v1527
        %v1560 = vadd.f32 %v1483, %v1528
        %v1561 = vadd.f32 %v1484, %v1529
        %v1562 = vadd.f32 %v1485, %v1530
        %v1563 = vadd.f32 %v1486, %v1531
        %v1564 = vadd.f32 %v1487, %v1532
        %v1565 = vadd.f32 %v1488, %v1533
        %v1566 = vadd.f32 %v1489, %v1534
        %v1567 = vadd.f32 %v1490, %v1535
        %v1568 = vadd.f32 %v1491, %v1536
        %v1569 = vadd.f32 %v1492, %v1537
        %v1570 = vadd.f32 %v1493, %v1538
        %v1571 = vadd.f32 %v1494, %v1539
        %v1572 = vadd.f32 %v1495, %v1540
        %v1573 = vadd.f32 %v1496, %v1541
        %v1574 = vadd.f32 %v1497, %v1542
        %v1575 = vadd.f32 %v1498, %v1543
        %v1576 = vadd.f32 %v1499, %v1544
        %v1577 = vadd.f32 %v1500, %v1545
        %v1578 = vadd.f32 %v1501, %v1546
        %v1579 = vadd.f32 %v1502, %v1547
        %v1580 = vadd.f32 %v1503, %v1548
        %v1581 = vadd.f32 %v1504, %v1549
        %v1582 = vadd.f32 %v1505, %v1550
        %v1583 = vmax.f32 %v1551, 0.0
        %v1584 = vmax.f32 %v1552, 0.0
        %v1585 = vmax.f32 %v1553, 0.0
        %v1586 = vmax.f32 %v1554, 0.0
        %v1587 = vmax.f32 %v1555, 0.0
        %v1588 = vmax.f32 %v1556, 0.0
        %v1589 = vmax.f32 %v1557, 0.0
        %v1590 = vmax.f32 %v1558, 0.0
        %v1591 = vmax.f32 %v1559, 0.0
        %v1592 = vmax.f32 %v1560, 0.0
        %v1593 = vmax.f32 %v1561, 0.0
        %v1594 = vmax.f32 %v1562, 0.0
        %v1595 = vmax.f32 %v1563, 0.0
        %v1596 = vmax.f32 %v1564, 0.0
        %v1597 = vmax.f32 %v1565, 0.0
        %v1598 = vmax.f32 %v1566, 0.0
        %v1599 = vmax.f32 %v1567, 0.0
        %v1600 = vmax.f32 %v1568, 0.0
        %v1601 = vmax.f32 %v1569, 0.0
        %v1602 = vmax.f32 %v1570, 0.0
        %v1603 = vmax.f32 %v1571, 0.0
        %v1604 = vmax.f32 %v1572, 0.0
        %v1605 = vmax.f32 %v1573, 0.0
        %v1606 = vmax.f32 %v1574, 0.0
        %v1607 = vmax.f32 %v1575, 0.0
        %v1608 = vmax.f32 %v1576, 0.0
        %v1609 = vmax.f32 %v1577, 0.0
        %v1610 = vmax.f32 %v1578, 0.0
        %v1611 = vmax.f32 %v1579, 0.0
        %v1612 = vmax.f32 %v1580, 0.0
        %v1613 = vmax.f32 %v1581, 0.0
        %v1614 = vmax.f32 %v1582, 0.0
        %v1615 = vpack.c.bf16 %v1583, %v1583
        %v1616 = vpack.c.bf16 %v1584, %v1584
        %v1617 = vpack.c.bf16 %v1585, %v1585
        %v1618 = vpack.c.bf16 %v1586, %v1586
        %v1619 = vpack.c.bf16 %v1587, %v1587
        %v1620 = vpack.c.bf16 %v1588, %v1588
        %v1621 = vpack.c.bf16 %v1589, %v1589
        %v1622 = vpack.c.bf16 %v1590, %v1590
        %v1623 = vpack.c.bf16 %v1591, %v1591
        %v1624 = vpack.c.bf16 %v1592, %v1592
        %v1625 = vpack.c.bf16 %v1593, %v1593
        %v1626 = vpack.c.bf16 %v1594, %v1594
        %v1627 = vpack.c.bf16 %v1595, %v1595
        %v1628 = vpack.c.bf16 %v1596, %v1596
        %v1629 = vpack.c.bf16 %v1597, %v1597
        %v1630 = vpack.c.bf16 %v1598, %v1598
        %v1631 = vpack.c.bf16 %v1599, %v1599
        %v1632 = vpack.c.bf16 %v1600, %v1600
        %v1633 = vpack.c.bf16 %v1601, %v1601
        %v1634 = vpack.c.bf16 %v1602, %v1602
        %v1635 = vpack.c.bf16 %v1603, %v1603
        %v1636 = vpack.c.bf16 %v1604, %v1604
        %v1637 = vpack.c.bf16 %v1605, %v1605
        %v1638 = vpack.c.bf16 %v1606, %v1606
        %v1639 = vpack.c.bf16 %v1607, %v1607
        %v1640 = vpack.c.bf16 %v1608, %v1608
        %v1641 = vpack.c.bf16 %v1609, %v1609
        %v1642 = vpack.c.bf16 %v1610, %v1610
        %v1643 = vpack.c.bf16 %v1611, %v1611
        %v1644 = vpack.c.bf16 %v1612, %v1612
        %v1645 = vpack.c.bf16 %v1613, %v1613
        %v1646 = vpack.c.bf16 %v1614, %v1614
        %vm1647 = vsmask.f32 4368
        %vm1648 = vmor %vm207, %vm1647
        %v1650 = vshrl.u32 %v1615, 16
        %v1652 = vrot.slane %v1650, 7
        %v1653 = vshll.u32 %v1615, 16
        %v1655 = vor.u32 %v1652, %v1653
        %v1656 = vrot.slane %v1652, 4
        %v1658 = vshrl.u32 %v1616, 16
        %v1660 = vrot.slane %v1658, 7
        %v1661 = vshll.u32 %v1616, 16
        %v1663 = vor.u32 %v1660, %v1661
        %v1664 = vsel %vm1648, %v1656, %v1663
        %v1665 = vrot.slane %v1660, 4
        %v1667 = vshrl.u32 %v1617, 16
        %v1669 = vrot.slane %v1667, 7
        %v1670 = vshll.u32 %v1617, 16
        %v1672 = vor.u32 %v1669, %v1670
        %v1673 = vrot.slane %v1669, 4
        %v1675 = vshrl.u32 %v1618, 16
        %v1677 = vrot.slane %v1675, 7
        %v1678 = vshll.u32 %v1618, 16
        %v1680 = vor.u32 %v1677, %v1678
        %v1681 = vsel %vm1648, %v1673, %v1680
        %v1682 = vrot.slane %v1677, 4
        %v1684 = vshrl.u32 %v1619, 16
        %v1686 = vrot.slane %v1684, 7
        %v1687 = vshll.u32 %v1619, 16
        %v1689 = vor.u32 %v1686, %v1687
        %v1690 = vrot.slane %v1686, 4
        %v1692 = vshrl.u32 %v1620, 16
        %v1694 = vrot.slane %v1692, 7
        %v1695 = vshll.u32 %v1620, 16
        %v1697 = vor.u32 %v1694, %v1695
        %v1698 = vsel %vm1648, %v1690, %v1697
        %v1699 = vrot.slane %v1694, 4
        %v1701 = vshrl.u32 %v1621, 16
        %v1703 = vrot.slane %v1701, 7
        %v1704 = vshll.u32 %v1621, 16
        %v1706 = vor.u32 %v1703, %v1704
        %v1707 = vrot.slane %v1703, 4
        %v1709 = vshrl.u32 %v1622, 16
        %v1711 = vrot.slane %v1709, 7
        %v1712 = vshll.u32 %v1622, 16
        %v1714 = vor.u32 %v1711, %v1712
        %v1715 = vsel %vm1648, %v1707, %v1714
        %v1716 = vrot.slane %v1711, 4
        %v1718 = vshrl.u32 %v1623, 16
        %v1720 = vrot.slane %v1718, 7
        %v1721 = vshll.u32 %v1623, 16
        %v1723 = vor.u32 %v1720, %v1721
        %v1724 = vrot.slane %v1720, 4
        %v1726 = vshrl.u32 %v1624, 16
        %v1728 = vrot.slane %v1726, 7
        %v1729 = vshll.u32 %v1624, 16
        %v1731 = vor.u32 %v1728, %v1729
        %v1732 = vsel %vm1648, %v1724, %v1731
        %v1733 = vrot.slane %v1728, 4
        %v1735 = vshrl.u32 %v1625, 16
        %v1737 = vrot.slane %v1735, 7
        %v1738 = vshll.u32 %v1625, 16
        %v1740 = vor.u32 %v1737, %v1738
        %v1741 = vrot.slane %v1737, 4
        %v1743 = vshrl.u32 %v1626, 16
        %v1745 = vrot.slane %v1743, 7
        %v1746 = vshll.u32 %v1626, 16
        %v1748 = vor.u32 %v1745, %v1746
        %v1749 = vsel %vm1648, %v1741, %v1748
        %v1750 = vrot.slane %v1745, 4
        %v1752 = vshrl.u32 %v1627, 16
        %v1754 = vrot.slane %v1752, 7
        %v1755 = vshll.u32 %v1627, 16
        %v1757 = vor.u32 %v1754, %v1755
        %v1758 = vrot.slane %v1754, 4
        %v1760 = vshrl.u32 %v1628, 16
        %v1762 = vrot.slane %v1760, 7
        %v1763 = vshll.u32 %v1628, 16
        %v1765 = vor.u32 %v1762, %v1763
        %v1766 = vsel %vm1648, %v1758, %v1765
        %v1767 = vrot.slane %v1762, 4
        %v1769 = vshrl.u32 %v1629, 16
        %v1771 = vrot.slane %v1769, 7
        %v1772 = vshll.u32 %v1629, 16
        %v1774 = vor.u32 %v1771, %v1772
        %v1775 = vrot.slane %v1771, 4
        %v1777 = vshrl.u32 %v1630, 16
        %v1779 = vrot.slane %v1777, 7
        %v1780 = vshll.u32 %v1630, 16
        %v1782 = vor.u32 %v1779, %v1780
        %v1783 = vsel %vm1648, %v1775, %v1782
        %v1784 = vrot.slane %v1779, 4
        %v1786 = vshrl.u32 %v1631, 16
        %v1788 = vrot.slane %v1786, 7
        %v1789 = vshll.u32 %v1631, 16
        %v1791 = vor.u32 %v1788, %v1789
        %v1792 = vrot.slane %v1788, 4
        %v1794 = vshrl.u32 %v1632, 16
        %v1796 = vrot.slane %v1794, 7
        %v1797 = vshll.u32 %v1632, 16
        %v1799 = vor.u32 %v1796, %v1797
        %v1800 = vsel %vm1648, %v1792, %v1799
        %v1801 = vrot.slane %v1796, 4
        %v1803 = vshrl.u32 %v1633, 16
        %v1805 = vrot.slane %v1803, 7
        %v1806 = vshll.u32 %v1633, 16
        %v1808 = vor.u32 %v1805, %v1806
        %v1809 = vrot.slane %v1805, 4
        %v1811 = vshrl.u32 %v1634, 16
        %v1813 = vrot.slane %v1811, 7
        %v1814 = vshll.u32 %v1634, 16
        %v1816 = vor.u32 %v1813, %v1814
        %v1817 = vsel %vm1648, %v1809, %v1816
        %v1818 = vrot.slane %v1813, 4
        %v1820 = vshrl.u32 %v1635, 16
        %v1822 = vrot.slane %v1820, 7
        %v1823 = vshll.u32 %v1635, 16
        %v1825 = vor.u32 %v1822, %v1823
        %v1826 = vrot.slane %v1822, 4
        %v1828 = vshrl.u32 %v1636, 16
        %v1830 = vrot.slane %v1828, 7
        %v1831 = vshll.u32 %v1636, 16
        %v1833 = vor.u32 %v1830, %v1831
        %v1834 = vsel %vm1648, %v1826, %v1833
        %v1835 = vrot.slane %v1830, 4
        %v1837 = vshrl.u32 %v1637, 16
        %v1839 = vrot.slane %v1837, 7
        %v1840 = vshll.u32 %v1637, 16
        %v1842 = vor.u32 %v1839, %v1840
        %v1843 = vrot.slane %v1839, 4
        %v1845 = vshrl.u32 %v1638, 16
        %v1847 = vrot.slane %v1845, 7
        %v1848 = vshll.u32 %v1638, 16
        %v1850 = vor.u32 %v1847, %v1848
        %v1851 = vsel %vm1648, %v1843, %v1850
        %v1852 = vrot.slane %v1847, 4
        %v1854 = vshrl.u32 %v1639, 16
        %v1856 = vrot.slane %v1854, 7
        %v1857 = vshll.u32 %v1639, 16
        %v1859 = vor.u32 %v1856, %v1857
        %v1860 = vrot.slane %v1856, 4
        %v1862 = vshrl.u32 %v1640, 16
        %v1864 = vrot.slane %v1862, 7
        %v1865 = vshll.u32 %v1640, 16
        %v1867 = vor.u32 %v1864, %v1865
        %v1868 = vsel %vm1648, %v1860, %v1867
        %v1869 = vrot.slane %v1864, 4
        %v1871 = vshrl.u32 %v1641, 16
        %v1873 = vrot.slane %v1871, 7
        %v1874 = vshll.u32 %v1641, 16
        %v1876 = vor.u32 %v1873, %v1874
        %v1877 = vrot.slane %v1873, 4
        %v1879 = vshrl.u32 %v1642, 16
        %v1881 = vrot.slane %v1879, 7
        %v1882 = vshll.u32 %v1642, 16
        %v1884 = vor.u32 %v1881, %v1882
        %v1885 = vsel %vm1648, %v1877, %v1884
        %v1886 = vrot.slane %v1881, 4
        %v1888 = vshrl.u32 %v1643, 16
        %v1890 = vrot.slane %v1888, 7
        %v1891 = vshll.u32 %v1643, 16
        %v1893 = vor.u32 %v1890, %v1891
        %v1894 = vrot.slane %v1890, 4
        %v1896 = vshrl.u32 %v1644, 16
        %v1898 = vrot.slane %v1896, 7
        %v1899 = vshll.u32 %v1644, 16
        %v1901 = vor.u32 %v1898, %v1899
        %v1902 = vsel %vm1648, %v1894, %v1901
        %v1903 = vrot.slane %v1898, 4
        %v1905 = vshrl.u32 %v1645, 16
        %v1907 = vrot.slane %v1905, 7
        %v1908 = vshll.u32 %v1645, 16
        %v1910 = vor.u32 %v1907, %v1908
        %v1911 = vrot.slane %v1907, 4
        %v1913 = vshrl.u32 %v1646, 16
        %v1915 = vrot.slane %v1913, 7
        %v1916 = vshll.u32 %v1646, 16
        %v1918 = vor.u32 %v1915, %v1916
        %v1919 = vsel %vm1648, %v1911, %v1918
        %v1920 = vrot.slane %v1915, 4
        %s1969 = scalar_lea.vmem [#allocation2], 12
        %vm1970 = vcmask 519168
        %vm1971 = vmand %vm1970, %vm263
        %v1972 = vld [vmem:[%s1969] sm:$0xf]
        %v1973 = vsel %vm1971, %v1655, %v1972
        %1974 = vst [vmem:[%s1969] sm:$0xf] %v1973
        %1975 = vst.msk [vmem:[%s1969 + $0x4] sm:$0xf] %vm197, %v1664
        %v1976 = vld [vmem:[%s1969 + $0x8] sm:$0x1]
        %v1977 = vsel %vm208, %v1665, %v1976
        %1978 = vst [vmem:[%s1969 + $0x8] sm:$0x1] %v1977
        %v1979 = vld [vmem:[%s1969 + $0xc] sm:$0xf]
        %v1980 = vsel %vm1971, %v1672, %v1979
        %1981 = vst [vmem:[%s1969 + $0xc] sm:$0xf] %v1980
        %1982 = vst.msk [vmem:[%s1969 + $0x10] sm:$0xf] %vm197, %v1681
        %v1983 = vld [vmem:[%s1969 + $0x14] sm:$0x1]
        %v1984 = vsel %vm208, %v1682, %v1983
        %1985 = vst [vmem:[%s1969 + $0x14] sm:$0x1] %v1984
        %v1986 = vld [vmem:[%s1969 + $0x18] sm:$0xf]
        %v1987 = vsel %vm1971, %v1689, %v1986
        %1988 = vst [vmem:[%s1969 + $0x18] sm:$0xf] %v1987
        %1989 = vst.msk [vmem:[%s1969 + $0x1c] sm:$0xf] %vm197, %v1698
        %v1990 = vld [vmem:[%s1969 + $0x20] sm:$0x1]
        %v1991 = vsel %vm208, %v1699, %v1990
        %1992 = vst [vmem:[%s1969 + $0x20] sm:$0x1] %v1991
        %v1993 = vld [vmem:[%s1969 + $0x24] sm:$0xf]
        %v1994 = vsel %vm1971, %v1706, %v1993
        %1995 = vst [vmem:[%s1969 + $0x24] sm:$0xf] %v1994
        %1996 = vst.msk [vmem:[%s1969 + $0x28] sm:$0xf] %vm197, %v1715
        %v1997 = vld [vmem:[%s1969 + $0x2c] sm:$0x1]
        %v1998 = vsel %vm208, %v1716, %v1997
        %1999 = vst [vmem:[%s1969 + $0x2c] sm:$0x1] %v1998
        %v2000 = vld [vmem:[%s1969 + $0x30] sm:$0xf]
        %v2001 = vsel %vm1971, %v1723, %v2000
        %2002 = vst [vmem:[%s1969 + $0x30] sm:$0xf] %v2001
        %2003 = vst.msk [vmem:[%s1969 + $0x34] sm:$0xf] %vm197, %v1732
        %v2004 = vld [vmem:[%s1969 + $0x38] sm:$0x1]
        %v2005 = vsel %vm208, %v1733, %v2004
        %2006 = vst [vmem:[%s1969 + $0x38] sm:$0x1] %v2005
        %v2007 = vld [vmem:[%s1969 + $0x3c] sm:$0xf]
        %v2008 = vsel %vm1971, %v1740, %v2007
        %2009 = vst [vmem:[%s1969 + $0x3c] sm:$0xf] %v2008
        %2010 = vst.msk [vmem:[%s1969 + $0x40] sm:$0xf] %vm197, %v1749
        %v2011 = vld [vmem:[%s1969 + $0x44] sm:$0x1]
        %v2012 = vsel %vm208, %v1750, %v2011
        %2013 = vst [vmem:[%s1969 + $0x44] sm:$0x1] %v2012
        %v2014 = vld [vmem:[%s1969 + $0x48] sm:$0xf]
        %v2015 = vsel %vm1971, %v1757, %v2014
        %2016 = vst [vmem:[%s1969 + $0x48] sm:$0xf] %v2015
        %2017 = vst.msk [vmem:[%s1969 + $0x4c] sm:$0xf] %vm197, %v1766
        %v2018 = vld [vmem:[%s1969 + $0x50] sm:$0x1]
        %v2019 = vsel %vm208, %v1767, %v2018
        %2020 = vst [vmem:[%s1969 + $0x50] sm:$0x1] %v2019
        %v2021 = vld [vmem:[%s1969 + $0x54] sm:$0xf]
        %v2022 = vsel %vm1971, %v1774, %v2021
        %2023 = vst [vmem:[%s1969 + $0x54] sm:$0xf] %v2022
        %2024 = vst.msk [vmem:[%s1969 + $0x58] sm:$0xf] %vm197, %v1783
        %v2025 = vld [vmem:[%s1969 + $0x5c] sm:$0x1]
        %v2026 = vsel %vm208, %v1784, %v2025
        %2027 = vst [vmem:[%s1969 + $0x5c] sm:$0x1] %v2026
        %v2028 = vld [vmem:[%s1969 + $0x60] sm:$0xf]
        %v2029 = vsel %vm1971, %v1791, %v2028
        %2030 = vst [vmem:[%s1969 + $0x60] sm:$0xf] %v2029
        %2031 = vst.msk [vmem:[%s1969 + $0x64] sm:$0xf] %vm197, %v1800
        %v2032 = vld [vmem:[%s1969 + $0x68] sm:$0x1]
        %v2033 = vsel %vm208, %v1801, %v2032
        %2034 = vst [vmem:[%s1969 + $0x68] sm:$0x1] %v2033
        %v2035 = vld [vmem:[%s1969 + $0x6c] sm:$0xf]
        %v2036 = vsel %vm1971, %v1808, %v2035
        %2037 = vst [vmem:[%s1969 + $0x6c] sm:$0xf] %v2036
        %2038 = vst.msk [vmem:[%s1969 + $0x70] sm:$0xf] %vm197, %v1817
        %v2039 = vld [vmem:[%s1969 + $0x74] sm:$0x1]
        %v2040 = vsel %vm208, %v1818, %v2039
        %2041 = vst [vmem:[%s1969 + $0x74] sm:$0x1] %v2040
        %v2042 = vld [vmem:[%s1969 + $0x78] sm:$0xf]
        %v2043 = vsel %vm1971, %v1825, %v2042
        %2044 = vst [vmem:[%s1969 + $0x78] sm:$0xf] %v2043
        %2045 = vst.msk [vmem:[%s1969 + $0x7c] sm:$0xf] %vm197, %v1834
        %v2046 = vld [vmem:[%s1969 + $0x80] sm:$0x1]
        %v2047 = vsel %vm208, %v1835, %v2046
        %2048 = vst [vmem:[%s1969 + $0x80] sm:$0x1] %v2047
        %v2049 = vld [vmem:[%s1969 + $0x84] sm:$0xf]
        %v2050 = vsel %vm1971, %v1842, %v2049
        %2051 = vst [vmem:[%s1969 + $0x84] sm:$0xf] %v2050
        %2052 = vst.msk [vmem:[%s1969 + $0x88] sm:$0xf] %vm197, %v1851
        %v2053 = vld [vmem:[%s1969 + $0x8c] sm:$0x1]
        %v2054 = vsel %vm208, %v1852, %v2053
        %2055 = vst [vmem:[%s1969 + $0x8c] sm:$0x1] %v2054
        %v2056 = vld [vmem:[%s1969 + $0x90] sm:$0xf]
        %v2057 = vsel %vm1971, %v1859, %v2056
        %2058 = vst [vmem:[%s1969 + $0x90] sm:$0xf] %v2057
        %2059 = vst.msk [vmem:[%s1969 + $0x94] sm:$0xf] %vm197, %v1868
        %v2060 = vld [vmem:[%s1969 + $0x98] sm:$0x1]
        %v2061 = vsel %vm208, %v1869, %v2060
        %2062 = vst [vmem:[%s1969 + $0x98] sm:$0x1] %v2061
        %v2063 = vld [vmem:[%s1969 + $0x9c] sm:$0xf]
        %v2064 = vsel %vm1971, %v1876, %v2063
        %2065 = vst [vmem:[%s1969 + $0x9c] sm:$0xf] %v2064
        %2066 = vst.msk [vmem:[%s1969 + $0xa0] sm:$0xf] %vm197, %v1885
        %v2067 = vld [vmem:[%s1969 + $0xa4] sm:$0x1]
        %v2068 = vsel %vm208, %v1886, %v2067
        %2069 = vst [vmem:[%s1969 + $0xa4] sm:$0x1] %v2068
        %v2070 = vld [vmem:[%s1969 + $0xa8] sm:$0xf]
        %v2071 = vsel %vm1971, %v1893, %v2070
        %2072 = vst [vmem:[%s1969 + $0xa8] sm:$0xf] %v2071
        %2073 = vst.msk [vmem:[%s1969 + $0xac] sm:$0xf] %vm197, %v1902
        %v2074 = vld [vmem:[%s1969 + $0xb0] sm:$0x1]
        %v2075 = vsel %vm208, %v1903, %v2074
        %2076 = vst [vmem:[%s1969 + $0xb0] sm:$0x1] %v2075
        %v2077 = vld [vmem:[%s1969 + $0xb4] sm:$0xf]
        %v2078 = vsel %vm1971, %v1910, %v2077
        %2079 = vst [vmem:[%s1969 + $0xb4] sm:$0xf] %v2078
        %2080 = vst.msk [vmem:[%s1969 + $0xb8] sm:$0xf] %vm197, %v1919
        %v2081 = vld [vmem:[%s1969 + $0xbc] sm:$0x1]
        %v2082 = vsel %vm208, %v1920, %v2081
        %2083 = vst [vmem:[%s1969 + $0xbc] sm:$0x1] %v2082
        loop: start=0, step=1, limit=18
        $region37: #{vdsr_forward.1} parent=35 // loop_pre_header
          _
        $region38: #{vdsr_forward.1} parent=35 // loop_header
          %s2085 = sphi 0, %s2089
          %p2086 = scmp.ge.s32.totalorder %s2085, 18
        $region39: #{vdsr_forward.1} parent=35 // loop_header_branch
          %2088 = sbr.rel (%p2086) target = $region43
        $region40: #{vdsr_forward.1} parent=35 // loop_body
          %v2090 = vld [vmem:[#allocation2] sm:$0xf]
          %v2091 = vld [vmem:[#allocation2 + $0x4] sm:$0xf]
          %v2092 = vld [vmem:[#allocation2 + $0xc] sm:$0xf]
          %v2093 = vld [vmem:[#allocation2 + $0x10] sm:$0xf]
          %v2094 = vld [vmem:[#allocation2 + $0x18] sm:$0xf]
          %v2095 = vld [vmem:[#allocation2 + $0x1c] sm:$0xf]
          %v2096 = vld [vmem:[#allocation2 + $0x24] sm:$0xf]
          %v2097 = vld [vmem:[#allocation2 + $0x28] sm:$0xf]
          %v2098 = vld [vmem:[#allocation2 + $0x30] sm:$0xf]
          %v2099 = vld [vmem:[#allocation2 + $0x34] sm:$0xf]
          %v2100 = vld [vmem:[#allocation2 + $0x3c] sm:$0xf]
          %v2101 = vld [vmem:[#allocation2 + $0x40] sm:$0xf]
          %v2102 = vld [vmem:[#allocation2 + $0x48] sm:$0xf]
          %v2103 = vld [vmem:[#allocation2 + $0x4c] sm:$0xf]
          %v2104 = vld [vmem:[#allocation2 + $0x54] sm:$0xf]
          %v2105 = vld [vmem:[#allocation2 + $0x58] sm:$0xf]
          %v2106 = vld [vmem:[#allocation2 + $0x60] sm:$0xf]
          %v2107 = vld [vmem:[#allocation2 + $0x64] sm:$0xf]
          %v2108 = vld [vmem:[#allocation2 + $0x6c] sm:$0xf]
          %v2109 = vld [vmem:[#allocation2 + $0x70] sm:$0xf]
          %v2110 = vld [vmem:[#allocation2 + $0x78] sm:$0xf]
          %v2111 = vld [vmem:[#allocation2 + $0x7c] sm:$0xf]
          %v2112 = vld [vmem:[#allocation2 + $0x84] sm:$0xf]
          %v2113 = vld [vmem:[#allocation2 + $0x88] sm:$0xf]
          %v2114 = vld [vmem:[#allocation2 + $0x90] sm:$0xf]
          %v2115 = vld [vmem:[#allocation2 + $0x94] sm:$0xf]
          %v2116 = vld [vmem:[#allocation2 + $0x9c] sm:$0xf]
          %v2117 = vld [vmem:[#allocation2 + $0xa0] sm:$0xf]
          %v2118 = vld [vmem:[#allocation2 + $0xa8] sm:$0xf]
          %v2119 = vld [vmem:[#allocation2 + $0xac] sm:$0xf]
          %v2120 = vld [vmem:[#allocation2 + $0xb4] sm:$0xf]
          %v2121 = vld [vmem:[#allocation2 + $0xb8] sm:$0xf]
          %2122 = vst.msk [vmem:[#allocation3] sm:$0xf] %vm197, %v2090
          %2123 = vst.msk [vmem:[#allocation3 + $0x14] sm:$0xf] %vm197, %v2091
          %2124 = vst.msk [vmem:[#allocation3 + $0x28] sm:$0xf] %vm197, %v2092
          %2125 = vst.msk [vmem:[#allocation3 + $0x3c] sm:$0xf] %vm197, %v2093
          %2126 = vst.msk [vmem:[#allocation3 + $0x50] sm:$0xf] %vm197, %v2094
          %2127 = vst.msk [vmem:[#allocation3 + $0x64] sm:$0xf] %vm197, %v2095
          %2128 = vst.msk [vmem:[#allocation3 + $0x78] sm:$0xf] %vm197, %v2096
          %2129 = vst.msk [vmem:[#allocation3 + $0x8c] sm:$0xf] %vm197, %v2097
          %2130 = vst.msk [vmem:[#allocation3 + $0xa0] sm:$0xf] %vm197, %v2098
          %2131 = vst.msk [vmem:[#allocation3 + $0xb4] sm:$0xf] %vm197, %v2099
          %2132 = vst.msk [vmem:[#allocation3 + $0xc8] sm:$0xf] %vm197, %v2100
          %2133 = vst.msk [vmem:[#allocation3 + $0xdc] sm:$0xf] %vm197, %v2101
          %2134 = vst.msk [vmem:[#allocation3 + $0xf0] sm:$0xf] %vm197, %v2102
          %2135 = vst.msk [vmem:[#allocation3 + $0x104] sm:$0xf] %vm197, %v2103
          %2136 = vst.msk [vmem:[#allocation3 + $0x118] sm:$0xf] %vm197, %v2104
          %2137 = vst.msk [vmem:[#allocation3 + $0x12c] sm:$0xf] %vm197, %v2105
          %2138 = vst.msk [vmem:[#allocation3 + $0x140] sm:$0xf] %vm197, %v2106
          %2139 = vst.msk [vmem:[#allocation3 + $0x154] sm:$0xf] %vm197, %v2107
          %2140 = vst.msk [vmem:[#allocation3 + $0x168] sm:$0xf] %vm197, %v2108
          %2141 = vst.msk [vmem:[#allocation3 + $0x17c] sm:$0xf] %vm197, %v2109
          %2142 = vst.msk [vmem:[#allocation3 + $0x190] sm:$0xf] %vm197, %v2110
          %2143 = vst.msk [vmem:[#allocation3 + $0x1a4] sm:$0xf] %vm197, %v2111
          %2144 = vst.msk [vmem:[#allocation3 + $0x1b8] sm:$0xf] %vm197, %v2112
          %2145 = vst.msk [vmem:[#allocation3 + $0x1cc] sm:$0xf] %vm197, %v2113
          %2146 = vst.msk [vmem:[#allocation3 + $0x1e0] sm:$0xf] %vm197, %v2114
          %2147 = vst.msk [vmem:[#allocation3 + $0x1f4] sm:$0xf] %vm197, %v2115
          %2148 = vst.msk [vmem:[#allocation3 + $0x208] sm:$0xf] %vm197, %v2116
          %2149 = vst.msk [vmem:[#allocation3 + $0x21c] sm:$0xf] %vm197, %v2117
          %2150 = vst.msk [vmem:[#allocation3 + $0x230] sm:$0xf] %vm197, %v2118
          %2151 = vst.msk [vmem:[#allocation3 + $0x244] sm:$0xf] %vm197, %v2119
          %2152 = vst.msk [vmem:[#allocation3 + $0x258] sm:$0xf] %vm197, %v2120
          %2153 = vst.msk [vmem:[#allocation3 + $0x26c] sm:$0xf] %vm197, %v2121
          %v2154 = vld [vmem:[#allocation2] sm:$0xf]
          %v2155 = vld [vmem:[#allocation2 + $0x4] sm:$0xf]
          %v2156 = vld [vmem:[#allocation2 + $0x8] sm:$0x1]
          %v2157 = vld [vmem:[#allocation2 + $0xc] sm:$0xf]
          %v2158 = vld [vmem:[#allocation2 + $0x10] sm:$0xf]
          %v2159 = vld [vmem:[#allocation2 + $0x14] sm:$0x1]
          %v2160 = vld [vmem:[#allocation2 + $0x18] sm:$0xf]
          %v2161 = vld [vmem:[#allocation2 + $0x1c] sm:$0xf]
          %v2162 = vld [vmem:[#allocation2 + $0x20] sm:$0x1]
          %v2163 = vld [vmem:[#allocation2 + $0x24] sm:$0xf]
          %v2164 = vld [vmem:[#allocation2 + $0x28] sm:$0xf]
          %v2165 = vld [vmem:[#allocation2 + $0x2c] sm:$0x1]
          %v2166 = vld [vmem:[#allocation2 + $0x30] sm:$0xf]
          %v2167 = vld [vmem:[#allocation2 + $0x34] sm:$0xf]
          %v2168 = vld [vmem:[#allocation2 + $0x38] sm:$0x1]
          %v2169 = vld [vmem:[#allocation2 + $0x3c] sm:$0xf]
          %v2170 = vld [vmem:[#allocation2 + $0x40] sm:$0xf]
          %v2171 = vld [vmem:[#allocation2 + $0x44] sm:$0x1]
          %v2172 = vld [vmem:[#allocation2 + $0x48] sm:$0xf]
          %v2173 = vld [vmem:[#allocation2 + $0x4c] sm:$0xf]
          %v2174 = vld [vmem:[#allocation2 + $0x50] sm:$0x1]
          %v2175 = vld [vmem:[#allocation2 + $0x54] sm:$0xf]
          %v2176 = vld [vmem:[#allocation2 + $0x58] sm:$0xf]
          %v2177 = vld [vmem:[#allocation2 + $0x5c] sm:$0x1]
          %v2178 = vld [vmem:[#allocation2 + $0x60] sm:$0xf]
          %v2179 = vld [vmem:[#allocation2 + $0x64] sm:$0xf]
          %v2180 = vld [vmem:[#allocation2 + $0x68] sm:$0x1]
          %v2181 = vld [vmem:[#allocation2 + $0x6c] sm:$0xf]
          %v2182 = vld [vmem:[#allocation2 + $0x70] sm:$0xf]
          %v2183 = vld [vmem:[#allocation2 + $0x74] sm:$0x1]
          %v2184 = vld [vmem:[#allocation2 + $0x78] sm:$0xf]
          %v2185 = vld [vmem:[#allocation2 + $0x7c] sm:$0xf]
          %v2186 = vld [vmem:[#allocation2 + $0x80] sm:$0x1]
          %v2187 = vld [vmem:[#allocation2 + $0x84] sm:$0xf]
          %v2188 = vld [vmem:[#allocation2 + $0x88] sm:$0xf]
          %v2189 = vld [vmem:[#allocation2 + $0x8c] sm:$0x1]
          %v2190 = vld [vmem:[#allocation2 + $0x90] sm:$0xf]
          %v2191 = vld [vmem:[#allocation2 + $0x94] sm:$0xf]
          %v2192 = vld [vmem:[#allocation2 + $0x98] sm:$0x1]
          %v2193 = vld [vmem:[#allocation2 + $0x9c] sm:$0xf]
          %v2194 = vld [vmem:[#allocation2 + $0xa0] sm:$0xf]
          %v2195 = vld [vmem:[#allocation2 + $0xa4] sm:$0x1]
          %v2196 = vld [vmem:[#allocation2 + $0xa8] sm:$0xf]
          %v2197 = vld [vmem:[#allocation2 + $0xac] sm:$0xf]
          %v2198 = vld [vmem:[#allocation2 + $0xb0] sm:$0x1]
          %v2199 = vld [vmem:[#allocation2 + $0xb4] sm:$0xf]
          %v2200 = vld [vmem:[#allocation2 + $0xb8] sm:$0xf]
          %v2201 = vld [vmem:[#allocation2 + $0xbc] sm:$0x1]
          %vm2202 = vsmask.f32 3328
          %vm2203 = vsmask.f32 7440
          %vm2204 = vmor %vm2202, %vm2203
          %v2206 = vshrl.u32 %v2154, 16
          %v2208 = vrot.slane %v2206, 4
          %v2209 = vshll.u32 %v2154, 16
          %v2211 = vrot.slane %v2209, 5
          %v2212 = vor.u32 %v2208, %v2211
          %v2213 = vrot.slane %v2212, 4
          %v2215 = vshll.u32 %v2155, 16
          %v2217 = vrot.slane %v2215, 5
          %v2218 = vsel %vm2204, %v2213, %v2217
          %v2219 = vshrl.u32 %v2155, 16
          %v2221 = vrot.slane %v2219, 4
          %v2222 = vor.u32 %v2221, %v2217
          %v2223 = vrot.slane %v2222, 4
          %v2225 = vshll.u32 %v2156, 16
          %v2227 = vrot.slane %v2225, 5
          %v2228 = vsel %vm2204, %v2223, %v2227
          %v2230 = vshrl.u32 %v2157, 16
          %v2232 = vrot.slane %v2230, 4
          %v2233 = vshll.u32 %v2157, 16
          %v2235 = vrot.slane %v2233, 5
          %v2236 = vor.u32 %v2232, %v2235
          %v2237 = vrot.slane %v2236, 4
          %v2239 = vshll.u32 %v2158, 16
          %v2241 = vrot.slane %v2239, 5
          %v2242 = vsel %vm2204, %v2237, %v2241
          %v2243 = vshrl.u32 %v2158, 16
          %v2245 = vrot.slane %v2243, 4
          %v2246 = vor.u32 %v2245, %v2241
          %v2247 = vrot.slane %v2246, 4
          %v2249 = vshll.u32 %v2159, 16
          %v2251 = vrot.slane %v2249, 5
          %v2252 = vsel %vm2204, %v2247, %v2251
          %v2254 = vshrl.u32 %v2160, 16
          %v2256 = vrot.slane %v2254, 4
          %v2257 = vshll.u32 %v2160, 16
          %v2259 = vrot.slane %v2257, 5
          %v2260 = vor.u32 %v2256, %v2259
          %v2261 = vrot.slane %v2260, 4
          %v2263 = vshll.u32 %v2161, 16
          %v2265 = vrot.slane %v2263, 5
          %v2266 = vsel %vm2204, %v2261, %v2265
          %v2267 = vshrl.u32 %v2161, 16
          %v2269 = vrot.slane %v2267, 4
          %v2270 = vor.u32 %v2269, %v2265
          %v2271 = vrot.slane %v2270, 4
          %v2273 = vshll.u32 %v2162, 16
          %v2275 = vrot.slane %v2273, 5
          %v2276 = vsel %vm2204, %v2271, %v2275
          %v2278 = vshrl.u32 %v2163, 16
          %v2280 = vrot.slane %v2278, 4
          %v2281 = vshll.u32 %v2163, 16
          %v2283 = vrot.slane %v2281, 5
          %v2284 = vor.u32 %v2280, %v2283
          %v2285 = vrot.slane %v2284, 4
          %v2287 = vshll.u32 %v2164, 16
          %v2289 = vrot.slane %v2287, 5
          %v2290 = vsel %vm2204, %v2285, %v2289
          %v2291 = vshrl.u32 %v2164, 16
          %v2293 = vrot.slane %v2291, 4
          %v2294 = vor.u32 %v2293, %v2289
          %v2295 = vrot.slane %v2294, 4
          %v2297 = vshll.u32 %v2165, 16
          %v2299 = vrot.slane %v2297, 5
          %v2300 = vsel %vm2204, %v2295, %v2299
          %v2302 = vshrl.u32 %v2166, 16
          %v2304 = vrot.slane %v2302, 4
          %v2305 = vshll.u32 %v2166, 16
          %v2307 = vrot.slane %v2305, 5
          %v2308 = vor.u32 %v2304, %v2307
          %v2309 = vrot.slane %v2308, 4
          %v2311 = vshll.u32 %v2167, 16
          %v2313 = vrot.slane %v2311, 5
          %v2314 = vsel %vm2204, %v2309, %v2313
          %v2315 = vshrl.u32 %v2167, 16
          %v2317 = vrot.slane %v2315, 4
          %v2318 = vor.u32 %v2317, %v2313
          %v2319 = vrot.slane %v2318, 4
          %v2321 = vshll.u32 %v2168, 16
          %v2323 = vrot.slane %v2321, 5
          %v2324 = vsel %vm2204, %v2319, %v2323
          %v2326 = vshrl.u32 %v2169, 16
          %v2328 = vrot.slane %v2326, 4
          %v2329 = vshll.u32 %v2169, 16
          %v2331 = vrot.slane %v2329, 5
          %v2332 = vor.u32 %v2328, %v2331
          %v2333 = vrot.slane %v2332, 4
          %v2335 = vshll.u32 %v2170, 16
          %v2337 = vrot.slane %v2335, 5
          %v2338 = vsel %vm2204, %v2333, %v2337
          %v2339 = vshrl.u32 %v2170, 16
          %v2341 = vrot.slane %v2339, 4
          %v2342 = vor.u32 %v2341, %v2337
          %v2343 = vrot.slane %v2342, 4
          %v2345 = vshll.u32 %v2171, 16
          %v2347 = vrot.slane %v2345, 5
          %v2348 = vsel %vm2204, %v2343, %v2347
          %v2350 = vshrl.u32 %v2172, 16
          %v2352 = vrot.slane %v2350, 4
          %v2353 = vshll.u32 %v2172, 16
          %v2355 = vrot.slane %v2353, 5
          %v2356 = vor.u32 %v2352, %v2355
          %v2357 = vrot.slane %v2356, 4
          %v2359 = vshll.u32 %v2173, 16
          %v2361 = vrot.slane %v2359, 5
          %v2362 = vsel %vm2204, %v2357, %v2361
          %v2363 = vshrl.u32 %v2173, 16
          %v2365 = vrot.slane %v2363, 4
          %v2366 = vor.u32 %v2365, %v2361
          %v2367 = vrot.slane %v2366, 4
          %v2369 = vshll.u32 %v2174, 16
          %v2371 = vrot.slane %v2369, 5
          %v2372 = vsel %vm2204, %v2367, %v2371
          %v2374 = vshrl.u32 %v2175, 16
          %v2376 = vrot.slane %v2374, 4
          %v2377 = vshll.u32 %v2175, 16
          %v2379 = vrot.slane %v2377, 5
          %v2380 = vor.u32 %v2376, %v2379
          %v2381 = vrot.slane %v2380, 4
          %v2383 = vshll.u32 %v2176, 16
          %v2385 = vrot.slane %v2383, 5
          %v2386 = vsel %vm2204, %v2381, %v2385
          %v2387 = vshrl.u32 %v2176, 16
          %v2389 = vrot.slane %v2387, 4
          %v2390 = vor.u32 %v2389, %v2385
          %v2391 = vrot.slane %v2390, 4
          %v2393 = vshll.u32 %v2177, 16
          %v2395 = vrot.slane %v2393, 5
          %v2396 = vsel %vm2204, %v2391, %v2395
          %v2398 = vshrl.u32 %v2178, 16
          %v2400 = vrot.slane %v2398, 4
          %v2401 = vshll.u32 %v2178, 16
          %v2403 = vrot.slane %v2401, 5
          %v2404 = vor.u32 %v2400, %v2403
          %v2405 = vrot.slane %v2404, 4
          %v2407 = vshll.u32 %v2179, 16
          %v2409 = vrot.slane %v2407, 5
          %v2410 = vsel %vm2204, %v2405, %v2409
          %v2411 = vshrl.u32 %v2179, 16
          %v2413 = vrot.slane %v2411, 4
          %v2414 = vor.u32 %v2413, %v2409
          %v2415 = vrot.slane %v2414, 4
          %v2417 = vshll.u32 %v2180, 16
          %v2419 = vrot.slane %v2417, 5
          %v2420 = vsel %vm2204, %v2415, %v2419
          %v2422 = vshrl.u32 %v2181, 16
          %v2424 = vrot.slane %v2422, 4
          %v2425 = vshll.u32 %v2181, 16
          %v2427 = vrot.slane %v2425, 5
          %v2428 = vor.u32 %v2424, %v2427
          %v2429 = vrot.slane %v2428, 4
          %v2431 = vshll.u32 %v2182, 16
          %v2433 = vrot.slane %v2431, 5
          %v2434 = vsel %vm2204, %v2429, %v2433
          %v2435 = vshrl.u32 %v2182, 16
          %v2437 = vrot.slane %v2435, 4
          %v2438 = vor.u32 %v2437, %v2433
          %v2439 = vrot.slane %v2438, 4
          %v2441 = vshll.u32 %v2183, 16
          %v2443 = vrot.slane %v2441, 5
          %v2444 = vsel %vm2204, %v2439, %v2443
          %v2446 = vshrl.u32 %v2184, 16
          %v2448 = vrot.slane %v2446, 4
          %v2449 = vshll.u32 %v2184, 16
          %v2451 = vrot.slane %v2449, 5
          %v2452 = vor.u32 %v2448, %v2451
          %v2453 = vrot.slane %v2452, 4
          %v2455 = vshll.u32 %v2185, 16
          %v2457 = vrot.slane %v2455, 5
          %v2458 = vsel %vm2204, %v2453, %v2457
          %v2459 = vshrl.u32 %v2185, 16
          %v2461 = vrot.slane %v2459, 4
          %v2462 = vor.u32 %v2461, %v2457
          %v2463 = vrot.slane %v2462, 4
          %v2465 = vshll.u32 %v2186, 16
          %v2467 = vrot.slane %v2465, 5
          %v2468 = vsel %vm2204, %v2463, %v2467
          %v2470 = vshrl.u32 %v2187, 16
          %v2472 = vrot.slane %v2470, 4
          %v2473 = vshll.u32 %v2187, 16
          %v2475 = vrot.slane %v2473, 5
          %v2476 = vor.u32 %v2472, %v2475
          %v2477 = vrot.slane %v2476, 4
          %v2479 = vshll.u32 %v2188, 16
          %v2481 = vrot.slane %v2479, 5
          %v2482 = vsel %vm2204, %v2477, %v2481
          %v2483 = vshrl.u32 %v2188, 16
          %v2485 = vrot.slane %v2483, 4
          %v2486 = vor.u32 %v2485, %v2481
          %v2487 = vrot.slane %v2486, 4
          %v2489 = vshll.u32 %v2189, 16
          %v2491 = vrot.slane %v2489, 5
          %v2492 = vsel %vm2204, %v2487, %v2491
          %v2494 = vshrl.u32 %v2190, 16
          %v2496 = vrot.slane %v2494, 4
          %v2497 = vshll.u32 %v2190, 16
          %v2499 = vrot.slane %v2497, 5
          %v2500 = vor.u32 %v2496, %v2499
          %v2501 = vrot.slane %v2500, 4
          %v2503 = vshll.u32 %v2191, 16
          %v2505 = vrot.slane %v2503, 5
          %v2506 = vsel %vm2204, %v2501, %v2505
          %v2507 = vshrl.u32 %v2191, 16
          %v2509 = vrot.slane %v2507, 4
          %v2510 = vor.u32 %v2509, %v2505
          %v2511 = vrot.slane %v2510, 4
          %v2513 = vshll.u32 %v2192, 16
          %v2515 = vrot.slane %v2513, 5
          %v2516 = vsel %vm2204, %v2511, %v2515
          %v2518 = vshrl.u32 %v2193, 16
          %v2520 = vrot.slane %v2518, 4
          %v2521 = vshll.u32 %v2193, 16
          %v2523 = vrot.slane %v2521, 5
          %v2524 = vor.u32 %v2520, %v2523
          %v2525 = vrot.slane %v2524, 4
          %v2527 = vshll.u32 %v2194, 16
          %v2529 = vrot.slane %v2527, 5
          %v2530 = vsel %vm2204, %v2525, %v2529
          %v2531 = vshrl.u32 %v2194, 16
          %v2533 = vrot.slane %v2531, 4
          %v2534 = vor.u32 %v2533, %v2529
          %v2535 = vrot.slane %v2534, 4
          %v2537 = vshll.u32 %v2195, 16
          %v2539 = vrot.slane %v2537, 5
          %v2540 = vsel %vm2204, %v2535, %v2539
          %v2542 = vshrl.u32 %v2196, 16
          %v2544 = vrot.slane %v2542, 4
          %v2545 = vshll.u32 %v2196, 16
          %v2547 = vrot.slane %v2545, 5
          %v2548 = vor.u32 %v2544, %v2547
          %v2549 = vrot.slane %v2548, 4
          %v2551 = vshll.u32 %v2197, 16
          %v2553 = vrot.slane %v2551, 5
          %v2554 = vsel %vm2204, %v2549, %v2553
          %v2555 = vshrl.u32 %v2197, 16
          %v2557 = vrot.slane %v2555, 4
          %v2558 = vor.u32 %v2557, %v2553
          %v2559 = vrot.slane %v2558, 4
          %v2561 = vshll.u32 %v2198, 16
          %v2563 = vrot.slane %v2561, 5
          %v2564 = vsel %vm2204, %v2559, %v2563
          %v2566 = vshrl.u32 %v2199, 16
          %v2568 = vrot.slane %v2566, 4
          %v2569 = vshll.u32 %v2199, 16
          %v2571 = vrot.slane %v2569, 5
          %v2572 = vor.u32 %v2568, %v2571
          %v2573 = vrot.slane %v2572, 4
          %v2575 = vshll.u32 %v2200, 16
          %v2577 = vrot.slane %v2575, 5
          %v2578 = vsel %vm2204, %v2573, %v2577
          %v2579 = vshrl.u32 %v2200, 16
          %v2581 = vrot.slane %v2579, 4
          %v2582 = vor.u32 %v2581, %v2577
          %v2583 = vrot.slane %v2582, 4
          %v2585 = vshll.u32 %v2201, 16
          %v2587 = vrot.slane %v2585, 5
          %v2588 = vsel %vm2204, %v2583, %v2587
          %2589 = vrot.lane.b32.xlu0 %v2218, 64
          %v2590 = vpop.permute.xlu0 %2589
          %2591 = vrot.lane.b32.xlu0 %v2228, 64
          %v2592 = vpop.permute.xlu0 %2591
          %2593 = vrot.lane.b32.xlu0 %v2242, 64
          %v2594 = vpop.permute.xlu0 %2593
          %2595 = vrot.lane.b32.xlu0 %v2252, 64
          %v2596 = vpop.permute.xlu0 %2595
          %2597 = vrot.lane.b32.xlu0 %v2266, 64
          %v2598 = vpop.permute.xlu0 %2597
          %2599 = vrot.lane.b32.xlu0 %v2276, 64
          %v2600 = vpop.permute.xlu0 %2599
          %2601 = vrot.lane.b32.xlu0 %v2290, 64
          %v2602 = vpop.permute.xlu0 %2601
          %2603 = vrot.lane.b32.xlu0 %v2300, 64
          %v2604 = vpop.permute.xlu0 %2603
          %2605 = vrot.lane.b32.xlu0 %v2314, 64
          %v2606 = vpop.permute.xlu0 %2605
          %2607 = vrot.lane.b32.xlu0 %v2324, 64
          %v2608 = vpop.permute.xlu0 %2607
          %2609 = vrot.lane.b32.xlu0 %v2338, 64
          %v2610 = vpop.permute.xlu0 %2609
          %2611 = vrot.lane.b32.xlu0 %v2348, 64
          %v2612 = vpop.permute.xlu0 %2611
          %2613 = vrot.lane.b32.xlu0 %v2362, 64
          %v2614 = vpop.permute.xlu0 %2613
          %2615 = vrot.lane.b32.xlu0 %v2372, 64
          %v2616 = vpop.permute.xlu0 %2615
          %2617 = vrot.lane.b32.xlu0 %v2386, 64
          %v2618 = vpop.permute.xlu0 %2617
          %2619 = vrot.lane.b32.xlu0 %v2396, 64
          %v2620 = vpop.permute.xlu0 %2619
          %2621 = vrot.lane.b32.xlu0 %v2410, 64
          %v2622 = vpop.permute.xlu0 %2621
          %2623 = vrot.lane.b32.xlu0 %v2420, 64
          %v2624 = vpop.permute.xlu0 %2623
          %2625 = vrot.lane.b32.xlu0 %v2434, 64
          %v2626 = vpop.permute.xlu0 %2625
          %2627 = vrot.lane.b32.xlu0 %v2444, 64
          %v2628 = vpop.permute.xlu0 %2627
          %2629 = vrot.lane.b32.xlu0 %v2458, 64
          %v2630 = vpop.permute.xlu0 %2629
          %2631 = vrot.lane.b32.xlu0 %v2468, 64
          %v2632 = vpop.permute.xlu0 %2631
          %2633 = vrot.lane.b32.xlu0 %v2482, 64
          %v2634 = vpop.permute.xlu0 %2633
          %2635 = vrot.lane.b32.xlu0 %v2492, 64
          %v2636 = vpop.permute.xlu0 %2635
          %2637 = vrot.lane.b32.xlu0 %v2506, 64
          %v2638 = vpop.permute.xlu0 %2637
          %2639 = vrot.lane.b32.xlu0 %v2516, 64
          %v2640 = vpop.permute.xlu0 %2639
          %2641 = vrot.lane.b32.xlu0 %v2530, 64
          %v2642 = vpop.permute.xlu0 %2641
          %2643 = vrot.lane.b32.xlu0 %v2540, 64
          %v2644 = vpop.permute.xlu0 %2643
          %2645 = vrot.lane.b32.xlu0 %v2554, 64
          %v2646 = vpop.permute.xlu0 %2645
          %2647 = vrot.lane.b32.xlu0 %v2564, 64
          %v2648 = vpop.permute.xlu0 %2647
          %2649 = vrot.lane.b32.xlu0 %v2578, 64
          %v2650 = vpop.permute.xlu0 %2649
          %2651 = vrot.lane.b32.xlu0 %v2588, 64
          %v2652 = vpop.permute.xlu0 %2651
          %vm2685 = vcmask 1043968
          %2686 = vst.msk [vmem:[#allocation3] sm:$0xf] %vm2685, %v2590
          %2687 = vst.msk [vmem:[#allocation3 + $0x14] sm:$0xf] %vm2685, %v2592
          %2688 = vst.msk [vmem:[#allocation3 + $0x28] sm:$0xf] %vm2685, %v2594
          %2689 = vst.msk [vmem:[#allocation3 + $0x3c] sm:$0xf] %vm2685, %v2596
          %2690 = vst.msk [vmem:[#allocation3 + $0x50] sm:$0xf] %vm2685, %v2598
          %2691 = vst.msk [vmem:[#allocation3 + $0x64] sm:$0xf] %vm2685, %v2600
          %2692 = vst.msk [vmem:[#allocation3 + $0x78] sm:$0xf] %vm2685, %v2602
          %2693 = vst.msk [vmem:[#allocation3 + $0x8c] sm:$0xf] %vm2685, %v2604
          %2694 = vst.msk [vmem:[#allocation3 + $0xa0] sm:$0xf] %vm2685, %v2606
          %2695 = vst.msk [vmem:[#allocation3 + $0xb4] sm:$0xf] %vm2685, %v2608
          %2696 = vst.msk [vmem:[#allocation3 + $0xc8] sm:$0xf] %vm2685, %v2610
          %2697 = vst.msk [vmem:[#allocation3 + $0xdc] sm:$0xf] %vm2685, %v2612
          %2698 = vst.msk [vmem:[#allocation3 + $0xf0] sm:$0xf] %vm2685, %v2614
          %2699 = vst.msk [vmem:[#allocation3 + $0x104] sm:$0xf] %vm2685, %v2616
          %2700 = vst.msk [vmem:[#allocation3 + $0x118] sm:$0xf] %vm2685, %v2618
          %2701 = vst.msk [vmem:[#allocation3 + $0x12c] sm:$0xf] %vm2685, %v2620
          %2702 = vst.msk [vmem:[#allocation3 + $0x140] sm:$0xf] %vm2685, %v2622
          %2703 = vst.msk [vmem:[#allocation3 + $0x154] sm:$0xf] %vm2685, %v2624
          %2704 = vst.msk [vmem:[#allocation3 + $0x168] sm:$0xf] %vm2685, %v2626
          %2705 = vst.msk [vmem:[#allocation3 + $0x17c] sm:$0xf] %vm2685, %v2628
          %2706 = vst.msk [vmem:[#allocation3 + $0x190] sm:$0xf] %vm2685, %v2630
          %2707 = vst.msk [vmem:[#allocation3 + $0x1a4] sm:$0xf] %vm2685, %v2632
          %2708 = vst.msk [vmem:[#allocation3 + $0x1b8] sm:$0xf] %vm2685, %v2634
          %2709 = vst.msk [vmem:[#allocation3 + $0x1cc] sm:$0xf] %vm2685, %v2636
          %2710 = vst.msk [vmem:[#allocation3 + $0x1e0] sm:$0xf] %vm2685, %v2638
          %2711 = vst.msk [vmem:[#allocation3 + $0x1f4] sm:$0xf] %vm2685, %v2640
          %2712 = vst.msk [vmem:[#allocation3 + $0x208] sm:$0xf] %vm2685, %v2642
          %2713 = vst.msk [vmem:[#allocation3 + $0x21c] sm:$0xf] %vm2685, %v2644
          %2714 = vst.msk [vmem:[#allocation3 + $0x230] sm:$0xf] %vm2685, %v2646
          %2715 = vst.msk [vmem:[#allocation3 + $0x244] sm:$0xf] %vm2685, %v2648
          %2716 = vst.msk [vmem:[#allocation3 + $0x258] sm:$0xf] %vm2685, %v2650
          %2717 = vst.msk [vmem:[#allocation3 + $0x26c] sm:$0xf] %vm2685, %v2652
          %v2718 = vld [vmem:[#allocation2] sm:$0xe]
          %v2719 = vld [vmem:[#allocation2 + $0x4] sm:$0xf]
          %v2720 = vld [vmem:[#allocation2 + $0x8] sm:$0x1]
          %v2721 = vld [vmem:[#allocation2 + $0xc] sm:$0xe]
          %v2722 = vld [vmem:[#allocation2 + $0x10] sm:$0xf]
          %v2723 = vld [vmem:[#allocation2 + $0x14] sm:$0x1]
          %v2724 = vld [vmem:[#allocation2 + $0x18] sm:$0xe]
          %v2725 = vld [vmem:[#allocation2 + $0x1c] sm:$0xf]
          %v2726 = vld [vmem:[#allocation2 + $0x20] sm:$0x1]
          %v2727 = vld [vmem:[#allocation2 + $0x24] sm:$0xe]
          %v2728 = vld [vmem:[#allocation2 + $0x28] sm:$0xf]
          %v2729 = vld [vmem:[#allocation2 + $0x2c] sm:$0x1]
          %v2730 = vld [vmem:[#allocation2 + $0x30] sm:$0xe]
          %v2731 = vld [vmem:[#allocation2 + $0x34] sm:$0xf]
          %v2732 = vld [vmem:[#allocation2 + $0x38] sm:$0x1]
          %v2733 = vld [vmem:[#allocation2 + $0x3c] sm:$0xe]
          %v2734 = vld [vmem:[#allocation2 + $0x40] sm:$0xf]
          %v2735 = vld [vmem:[#allocation2 + $0x44] sm:$0x1]
          %v2736 = vld [vmem:[#allocation2 + $0x48] sm:$0xe]
          %v2737 = vld [vmem:[#allocation2 + $0x4c] sm:$0xf]
          %v2738 = vld [vmem:[#allocation2 + $0x50] sm:$0x1]
          %v2739 = vld [vmem:[#allocation2 + $0x54] sm:$0xe]
          %v2740 = vld [vmem:[#allocation2 + $0x58] sm:$0xf]
          %v2741 = vld [vmem:[#allocation2 + $0x5c] sm:$0x1]
          %v2742 = vld [vmem:[#allocation2 + $0x60] sm:$0xe]
          %v2743 = vld [vmem:[#allocation2 + $0x64] sm:$0xf]
          %v2744 = vld [vmem:[#allocation2 + $0x68] sm:$0x1]
          %v2745 = vld [vmem:[#allocation2 + $0x6c] sm:$0xe]
          %v2746 = vld [vmem:[#allocation2 + $0x70] sm:$0xf]
          %v2747 = vld [vmem:[#allocation2 + $0x74] sm:$0x1]
          %v2748 = vld [vmem:[#allocation2 + $0x78] sm:$0xe]
          %v2749 = vld [vmem:[#allocation2 + $0x7c] sm:$0xf]
          %v2750 = vld [vmem:[#allocation2 + $0x80] sm:$0x1]
          %v2751 = vld [vmem:[#allocation2 + $0x84] sm:$0xe]
          %v2752 = vld [vmem:[#allocation2 + $0x88] sm:$0xf]
          %v2753 = vld [vmem:[#allocation2 + $0x8c] sm:$0x1]
          %v2754 = vld [vmem:[#allocation2 + $0x90] sm:$0xe]
          %v2755 = vld [vmem:[#allocation2 + $0x94] sm:$0xf]
          %v2756 = vld [vmem:[#allocation2 + $0x98] sm:$0x1]
          %v2757 = vld [vmem:[#allocation2 + $0x9c] sm:$0xe]
          %v2758 = vld [vmem:[#allocation2 + $0xa0] sm:$0xf]
          %v2759 = vld [vmem:[#allocation2 + $0xa4] sm:$0x1]
          %v2760 = vld [vmem:[#allocation2 + $0xa8] sm:$0xe]
          %v2761 = vld [vmem:[#allocation2 + $0xac] sm:$0xf]
          %v2762 = vld [vmem:[#allocation2 + $0xb0] sm:$0x1]
          %v2763 = vld [vmem:[#allocation2 + $0xb4] sm:$0xe]
          %v2764 = vld [vmem:[#allocation2 + $0xb8] sm:$0xf]
          %v2765 = vld [vmem:[#allocation2 + $0xbc] sm:$0x1]
          %vm2814 = vcmask 1042432
          %vm2815 = vcmask 1046532
          %vm2816 = vmor %vm2814, %vm2815
          %v2817 = vrot.slane %v2718, 5
          %v2818 = vrot.slane %v2817, 4
          %v2819 = vrot.slane %v2719, 5
          %v2820 = vsel %vm2816, %v2818, %v2819
          %v2821 = vrot.slane %v2819, 4
          %v2822 = vrot.slane %v2720, 5
          %v2823 = vsel %vm2816, %v2821, %v2822
          %v2824 = vrot.slane %v2721, 5
          %v2825 = vrot.slane %v2824, 4
          %v2826 = vrot.slane %v2722, 5
          %v2827 = vsel %vm2816, %v2825, %v2826
          %v2828 = vrot.slane %v2826, 4
          %v2829 = vrot.slane %v2723, 5
          %v2830 = vsel %vm2816, %v2828, %v2829
          %v2831 = vrot.slane %v2724, 5
          %v2832 = vrot.slane %v2831, 4
          %v2833 = vrot.slane %v2725, 5
          %v2834 = vsel %vm2816, %v2832, %v2833
          %v2835 = vrot.slane %v2833, 4
          %v2836 = vrot.slane %v2726, 5
          %v2837 = vsel %vm2816, %v2835, %v2836
          %v2838 = vrot.slane %v2727, 5
          %v2839 = vrot.slane %v2838, 4
          %v2840 = vrot.slane %v2728, 5
          %v2841 = vsel %vm2816, %v2839, %v2840
          %v2842 = vrot.slane %v2840, 4
          %v2843 = vrot.slane %v2729, 5
          %v2844 = vsel %vm2816, %v2842, %v2843
          %v2845 = vrot.slane %v2730, 5
          %v2846 = vrot.slane %v2845, 4
          %v2847 = vrot.slane %v2731, 5
          %v2848 = vsel %vm2816, %v2846, %v2847
          %v2849 = vrot.slane %v2847, 4
          %v2850 = vrot.slane %v2732, 5
          %v2851 = vsel %vm2816, %v2849, %v2850
          %v2852 = vrot.slane %v2733, 5
          %v2853 = vrot.slane %v2852, 4
          %v2854 = vrot.slane %v2734, 5
          %v2855 = vsel %vm2816, %v2853, %v2854
          %v2856 = vrot.slane %v2854, 4
          %v2857 = vrot.slane %v2735, 5
          %v2858 = vsel %vm2816, %v2856, %v2857
          %v2859 = vrot.slane %v2736, 5
          %v2860 = vrot.slane %v2859, 4
          %v2861 = vrot.slane %v2737, 5
          %v2862 = vsel %vm2816, %v2860, %v2861
          %v2863 = vrot.slane %v2861, 4
          %v2864 = vrot.slane %v2738, 5
          %v2865 = vsel %vm2816, %v2863, %v2864
          %v2866 = vrot.slane %v2739, 5
          %v2867 = vrot.slane %v2866, 4
          %v2868 = vrot.slane %v2740, 5
          %v2869 = vsel %vm2816, %v2867, %v2868
          %v2870 = vrot.slane %v2868, 4
          %v2871 = vrot.slane %v2741, 5
          %v2872 = vsel %vm2816, %v2870, %v2871
          %v2873 = vrot.slane %v2742, 5
          %v2874 = vrot.slane %v2873, 4
          %v2875 = vrot.slane %v2743, 5
          %v2876 = vsel %vm2816, %v2874, %v2875
          %v2877 = vrot.slane %v2875, 4
          %v2878 = vrot.slane %v2744, 5
          %v2879 = vsel %vm2816, %v2877, %v2878
          %v2880 = vrot.slane %v2745, 5
          %v2881 = vrot.slane %v2880, 4
          %v2882 = vrot.slane %v2746, 5
          %v2883 = vsel %vm2816, %v2881, %v2882
          %v2884 = vrot.slane %v2882, 4
          %v2885 = vrot.slane %v2747, 5
          %v2886 = vsel %vm2816, %v2884, %v2885
          %v2887 = vrot.slane %v2748, 5
          %v2888 = vrot.slane %v2887, 4
          %v2889 = vrot.slane %v2749, 5
          %v2890 = vsel %vm2816, %v2888, %v2889
          %v2891 = vrot.slane %v2889, 4
          %v2892 = vrot.slane %v2750, 5
          %v2893 = vsel %vm2816, %v2891, %v2892
          %v2894 = vrot.slane %v2751, 5
          %v2895 = vrot.slane %v2894, 4
          %v2896 = vrot.slane %v2752, 5
          %v2897 = vsel %vm2816, %v2895, %v2896
          %v2898 = vrot.slane %v2896, 4
          %v2899 = vrot.slane %v2753, 5
          %v2900 = vsel %vm2816, %v2898, %v2899
          %v2901 = vrot.slane %v2754, 5
          %v2902 = vrot.slane %v2901, 4
          %v2903 = vrot.slane %v2755, 5
          %v2904 = vsel %vm2816, %v2902, %v2903
          %v2905 = vrot.slane %v2903, 4
          %v2906 = vrot.slane %v2756, 5
          %v2907 = vsel %vm2816, %v2905, %v2906
          %v2908 = vrot.slane %v2757, 5
          %v2909 = vrot.slane %v2908, 4
          %v2910 = vrot.slane %v2758, 5
          %v2911 = vsel %vm2816, %v2909, %v2910
          %v2912 = vrot.slane %v2910, 4
          %v2913 = vrot.slane %v2759, 5
          %v2914 = vsel %vm2816, %v2912, %v2913
          %v2915 = vrot.slane %v2760, 5
          %v2916 = vrot.slane %v2915, 4
          %v2917 = vrot.slane %v2761, 5
          %v2918 = vsel %vm2816, %v2916, %v2917
          %v2919 = vrot.slane %v2917, 4
          %v2920 = vrot.slane %v2762, 5
          %v2921 = vsel %vm2816, %v2919, %v2920
          %v2922 = vrot.slane %v2763, 5
          %v2923 = vrot.slane %v2922, 4
          %v2924 = vrot.slane %v2764, 5
          %v2925 = vsel %vm2816, %v2923, %v2924
          %v2926 = vrot.slane %v2924, 4
          %v2927 = vrot.slane %v2765, 5
          %v2928 = vsel %vm2816, %v2926, %v2927
          %2961 = vst.msk [vmem:[#allocation3 + $0x4] sm:$0xf] %vm197, %v2820
          %2962 = vst.msk [vmem:[#allocation3 + $0x18] sm:$0xf] %vm197, %v2823
          %2963 = vst.msk [vmem:[#allocation3 + $0x2c] sm:$0xf] %vm197, %v2827
          %2964 = vst.msk [vmem:[#allocation3 + $0x40] sm:$0xf] %vm197, %v2830
          %2965 = vst.msk [vmem:[#allocation3 + $0x54] sm:$0xf] %vm197, %v2834
          %2966 = vst.msk [vmem:[#allocation3 + $0x68] sm:$0xf] %vm197, %v2837
          %2967 = vst.msk [vmem:[#allocation3 + $0x7c] sm:$0xf] %vm197, %v2841
          %2968 = vst.msk [vmem:[#allocation3 + $0x90] sm:$0xf] %vm197, %v2844
          %2969 = vst.msk [vmem:[#allocation3 + $0xa4] sm:$0xf] %vm197, %v2848
          %2970 = vst.msk [vmem:[#allocation3 + $0xb8] sm:$0xf] %vm197, %v2851
          %2971 = vst.msk [vmem:[#allocation3 + $0xcc] sm:$0xf] %vm197, %v2855
          %2972 = vst.msk [vmem:[#allocation3 + $0xe0] sm:$0xf] %vm197, %v2858
          %2973 = vst.msk [vmem:[#allocation3 + $0xf4] sm:$0xf] %vm197, %v2862
          %2974 = vst.msk [vmem:[#allocation3 + $0x108] sm:$0xf] %vm197, %v2865
          %2975 = vst.msk [vmem:[#allocation3 + $0x11c] sm:$0xf] %vm197, %v2869
          %2976 = vst.msk [vmem:[#allocation3 + $0x130] sm:$0xf] %vm197, %v2872
          %2977 = vst.msk [vmem:[#allocation3 + $0x144] sm:$0xf] %vm197, %v2876
          %2978 = vst.msk [vmem:[#allocation3 + $0x158] sm:$0xf] %vm197, %v2879
          %2979 = vst.msk [vmem:[#allocation3 + $0x16c] sm:$0xf] %vm197, %v2883
          %2980 = vst.msk [vmem:[#allocation3 + $0x180] sm:$0xf] %vm197, %v2886
          %2981 = vst.msk [vmem:[#allocation3 + $0x194] sm:$0xf] %vm197, %v2890
          %2982 = vst.msk [vmem:[#allocation3 + $0x1a8] sm:$0xf] %vm197, %v2893
          %2983 = vst.msk [vmem:[#allocation3 + $0x1bc] sm:$0xf] %vm197, %v2897
          %2984 = vst.msk [vmem:[#allocation3 + $0x1d0] sm:$0xf] %vm197, %v2900
          %2985 = vst.msk [vmem:[#allocation3 + $0x1e4] sm:$0xf] %vm197, %v2904
          %2986 = vst.msk [vmem:[#allocation3 + $0x1f8] sm:$0xf] %vm197, %v2907
          %2987 = vst.msk [vmem:[#allocation3 + $0x20c] sm:$0xf] %vm197, %v2911
          %2988 = vst.msk [vmem:[#allocation3 + $0x220] sm:$0xf] %vm197, %v2914
          %2989 = vst.msk [vmem:[#allocation3 + $0x234] sm:$0xf] %vm197, %v2918
          %2990 = vst.msk [vmem:[#allocation3 + $0x248] sm:$0xf] %vm197, %v2921
          %2991 = vst.msk [vmem:[#allocation3 + $0x25c] sm:$0xf] %vm197, %v2925
          %2992 = vst.msk [vmem:[#allocation3 + $0x270] sm:$0xf] %vm197, %v2928
          %v2993 = vld [vmem:[%s1969] sm:$0xf]
          %v2994 = vld [vmem:[%s1969 + $0x4] sm:$0xf]
          %v2995 = vld [vmem:[%s1969 + $0xc] sm:$0xf]
          %v2996 = vld [vmem:[%s1969 + $0x10] sm:$0xf]
          %v2997 = vld [vmem:[%s1969 + $0x18] sm:$0xf]
          %v2998 = vld [vmem:[%s1969 + $0x1c] sm:$0xf]
          %v2999 = vld [vmem:[%s1969 + $0x24] sm:$0xf]
          %v3000 = vld [vmem:[%s1969 + $0x28] sm:$0xf]
          %v3001 = vld [vmem:[%s1969 + $0x30] sm:$0xf]
          %v3002 = vld [vmem:[%s1969 + $0x34] sm:$0xf]
          %v3003 = vld [vmem:[%s1969 + $0x3c] sm:$0xf]
          %v3004 = vld [vmem:[%s1969 + $0x40] sm:$0xf]
          %v3005 = vld [vmem:[%s1969 + $0x48] sm:$0xf]
          %v3006 = vld [vmem:[%s1969 + $0x4c] sm:$0xf]
          %v3007 = vld [vmem:[%s1969 + $0x54] sm:$0xf]
          %v3008 = vld [vmem:[%s1969 + $0x58] sm:$0xf]
          %v3009 = vld [vmem:[%s1969 + $0x60] sm:$0xf]
          %v3010 = vld [vmem:[%s1969 + $0x64] sm:$0xf]
          %v3011 = vld [vmem:[%s1969 + $0x6c] sm:$0xf]
          %v3012 = vld [vmem:[%s1969 + $0x70] sm:$0xf]
          %v3013 = vld [vmem:[%s1969 + $0x78] sm:$0xf]
          %v3014 = vld [vmem:[%s1969 + $0x7c] sm:$0xf]
          %v3015 = vld [vmem:[%s1969 + $0x84] sm:$0xf]
          %v3016 = vld [vmem:[%s1969 + $0x88] sm:$0xf]
          %v3017 = vld [vmem:[%s1969 + $0x90] sm:$0xf]
          %v3018 = vld [vmem:[%s1969 + $0x94] sm:$0xf]
          %v3019 = vld [vmem:[%s1969 + $0x9c] sm:$0xf]
          %v3020 = vld [vmem:[%s1969 + $0xa0] sm:$0xf]
          %v3021 = vld [vmem:[%s1969 + $0xa8] sm:$0xf]
          %v3022 = vld [vmem:[%s1969 + $0xac] sm:$0xf]
          %v3023 = vld [vmem:[%s1969 + $0xb4] sm:$0xf]
          %v3024 = vld [vmem:[%s1969 + $0xb8] sm:$0xf]
          %3057 = vrot.lane.b32.xlu0 %v2993, 64
          %v3058 = vpop.permute.xlu0 %3057
          %3059 = vrot.lane.b32.xlu0 %v2994, 64
          %v3060 = vpop.permute.xlu0 %3059
          %3061 = vrot.lane.b32.xlu0 %v2995, 64
          %v3062 = vpop.permute.xlu0 %3061
          %3063 = vrot.lane.b32.xlu0 %v2996, 64
          %v3064 = vpop.permute.xlu0 %3063
          %3065 = vrot.lane.b32.xlu0 %v2997, 64
          %v3066 = vpop.permute.xlu0 %3065
          %3067 = vrot.lane.b32.xlu0 %v2998, 64
          %v3068 = vpop.permute.xlu0 %3067
          %3069 = vrot.lane.b32.xlu0 %v2999, 64
          %v3070 = vpop.permute.xlu0 %3069
          %3071 = vrot.lane.b32.xlu0 %v3000, 64
          %v3072 = vpop.permute.xlu0 %3071
          %3073 = vrot.lane.b32.xlu0 %v3001, 64
          %v3074 = vpop.permute.xlu0 %3073
          %3075 = vrot.lane.b32.xlu0 %v3002, 64
          %v3076 = vpop.permute.xlu0 %3075
          %3077 = vrot.lane.b32.xlu0 %v3003, 64
          %v3078 = vpop.permute.xlu0 %3077
          %3079 = vrot.lane.b32.xlu0 %v3004, 64
          %v3080 = vpop.permute.xlu0 %3079
          %3081 = vrot.lane.b32.xlu0 %v3005, 64
          %v3082 = vpop.permute.xlu0 %3081
          %3083 = vrot.lane.b32.xlu0 %v3006, 64
          %v3084 = vpop.permute.xlu0 %3083
          %3085 = vrot.lane.b32.xlu0 %v3007, 64
          %v3086 = vpop.permute.xlu0 %3085
          %3087 = vrot.lane.b32.xlu0 %v3008, 64
          %v3088 = vpop.permute.xlu0 %3087
          %3089 = vrot.lane.b32.xlu0 %v3009, 64
          %v3090 = vpop.permute.xlu0 %3089
          %3091 = vrot.lane.b32.xlu0 %v3010, 64
          %v3092 = vpop.permute.xlu0 %3091
          %3093 = vrot.lane.b32.xlu0 %v3011, 64
          %v3094 = vpop.permute.xlu0 %3093
          %3095 = vrot.lane.b32.xlu0 %v3012, 64
          %v3096 = vpop.permute.xlu0 %3095
          %3097 = vrot.lane.b32.xlu0 %v3013, 64
          %v3098 = vpop.permute.xlu0 %3097
          %3099 = vrot.lane.b32.xlu0 %v3014, 64
          %v3100 = vpop.permute.xlu0 %3099
          %3101 = vrot.lane.b32.xlu0 %v3015, 64
          %v3102 = vpop.permute.xlu0 %3101
          %3103 = vrot.lane.b32.xlu0 %v3016, 64
          %v3104 = vpop.permute.xlu0 %3103
          %3105 = vrot.lane.b32.xlu0 %v3017, 64
          %v3106 = vpop.permute.xlu0 %3105
          %3107 = vrot.lane.b32.xlu0 %v3018, 64
          %v3108 = vpop.permute.xlu0 %3107
          %3109 = vrot.lane.b32.xlu0 %v3019, 64
          %v3110 = vpop.permute.xlu0 %3109
          %3111 = vrot.lane.b32.xlu0 %v3020, 64
          %v3112 = vpop.permute.xlu0 %3111
          %3113 = vrot.lane.b32.xlu0 %v3021, 64
          %v3114 = vpop.permute.xlu0 %3113
          %3115 = vrot.lane.b32.xlu0 %v3022, 64
          %v3116 = vpop.permute.xlu0 %3115
          %3117 = vrot.lane.b32.xlu0 %v3023, 64
          %v3118 = vpop.permute.xlu0 %3117
          %3119 = vrot.lane.b32.xlu0 %v3024, 64
          %v3120 = vpop.permute.xlu0 %3119
          %3153 = vst.msk [vmem:[#allocation3 + $0x4] sm:$0xf] %vm2685, %v3058
          %3154 = vst.msk [vmem:[#allocation3 + $0x18] sm:$0xf] %vm2685, %v3060
          %3155 = vst.msk [vmem:[#allocation3 + $0x2c] sm:$0xf] %vm2685, %v3062
          %3156 = vst.msk [vmem:[#allocation3 + $0x40] sm:$0xf] %vm2685, %v3064
          %3157 = vst.msk [vmem:[#allocation3 + $0x54] sm:$0xf] %vm2685, %v3066
          %3158 = vst.msk [vmem:[#allocation3 + $0x68] sm:$0xf] %vm2685, %v3068
          %3159 = vst.msk [vmem:[#allocation3 + $0x7c] sm:$0xf] %vm2685, %v3070
          %3160 = vst.msk [vmem:[#allocation3 + $0x90] sm:$0xf] %vm2685, %v3072
          %3161 = vst.msk [vmem:[#allocation3 + $0xa4] sm:$0xf] %vm2685, %v3074
          %3162 = vst.msk [vmem:[#allocation3 + $0xb8] sm:$0xf] %vm2685, %v3076
          %3163 = vst.msk [vmem:[#allocation3 + $0xcc] sm:$0xf] %vm2685, %v3078
          %3164 = vst.msk [vmem:[#allocation3 + $0xe0] sm:$0xf] %vm2685, %v3080
          %3165 = vst.msk [vmem:[#allocation3 + $0xf4] sm:$0xf] %vm2685, %v3082
          %3166 = vst.msk [vmem:[#allocation3 + $0x108] sm:$0xf] %vm2685, %v3084
          %3167 = vst.msk [vmem:[#allocation3 + $0x11c] sm:$0xf] %vm2685, %v3086
          %3168 = vst.msk [vmem:[#allocation3 + $0x130] sm:$0xf] %vm2685, %v3088
          %3169 = vst.msk [vmem:[#allocation3 + $0x144] sm:$0xf] %vm2685, %v3090
          %3170 = vst.msk [vmem:[#allocation3 + $0x158] sm:$0xf] %vm2685, %v3092
          %3171 = vst.msk [vmem:[#allocation3 + $0x16c] sm:$0xf] %vm2685, %v3094
          %3172 = vst.msk [vmem:[#allocation3 + $0x180] sm:$0xf] %vm2685, %v3096
          %3173 = vst.msk [vmem:[#allocation3 + $0x194] sm:$0xf] %vm2685, %v3098
          %3174 = vst.msk [vmem:[#allocation3 + $0x1a8] sm:$0xf] %vm2685, %v3100
          %3175 = vst.msk [vmem:[#allocation3 + $0x1bc] sm:$0xf] %vm2685, %v3102
          %3176 = vst.msk [vmem:[#allocation3 + $0x1d0] sm:$0xf] %vm2685, %v3104
          %3177 = vst.msk [vmem:[#allocation3 + $0x1e4] sm:$0xf] %vm2685, %v3106
          %3178 = vst.msk [vmem:[#allocation3 + $0x1f8] sm:$0xf] %vm2685, %v3108
          %3179 = vst.msk [vmem:[#allocation3 + $0x20c] sm:$0xf] %vm2685, %v3110
          %3180 = vst.msk [vmem:[#allocation3 + $0x220] sm:$0xf] %vm2685, %v3112
          %3181 = vst.msk [vmem:[#allocation3 + $0x234] sm:$0xf] %vm2685, %v3114
          %3182 = vst.msk [vmem:[#allocation3 + $0x248] sm:$0xf] %vm2685, %v3116
          %3183 = vst.msk [vmem:[#allocation3 + $0x25c] sm:$0xf] %vm2685, %v3118
          %3184 = vst.msk [vmem:[#allocation3 + $0x270] sm:$0xf] %vm2685, %v3120
          %v3185 = vld [vmem:[%s1969] sm:$0xf]
          %v3186 = vld [vmem:[%s1969 + $0x4] sm:$0xf]
          %v3187 = vld [vmem:[%s1969 + $0x8] sm:$0x1]
          %v3188 = vld [vmem:[%s1969 + $0xc] sm:$0xf]
          %v3189 = vld [vmem:[%s1969 + $0x10] sm:$0xf]
          %v3190 = vld [vmem:[%s1969 + $0x14] sm:$0x1]
          %v3191 = vld [vmem:[%s1969 + $0x18] sm:$0xf]
          %v3192 = vld [vmem:[%s1969 + $0x1c] sm:$0xf]
          %v3193 = vld [vmem:[%s1969 + $0x20] sm:$0x1]
          %v3194 = vld [vmem:[%s1969 + $0x24] sm:$0xf]
          %v3195 = vld [vmem:[%s1969 + $0x28] sm:$0xf]
          %v3196 = vld [vmem:[%s1969 + $0x2c] sm:$0x1]
          %v3197 = vld [vmem:[%s1969 + $0x30] sm:$0xf]
          %v3198 = vld [vmem:[%s1969 + $0x34] sm:$0xf]
          %v3199 = vld [vmem:[%s1969 + $0x38] sm:$0x1]
          %v3200 = vld [vmem:[%s1969 + $0x3c] sm:$0xf]
          %v3201 = vld [vmem:[%s1969 + $0x40] sm:$0xf]
          %v3202 = vld [vmem:[%s1969 + $0x44] sm:$0x1]
          %v3203 = vld [vmem:[%s1969 + $0x48] sm:$0xf]
          %v3204 = vld [vmem:[%s1969 + $0x4c] sm:$0xf]
          %v3205 = vld [vmem:[%s1969 + $0x50] sm:$0x1]
          %v3206 = vld [vmem:[%s1969 + $0x54] sm:$0xf]
          %v3207 = vld [vmem:[%s1969 + $0x58] sm:$0xf]
          %v3208 = vld [vmem:[%s1969 + $0x5c] sm:$0x1]
          %v3209 = vld [vmem:[%s1969 + $0x60] sm:$0xf]
          %v3210 = vld [vmem:[%s1969 + $0x64] sm:$0xf]
          %v3211 = vld [vmem:[%s1969 + $0x68] sm:$0x1]
          %v3212 = vld [vmem:[%s1969 + $0x6c] sm:$0xf]
          %v3213 = vld [vmem:[%s1969 + $0x70] sm:$0xf]
          %v3214 = vld [vmem:[%s1969 + $0x74] sm:$0x1]
          %v3215 = vld [vmem:[%s1969 + $0x78] sm:$0xf]
          %v3216 = vld [vmem:[%s1969 + $0x7c] sm:$0xf]
          %v3217 = vld [vmem:[%s1969 + $0x80] sm:$0x1]
          %v3218 = vld [vmem:[%s1969 + $0x84] sm:$0xf]
          %v3219 = vld [vmem:[%s1969 + $0x88] sm:$0xf]
          %v3220 = vld [vmem:[%s1969 + $0x8c] sm:$0x1]
          %v3221 = vld [vmem:[%s1969 + $0x90] sm:$0xf]
          %v3222 = vld [vmem:[%s1969 + $0x94] sm:$0xf]
          %v3223 = vld [vmem:[%s1969 + $0x98] sm:$0x1]
          %v3224 = vld [vmem:[%s1969 + $0x9c] sm:$0xf]
          %v3225 = vld [vmem:[%s1969 + $0xa0] sm:$0xf]
          %v3226 = vld [vmem:[%s1969 + $0xa4] sm:$0x1]
          %v3227 = vld [vmem:[%s1969 + $0xa8] sm:$0xf]
          %v3228 = vld [vmem:[%s1969 + $0xac] sm:$0xf]
          %v3229 = vld [vmem:[%s1969 + $0xb0] sm:$0x1]
          %v3230 = vld [vmem:[%s1969 + $0xb4] sm:$0xf]
          %v3231 = vld [vmem:[%s1969 + $0xb8] sm:$0xf]
          %v3232 = vld [vmem:[%s1969 + $0xbc] sm:$0x1]
          %v3234 = vshrl.u32 %v3185, 16
          %v3236 = vrot.slane %v3234, 4
          %v3237 = vshll.u32 %v3185, 16
          %v3239 = vrot.slane %v3237, 5
          %v3240 = vor.u32 %v3236, %v3239
          %v3241 = vrot.slane %v3240, 4
          %v3243 = vshll.u32 %v3186, 16
          %v3245 = vrot.slane %v3243, 5
          %v3246 = vsel %vm2204, %v3241, %v3245
          %v3247 = vshrl.u32 %v3186, 16
          %v3249 = vrot.slane %v3247, 4
          %v3250 = vor.u32 %v3249, %v3245
          %v3251 = vrot.slane %v3250, 4
          %v3253 = vshll.u32 %v3187, 16
          %v3255 = vrot.slane %v3253, 5
          %v3256 = vsel %vm2204, %v3251, %v3255
          %v3258 = vshrl.u32 %v3188, 16
          %v3260 = vrot.slane %v3258, 4
          %v3261 = vshll.u32 %v3188, 16
          %v3263 = vrot.slane %v3261, 5
          %v3264 = vor.u32 %v3260, %v3263
          %v3265 = vrot.slane %v3264, 4
          %v3267 = vshll.u32 %v3189, 16
          %v3269 = vrot.slane %v3267, 5
          %v3270 = vsel %vm2204, %v3265, %v3269
          %v3271 = vshrl.u32 %v3189, 16
          %v3273 = vrot.slane %v3271, 4
          %v3274 = vor.u32 %v3273, %v3269
          %v3275 = vrot.slane %v3274, 4
          %v3277 = vshll.u32 %v3190, 16
          %v3279 = vrot.slane %v3277, 5
          %v3280 = vsel %vm2204, %v3275, %v3279
          %v3282 = vshrl.u32 %v3191, 16
          %v3284 = vrot.slane %v3282, 4
          %v3285 = vshll.u32 %v3191, 16
          %v3287 = vrot.slane %v3285, 5
          %v3288 = vor.u32 %v3284, %v3287
          %v3289 = vrot.slane %v3288, 4
          %v3291 = vshll.u32 %v3192, 16
          %v3293 = vrot.slane %v3291, 5
          %v3294 = vsel %vm2204, %v3289, %v3293
          %v3295 = vshrl.u32 %v3192, 16
          %v3297 = vrot.slane %v3295, 4
          %v3298 = vor.u32 %v3297, %v3293
          %v3299 = vrot.slane %v3298, 4
          %v3301 = vshll.u32 %v3193, 16
          %v3303 = vrot.slane %v3301, 5
          %v3304 = vsel %vm2204, %v3299, %v3303
          %v3306 = vshrl.u32 %v3194, 16
          %v3308 = vrot.slane %v3306, 4
          %v3309 = vshll.u32 %v3194, 16
          %v3311 = vrot.slane %v3309, 5
          %v3312 = vor.u32 %v3308, %v3311
          %v3313 = vrot.slane %v3312, 4
          %v3315 = vshll.u32 %v3195, 16
          %v3317 = vrot.slane %v3315, 5
          %v3318 = vsel %vm2204, %v3313, %v3317
          %v3319 = vshrl.u32 %v3195, 16
          %v3321 = vrot.slane %v3319, 4
          %v3322 = vor.u32 %v3321, %v3317
          %v3323 = vrot.slane %v3322, 4
          %v3325 = vshll.u32 %v3196, 16
          %v3327 = vrot.slane %v3325, 5
          %v3328 = vsel %vm2204, %v3323, %v3327
          %v3330 = vshrl.u32 %v3197, 16
          %v3332 = vrot.slane %v3330, 4
          %v3333 = vshll.u32 %v3197, 16
          %v3335 = vrot.slane %v3333, 5
          %v3336 = vor.u32 %v3332, %v3335
          %v3337 = vrot.slane %v3336, 4
          %v3339 = vshll.u32 %v3198, 16
          %v3341 = vrot.slane %v3339, 5
          %v3342 = vsel %vm2204, %v3337, %v3341
          %v3343 = vshrl.u32 %v3198, 16
          %v3345 = vrot.slane %v3343, 4
          %v3346 = vor.u32 %v3345, %v3341
          %v3347 = vrot.slane %v3346, 4
          %v3349 = vshll.u32 %v3199, 16
          %v3351 = vrot.slane %v3349, 5
          %v3352 = vsel %vm2204, %v3347, %v3351
          %v3354 = vshrl.u32 %v3200, 16
          %v3356 = vrot.slane %v3354, 4
          %v3357 = vshll.u32 %v3200, 16
          %v3359 = vrot.slane %v3357, 5
          %v3360 = vor.u32 %v3356, %v3359
          %v3361 = vrot.slane %v3360, 4
          %v3363 = vshll.u32 %v3201, 16
          %v3365 = vrot.slane %v3363, 5
          %v3366 = vsel %vm2204, %v3361, %v3365
          %v3367 = vshrl.u32 %v3201, 16
          %v3369 = vrot.slane %v3367, 4
          %v3370 = vor.u32 %v3369, %v3365
          %v3371 = vrot.slane %v3370, 4
          %v3373 = vshll.u32 %v3202, 16
          %v3375 = vrot.slane %v3373, 5
          %v3376 = vsel %vm2204, %v3371, %v3375
          %v3378 = vshrl.u32 %v3203, 16
          %v3380 = vrot.slane %v3378, 4
          %v3381 = vshll.u32 %v3203, 16
          %v3383 = vrot.slane %v3381, 5
          %v3384 = vor.u32 %v3380, %v3383
          %v3385 = vrot.slane %v3384, 4
          %v3387 = vshll.u32 %v3204, 16
          %v3389 = vrot.slane %v3387, 5
          %v3390 = vsel %vm2204, %v3385, %v3389
          %v3391 = vshrl.u32 %v3204, 16
          %v3393 = vrot.slane %v3391, 4
          %v3394 = vor.u32 %v3393, %v3389
          %v3395 = vrot.slane %v3394, 4
          %v3397 = vshll.u32 %v3205, 16
          %v3399 = vrot.slane %v3397, 5
          %v3400 = vsel %vm2204, %v3395, %v3399
          %v3402 = vshrl.u32 %v3206, 16
          %v3404 = vrot.slane %v3402, 4
          %v3405 = vshll.u32 %v3206, 16
          %v3407 = vrot.slane %v3405, 5
          %v3408 = vor.u32 %v3404, %v3407
          %v3409 = vrot.slane %v3408, 4
          %v3411 = vshll.u32 %v3207, 16
          %v3413 = vrot.slane %v3411, 5
          %v3414 = vsel %vm2204, %v3409, %v3413
          %v3415 = vshrl.u32 %v3207, 16
          %v3417 = vrot.slane %v3415, 4
          %v3418 = vor.u32 %v3417, %v3413
          %v3419 = vrot.slane %v3418, 4
          %v3421 = vshll.u32 %v3208, 16
          %v3423 = vrot.slane %v3421, 5
          %v3424 = vsel %vm2204, %v3419, %v3423
          %v3426 = vshrl.u32 %v3209, 16
          %v3428 = vrot.slane %v3426, 4
          %v3429 = vshll.u32 %v3209, 16
          %v3431 = vrot.slane %v3429, 5
          %v3432 = vor.u32 %v3428, %v3431
          %v3433 = vrot.slane %v3432, 4
          %v3435 = vshll.u32 %v3210, 16
          %v3437 = vrot.slane %v3435, 5
          %v3438 = vsel %vm2204, %v3433, %v3437
          %v3439 = vshrl.u32 %v3210, 16
          %v3441 = vrot.slane %v3439, 4
          %v3442 = vor.u32 %v3441, %v3437
          %v3443 = vrot.slane %v3442, 4
          %v3445 = vshll.u32 %v3211, 16
          %v3447 = vrot.slane %v3445, 5
          %v3448 = vsel %vm2204, %v3443, %v3447
          %v3450 = vshrl.u32 %v3212, 16
          %v3452 = vrot.slane %v3450, 4
          %v3453 = vshll.u32 %v3212, 16
          %v3455 = vrot.slane %v3453, 5
          %v3456 = vor.u32 %v3452, %v3455
          %v3457 = vrot.slane %v3456, 4
          %v3459 = vshll.u32 %v3213, 16
          %v3461 = vrot.slane %v3459, 5
          %v3462 = vsel %vm2204, %v3457, %v3461
          %v3463 = vshrl.u32 %v3213, 16
          %v3465 = vrot.slane %v3463, 4
          %v3466 = vor.u32 %v3465, %v3461
          %v3467 = vrot.slane %v3466, 4
          %v3469 = vshll.u32 %v3214, 16
          %v3471 = vrot.slane %v3469, 5
          %v3472 = vsel %vm2204, %v3467, %v3471
          %v3474 = vshrl.u32 %v3215, 16
          %v3476 = vrot.slane %v3474, 4
          %v3477 = vshll.u32 %v3215, 16
          %v3479 = vrot.slane %v3477, 5
          %v3480 = vor.u32 %v3476, %v3479
          %v3481 = vrot.slane %v3480, 4
          %v3483 = vshll.u32 %v3216, 16
          %v3485 = vrot.slane %v3483, 5
          %v3486 = vsel %vm2204, %v3481, %v3485
          %v3487 = vshrl.u32 %v3216, 16
          %v3489 = vrot.slane %v3487, 4
          %v3490 = vor.u32 %v3489, %v3485
          %v3491 = vrot.slane %v3490, 4
          %v3493 = vshll.u32 %v3217, 16
          %v3495 = vrot.slane %v3493, 5
          %v3496 = vsel %vm2204, %v3491, %v3495
          %v3498 = vshrl.u32 %v3218, 16
          %v3500 = vrot.slane %v3498, 4
          %v3501 = vshll.u32 %v3218, 16
          %v3503 = vrot.slane %v3501, 5
          %v3504 = vor.u32 %v3500, %v3503
          %v3505 = vrot.slane %v3504, 4
          %v3507 = vshll.u32 %v3219, 16
          %v3509 = vrot.slane %v3507, 5
          %v3510 = vsel %vm2204, %v3505, %v3509
          %v3511 = vshrl.u32 %v3219, 16
          %v3513 = vrot.slane %v3511, 4
          %v3514 = vor.u32 %v3513, %v3509
          %v3515 = vrot.slane %v3514, 4
          %v3517 = vshll.u32 %v3220, 16
          %v3519 = vrot.slane %v3517, 5
          %v3520 = vsel %vm2204, %v3515, %v3519
          %v3522 = vshrl.u32 %v3221, 16
          %v3524 = vrot.slane %v3522, 4
          %v3525 = vshll.u32 %v3221, 16
          %v3527 = vrot.slane %v3525, 5
          %v3528 = vor.u32 %v3524, %v3527
          %v3529 = vrot.slane %v3528, 4
          %v3531 = vshll.u32 %v3222, 16
          %v3533 = vrot.slane %v3531, 5
          %v3534 = vsel %vm2204, %v3529, %v3533
          %v3535 = vshrl.u32 %v3222, 16
          %v3537 = vrot.slane %v3535, 4
          %v3538 = vor.u32 %v3537, %v3533
          %v3539 = vrot.slane %v3538, 4
          %v3541 = vshll.u32 %v3223, 16
          %v3543 = vrot.slane %v3541, 5
          %v3544 = vsel %vm2204, %v3539, %v3543
          %v3546 = vshrl.u32 %v3224, 16
          %v3548 = vrot.slane %v3546, 4
          %v3549 = vshll.u32 %v3224, 16
          %v3551 = vrot.slane %v3549, 5
          %v3552 = vor.u32 %v3548, %v3551
          %v3553 = vrot.slane %v3552, 4
          %v3555 = vshll.u32 %v3225, 16
          %v3557 = vrot.slane %v3555, 5
          %v3558 = vsel %vm2204, %v3553, %v3557
          %v3559 = vshrl.u32 %v3225, 16
          %v3561 = vrot.slane %v3559, 4
          %v3562 = vor.u32 %v3561, %v3557
          %v3563 = vrot.slane %v3562, 4
          %v3565 = vshll.u32 %v3226, 16
          %v3567 = vrot.slane %v3565, 5
          %v3568 = vsel %vm2204, %v3563, %v3567
          %v3570 = vshrl.u32 %v3227, 16
          %v3572 = vrot.slane %v3570, 4
          %v3573 = vshll.u32 %v3227, 16
          %v3575 = vrot.slane %v3573, 5
          %v3576 = vor.u32 %v3572, %v3575
          %v3577 = vrot.slane %v3576, 4
          %v3579 = vshll.u32 %v3228, 16
          %v3581 = vrot.slane %v3579, 5
          %v3582 = vsel %vm2204, %v3577, %v3581
          %v3583 = vshrl.u32 %v3228, 16
          %v3585 = vrot.slane %v3583, 4
          %v3586 = vor.u32 %v3585, %v3581
          %v3587 = vrot.slane %v3586, 4
          %v3589 = vshll.u32 %v3229, 16
          %v3591 = vrot.slane %v3589, 5
          %v3592 = vsel %vm2204, %v3587, %v3591
          %v3594 = vshrl.u32 %v3230, 16
          %v3596 = vrot.slane %v3594, 4
          %v3597 = vshll.u32 %v3230, 16
          %v3599 = vrot.slane %v3597, 5
          %v3600 = vor.u32 %v3596, %v3599
          %v3601 = vrot.slane %v3600, 4
          %v3603 = vshll.u32 %v3231, 16
          %v3605 = vrot.slane %v3603, 5
          %v3606 = vsel %vm2204, %v3601, %v3605
          %v3607 = vshrl.u32 %v3231, 16
          %v3609 = vrot.slane %v3607, 4
          %v3610 = vor.u32 %v3609, %v3605
          %v3611 = vrot.slane %v3610, 4
          %v3613 = vshll.u32 %v3232, 16
          %v3615 = vrot.slane %v3613, 5
          %v3616 = vsel %vm2204, %v3611, %v3615
          %3649 = vst.msk [vmem:[#allocation3 + $0x8] sm:$0xf] %vm197, %v3246
          %3650 = vst.msk [vmem:[#allocation3 + $0x1c] sm:$0xf] %vm197, %v3256
          %3651 = vst.msk [vmem:[#allocation3 + $0x30] sm:$0xf] %vm197, %v3270
          %3652 = vst.msk [vmem:[#allocation3 + $0x44] sm:$0xf] %vm197, %v3280
          %3653 = vst.msk [vmem:[#allocation3 + $0x58] sm:$0xf] %vm197, %v3294
          %3654 = vst.msk [vmem:[#allocation3 + $0x6c] sm:$0xf] %vm197, %v3304
          %3655 = vst.msk [vmem:[#allocation3 + $0x80] sm:$0xf] %vm197, %v3318
          %3656 = vst.msk [vmem:[#allocation3 + $0x94] sm:$0xf] %vm197, %v3328
          %3657 = vst.msk [vmem:[#allocation3 + $0xa8] sm:$0xf] %vm197, %v3342
          %3658 = vst.msk [vmem:[#allocation3 + $0xbc] sm:$0xf] %vm197, %v3352
          %3659 = vst.msk [vmem:[#allocation3 + $0xd0] sm:$0xf] %vm197, %v3366
          %3660 = vst.msk [vmem:[#allocation3 + $0xe4] sm:$0xf] %vm197, %v3376
          %3661 = vst.msk [vmem:[#allocation3 + $0xf8] sm:$0xf] %vm197, %v3390
          %3662 = vst.msk [vmem:[#allocation3 + $0x10c] sm:$0xf] %vm197, %v3400
          %3663 = vst.msk [vmem:[#allocation3 + $0x120] sm:$0xf] %vm197, %v3414
          %3664 = vst.msk [vmem:[#allocation3 + $0x134] sm:$0xf] %vm197, %v3424
          %3665 = vst.msk [vmem:[#allocation3 + $0x148] sm:$0xf] %vm197, %v3438
          %3666 = vst.msk [vmem:[#allocation3 + $0x15c] sm:$0xf] %vm197, %v3448
          %3667 = vst.msk [vmem:[#allocation3 + $0x170] sm:$0xf] %vm197, %v3462
          %3668 = vst.msk [vmem:[#allocation3 + $0x184] sm:$0xf] %vm197, %v3472
          %3669 = vst.msk [vmem:[#allocation3 + $0x198] sm:$0xf] %vm197, %v3486
          %3670 = vst.msk [vmem:[#allocation3 + $0x1ac] sm:$0xf] %vm197, %v3496
          %3671 = vst.msk [vmem:[#allocation3 + $0x1c0] sm:$0xf] %vm197, %v3510
          %3672 = vst.msk [vmem:[#allocation3 + $0x1d4] sm:$0xf] %vm197, %v3520
          %3673 = vst.msk [vmem:[#allocation3 + $0x1e8] sm:$0xf] %vm197, %v3534
          %3674 = vst.msk [vmem:[#allocation3 + $0x1fc] sm:$0xf] %vm197, %v3544
          %3675 = vst.msk [vmem:[#allocation3 + $0x210] sm:$0xf] %vm197, %v3558
          %3676 = vst.msk [vmem:[#allocation3 + $0x224] sm:$0xf] %vm197, %v3568
          %3677 = vst.msk [vmem:[#allocation3 + $0x238] sm:$0xf] %vm197, %v3582
          %3678 = vst.msk [vmem:[#allocation3 + $0x24c] sm:$0xf] %vm197, %v3592
          %3679 = vst.msk [vmem:[#allocation3 + $0x260] sm:$0xf] %vm197, %v3606
          %3680 = vst.msk [vmem:[#allocation3 + $0x274] sm:$0xf] %vm197, %v3616
          %v3681 = vld [vmem:[%s1969] sm:$0xe]
          %v3682 = vld [vmem:[%s1969 + $0x4] sm:$0xf]
          %v3683 = vld [vmem:[%s1969 + $0x8] sm:$0x1]
          %v3684 = vld [vmem:[%s1969 + $0xc] sm:$0xe]
          %v3685 = vld [vmem:[%s1969 + $0x10] sm:$0xf]
          %v3686 = vld [vmem:[%s1969 + $0x14] sm:$0x1]
          %v3687 = vld [vmem:[%s1969 + $0x18] sm:$0xe]
          %v3688 = vld [vmem:[%s1969 + $0x1c] sm:$0xf]
          %v3689 = vld [vmem:[%s1969 + $0x20] sm:$0x1]
          %v3690 = vld [vmem:[%s1969 + $0x24] sm:$0xe]
          %v3691 = vld [vmem:[%s1969 + $0x28] sm:$0xf]
          %v3692 = vld [vmem:[%s1969 + $0x2c] sm:$0x1]
          %v3693 = vld [vmem:[%s1969 + $0x30] sm:$0xe]
          %v3694 = vld [vmem:[%s1969 + $0x34] sm:$0xf]
          %v3695 = vld [vmem:[%s1969 + $0x38] sm:$0x1]
          %v3696 = vld [vmem:[%s1969 + $0x3c] sm:$0xe]
          %v3697 = vld [vmem:[%s1969 + $0x40] sm:$0xf]
          %v3698 = vld [vmem:[%s1969 + $0x44] sm:$0x1]
          %v3699 = vld [vmem:[%s1969 + $0x48] sm:$0xe]
          %v3700 = vld [vmem:[%s1969 + $0x4c] sm:$0xf]
          %v3701 = vld [vmem:[%s1969 + $0x50] sm:$0x1]
          %v3702 = vld [vmem:[%s1969 + $0x54] sm:$0xe]
          %v3703 = vld [vmem:[%s1969 + $0x58] sm:$0xf]
          %v3704 = vld [vmem:[%s1969 + $0x5c] sm:$0x1]
          %v3705 = vld [vmem:[%s1969 + $0x60] sm:$0xe]
          %v3706 = vld [vmem:[%s1969 + $0x64] sm:$0xf]
          %v3707 = vld [vmem:[%s1969 + $0x68] sm:$0x1]
          %v3708 = vld [vmem:[%s1969 + $0x6c] sm:$0xe]
          %v3709 = vld [vmem:[%s1969 + $0x70] sm:$0xf]
          %v3710 = vld [vmem:[%s1969 + $0x74] sm:$0x1]
          %v3711 = vld [vmem:[%s1969 + $0x78] sm:$0xe]
          %v3712 = vld [vmem:[%s1969 + $0x7c] sm:$0xf]
          %v3713 = vld [vmem:[%s1969 + $0x80] sm:$0x1]
          %v3714 = vld [vmem:[%s1969 + $0x84] sm:$0xe]
          %v3715 = vld [vmem:[%s1969 + $0x88] sm:$0xf]
          %v3716 = vld [vmem:[%s1969 + $0x8c] sm:$0x1]
          %v3717 = vld [vmem:[%s1969 + $0x90] sm:$0xe]
          %v3718 = vld [vmem:[%s1969 + $0x94] sm:$0xf]
          %v3719 = vld [vmem:[%s1969 + $0x98] sm:$0x1]
          %v3720 = vld [vmem:[%s1969 + $0x9c] sm:$0xe]
          %v3721 = vld [vmem:[%s1969 + $0xa0] sm:$0xf]
          %v3722 = vld [vmem:[%s1969 + $0xa4] sm:$0x1]
          %v3723 = vld [vmem:[%s1969 + $0xa8] sm:$0xe]
          %v3724 = vld [vmem:[%s1969 + $0xac] sm:$0xf]
          %v3725 = vld [vmem:[%s1969 + $0xb0] sm:$0x1]
          %v3726 = vld [vmem:[%s1969 + $0xb4] sm:$0xe]
          %v3727 = vld [vmem:[%s1969 + $0xb8] sm:$0xf]
          %v3728 = vld [vmem:[%s1969 + $0xbc] sm:$0x1]
          %v3777 = vrot.slane %v3681, 5
          %v3778 = vrot.slane %v3777, 4
          %v3779 = vrot.slane %v3682, 5
          %v3780 = vsel %vm2816, %v3778, %v3779
          %v3781 = vrot.slane %v3779, 4
          %v3782 = vrot.slane %v3683, 5
          %v3783 = vsel %vm2816, %v3781, %v3782
          %v3784 = vrot.slane %v3684, 5
          %v3785 = vrot.slane %v3784, 4
          %v3786 = vrot.slane %v3685, 5
          %v3787 = vsel %vm2816, %v3785, %v3786
          %v3788 = vrot.slane %v3786, 4
          %v3789 = vrot.slane %v3686, 5
          %v3790 = vsel %vm2816, %v3788, %v3789
          %v3791 = vrot.slane %v3687, 5
          %v3792 = vrot.slane %v3791, 4
          %v3793 = vrot.slane %v3688, 5
          %v3794 = vsel %vm2816, %v3792, %v3793
          %v3795 = vrot.slane %v3793, 4
          %v3796 = vrot.slane %v3689, 5
          %v3797 = vsel %vm2816, %v3795, %v3796
          %v3798 = vrot.slane %v3690, 5
          %v3799 = vrot.slane %v3798, 4
          %v3800 = vrot.slane %v3691, 5
          %v3801 = vsel %vm2816, %v3799, %v3800
          %v3802 = vrot.slane %v3800, 4
          %v3803 = vrot.slane %v3692, 5
          %v3804 = vsel %vm2816, %v3802, %v3803
          %v3805 = vrot.slane %v3693, 5
          %v3806 = vrot.slane %v3805, 4
          %v3807 = vrot.slane %v3694, 5
          %v3808 = vsel %vm2816, %v3806, %v3807
          %v3809 = vrot.slane %v3807, 4
          %v3810 = vrot.slane %v3695, 5
          %v3811 = vsel %vm2816, %v3809, %v3810
          %v3812 = vrot.slane %v3696, 5
          %v3813 = vrot.slane %v3812, 4
          %v3814 = vrot.slane %v3697, 5
          %v3815 = vsel %vm2816, %v3813, %v3814
          %v3816 = vrot.slane %v3814, 4
          %v3817 = vrot.slane %v3698, 5
          %v3818 = vsel %vm2816, %v3816, %v3817
          %v3819 = vrot.slane %v3699, 5
          %v3820 = vrot.slane %v3819, 4
          %v3821 = vrot.slane %v3700, 5
          %v3822 = vsel %vm2816, %v3820, %v3821
          %v3823 = vrot.slane %v3821, 4
          %v3824 = vrot.slane %v3701, 5
          %v3825 = vsel %vm2816, %v3823, %v3824
          %v3826 = vrot.slane %v3702, 5
          %v3827 = vrot.slane %v3826, 4
          %v3828 = vrot.slane %v3703, 5
          %v3829 = vsel %vm2816, %v3827, %v3828
          %v3830 = vrot.slane %v3828, 4
          %v3831 = vrot.slane %v3704, 5
          %v3832 = vsel %vm2816, %v3830, %v3831
          %v3833 = vrot.slane %v3705, 5
          %v3834 = vrot.slane %v3833, 4
          %v3835 = vrot.slane %v3706, 5
          %v3836 = vsel %vm2816, %v3834, %v3835
          %v3837 = vrot.slane %v3835, 4
          %v3838 = vrot.slane %v3707, 5
          %v3839 = vsel %vm2816, %v3837, %v3838
          %v3840 = vrot.slane %v3708, 5
          %v3841 = vrot.slane %v3840, 4
          %v3842 = vrot.slane %v3709, 5
          %v3843 = vsel %vm2816, %v3841, %v3842
          %v3844 = vrot.slane %v3842, 4
          %v3845 = vrot.slane %v3710, 5
          %v3846 = vsel %vm2816, %v3844, %v3845
          %v3847 = vrot.slane %v3711, 5
          %v3848 = vrot.slane %v3847, 4
          %v3849 = vrot.slane %v3712, 5
          %v3850 = vsel %vm2816, %v3848, %v3849
          %v3851 = vrot.slane %v3849, 4
          %v3852 = vrot.slane %v3713, 5
          %v3853 = vsel %vm2816, %v3851, %v3852
          %v3854 = vrot.slane %v3714, 5
          %v3855 = vrot.slane %v3854, 4
          %v3856 = vrot.slane %v3715, 5
          %v3857 = vsel %vm2816, %v3855, %v3856
          %v3858 = vrot.slane %v3856, 4
          %v3859 = vrot.slane %v3716, 5
          %v3860 = vsel %vm2816, %v3858, %v3859
          %v3861 = vrot.slane %v3717, 5
          %v3862 = vrot.slane %v3861, 4
          %v3863 = vrot.slane %v3718, 5
          %v3864 = vsel %vm2816, %v3862, %v3863
          %v3865 = vrot.slane %v3863, 4
          %v3866 = vrot.slane %v3719, 5
          %v3867 = vsel %vm2816, %v3865, %v3866
          %v3868 = vrot.slane %v3720, 5
          %v3869 = vrot.slane %v3868, 4
          %v3870 = vrot.slane %v3721, 5
          %v3871 = vsel %vm2816, %v3869, %v3870
          %v3872 = vrot.slane %v3870, 4
          %v3873 = vrot.slane %v3722, 5
          %v3874 = vsel %vm2816, %v3872, %v3873
          %v3875 = vrot.slane %v3723, 5
          %v3876 = vrot.slane %v3875, 4
          %v3877 = vrot.slane %v3724, 5
          %v3878 = vsel %vm2816, %v3876, %v3877
          %v3879 = vrot.slane %v3877, 4
          %v3880 = vrot.slane %v3725, 5
          %v3881 = vsel %vm2816, %v3879, %v3880
          %v3882 = vrot.slane %v3726, 5
          %v3883 = vrot.slane %v3882, 4
          %v3884 = vrot.slane %v3727, 5
          %v3885 = vsel %vm2816, %v3883, %v3884
          %v3886 = vrot.slane %v3884, 4
          %v3887 = vrot.slane %v3728, 5
          %v3888 = vsel %vm2816, %v3886, %v3887
          %3889 = vrot.lane.b32.xlu0 %v3780, 64
          %v3890 = vpop.permute.xlu0 %3889
          %3891 = vrot.lane.b32.xlu0 %v3783, 64
          %v3892 = vpop.permute.xlu0 %3891
          %3893 = vrot.lane.b32.xlu0 %v3787, 64
          %v3894 = vpop.permute.xlu0 %3893
          %3895 = vrot.lane.b32.xlu0 %v3790, 64
          %v3896 = vpop.permute.xlu0 %3895
          %3897 = vrot.lane.b32.xlu0 %v3794, 64
          %v3898 = vpop.permute.xlu0 %3897
          %3899 = vrot.lane.b32.xlu0 %v3797, 64
          %v3900 = vpop.permute.xlu0 %3899
          %3901 = vrot.lane.b32.xlu0 %v3801, 64
          %v3902 = vpop.permute.xlu0 %3901
          %3903 = vrot.lane.b32.xlu0 %v3804, 64
          %v3904 = vpop.permute.xlu0 %3903
          %3905 = vrot.lane.b32.xlu0 %v3808, 64
          %v3906 = vpop.permute.xlu0 %3905
          %3907 = vrot.lane.b32.xlu0 %v3811, 64
          %v3908 = vpop.permute.xlu0 %3907
          %3909 = vrot.lane.b32.xlu0 %v3815, 64
          %v3910 = vpop.permute.xlu0 %3909
          %3911 = vrot.lane.b32.xlu0 %v3818, 64
          %v3912 = vpop.permute.xlu0 %3911
          %3913 = vrot.lane.b32.xlu0 %v3822, 64
          %v3914 = vpop.permute.xlu0 %3913
          %3915 = vrot.lane.b32.xlu0 %v3825, 64
          %v3916 = vpop.permute.xlu0 %3915
          %3917 = vrot.lane.b32.xlu0 %v3829, 64
          %v3918 = vpop.permute.xlu0 %3917
          %3919 = vrot.lane.b32.xlu0 %v3832, 64
          %v3920 = vpop.permute.xlu0 %3919
          %3921 = vrot.lane.b32.xlu0 %v3836, 64
          %v3922 = vpop.permute.xlu0 %3921
          %3923 = vrot.lane.b32.xlu0 %v3839, 64
          %v3924 = vpop.permute.xlu0 %3923
          %3925 = vrot.lane.b32.xlu0 %v3843, 64
          %v3926 = vpop.permute.xlu0 %3925
          %3927 = vrot.lane.b32.xlu0 %v3846, 64
          %v3928 = vpop.permute.xlu0 %3927
          %3929 = vrot.lane.b32.xlu0 %v3850, 64
          %v3930 = vpop.permute.xlu0 %3929
          %3931 = vrot.lane.b32.xlu0 %v3853, 64
          %v3932 = vpop.permute.xlu0 %3931
          %3933 = vrot.lane.b32.xlu0 %v3857, 64
          %v3934 = vpop.permute.xlu0 %3933
          %3935 = vrot.lane.b32.xlu0 %v3860, 64
          %v3936 = vpop.permute.xlu0 %3935
          %3937 = vrot.lane.b32.xlu0 %v3864, 64
          %v3938 = vpop.permute.xlu0 %3937
          %3939 = vrot.lane.b32.xlu0 %v3867, 64
          %v3940 = vpop.permute.xlu0 %3939
          %3941 = vrot.lane.b32.xlu0 %v3871, 64
          %v3942 = vpop.permute.xlu0 %3941
          %3943 = vrot.lane.b32.xlu0 %v3874, 64
          %v3944 = vpop.permute.xlu0 %3943
          %3945 = vrot.lane.b32.xlu0 %v3878, 64
          %v3946 = vpop.permute.xlu0 %3945
          %3947 = vrot.lane.b32.xlu0 %v3881, 64
          %v3948 = vpop.permute.xlu0 %3947
          %3949 = vrot.lane.b32.xlu0 %v3885, 64
          %v3950 = vpop.permute.xlu0 %3949
          %3951 = vrot.lane.b32.xlu0 %v3888, 64
          %v3952 = vpop.permute.xlu0 %3951
          %3985 = vst.msk [vmem:[#allocation3 + $0x8] sm:$0xf] %vm2685, %v3890
          %3986 = vst.msk [vmem:[#allocation3 + $0x1c] sm:$0xf] %vm2685, %v3892
          %3987 = vst.msk [vmem:[#allocation3 + $0x30] sm:$0xf] %vm2685, %v3894
          %3988 = vst.msk [vmem:[#allocation3 + $0x44] sm:$0xf] %vm2685, %v3896
          %3989 = vst.msk [vmem:[#allocation3 + $0x58] sm:$0xf] %vm2685, %v3898
          %3990 = vst.msk [vmem:[#allocation3 + $0x6c] sm:$0xf] %vm2685, %v3900
          %3991 = vst.msk [vmem:[#allocation3 + $0x80] sm:$0xf] %vm2685, %v3902
          %3992 = vst.msk [vmem:[#allocation3 + $0x94] sm:$0xf] %vm2685, %v3904
          %3993 = vst.msk [vmem:[#allocation3 + $0xa8] sm:$0xf] %vm2685, %v3906
          %3994 = vst.msk [vmem:[#allocation3 + $0xbc] sm:$0xf] %vm2685, %v3908
          %3995 = vst.msk [vmem:[#allocation3 + $0xd0] sm:$0xf] %vm2685, %v3910
          %3996 = vst.msk [vmem:[#allocation3 + $0xe4] sm:$0xf] %vm2685, %v3912
          %3997 = vst.msk [vmem:[#allocation3 + $0xf8] sm:$0xf] %vm2685, %v3914
          %3998 = vst.msk [vmem:[#allocation3 + $0x10c] sm:$0xf] %vm2685, %v3916
          %3999 = vst.msk [vmem:[#allocation3 + $0x120] sm:$0xf] %vm2685, %v3918
          %4000 = vst.msk [vmem:[#allocation3 + $0x134] sm:$0xf] %vm2685, %v3920
          %4001 = vst.msk [vmem:[#allocation3 + $0x148] sm:$0xf] %vm2685, %v3922
          %4002 = vst.msk [vmem:[#allocation3 + $0x15c] sm:$0xf] %vm2685, %v3924
          %4003 = vst.msk [vmem:[#allocation3 + $0x170] sm:$0xf] %vm2685, %v3926
          %4004 = vst.msk [vmem:[#allocation3 + $0x184] sm:$0xf] %vm2685, %v3928
          %4005 = vst.msk [vmem:[#allocation3 + $0x198] sm:$0xf] %vm2685, %v3930
          %4006 = vst.msk [vmem:[#allocation3 + $0x1ac] sm:$0xf] %vm2685, %v3932
          %4007 = vst.msk [vmem:[#allocation3 + $0x1c0] sm:$0xf] %vm2685, %v3934
          %4008 = vst.msk [vmem:[#allocation3 + $0x1d4] sm:$0xf] %vm2685, %v3936
          %4009 = vst.msk [vmem:[#allocation3 + $0x1e8] sm:$0xf] %vm2685, %v3938
          %4010 = vst.msk [vmem:[#allocation3 + $0x1fc] sm:$0xf] %vm2685, %v3940
          %4011 = vst.msk [vmem:[#allocation3 + $0x210] sm:$0xf] %vm2685, %v3942
          %4012 = vst.msk [vmem:[#allocation3 + $0x224] sm:$0xf] %vm2685, %v3944
          %4013 = vst.msk [vmem:[#allocation3 + $0x238] sm:$0xf] %vm2685, %v3946
          %4014 = vst.msk [vmem:[#allocation3 + $0x24c] sm:$0xf] %vm2685, %v3948
          %4015 = vst.msk [vmem:[#allocation3 + $0x260] sm:$0xf] %vm2685, %v3950
          %4016 = vst.msk [vmem:[#allocation3 + $0x274] sm:$0xf] %vm2685, %v3952
          %s4017 = scalar_lea.vmem [#allocation2], 24
          %v4018 = vld [vmem:[%s4017] sm:$0xf]
          %v4019 = vld [vmem:[%s4017 + $0x4] sm:$0xf]
          %v4020 = vld [vmem:[%s4017 + $0xc] sm:$0xf]
          %v4021 = vld [vmem:[%s4017 + $0x10] sm:$0xf]
          %v4022 = vld [vmem:[%s4017 + $0x18] sm:$0xf]
          %v4023 = vld [vmem:[%s4017 + $0x1c] sm:$0xf]
          %v4024 = vld [vmem:[%s4017 + $0x24] sm:$0xf]
          %v4025 = vld [vmem:[%s4017 + $0x28] sm:$0xf]
          %v4026 = vld [vmem:[%s4017 + $0x30] sm:$0xf]
          %v4027 = vld [vmem:[%s4017 + $0x34] sm:$0xf]
          %v4028 = vld [vmem:[%s4017 + $0x3c] sm:$0xf]
          %v4029 = vld [vmem:[%s4017 + $0x40] sm:$0xf]
          %v4030 = vld [vmem:[%s4017 + $0x48] sm:$0xf]
          %v4031 = vld [vmem:[%s4017 + $0x4c] sm:$0xf]
          %v4032 = vld [vmem:[%s4017 + $0x54] sm:$0xf]
          %v4033 = vld [vmem:[%s4017 + $0x58] sm:$0xf]
          %v4034 = vld [vmem:[%s4017 + $0x60] sm:$0xf]
          %v4035 = vld [vmem:[%s4017 + $0x64] sm:$0xf]
          %v4036 = vld [vmem:[%s4017 + $0x6c] sm:$0xf]
          %v4037 = vld [vmem:[%s4017 + $0x70] sm:$0xf]
          %v4038 = vld [vmem:[%s4017 + $0x78] sm:$0xf]
          %v4039 = vld [vmem:[%s4017 + $0x7c] sm:$0xf]
          %v4040 = vld [vmem:[%s4017 + $0x84] sm:$0xf]
          %v4041 = vld [vmem:[%s4017 + $0x88] sm:$0xf]
          %v4042 = vld [vmem:[%s4017 + $0x90] sm:$0xf]
          %v4043 = vld [vmem:[%s4017 + $0x94] sm:$0xf]
          %v4044 = vld [vmem:[%s4017 + $0x9c] sm:$0xf]
          %v4045 = vld [vmem:[%s4017 + $0xa0] sm:$0xf]
          %v4046 = vld [vmem:[%s4017 + $0xa8] sm:$0xf]
          %v4047 = vld [vmem:[%s4017 + $0xac] sm:$0xf]
          %v4048 = vld [vmem:[%s4017 + $0xb4] sm:$0xf]
          %v4049 = vld [vmem:[%s4017 + $0xb8] sm:$0xf]
          %4050 = vst.msk [vmem:[#allocation3 + $0xc] sm:$0xf] %vm197, %v4018
          %4051 = vst.msk [vmem:[#allocation3 + $0x20] sm:$0xf] %vm197, %v4019
          %4052 = vst.msk [vmem:[#allocation3 + $0x34] sm:$0xf] %vm197, %v4020
          %4053 = vst.msk [vmem:[#allocation3 + $0x48] sm:$0xf] %vm197, %v4021
          %4054 = vst.msk [vmem:[#allocation3 + $0x5c] sm:$0xf] %vm197, %v4022
          %4055 = vst.msk [vmem:[#allocation3 + $0x70] sm:$0xf] %vm197, %v4023
          %4056 = vst.msk [vmem:[#allocation3 + $0x84] sm:$0xf] %vm197, %v4024
          %4057 = vst.msk [vmem:[#allocation3 + $0x98] sm:$0xf] %vm197, %v4025
          %4058 = vst.msk [vmem:[#allocation3 + $0xac] sm:$0xf] %vm197, %v4026
          %4059 = vst.msk [vmem:[#allocation3 + $0xc0] sm:$0xf] %vm197, %v4027
          %4060 = vst.msk [vmem:[#allocation3 + $0xd4] sm:$0xf] %vm197, %v4028
          %4061 = vst.msk [vmem:[#allocation3 + $0xe8] sm:$0xf] %vm197, %v4029
          %4062 = vst.msk [vmem:[#allocation3 + $0xfc] sm:$0xf] %vm197, %v4030
          %4063 = vst.msk [vmem:[#allocation3 + $0x110] sm:$0xf] %vm197, %v4031
          %4064 = vst.msk [vmem:[#allocation3 + $0x124] sm:$0xf] %vm197, %v4032
          %4065 = vst.msk [vmem:[#allocation3 + $0x138] sm:$0xf] %vm197, %v4033
          %4066 = vst.msk [vmem:[#allocation3 + $0x14c] sm:$0xf] %vm197, %v4034
          %4067 = vst.msk [vmem:[#allocation3 + $0x160] sm:$0xf] %vm197, %v4035
          %4068 = vst.msk [vmem:[#allocation3 + $0x174] sm:$0xf] %vm197, %v4036
          %4069 = vst.msk [vmem:[#allocation3 + $0x188] sm:$0xf] %vm197, %v4037
          %4070 = vst.msk [vmem:[#allocation3 + $0x19c] sm:$0xf] %vm197, %v4038
          %4071 = vst.msk [vmem:[#allocation3 + $0x1b0] sm:$0xf] %vm197, %v4039
          %4072 = vst.msk [vmem:[#allocation3 + $0x1c4] sm:$0xf] %vm197, %v4040
          %4073 = vst.msk [vmem:[#allocation3 + $0x1d8] sm:$0xf] %vm197, %v4041
          %4074 = vst.msk [vmem:[#allocation3 + $0x1ec] sm:$0xf] %vm197, %v4042
          %4075 = vst.msk [vmem:[#allocation3 + $0x200] sm:$0xf] %vm197, %v4043
          %4076 = vst.msk [vmem:[#allocation3 + $0x214] sm:$0xf] %vm197, %v4044
          %4077 = vst.msk [vmem:[#allocation3 + $0x228] sm:$0xf] %vm197, %v4045
          %4078 = vst.msk [vmem:[#allocation3 + $0x23c] sm:$0xf] %vm197, %v4046
          %4079 = vst.msk [vmem:[#allocation3 + $0x250] sm:$0xf] %vm197, %v4047
          %4080 = vst.msk [vmem:[#allocation3 + $0x264] sm:$0xf] %vm197, %v4048
          %4081 = vst.msk [vmem:[#allocation3 + $0x278] sm:$0xf] %vm197, %v4049
          %v4082 = vld [vmem:[%s4017] sm:$0xf]
          %v4083 = vld [vmem:[%s4017 + $0x4] sm:$0xf]
          %v4084 = vld [vmem:[%s4017 + $0x8] sm:$0x1]
          %v4085 = vld [vmem:[%s4017 + $0xc] sm:$0xf]
          %v4086 = vld [vmem:[%s4017 + $0x10] sm:$0xf]
          %v4087 = vld [vmem:[%s4017 + $0x14] sm:$0x1]
          %v4088 = vld [vmem:[%s4017 + $0x18] sm:$0xf]
          %v4089 = vld [vmem:[%s4017 + $0x1c] sm:$0xf]
          %v4090 = vld [vmem:[%s4017 + $0x20] sm:$0x1]
          %v4091 = vld [vmem:[%s4017 + $0x24] sm:$0xf]
          %v4092 = vld [vmem:[%s4017 + $0x28] sm:$0xf]
          %v4093 = vld [vmem:[%s4017 + $0x2c] sm:$0x1]
          %v4094 = vld [vmem:[%s4017 + $0x30] sm:$0xf]
          %v4095 = vld [vmem:[%s4017 + $0x34] sm:$0xf]
          %v4096 = vld [vmem:[%s4017 + $0x38] sm:$0x1]
          %v4097 = vld [vmem:[%s4017 + $0x3c] sm:$0xf]
          %v4098 = vld [vmem:[%s4017 + $0x40] sm:$0xf]
          %v4099 = vld [vmem:[%s4017 + $0x44] sm:$0x1]
          %v4100 = vld [vmem:[%s4017 + $0x48] sm:$0xf]
          %v4101 = vld [vmem:[%s4017 + $0x4c] sm:$0xf]
          %v4102 = vld [vmem:[%s4017 + $0x50] sm:$0x1]
          %v4103 = vld [vmem:[%s4017 + $0x54] sm:$0xf]
          %v4104 = vld [vmem:[%s4017 + $0x58] sm:$0xf]
          %v4105 = vld [vmem:[%s4017 + $0x5c] sm:$0x1]
          %v4106 = vld [vmem:[%s4017 + $0x60] sm:$0xf]
          %v4107 = vld [vmem:[%s4017 + $0x64] sm:$0xf]
          %v4108 = vld [vmem:[%s4017 + $0x68] sm:$0x1]
          %v4109 = vld [vmem:[%s4017 + $0x6c] sm:$0xf]
          %v4110 = vld [vmem:[%s4017 + $0x70] sm:$0xf]
          %v4111 = vld [vmem:[%s4017 + $0x74] sm:$0x1]
          %v4112 = vld [vmem:[%s4017 + $0x78] sm:$0xf]
          %v4113 = vld [vmem:[%s4017 + $0x7c] sm:$0xf]
          %v4114 = vld [vmem:[%s4017 + $0x80] sm:$0x1]
          %v4115 = vld [vmem:[%s4017 + $0x84] sm:$0xf]
          %v4116 = vld [vmem:[%s4017 + $0x88] sm:$0xf]
          %v4117 = vld [vmem:[%s4017 + $0x8c] sm:$0x1]
          %v4118 = vld [vmem:[%s4017 + $0x90] sm:$0xf]
          %v4119 = vld [vmem:[%s4017 + $0x94] sm:$0xf]
          %v4120 = vld [vmem:[%s4017 + $0x98] sm:$0x1]
          %v4121 = vld [vmem:[%s4017 + $0x9c] sm:$0xf]
          %v4122 = vld [vmem:[%s4017 + $0xa0] sm:$0xf]
          %v4123 = vld [vmem:[%s4017 + $0xa4] sm:$0x1]
          %v4124 = vld [vmem:[%s4017 + $0xa8] sm:$0xf]
          %v4125 = vld [vmem:[%s4017 + $0xac] sm:$0xf]
          %v4126 = vld [vmem:[%s4017 + $0xb0] sm:$0x1]
          %v4127 = vld [vmem:[%s4017 + $0xb4] sm:$0xf]
          %v4128 = vld [vmem:[%s4017 + $0xb8] sm:$0xf]
          %v4129 = vld [vmem:[%s4017 + $0xbc] sm:$0x1]
          %v4131 = vshrl.u32 %v4082, 16
          %v4133 = vrot.slane %v4131, 4
          %v4134 = vshll.u32 %v4082, 16
          %v4136 = vrot.slane %v4134, 5
          %v4137 = vor.u32 %v4133, %v4136
          %v4138 = vrot.slane %v4137, 4
          %v4140 = vshll.u32 %v4083, 16
          %v4142 = vrot.slane %v4140, 5
          %v4143 = vsel %vm2204, %v4138, %v4142
          %v4144 = vshrl.u32 %v4083, 16
          %v4146 = vrot.slane %v4144, 4
          %v4147 = vor.u32 %v4146, %v4142
          %v4148 = vrot.slane %v4147, 4
          %v4150 = vshll.u32 %v4084, 16
          %v4152 = vrot.slane %v4150, 5
          %v4153 = vsel %vm2204, %v4148, %v4152
          %v4155 = vshrl.u32 %v4085, 16
          %v4157 = vrot.slane %v4155, 4
          %v4158 = vshll.u32 %v4085, 16
          %v4160 = vrot.slane %v4158, 5
          %v4161 = vor.u32 %v4157, %v4160
          %v4162 = vrot.slane %v4161, 4
          %v4164 = vshll.u32 %v4086, 16
          %v4166 = vrot.slane %v4164, 5
          %v4167 = vsel %vm2204, %v4162, %v4166
          %v4168 = vshrl.u32 %v4086, 16
          %v4170 = vrot.slane %v4168, 4
          %v4171 = vor.u32 %v4170, %v4166
          %v4172 = vrot.slane %v4171, 4
          %v4174 = vshll.u32 %v4087, 16
          %v4176 = vrot.slane %v4174, 5
          %v4177 = vsel %vm2204, %v4172, %v4176
          %v4179 = vshrl.u32 %v4088, 16
          %v4181 = vrot.slane %v4179, 4
          %v4182 = vshll.u32 %v4088, 16
          %v4184 = vrot.slane %v4182, 5
          %v4185 = vor.u32 %v4181, %v4184
          %v4186 = vrot.slane %v4185, 4
          %v4188 = vshll.u32 %v4089, 16
          %v4190 = vrot.slane %v4188, 5
          %v4191 = vsel %vm2204, %v4186, %v4190
          %v4192 = vshrl.u32 %v4089, 16
          %v4194 = vrot.slane %v4192, 4
          %v4195 = vor.u32 %v4194, %v4190
          %v4196 = vrot.slane %v4195, 4
          %v4198 = vshll.u32 %v4090, 16
          %v4200 = vrot.slane %v4198, 5
          %v4201 = vsel %vm2204, %v4196, %v4200
          %v4203 = vshrl.u32 %v4091, 16
          %v4205 = vrot.slane %v4203, 4
          %v4206 = vshll.u32 %v4091, 16
          %v4208 = vrot.slane %v4206, 5
          %v4209 = vor.u32 %v4205, %v4208
          %v4210 = vrot.slane %v4209, 4
          %v4212 = vshll.u32 %v4092, 16
          %v4214 = vrot.slane %v4212, 5
          %v4215 = vsel %vm2204, %v4210, %v4214
          %v4216 = vshrl.u32 %v4092, 16
          %v4218 = vrot.slane %v4216, 4
          %v4219 = vor.u32 %v4218, %v4214
          %v4220 = vrot.slane %v4219, 4
          %v4222 = vshll.u32 %v4093, 16
          %v4224 = vrot.slane %v4222, 5
          %v4225 = vsel %vm2204, %v4220, %v4224
          %v4227 = vshrl.u32 %v4094, 16
          %v4229 = vrot.slane %v4227, 4
          %v4230 = vshll.u32 %v4094, 16
          %v4232 = vrot.slane %v4230, 5
          %v4233 = vor.u32 %v4229, %v4232
          %v4234 = vrot.slane %v4233, 4
          %v4236 = vshll.u32 %v4095, 16
          %v4238 = vrot.slane %v4236, 5
          %v4239 = vsel %vm2204, %v4234, %v4238
          %v4240 = vshrl.u32 %v4095, 16
          %v4242 = vrot.slane %v4240, 4
          %v4243 = vor.u32 %v4242, %v4238
          %v4244 = vrot.slane %v4243, 4
          %v4246 = vshll.u32 %v4096, 16
          %v4248 = vrot.slane %v4246, 5
          %v4249 = vsel %vm2204, %v4244, %v4248
          %v4251 = vshrl.u32 %v4097, 16
          %v4253 = vrot.slane %v4251, 4
          %v4254 = vshll.u32 %v4097, 16
          %v4256 = vrot.slane %v4254, 5
          %v4257 = vor.u32 %v4253, %v4256
          %v4258 = vrot.slane %v4257, 4
          %v4260 = vshll.u32 %v4098, 16
          %v4262 = vrot.slane %v4260, 5
          %v4263 = vsel %vm2204, %v4258, %v4262
          %v4264 = vshrl.u32 %v4098, 16
          %v4266 = vrot.slane %v4264, 4
          %v4267 = vor.u32 %v4266, %v4262
          %v4268 = vrot.slane %v4267, 4
          %v4270 = vshll.u32 %v4099, 16
          %v4272 = vrot.slane %v4270, 5
          %v4273 = vsel %vm2204, %v4268, %v4272
          %v4275 = vshrl.u32 %v4100, 16
          %v4277 = vrot.slane %v4275, 4
          %v4278 = vshll.u32 %v4100, 16
          %v4280 = vrot.slane %v4278, 5
          %v4281 = vor.u32 %v4277, %v4280
          %v4282 = vrot.slane %v4281, 4
          %v4284 = vshll.u32 %v4101, 16
          %v4286 = vrot.slane %v4284, 5
          %v4287 = vsel %vm2204, %v4282, %v4286
          %v4288 = vshrl.u32 %v4101, 16
          %v4290 = vrot.slane %v4288, 4
          %v4291 = vor.u32 %v4290, %v4286
          %v4292 = vrot.slane %v4291, 4
          %v4294 = vshll.u32 %v4102, 16
          %v4296 = vrot.slane %v4294, 5
          %v4297 = vsel %vm2204, %v4292, %v4296
          %v4299 = vshrl.u32 %v4103, 16
          %v4301 = vrot.slane %v4299, 4
          %v4302 = vshll.u32 %v4103, 16
          %v4304 = vrot.slane %v4302, 5
          %v4305 = vor.u32 %v4301, %v4304
          %v4306 = vrot.slane %v4305, 4
          %v4308 = vshll.u32 %v4104, 16
          %v4310 = vrot.slane %v4308, 5
          %v4311 = vsel %vm2204, %v4306, %v4310
          %v4312 = vshrl.u32 %v4104, 16
          %v4314 = vrot.slane %v4312, 4
          %v4315 = vor.u32 %v4314, %v4310
          %v4316 = vrot.slane %v4315, 4
          %v4318 = vshll.u32 %v4105, 16
          %v4320 = vrot.slane %v4318, 5
          %v4321 = vsel %vm2204, %v4316, %v4320
          %v4323 = vshrl.u32 %v4106, 16
          %v4325 = vrot.slane %v4323, 4
          %v4326 = vshll.u32 %v4106, 16
          %v4328 = vrot.slane %v4326, 5
          %v4329 = vor.u32 %v4325, %v4328
          %v4330 = vrot.slane %v4329, 4
          %v4332 = vshll.u32 %v4107, 16
          %v4334 = vrot.slane %v4332, 5
          %v4335 = vsel %vm2204, %v4330, %v4334
          %v4336 = vshrl.u32 %v4107, 16
          %v4338 = vrot.slane %v4336, 4
          %v4339 = vor.u32 %v4338, %v4334
          %v4340 = vrot.slane %v4339, 4
          %v4342 = vshll.u32 %v4108, 16
          %v4344 = vrot.slane %v4342, 5
          %v4345 = vsel %vm2204, %v4340, %v4344
          %v4347 = vshrl.u32 %v4109, 16
          %v4349 = vrot.slane %v4347, 4
          %v4350 = vshll.u32 %v4109, 16
          %v4352 = vrot.slane %v4350, 5
          %v4353 = vor.u32 %v4349, %v4352
          %v4354 = vrot.slane %v4353, 4
          %v4356 = vshll.u32 %v4110, 16
          %v4358 = vrot.slane %v4356, 5
          %v4359 = vsel %vm2204, %v4354, %v4358
          %v4360 = vshrl.u32 %v4110, 16
          %v4362 = vrot.slane %v4360, 4
          %v4363 = vor.u32 %v4362, %v4358
          %v4364 = vrot.slane %v4363, 4
          %v4366 = vshll.u32 %v4111, 16
          %v4368 = vrot.slane %v4366, 5
          %v4369 = vsel %vm2204, %v4364, %v4368
          %v4371 = vshrl.u32 %v4112, 16
          %v4373 = vrot.slane %v4371, 4
          %v4374 = vshll.u32 %v4112, 16
          %v4376 = vrot.slane %v4374, 5
          %v4377 = vor.u32 %v4373, %v4376
          %v4378 = vrot.slane %v4377, 4
          %v4380 = vshll.u32 %v4113, 16
          %v4382 = vrot.slane %v4380, 5
          %v4383 = vsel %vm2204, %v4378, %v4382
          %v4384 = vshrl.u32 %v4113, 16
          %v4386 = vrot.slane %v4384, 4
          %v4387 = vor.u32 %v4386, %v4382
          %v4388 = vrot.slane %v4387, 4
          %v4390 = vshll.u32 %v4114, 16
          %v4392 = vrot.slane %v4390, 5
          %v4393 = vsel %vm2204, %v4388, %v4392
          %v4395 = vshrl.u32 %v4115, 16
          %v4397 = vrot.slane %v4395, 4
          %v4398 = vshll.u32 %v4115, 16
          %v4400 = vrot.slane %v4398, 5
          %v4401 = vor.u32 %v4397, %v4400
          %v4402 = vrot.slane %v4401, 4
          %v4404 = vshll.u32 %v4116, 16
          %v4406 = vrot.slane %v4404, 5
          %v4407 = vsel %vm2204, %v4402, %v4406
          %v4408 = vshrl.u32 %v4116, 16
          %v4410 = vrot.slane %v4408, 4
          %v4411 = vor.u32 %v4410, %v4406
          %v4412 = vrot.slane %v4411, 4
          %v4414 = vshll.u32 %v4117, 16
          %v4416 = vrot.slane %v4414, 5
          %v4417 = vsel %vm2204, %v4412, %v4416
          %v4419 = vshrl.u32 %v4118, 16
          %v4421 = vrot.slane %v4419, 4
          %v4422 = vshll.u32 %v4118, 16
          %v4424 = vrot.slane %v4422, 5
          %v4425 = vor.u32 %v4421, %v4424
          %v4426 = vrot.slane %v4425, 4
          %v4428 = vshll.u32 %v4119, 16
          %v4430 = vrot.slane %v4428, 5
          %v4431 = vsel %vm2204, %v4426, %v4430
          %v4432 = vshrl.u32 %v4119, 16
          %v4434 = vrot.slane %v4432, 4
          %v4435 = vor.u32 %v4434, %v4430
          %v4436 = vrot.slane %v4435, 4
          %v4438 = vshll.u32 %v4120, 16
          %v4440 = vrot.slane %v4438, 5
          %v4441 = vsel %vm2204, %v4436, %v4440
          %v4443 = vshrl.u32 %v4121, 16
          %v4445 = vrot.slane %v4443, 4
          %v4446 = vshll.u32 %v4121, 16
          %v4448 = vrot.slane %v4446, 5
          %v4449 = vor.u32 %v4445, %v4448
          %v4450 = vrot.slane %v4449, 4
          %v4452 = vshll.u32 %v4122, 16
          %v4454 = vrot.slane %v4452, 5
          %v4455 = vsel %vm2204, %v4450, %v4454
          %v4456 = vshrl.u32 %v4122, 16
          %v4458 = vrot.slane %v4456, 4
          %v4459 = vor.u32 %v4458, %v4454
          %v4460 = vrot.slane %v4459, 4
          %v4462 = vshll.u32 %v4123, 16
          %v4464 = vrot.slane %v4462, 5
          %v4465 = vsel %vm2204, %v4460, %v4464
          %v4467 = vshrl.u32 %v4124, 16
          %v4469 = vrot.slane %v4467, 4
          %v4470 = vshll.u32 %v4124, 16
          %v4472 = vrot.slane %v4470, 5
          %v4473 = vor.u32 %v4469, %v4472
          %v4474 = vrot.slane %v4473, 4
          %v4476 = vshll.u32 %v4125, 16
          %v4478 = vrot.slane %v4476, 5
          %v4479 = vsel %vm2204, %v4474, %v4478
          %v4480 = vshrl.u32 %v4125, 16
          %v4482 = vrot.slane %v4480, 4
          %v4483 = vor.u32 %v4482, %v4478
          %v4484 = vrot.slane %v4483, 4
          %v4486 = vshll.u32 %v4126, 16
          %v4488 = vrot.slane %v4486, 5
          %v4489 = vsel %vm2204, %v4484, %v4488
          %v4491 = vshrl.u32 %v4127, 16
          %v4493 = vrot.slane %v4491, 4
          %v4494 = vshll.u32 %v4127, 16
          %v4496 = vrot.slane %v4494, 5
          %v4497 = vor.u32 %v4493, %v4496
          %v4498 = vrot.slane %v4497, 4
          %v4500 = vshll.u32 %v4128, 16
          %v4502 = vrot.slane %v4500, 5
          %v4503 = vsel %vm2204, %v4498, %v4502
          %v4504 = vshrl.u32 %v4128, 16
          %v4506 = vrot.slane %v4504, 4
          %v4507 = vor.u32 %v4506, %v4502
          %v4508 = vrot.slane %v4507, 4
          %v4510 = vshll.u32 %v4129, 16
          %v4512 = vrot.slane %v4510, 5
          %v4513 = vsel %vm2204, %v4508, %v4512
          %4514 = vrot.lane.b32.xlu0 %v4143, 64
          %v4515 = vpop.permute.xlu0 %4514
          %4516 = vrot.lane.b32.xlu0 %v4153, 64
          %v4517 = vpop.permute.xlu0 %4516
          %4518 = vrot.lane.b32.xlu0 %v4167, 64
          %v4519 = vpop.permute.xlu0 %4518
          %4520 = vrot.lane.b32.xlu0 %v4177, 64
          %v4521 = vpop.permute.xlu0 %4520
          %4522 = vrot.lane.b32.xlu0 %v4191, 64
          %v4523 = vpop.permute.xlu0 %4522
          %4524 = vrot.lane.b32.xlu0 %v4201, 64
          %v4525 = vpop.permute.xlu0 %4524
          %4526 = vrot.lane.b32.xlu0 %v4215, 64
          %v4527 = vpop.permute.xlu0 %4526
          %4528 = vrot.lane.b32.xlu0 %v4225, 64
          %v4529 = vpop.permute.xlu0 %4528
          %4530 = vrot.lane.b32.xlu0 %v4239, 64
          %v4531 = vpop.permute.xlu0 %4530
          %4532 = vrot.lane.b32.xlu0 %v4249, 64
          %v4533 = vpop.permute.xlu0 %4532
          %4534 = vrot.lane.b32.xlu0 %v4263, 64
          %v4535 = vpop.permute.xlu0 %4534
          %4536 = vrot.lane.b32.xlu0 %v4273, 64
          %v4537 = vpop.permute.xlu0 %4536
          %4538 = vrot.lane.b32.xlu0 %v4287, 64
          %v4539 = vpop.permute.xlu0 %4538
          %4540 = vrot.lane.b32.xlu0 %v4297, 64
          %v4541 = vpop.permute.xlu0 %4540
          %4542 = vrot.lane.b32.xlu0 %v4311, 64
          %v4543 = vpop.permute.xlu0 %4542
          %4544 = vrot.lane.b32.xlu0 %v4321, 64
          %v4545 = vpop.permute.xlu0 %4544
          %4546 = vrot.lane.b32.xlu0 %v4335, 64
          %v4547 = vpop.permute.xlu0 %4546
          %4548 = vrot.lane.b32.xlu0 %v4345, 64
          %v4549 = vpop.permute.xlu0 %4548
          %4550 = vrot.lane.b32.xlu0 %v4359, 64
          %v4551 = vpop.permute.xlu0 %4550
          %4552 = vrot.lane.b32.xlu0 %v4369, 64
          %v4553 = vpop.permute.xlu0 %4552
          %4554 = vrot.lane.b32.xlu0 %v4383, 64
          %v4555 = vpop.permute.xlu0 %4554
          %4556 = vrot.lane.b32.xlu0 %v4393, 64
          %v4557 = vpop.permute.xlu0 %4556
          %4558 = vrot.lane.b32.xlu0 %v4407, 64
          %v4559 = vpop.permute.xlu0 %4558
          %4560 = vrot.lane.b32.xlu0 %v4417, 64
          %v4561 = vpop.permute.xlu0 %4560
          %4562 = vrot.lane.b32.xlu0 %v4431, 64
          %v4563 = vpop.permute.xlu0 %4562
          %4564 = vrot.lane.b32.xlu0 %v4441, 64
          %v4565 = vpop.permute.xlu0 %4564
          %4566 = vrot.lane.b32.xlu0 %v4455, 64
          %v4567 = vpop.permute.xlu0 %4566
          %4568 = vrot.lane.b32.xlu0 %v4465, 64
          %v4569 = vpop.permute.xlu0 %4568
          %4570 = vrot.lane.b32.xlu0 %v4479, 64
          %v4571 = vpop.permute.xlu0 %4570
          %4572 = vrot.lane.b32.xlu0 %v4489, 64
          %v4573 = vpop.permute.xlu0 %4572
          %4574 = vrot.lane.b32.xlu0 %v4503, 64
          %v4575 = vpop.permute.xlu0 %4574
          %4576 = vrot.lane.b32.xlu0 %v4513, 64
          %v4577 = vpop.permute.xlu0 %4576
          %4610 = vst.msk [vmem:[#allocation3 + $0xc] sm:$0xf] %vm2685, %v4515
          %4611 = vst.msk [vmem:[#allocation3 + $0x20] sm:$0xf] %vm2685, %v4517
          %4612 = vst.msk [vmem:[#allocation3 + $0x34] sm:$0xf] %vm2685, %v4519
          %4613 = vst.msk [vmem:[#allocation3 + $0x48] sm:$0xf] %vm2685, %v4521
          %4614 = vst.msk [vmem:[#allocation3 + $0x5c] sm:$0xf] %vm2685, %v4523
          %4615 = vst.msk [vmem:[#allocation3 + $0x70] sm:$0xf] %vm2685, %v4525
          %4616 = vst.msk [vmem:[#allocation3 + $0x84] sm:$0xf] %vm2685, %v4527
          %4617 = vst.msk [vmem:[#allocation3 + $0x98] sm:$0xf] %vm2685, %v4529
          %4618 = vst.msk [vmem:[#allocation3 + $0xac] sm:$0xf] %vm2685, %v4531
          %4619 = vst.msk [vmem:[#allocation3 + $0xc0] sm:$0xf] %vm2685, %v4533
          %4620 = vst.msk [vmem:[#allocation3 + $0xd4] sm:$0xf] %vm2685, %v4535
          %4621 = vst.msk [vmem:[#allocation3 + $0xe8] sm:$0xf] %vm2685, %v4537
          %4622 = vst.msk [vmem:[#allocation3 + $0xfc] sm:$0xf] %vm2685, %v4539
          %4623 = vst.msk [vmem:[#allocation3 + $0x110] sm:$0xf] %vm2685, %v4541
          %4624 = vst.msk [vmem:[#allocation3 + $0x124] sm:$0xf] %vm2685, %v4543
          %4625 = vst.msk [vmem:[#allocation3 + $0x138] sm:$0xf] %vm2685, %v4545
          %4626 = vst.msk [vmem:[#allocation3 + $0x14c] sm:$0xf] %vm2685, %v4547
          %4627 = vst.msk [vmem:[#allocation3 + $0x160] sm:$0xf] %vm2685, %v4549
          %4628 = vst.msk [vmem:[#allocation3 + $0x174] sm:$0xf] %vm2685, %v4551
          %4629 = vst.msk [vmem:[#allocation3 + $0x188] sm:$0xf] %vm2685, %v4553
          %4630 = vst.msk [vmem:[#allocation3 + $0x19c] sm:$0xf] %vm2685, %v4555
          %4631 = vst.msk [vmem:[#allocation3 + $0x1b0] sm:$0xf] %vm2685, %v4557
          %4632 = vst.msk [vmem:[#allocation3 + $0x1c4] sm:$0xf] %vm2685, %v4559
          %4633 = vst.msk [vmem:[#allocation3 + $0x1d8] sm:$0xf] %vm2685, %v4561
          %4634 = vst.msk [vmem:[#allocation3 + $0x1ec] sm:$0xf] %vm2685, %v4563
          %4635 = vst.msk [vmem:[#allocation3 + $0x200] sm:$0xf] %vm2685, %v4565
          %4636 = vst.msk [vmem:[#allocation3 + $0x214] sm:$0xf] %vm2685, %v4567
          %4637 = vst.msk [vmem:[#allocation3 + $0x228] sm:$0xf] %vm2685, %v4569
          %4638 = vst.msk [vmem:[#allocation3 + $0x23c] sm:$0xf] %vm2685, %v4571
          %4639 = vst.msk [vmem:[#allocation3 + $0x250] sm:$0xf] %vm2685, %v4573
          %4640 = vst.msk [vmem:[#allocation3 + $0x264] sm:$0xf] %vm2685, %v4575
          %4641 = vst.msk [vmem:[#allocation3 + $0x278] sm:$0xf] %vm2685, %v4577
          %v4642 = vld [vmem:[%s4017] sm:$0xe]
          %v4643 = vld [vmem:[%s4017 + $0x4] sm:$0xf]
          %v4644 = vld [vmem:[%s4017 + $0x8] sm:$0x1]
          %v4645 = vld [vmem:[%s4017 + $0xc] sm:$0xe]
          %v4646 = vld [vmem:[%s4017 + $0x10] sm:$0xf]
          %v4647 = vld [vmem:[%s4017 + $0x14] sm:$0x1]
          %v4648 = vld [vmem:[%s4017 + $0x18] sm:$0xe]
          %v4649 = vld [vmem:[%s4017 + $0x1c] sm:$0xf]
          %v4650 = vld [vmem:[%s4017 + $0x20] sm:$0x1]
          %v4651 = vld [vmem:[%s4017 + $0x24] sm:$0xe]
          %v4652 = vld [vmem:[%s4017 + $0x28] sm:$0xf]
          %v4653 = vld [vmem:[%s4017 + $0x2c] sm:$0x1]
          %v4654 = vld [vmem:[%s4017 + $0x30] sm:$0xe]
          %v4655 = vld [vmem:[%s4017 + $0x34] sm:$0xf]
          %v4656 = vld [vmem:[%s4017 + $0x38] sm:$0x1]
          %v4657 = vld [vmem:[%s4017 + $0x3c] sm:$0xe]
          %v4658 = vld [vmem:[%s4017 + $0x40] sm:$0xf]
          %v4659 = vld [vmem:[%s4017 + $0x44] sm:$0x1]
          %v4660 = vld [vmem:[%s4017 + $0x48] sm:$0xe]
          %v4661 = vld [vmem:[%s4017 + $0x4c] sm:$0xf]
          %v4662 = vld [vmem:[%s4017 + $0x50] sm:$0x1]
          %v4663 = vld [vmem:[%s4017 + $0x54] sm:$0xe]
          %v4664 = vld [vmem:[%s4017 + $0x58] sm:$0xf]
          %v4665 = vld [vmem:[%s4017 + $0x5c] sm:$0x1]
          %v4666 = vld [vmem:[%s4017 + $0x60] sm:$0xe]
          %v4667 = vld [vmem:[%s4017 + $0x64] sm:$0xf]
          %v4668 = vld [vmem:[%s4017 + $0x68] sm:$0x1]
          %v4669 = vld [vmem:[%s4017 + $0x6c] sm:$0xe]
          %v4670 = vld [vmem:[%s4017 + $0x70] sm:$0xf]
          %v4671 = vld [vmem:[%s4017 + $0x74] sm:$0x1]
          %v4672 = vld [vmem:[%s4017 + $0x78] sm:$0xe]
          %v4673 = vld [vmem:[%s4017 + $0x7c] sm:$0xf]
          %v4674 = vld [vmem:[%s4017 + $0x80] sm:$0x1]
          %v4675 = vld [vmem:[%s4017 + $0x84] sm:$0xe]
          %v4676 = vld [vmem:[%s4017 + $0x88] sm:$0xf]
          %v4677 = vld [vmem:[%s4017 + $0x8c] sm:$0x1]
          %v4678 = vld [vmem:[%s4017 + $0x90] sm:$0xe]
          %v4679 = vld [vmem:[%s4017 + $0x94] sm:$0xf]
          %v4680 = vld [vmem:[%s4017 + $0x98] sm:$0x1]
          %v4681 = vld [vmem:[%s4017 + $0x9c] sm:$0xe]
          %v4682 = vld [vmem:[%s4017 + $0xa0] sm:$0xf]
          %v4683 = vld [vmem:[%s4017 + $0xa4] sm:$0x1]
          %v4684 = vld [vmem:[%s4017 + $0xa8] sm:$0xe]
          %v4685 = vld [vmem:[%s4017 + $0xac] sm:$0xf]
          %v4686 = vld [vmem:[%s4017 + $0xb0] sm:$0x1]
          %v4687 = vld [vmem:[%s4017 + $0xb4] sm:$0xe]
          %v4688 = vld [vmem:[%s4017 + $0xb8] sm:$0xf]
          %v4689 = vld [vmem:[%s4017 + $0xbc] sm:$0x1]
          %v4738 = vrot.slane %v4642, 5
          %v4739 = vrot.slane %v4738, 4
          %v4740 = vrot.slane %v4643, 5
          %v4741 = vsel %vm2816, %v4739, %v4740
          %v4742 = vrot.slane %v4740, 4
          %v4743 = vrot.slane %v4644, 5
          %v4744 = vsel %vm2816, %v4742, %v4743
          %v4745 = vrot.slane %v4645, 5
          %v4746 = vrot.slane %v4745, 4
          %v4747 = vrot.slane %v4646, 5
          %v4748 = vsel %vm2816, %v4746, %v4747
          %v4749 = vrot.slane %v4747, 4
          %v4750 = vrot.slane %v4647, 5
          %v4751 = vsel %vm2816, %v4749, %v4750
          %v4752 = vrot.slane %v4648, 5
          %v4753 = vrot.slane %v4752, 4
          %v4754 = vrot.slane %v4649, 5
          %v4755 = vsel %vm2816, %v4753, %v4754
          %v4756 = vrot.slane %v4754, 4
          %v4757 = vrot.slane %v4650, 5
          %v4758 = vsel %vm2816, %v4756, %v4757
          %v4759 = vrot.slane %v4651, 5
          %v4760 = vrot.slane %v4759, 4
          %v4761 = vrot.slane %v4652, 5
          %v4762 = vsel %vm2816, %v4760, %v4761
          %v4763 = vrot.slane %v4761, 4
          %v4764 = vrot.slane %v4653, 5
          %v4765 = vsel %vm2816, %v4763, %v4764
          %v4766 = vrot.slane %v4654, 5
          %v4767 = vrot.slane %v4766, 4
          %v4768 = vrot.slane %v4655, 5
          %v4769 = vsel %vm2816, %v4767, %v4768
          %v4770 = vrot.slane %v4768, 4
          %v4771 = vrot.slane %v4656, 5
          %v4772 = vsel %vm2816, %v4770, %v4771
          %v4773 = vrot.slane %v4657, 5
          %v4774 = vrot.slane %v4773, 4
          %v4775 = vrot.slane %v4658, 5
          %v4776 = vsel %vm2816, %v4774, %v4775
          %v4777 = vrot.slane %v4775, 4
          %v4778 = vrot.slane %v4659, 5
          %v4779 = vsel %vm2816, %v4777, %v4778
          %v4780 = vrot.slane %v4660, 5
          %v4781 = vrot.slane %v4780, 4
          %v4782 = vrot.slane %v4661, 5
          %v4783 = vsel %vm2816, %v4781, %v4782
          %v4784 = vrot.slane %v4782, 4
          %v4785 = vrot.slane %v4662, 5
          %v4786 = vsel %vm2816, %v4784, %v4785
          %v4787 = vrot.slane %v4663, 5
          %v4788 = vrot.slane %v4787, 4
          %v4789 = vrot.slane %v4664, 5
          %v4790 = vsel %vm2816, %v4788, %v4789
          %v4791 = vrot.slane %v4789, 4
          %v4792 = vrot.slane %v4665, 5
          %v4793 = vsel %vm2816, %v4791, %v4792
          %v4794 = vrot.slane %v4666, 5
          %v4795 = vrot.slane %v4794, 4
          %v4796 = vrot.slane %v4667, 5
          %v4797 = vsel %vm2816, %v4795, %v4796
          %v4798 = vrot.slane %v4796, 4
          %v4799 = vrot.slane %v4668, 5
          %v4800 = vsel %vm2816, %v4798, %v4799
          %v4801 = vrot.slane %v4669, 5
          %v4802 = vrot.slane %v4801, 4
          %v4803 = vrot.slane %v4670, 5
          %v4804 = vsel %vm2816, %v4802, %v4803
          %v4805 = vrot.slane %v4803, 4
          %v4806 = vrot.slane %v4671, 5
          %v4807 = vsel %vm2816, %v4805, %v4806
          %v4808 = vrot.slane %v4672, 5
          %v4809 = vrot.slane %v4808, 4
          %v4810 = vrot.slane %v4673, 5
          %v4811 = vsel %vm2816, %v4809, %v4810
          %v4812 = vrot.slane %v4810, 4
          %v4813 = vrot.slane %v4674, 5
          %v4814 = vsel %vm2816, %v4812, %v4813
          %v4815 = vrot.slane %v4675, 5
          %v4816 = vrot.slane %v4815, 4
          %v4817 = vrot.slane %v4676, 5
          %v4818 = vsel %vm2816, %v4816, %v4817
          %v4819 = vrot.slane %v4817, 4
          %v4820 = vrot.slane %v4677, 5
          %v4821 = vsel %vm2816, %v4819, %v4820
          %v4822 = vrot.slane %v4678, 5
          %v4823 = vrot.slane %v4822, 4
          %v4824 = vrot.slane %v4679, 5
          %v4825 = vsel %vm2816, %v4823, %v4824
          %v4826 = vrot.slane %v4824, 4
          %v4827 = vrot.slane %v4680, 5
          %v4828 = vsel %vm2816, %v4826, %v4827
          %v4829 = vrot.slane %v4681, 5
          %v4830 = vrot.slane %v4829, 4
          %v4831 = vrot.slane %v4682, 5
          %v4832 = vsel %vm2816, %v4830, %v4831
          %v4833 = vrot.slane %v4831, 4
          %v4834 = vrot.slane %v4683, 5
          %v4835 = vsel %vm2816, %v4833, %v4834
          %v4836 = vrot.slane %v4684, 5
          %v4837 = vrot.slane %v4836, 4
          %v4838 = vrot.slane %v4685, 5
          %v4839 = vsel %vm2816, %v4837, %v4838
          %v4840 = vrot.slane %v4838, 4
          %v4841 = vrot.slane %v4686, 5
          %v4842 = vsel %vm2816, %v4840, %v4841
          %v4843 = vrot.slane %v4687, 5
          %v4844 = vrot.slane %v4843, 4
          %v4845 = vrot.slane %v4688, 5
          %v4846 = vsel %vm2816, %v4844, %v4845
          %v4847 = vrot.slane %v4845, 4
          %v4848 = vrot.slane %v4689, 5
          %v4849 = vsel %vm2816, %v4847, %v4848
          %4882 = vst.msk [vmem:[#allocation3 + $0x10] sm:$0xf] %vm197, %v4741
          %4883 = vst.msk [vmem:[#allocation3 + $0x24] sm:$0xf] %vm197, %v4744
          %4884 = vst.msk [vmem:[#allocation3 + $0x38] sm:$0xf] %vm197, %v4748
          %4885 = vst.msk [vmem:[#allocation3 + $0x4c] sm:$0xf] %vm197, %v4751
          %4886 = vst.msk [vmem:[#allocation3 + $0x60] sm:$0xf] %vm197, %v4755
          %4887 = vst.msk [vmem:[#allocation3 + $0x74] sm:$0xf] %vm197, %v4758
          %4888 = vst.msk [vmem:[#allocation3 + $0x88] sm:$0xf] %vm197, %v4762
          %4889 = vst.msk [vmem:[#allocation3 + $0x9c] sm:$0xf] %vm197, %v4765
          %4890 = vst.msk [vmem:[#allocation3 + $0xb0] sm:$0xf] %vm197, %v4769
          %4891 = vst.msk [vmem:[#allocation3 + $0xc4] sm:$0xf] %vm197, %v4772
          %4892 = vst.msk [vmem:[#allocation3 + $0xd8] sm:$0xf] %vm197, %v4776
          %4893 = vst.msk [vmem:[#allocation3 + $0xec] sm:$0xf] %vm197, %v4779
          %4894 = vst.msk [vmem:[#allocation3 + $0x100] sm:$0xf] %vm197, %v4783
          %4895 = vst.msk [vmem:[#allocation3 + $0x114] sm:$0xf] %vm197, %v4786
          %4896 = vst.msk [vmem:[#allocation3 + $0x128] sm:$0xf] %vm197, %v4790
          %4897 = vst.msk [vmem:[#allocation3 + $0x13c] sm:$0xf] %vm197, %v4793
          %4898 = vst.msk [vmem:[#allocation3 + $0x150] sm:$0xf] %vm197, %v4797
          %4899 = vst.msk [vmem:[#allocation3 + $0x164] sm:$0xf] %vm197, %v4800
          %4900 = vst.msk [vmem:[#allocation3 + $0x178] sm:$0xf] %vm197, %v4804
          %4901 = vst.msk [vmem:[#allocation3 + $0x18c] sm:$0xf] %vm197, %v4807
          %4902 = vst.msk [vmem:[#allocation3 + $0x1a0] sm:$0xf] %vm197, %v4811
          %4903 = vst.msk [vmem:[#allocation3 + $0x1b4] sm:$0xf] %vm197, %v4814
          %4904 = vst.msk [vmem:[#allocation3 + $0x1c8] sm:$0xf] %vm197, %v4818
          %4905 = vst.msk [vmem:[#allocation3 + $0x1dc] sm:$0xf] %vm197, %v4821
          %4906 = vst.msk [vmem:[#allocation3 + $0x1f0] sm:$0xf] %vm197, %v4825
          %4907 = vst.msk [vmem:[#allocation3 + $0x204] sm:$0xf] %vm197, %v4828
          %4908 = vst.msk [vmem:[#allocation3 + $0x218] sm:$0xf] %vm197, %v4832
          %4909 = vst.msk [vmem:[#allocation3 + $0x22c] sm:$0xf] %vm197, %v4835
          %4910 = vst.msk [vmem:[#allocation3 + $0x240] sm:$0xf] %vm197, %v4839
          %4911 = vst.msk [vmem:[#allocation3 + $0x254] sm:$0xf] %vm197, %v4842
          %4912 = vst.msk [vmem:[#allocation3 + $0x268] sm:$0xf] %vm197, %v4846
          %4913 = vst.msk [vmem:[#allocation3 + $0x27c] sm:$0xf] %vm197, %v4849
          %v4914 = vld [vmem:[#allocation3] sm:$0xff]
          %v4915 = vld [vmem:[#allocation3 + $0x8] sm:$0xff]
          %v4916 = vld [vmem:[#allocation3 + $0x10] sm:$0xf]
          %v4917 = vld [vmem:[#allocation3 + $0x14] sm:$0xff]
          %v4918 = vld [vmem:[#allocation3 + $0x1c] sm:$0xff]
          %v4919 = vld [vmem:[#allocation3 + $0x24] sm:$0xf]
          %v4920 = vld [vmem:[#allocation3 + $0x28] sm:$0xff]
          %v4921 = vld [vmem:[#allocation3 + $0x30] sm:$0xff]
          %v4922 = vld [vmem:[#allocation3 + $0x38] sm:$0xf]
          %v4923 = vld [vmem:[#allocation3 + $0x3c] sm:$0xff]
          %v4924 = vld [vmem:[#allocation3 + $0x44] sm:$0xff]
          %v4925 = vld [vmem:[#allocation3 + $0x4c] sm:$0xf]
          %v4926 = vld [vmem:[#allocation3 + $0x50] sm:$0xff]
          %v4927 = vld [vmem:[#allocation3 + $0x58] sm:$0xff]
          %v4928 = vld [vmem:[#allocation3 + $0x60] sm:$0xf]
          %v4929 = vld [vmem:[#allocation3 + $0x64] sm:$0xff]
          %v4930 = vld [vmem:[#allocation3 + $0x6c] sm:$0xff]
          %v4931 = vld [vmem:[#allocation3 + $0x74] sm:$0xf]
          %v4932 = vld [vmem:[#allocation3 + $0x78] sm:$0xff]
          %v4933 = vld [vmem:[#allocation3 + $0x80] sm:$0xff]
          %v4934 = vld [vmem:[#allocation3 + $0x88] sm:$0xf]
          %v4935 = vld [vmem:[#allocation3 + $0x8c] sm:$0xff]
          %v4936 = vld [vmem:[#allocation3 + $0x94] sm:$0xff]
          %v4937 = vld [vmem:[#allocation3 + $0x9c] sm:$0xf]
          %v4938 = vld [vmem:[#allocation3 + $0xa0] sm:$0xff]
          %v4939 = vld [vmem:[#allocation3 + $0xa8] sm:$0xff]
          %v4940 = vld [vmem:[#allocation3 + $0xb0] sm:$0xf]
          %v4941 = vld [vmem:[#allocation3 + $0xb4] sm:$0xff]
          %v4942 = vld [vmem:[#allocation3 + $0xbc] sm:$0xff]
          %v4943 = vld [vmem:[#allocation3 + $0xc4] sm:$0xf]
          %v4944 = vld [vmem:[#allocation3 + $0xc8] sm:$0xff]
          %v4945 = vld [vmem:[#allocation3 + $0xd0] sm:$0xff]
          %v4946 = vld [vmem:[#allocation3 + $0xd8] sm:$0xf]
          %v4947 = vld [vmem:[#allocation3 + $0xdc] sm:$0xff]
          %v4948 = vld [vmem:[#allocation3 + $0xe4] sm:$0xff]
          %v4949 = vld [vmem:[#allocation3 + $0xec] sm:$0xf]
          %v4950 = vld [vmem:[#allocation3 + $0xf0] sm:$0xff]
          %v4951 = vld [vmem:[#allocation3 + $0xf8] sm:$0xff]
          %v4952 = vld [vmem:[#allocation3 + $0x100] sm:$0xf]
          %v4953 = vld [vmem:[#allocation3 + $0x104] sm:$0xff]
          %v4954 = vld [vmem:[#allocation3 + $0x10c] sm:$0xff]
          %v4955 = vld [vmem:[#allocation3 + $0x114] sm:$0xf]
          %v4956 = vld [vmem:[#allocation3 + $0x118] sm:$0xff]
          %v4957 = vld [vmem:[#allocation3 + $0x120] sm:$0xff]
          %v4958 = vld [vmem:[#allocation3 + $0x128] sm:$0xf]
          %v4959 = vld [vmem:[#allocation3 + $0x12c] sm:$0xff]
          %v4960 = vld [vmem:[#allocation3 + $0x134] sm:$0xff]
          %v4961 = vld [vmem:[#allocation3 + $0x13c] sm:$0xf]
          %v4962 = vld [vmem:[#allocation3 + $0x140] sm:$0xff]
          %v4963 = vld [vmem:[#allocation3 + $0x148] sm:$0xff]
          %v4964 = vld [vmem:[#allocation3 + $0x150] sm:$0xf]
          %v4965 = vld [vmem:[#allocation3 + $0x154] sm:$0xff]
          %v4966 = vld [vmem:[#allocation3 + $0x15c] sm:$0xff]
          %v4967 = vld [vmem:[#allocation3 + $0x164] sm:$0xf]
          %v4968 = vld [vmem:[#allocation3 + $0x168] sm:$0xff]
          %v4969 = vld [vmem:[#allocation3 + $0x170] sm:$0xff]
          %v4970 = vld [vmem:[#allocation3 + $0x178] sm:$0xf]
          %v4971 = vld [vmem:[#allocation3 + $0x17c] sm:$0xff]
          %v4972 = vld [vmem:[#allocation3 + $0x184] sm:$0xff]
          %v4973 = vld [vmem:[#allocation3 + $0x18c] sm:$0xf]
          %v4974 = vld [vmem:[#allocation3 + $0x190] sm:$0xff]
          %v4975 = vld [vmem:[#allocation3 + $0x198] sm:$0xff]
          %v4976 = vld [vmem:[#allocation3 + $0x1a0] sm:$0xf]
          %v4977 = vld [vmem:[#allocation3 + $0x1a4] sm:$0xff]
          %v4978 = vld [vmem:[#allocation3 + $0x1ac] sm:$0xff]
          %v4979 = vld [vmem:[#allocation3 + $0x1b4] sm:$0xf]
          %v4980 = vld [vmem:[#allocation3 + $0x1b8] sm:$0xff]
          %v4981 = vld [vmem:[#allocation3 + $0x1c0] sm:$0xff]
          %v4982 = vld [vmem:[#allocation3 + $0x1c8] sm:$0xf]
          %v4983 = vld [vmem:[#allocation3 + $0x1cc] sm:$0xff]
          %v4984 = vld [vmem:[#allocation3 + $0x1d4] sm:$0xff]
          %v4985 = vld [vmem:[#allocation3 + $0x1dc] sm:$0xf]
          %v4986 = vld [vmem:[#allocation3 + $0x1e0] sm:$0xff]
          %v4987 = vld [vmem:[#allocation3 + $0x1e8] sm:$0xff]
          %v4988 = vld [vmem:[#allocation3 + $0x1f0] sm:$0xf]
          %v4989 = vld [vmem:[#allocation3 + $0x1f4] sm:$0xff]
          %v4990 = vld [vmem:[#allocation3 + $0x1fc] sm:$0xff]
          %v4991 = vld [vmem:[#allocation3 + $0x204] sm:$0xf]
          %v4992 = vld [vmem:[#allocation3 + $0x208] sm:$0xff]
          %v4993 = vld [vmem:[#allocation3 + $0x210] sm:$0xff]
          %v4994 = vld [vmem:[#allocation3 + $0x218] sm:$0xf]
          %v4995 = vld [vmem:[#allocation3 + $0x21c] sm:$0xff]
          %v4996 = vld [vmem:[#allocation3 + $0x224] sm:$0xff]
          %v4997 = vld [vmem:[#allocation3 + $0x22c] sm:$0xf]
          %v4998 = vld [vmem:[#allocation3 + $0x230] sm:$0xff]
          %v4999 = vld [vmem:[#allocation3 + $0x238] sm:$0xff]
          %v5000 = vld [vmem:[#allocation3 + $0x240] sm:$0xf]
          %v5001 = vld [vmem:[#allocation3 + $0x244] sm:$0xff]
          %v5002 = vld [vmem:[#allocation3 + $0x24c] sm:$0xff]
          %v5003 = vld [vmem:[#allocation3 + $0x254] sm:$0xf]
          %v5004 = vld [vmem:[#allocation3 + $0x258] sm:$0xff]
          %v5005 = vld [vmem:[#allocation3 + $0x260] sm:$0xff]
          %v5006 = vld [vmem:[#allocation3 + $0x268] sm:$0xf]
          %v5007 = vld [vmem:[#allocation3 + $0x26c] sm:$0xff]
          %v5008 = vld [vmem:[#allocation3 + $0x274] sm:$0xff]
          %v5009 = vld [vmem:[#allocation3 + $0x27c] sm:$0xf]
          %s5010 = smul.u32 %s2085, 72
          %s5011 = smul.addr %s5010, 4
          %s5012 = scalar_lea.vmem %s2, %s5011
          %v5013 = vld [vmem:[%s5012] sm:$0xf]
          %v5014 = vld [vmem:[%s5012 + $0x4] sm:$0xf]
          %v5015 = vld [vmem:[%s5012 + $0x8] sm:$0xf]
          %v5016 = vld [vmem:[%s5012 + $0xc] sm:$0xf]
          %v5017 = vld [vmem:[%s5012 + $0x10] sm:$0xf]
          %v5018 = vld [vmem:[%s5012 + $0x14] sm:$0xf]
          %v5019 = vld [vmem:[%s5012 + $0x18] sm:$0xf]
          %v5020 = vld [vmem:[%s5012 + $0x1c] sm:$0xf]
          %v5021 = vld [vmem:[%s5012 + $0x20] sm:$0xf]
          %v5022 = vld [vmem:[%s5012 + $0x24] sm:$0xf]
          %v5023 = vld [vmem:[%s5012 + $0x28] sm:$0xf]
          %v5024 = vld [vmem:[%s5012 + $0x2c] sm:$0xf]
          %v5025 = vld [vmem:[%s5012 + $0x30] sm:$0xf]
          %v5026 = vld [vmem:[%s5012 + $0x34] sm:$0xf]
          %v5027 = vld [vmem:[%s5012 + $0x38] sm:$0xf]
          %v5028 = vld [vmem:[%s5012 + $0x3c] sm:$0xf]
          %v5029 = vld [vmem:[%s5012 + $0x40] sm:$0xf]
          %v5030 = vld [vmem:[%s5012 + $0x44] sm:$0xf]
          %v5031 = vld [vmem:[%s5012 + $0x48] sm:$0xf]
          %v5032 = vld [vmem:[%s5012 + $0x4c] sm:$0xf]
          %v5033 = vld [vmem:[%s5012 + $0x50] sm:$0xf]
          %v5034 = vld [vmem:[%s5012 + $0x54] sm:$0xf]
          %v5035 = vld [vmem:[%s5012 + $0x58] sm:$0xf]
          %v5036 = vld [vmem:[%s5012 + $0x5c] sm:$0xf]
          %v5037 = vld [vmem:[%s5012 + $0x60] sm:$0xf]
          %v5038 = vld [vmem:[%s5012 + $0x64] sm:$0xf]
          %v5039 = vld [vmem:[%s5012 + $0x68] sm:$0xf]
          %v5040 = vld [vmem:[%s5012 + $0x6c] sm:$0xf]
          %v5041 = vld [vmem:[%s5012 + $0x70] sm:$0xf]
          %v5042 = vld [vmem:[%s5012 + $0x74] sm:$0xf]
          %v5043 = vld [vmem:[%s5012 + $0x78] sm:$0xf]
          %v5044 = vld [vmem:[%s5012 + $0x7c] sm:$0xf]
          %v5045 = vld [vmem:[%s5012 + $0x80] sm:$0xf]
          %v5046 = vld [vmem:[%s5012 + $0x84] sm:$0xf]
          %v5047 = vld [vmem:[%s5012 + $0x88] sm:$0xf]
          %v5048 = vld [vmem:[%s5012 + $0x8c] sm:$0xf]
          %v5049 = vld [vmem:[%s5012 + $0x90] sm:$0xf]
          %v5050 = vld [vmem:[%s5012 + $0x94] sm:$0xf]
          %v5051 = vld [vmem:[%s5012 + $0x98] sm:$0xf]
          %v5052 = vld [vmem:[%s5012 + $0x9c] sm:$0xf]
          %v5053 = vld [vmem:[%s5012 + $0xa0] sm:$0xf]
          %v5054 = vld [vmem:[%s5012 + $0xa4] sm:$0xf]
          %v5055 = vld [vmem:[%s5012 + $0xa8] sm:$0xf]
          %v5056 = vld [vmem:[%s5012 + $0xac] sm:$0xf]
          %v5057 = vld [vmem:[%s5012 + $0xb0] sm:$0xf]
          %v5058 = vld [vmem:[%s5012 + $0xb4] sm:$0xf]
          %v5059 = vld [vmem:[%s5012 + $0xb8] sm:$0xf]
          %v5060 = vld [vmem:[%s5012 + $0xbc] sm:$0xf]
          %v5061 = vld [vmem:[%s5012 + $0xc0] sm:$0xf]
          %v5062 = vld [vmem:[%s5012 + $0xc4] sm:$0xf]
          %v5063 = vld [vmem:[%s5012 + $0xc8] sm:$0xf]
          %v5064 = vld [vmem:[%s5012 + $0xcc] sm:$0xf]
          %v5065 = vld [vmem:[%s5012 + $0xd0] sm:$0xf]
          %v5066 = vld [vmem:[%s5012 + $0xd4] sm:$0xf]
          %v5067 = vld [vmem:[%s5012 + $0xd8] sm:$0xf]
          %v5068 = vld [vmem:[%s5012 + $0xdc] sm:$0xf]
          %v5069 = vld [vmem:[%s5012 + $0xe0] sm:$0xf]
          %v5070 = vld [vmem:[%s5012 + $0xe4] sm:$0xf]
          %v5071 = vld [vmem:[%s5012 + $0xe8] sm:$0xf]
          %v5072 = vld [vmem:[%s5012 + $0xec] sm:$0xf]
          %v5073 = vld [vmem:[%s5012 + $0xf0] sm:$0xf]
          %v5074 = vld [vmem:[%s5012 + $0xf4] sm:$0xf]
          %v5075 = vld [vmem:[%s5012 + $0xf8] sm:$0xf]
          %v5076 = vld [vmem:[%s5012 + $0xfc] sm:$0xf]
          %v5077 = vld [vmem:[%s5012 + $0x100] sm:$0xf]
          %v5078 = vld [vmem:[%s5012 + $0x104] sm:$0xf]
          %v5079 = vld [vmem:[%s5012 + $0x108] sm:$0xf]
          %v5080 = vld [vmem:[%s5012 + $0x10c] sm:$0xf]
          %v5081 = vld [vmem:[%s5012 + $0x110] sm:$0xf]
          %v5082 = vld [vmem:[%s5012 + $0x114] sm:$0xf]
          %v5083 = vld [vmem:[%s5012 + $0x118] sm:$0xf]
          %v5084 = vld [vmem:[%s5012 + $0x11c] sm:$0xf]
          %v5181 = vunpack.c.l.b16 %v4914
          %v5182 = vunpack.c.h.b16 %v4914
          %v5183 = vunpack.c.l.b16 %v4915
          %v5184 = vunpack.c.h.b16 %v4915
          %v5185 = vunpack.c.l.b16 %v4916
          %v5186 = vunpack.c.l.b16 %v4917
          %v5187 = vunpack.c.h.b16 %v4917
          %v5188 = vunpack.c.l.b16 %v4918
          %v5189 = vunpack.c.h.b16 %v4918
          %v5190 = vunpack.c.l.b16 %v4919
          %v5191 = vunpack.c.l.b16 %v4920
          %v5192 = vunpack.c.h.b16 %v4920
          %v5193 = vunpack.c.l.b16 %v4921
          %v5194 = vunpack.c.h.b16 %v4921
          %v5195 = vunpack.c.l.b16 %v4922
          %v5196 = vunpack.c.l.b16 %v4923
          %v5197 = vunpack.c.h.b16 %v4923
          %v5198 = vunpack.c.l.b16 %v4924
          %v5199 = vunpack.c.h.b16 %v4924
          %v5200 = vunpack.c.l.b16 %v4925
          %v5201 = vunpack.c.l.b16 %v4926
          %v5202 = vunpack.c.h.b16 %v4926
          %v5203 = vunpack.c.l.b16 %v4927
          %v5204 = vunpack.c.h.b16 %v4927
          %v5205 = vunpack.c.l.b16 %v4928
          %v5206 = vunpack.c.l.b16 %v4929
          %v5207 = vunpack.c.h.b16 %v4929
          %v5208 = vunpack.c.l.b16 %v4930
          %v5209 = vunpack.c.h.b16 %v4930
          %v5210 = vunpack.c.l.b16 %v4931
          %v5211 = vunpack.c.l.b16 %v4932
          %v5212 = vunpack.c.h.b16 %v4932
          %v5213 = vunpack.c.l.b16 %v4933
          %v5214 = vunpack.c.h.b16 %v4933
          %v5215 = vunpack.c.l.b16 %v4934
          %v5216 = vunpack.c.l.b16 %v4935
          %v5217 = vunpack.c.h.b16 %v4935
          %v5218 = vunpack.c.l.b16 %v4936
          %v5219 = vunpack.c.h.b16 %v4936
          %v5220 = vunpack.c.l.b16 %v4937
          %v5221 = vunpack.c.l.b16 %v4938
          %v5222 = vunpack.c.h.b16 %v4938
          %v5223 = vunpack.c.l.b16 %v4939
          %v5224 = vunpack.c.h.b16 %v4939
          %v5225 = vunpack.c.l.b16 %v4940
          %v5226 = vunpack.c.l.b16 %v4941
          %v5227 = vunpack.c.h.b16 %v4941
          %v5228 = vunpack.c.l.b16 %v4942
          %v5229 = vunpack.c.h.b16 %v4942
          %v5230 = vunpack.c.l.b16 %v4943
          %v5231 = vunpack.c.l.b16 %v4944
          %v5232 = vunpack.c.h.b16 %v4944
          %v5233 = vunpack.c.l.b16 %v4945
          %v5234 = vunpack.c.h.b16 %v4945
          %v5235 = vunpack.c.l.b16 %v4946
          %v5236 = vunpack.c.l.b16 %v4947
          %v5237 = vunpack.c.h.b16 %v4947
          %v5238 = vunpack.c.l.b16 %v4948
          %v5239 = vunpack.c.h.b16 %v4948
          %v5240 = vunpack.c.l.b16 %v4949
          %v5241 = vunpack.c.l.b16 %v4950
          %v5242 = vunpack.c.h.b16 %v4950
          %v5243 = vunpack.c.l.b16 %v4951
          %v5244 = vunpack.c.h.b16 %v4951
          %v5245 = vunpack.c.l.b16 %v4952
          %v5246 = vunpack.c.l.b16 %v4953
          %v5247 = vunpack.c.h.b16 %v4953
          %v5248 = vunpack.c.l.b16 %v4954
          %v5249 = vunpack.c.h.b16 %v4954
          %v5250 = vunpack.c.l.b16 %v4955
          %v5251 = vunpack.c.l.b16 %v4956
          %v5252 = vunpack.c.h.b16 %v4956
          %v5253 = vunpack.c.l.b16 %v4957
          %v5254 = vunpack.c.h.b16 %v4957
          %v5255 = vunpack.c.l.b16 %v4958
          %v5256 = vunpack.c.l.b16 %v4959
          %v5257 = vunpack.c.h.b16 %v4959
          %v5258 = vunpack.c.l.b16 %v4960
          %v5259 = vunpack.c.h.b16 %v4960
          %v5260 = vunpack.c.l.b16 %v4961
          %v5261 = vunpack.c.l.b16 %v4962
          %v5262 = vunpack.c.h.b16 %v4962
          %v5263 = vunpack.c.l.b16 %v4963
          %v5264 = vunpack.c.h.b16 %v4963
          %v5265 = vunpack.c.l.b16 %v4964
          %v5266 = vunpack.c.l.b16 %v4965
          %v5267 = vunpack.c.h.b16 %v4965
          %v5268 = vunpack.c.l.b16 %v4966
          %v5269 = vunpack.c.h.b16 %v4966
          %v5270 = vunpack.c.l.b16 %v4967
          %v5271 = vunpack.c.l.b16 %v4968
          %v5272 = vunpack.c.h.b16 %v4968
          %v5273 = vunpack.c.l.b16 %v4969
          %v5274 = vunpack.c.h.b16 %v4969
          %v5275 = vunpack.c.l.b16 %v4970
          %v5276 = vunpack.c.l.b16 %v4971
          %v5277 = vunpack.c.h.b16 %v4971
          %v5278 = vunpack.c.l.b16 %v4972
          %v5279 = vunpack.c.h.b16 %v4972
          %v5280 = vunpack.c.l.b16 %v4973
          %v5281 = vunpack.c.l.b16 %v4974
          %v5282 = vunpack.c.h.b16 %v4974
          %v5283 = vunpack.c.l.b16 %v4975
          %v5284 = vunpack.c.h.b16 %v4975
          %v5285 = vunpack.c.l.b16 %v4976
          %v5286 = vunpack.c.l.b16 %v4977
          %v5287 = vunpack.c.h.b16 %v4977
          %v5288 = vunpack.c.l.b16 %v4978
          %v5289 = vunpack.c.h.b16 %v4978
          %v5290 = vunpack.c.l.b16 %v4979
          %v5291 = vunpack.c.l.b16 %v4980
          %v5292 = vunpack.c.h.b16 %v4980
          %v5293 = vunpack.c.l.b16 %v4981
          %v5294 = vunpack.c.h.b16 %v4981
          %v5295 = vunpack.c.l.b16 %v4982
          %v5296 = vunpack.c.l.b16 %v4983
          %v5297 = vunpack.c.h.b16 %v4983
          %v5298 = vunpack.c.l.b16 %v4984
          %v5299 = vunpack.c.h.b16 %v4984
          %v5300 = vunpack.c.l.b16 %v4985
          %v5301 = vunpack.c.l.b16 %v4986
          %v5302 = vunpack.c.h.b16 %v4986
          %v5303 = vunpack.c.l.b16 %v4987
          %v5304 = vunpack.c.h.b16 %v4987
          %v5305 = vunpack.c.l.b16 %v4988
          %v5306 = vunpack.c.l.b16 %v4989
          %v5307 = vunpack.c.h.b16 %v4989
          %v5308 = vunpack.c.l.b16 %v4990
          %v5309 = vunpack.c.h.b16 %v4990
          %v5310 = vunpack.c.l.b16 %v4991
          %v5311 = vunpack.c.l.b16 %v4992
          %v5312 = vunpack.c.h.b16 %v4992
          %v5313 = vunpack.c.l.b16 %v4993
          %v5314 = vunpack.c.h.b16 %v4993
          %v5315 = vunpack.c.l.b16 %v4994
          %v5316 = vunpack.c.l.b16 %v4995
          %v5317 = vunpack.c.h.b16 %v4995
          %v5318 = vunpack.c.l.b16 %v4996
          %v5319 = vunpack.c.h.b16 %v4996
          %v5320 = vunpack.c.l.b16 %v4997
          %v5321 = vunpack.c.l.b16 %v4998
          %v5322 = vunpack.c.h.b16 %v4998
          %v5323 = vunpack.c.l.b16 %v4999
          %v5324 = vunpack.c.h.b16 %v4999
          %v5325 = vunpack.c.l.b16 %v5000
          %v5326 = vunpack.c.l.b16 %v5001
          %v5327 = vunpack.c.h.b16 %v5001
          %v5328 = vunpack.c.l.b16 %v5002
          %v5329 = vunpack.c.h.b16 %v5002
          %v5330 = vunpack.c.l.b16 %v5003
          %v5331 = vunpack.c.l.b16 %v5004
          %v5332 = vunpack.c.h.b16 %v5004
          %v5333 = vunpack.c.l.b16 %v5005
          %v5334 = vunpack.c.h.b16 %v5005
          %v5335 = vunpack.c.l.b16 %v5006
          %v5336 = vunpack.c.l.b16 %v5007
          %v5337 = vunpack.c.h.b16 %v5007
          %v5338 = vunpack.c.l.b16 %v5008
          %v5339 = vunpack.c.h.b16 %v5008
          %v5340 = vunpack.c.l.b16 %v5009
          %v5341 = vpack.c.b16 %v5186, %v5181
          %v5342 = vpack.c.b16 %v5187, %v5182
          %v5343 = vpack.c.b16 %v5188, %v5183
          %v5344 = vpack.c.b16 %v5189, %v5184
          %v5345 = vpack.c.b16 %v5190, %v5185
          %v5346 = vpack.c.b16 %v5196, %v5191
          %v5347 = vpack.c.b16 %v5197, %v5192
          %v5348 = vpack.c.b16 %v5198, %v5193
          %v5349 = vpack.c.b16 %v5199, %v5194
          %v5350 = vpack.c.b16 %v5200, %v5195
          %v5351 = vpack.c.b16 %v5206, %v5201
          %v5352 = vpack.c.b16 %v5207, %v5202
          %v5353 = vpack.c.b16 %v5208, %v5203
          %v5354 = vpack.c.b16 %v5209, %v5204
          %v5355 = vpack.c.b16 %v5210, %v5205
          %v5356 = vpack.c.b16 %v5216, %v5211
          %v5357 = vpack.c.b16 %v5217, %v5212
          %v5358 = vpack.c.b16 %v5218, %v5213
          %v5359 = vpack.c.b16 %v5219, %v5214
          %v5360 = vpack.c.b16 %v5220, %v5215
          %v5361 = vpack.c.b16 %v5226, %v5221
          %v5362 = vpack.c.b16 %v5227, %v5222
          %v5363 = vpack.c.b16 %v5228, %v5223
          %v5364 = vpack.c.b16 %v5229, %v5224
          %v5365 = vpack.c.b16 %v5230, %v5225
          %v5366 = vpack.c.b16 %v5236, %v5231
          %v5367 = vpack.c.b16 %v5237, %v5232
          %v5368 = vpack.c.b16 %v5238, %v5233
          %v5369 = vpack.c.b16 %v5239, %v5234
          %v5370 = vpack.c.b16 %v5240, %v5235
          %v5371 = vpack.c.b16 %v5246, %v5241
          %v5372 = vpack.c.b16 %v5247, %v5242
          %v5373 = vpack.c.b16 %v5248, %v5243
          %v5374 = vpack.c.b16 %v5249, %v5244
          %v5375 = vpack.c.b16 %v5250, %v5245
          %v5376 = vpack.c.b16 %v5256, %v5251
          %v5377 = vpack.c.b16 %v5257, %v5252
          %v5378 = vpack.c.b16 %v5258, %v5253
          %v5379 = vpack.c.b16 %v5259, %v5254
          %v5380 = vpack.c.b16 %v5260, %v5255
          %v5381 = vpack.c.b16 %v5266, %v5261
          %v5382 = vpack.c.b16 %v5267, %v5262
          %v5383 = vpack.c.b16 %v5268, %v5263
          %v5384 = vpack.c.b16 %v5269, %v5264
          %v5385 = vpack.c.b16 %v5270, %v5265
          %v5386 = vpack.c.b16 %v5276, %v5271
          %v5387 = vpack.c.b16 %v5277, %v5272
          %v5388 = vpack.c.b16 %v5278, %v5273
          %v5389 = vpack.c.b16 %v5279, %v5274
          %v5390 = vpack.c.b16 %v5280, %v5275
          %v5391 = vpack.c.b16 %v5286, %v5281
          %v5392 = vpack.c.b16 %v5287, %v5282
          %v5393 = vpack.c.b16 %v5288, %v5283
          %v5394 = vpack.c.b16 %v5289, %v5284
          %v5395 = vpack.c.b16 %v5290, %v5285
          %v5396 = vpack.c.b16 %v5296, %v5291
          %v5397 = vpack.c.b16 %v5297, %v5292
          %v5398 = vpack.c.b16 %v5298, %v5293
          %v5399 = vpack.c.b16 %v5299, %v5294
          %v5400 = vpack.c.b16 %v5300, %v5295
          %v5401 = vpack.c.b16 %v5306, %v5301
          %v5402 = vpack.c.b16 %v5307, %v5302
          %v5403 = vpack.c.b16 %v5308, %v5303
          %v5404 = vpack.c.b16 %v5309, %v5304
          %v5405 = vpack.c.b16 %v5310, %v5305
          %v5406 = vpack.c.b16 %v5316, %v5311
          %v5407 = vpack.c.b16 %v5317, %v5312
          %v5408 = vpack.c.b16 %v5318, %v5313
          %v5409 = vpack.c.b16 %v5319, %v5314
          %v5410 = vpack.c.b16 %v5320, %v5315
          %v5411 = vpack.c.b16 %v5326, %v5321
          %v5412 = vpack.c.b16 %v5327, %v5322
          %v5413 = vpack.c.b16 %v5328, %v5323
          %v5414 = vpack.c.b16 %v5329, %v5324
          %v5415 = vpack.c.b16 %v5330, %v5325
          %v5416 = vpack.c.b16 %v5336, %v5331
          %v5417 = vpack.c.b16 %v5337, %v5332
          %v5418 = vpack.c.b16 %v5338, %v5333
          %v5419 = vpack.c.b16 %v5339, %v5334
          %v5420 = vpack.c.b16 %v5340, %v5335
          %v5557 = vunpack.c.l.b16 %v5013
          %v5558 = vunpack.c.l.b16 %v5014
          %v5559 = vunpack.c.l.b16 %v5015
          %v5560 = vunpack.c.l.b16 %v5016
          %v5561 = vunpack.c.l.b16 %v5017
          %v5562 = vunpack.c.l.b16 %v5018
          %v5563 = vunpack.c.l.b16 %v5019
          %v5564 = vunpack.c.l.b16 %v5020
          %v5565 = vunpack.c.l.b16 %v5021
          %v5566 = vunpack.c.l.b16 %v5022
          %v5567 = vunpack.c.l.b16 %v5023
          %v5568 = vunpack.c.l.b16 %v5024
          %v5569 = vunpack.c.l.b16 %v5025
          %v5570 = vunpack.c.l.b16 %v5026
          %v5571 = vunpack.c.l.b16 %v5027
          %v5572 = vunpack.c.l.b16 %v5028
          %v5573 = vunpack.c.l.b16 %v5029
          %v5574 = vunpack.c.l.b16 %v5030
          %v5575 = vunpack.c.l.b16 %v5031
          %v5576 = vunpack.c.l.b16 %v5032
          %v5577 = vunpack.c.l.b16 %v5033
          %v5578 = vunpack.c.l.b16 %v5034
          %v5579 = vunpack.c.l.b16 %v5035
          %v5580 = vunpack.c.l.b16 %v5036
          %v5581 = vunpack.c.l.b16 %v5037
          %v5582 = vunpack.c.l.b16 %v5038
          %v5583 = vunpack.c.l.b16 %v5039
          %v5584 = vunpack.c.l.b16 %v5040
          %v5585 = vunpack.c.l.b16 %v5041
          %v5586 = vunpack.c.l.b16 %v5042
          %v5587 = vunpack.c.l.b16 %v5043
          %v5588 = vunpack.c.l.b16 %v5044
          %v5589 = vunpack.c.l.b16 %v5045
          %v5590 = vunpack.c.l.b16 %v5046
          %v5591 = vunpack.c.l.b16 %v5047
          %v5592 = vunpack.c.l.b16 %v5048
          %v5593 = vunpack.c.l.b16 %v5049
          %v5594 = vunpack.c.l.b16 %v5050
          %v5595 = vunpack.c.l.b16 %v5051
          %v5596 = vunpack.c.l.b16 %v5052
          %v5597 = vunpack.c.l.b16 %v5053
          %v5598 = vunpack.c.l.b16 %v5054
          %v5599 = vunpack.c.l.b16 %v5055
          %v5600 = vunpack.c.l.b16 %v5056
          %v5601 = vunpack.c.l.b16 %v5057
          %v5602 = vunpack.c.l.b16 %v5058
          %v5603 = vunpack.c.l.b16 %v5059
          %v5604 = vunpack.c.l.b16 %v5060
          %v5605 = vunpack.c.l.b16 %v5061
          %v5606 = vunpack.c.l.b16 %v5062
          %v5607 = vunpack.c.l.b16 %v5063
          %v5608 = vunpack.c.l.b16 %v5064
          %v5609 = vunpack.c.l.b16 %v5065
          %v5610 = vunpack.c.l.b16 %v5066
          %v5611 = vunpack.c.l.b16 %v5067
          %v5612 = vunpack.c.l.b16 %v5068
          %v5613 = vunpack.c.l.b16 %v5069
          %v5614 = vunpack.c.l.b16 %v5070
          %v5615 = vunpack.c.l.b16 %v5071
          %v5616 = vunpack.c.l.b16 %v5072
          %v5617 = vunpack.c.l.b16 %v5073
          %v5618 = vunpack.c.l.b16 %v5074
          %v5619 = vunpack.c.l.b16 %v5075
          %v5620 = vunpack.c.l.b16 %v5076
          %v5621 = vunpack.c.l.b16 %v5077
          %v5622 = vunpack.c.l.b16 %v5078
          %v5623 = vunpack.c.l.b16 %v5079
          %v5624 = vunpack.c.l.b16 %v5080
          %v5625 = vunpack.c.l.b16 %v5081
          %v5626 = vunpack.c.l.b16 %v5082
          %v5627 = vunpack.c.l.b16 %v5083
          %v5628 = vunpack.c.l.b16 %v5084
          %v5629 = vpack.c.b16 %v5558, %v5557
          %v5630 = vpack.c.b16 %v5560, %v5559
          %v5631 = vpack.c.b16 %v5562, %v5561
          %v5632 = vpack.c.b16 %v5564, %v5563
          %v5633 = vpack.c.b16 %v5566, %v5565
          %v5634 = vpack.c.b16 %v5568, %v5567
          %v5635 = vpack.c.b16 %v5570, %v5569
          %v5636 = vpack.c.b16 %v5572, %v5571
          %v5637 = vpack.c.b16 %v5574, %v5573
          %v5638 = vpack.c.b16 %v5576, %v5575
          %v5639 = vpack.c.b16 %v5578, %v5577
          %v5640 = vpack.c.b16 %v5580, %v5579
          %v5641 = vpack.c.b16 %v5582, %v5581
          %v5642 = vpack.c.b16 %v5584, %v5583
          %v5643 = vpack.c.b16 %v5586, %v5585
          %v5644 = vpack.c.b16 %v5588, %v5587
          %v5645 = vpack.c.b16 %v5590, %v5589
          %v5646 = vpack.c.b16 %v5592, %v5591
          %v5647 = vpack.c.b16 %v5594, %v5593
          %v5648 = vpack.c.b16 %v5596, %v5595
          %v5649 = vpack.c.b16 %v5598, %v5597
          %v5650 = vpack.c.b16 %v5600, %v5599
          %v5651 = vpack.c.b16 %v5602, %v5601
          %v5652 = vpack.c.b16 %v5604, %v5603
          %v5653 = vpack.c.b16 %v5606, %v5605
          %v5654 = vpack.c.b16 %v5608, %v5607
          %v5655 = vpack.c.b16 %v5610, %v5609
          %v5656 = vpack.c.b16 %v5612, %v5611
          %v5657 = vpack.c.b16 %v5614, %v5613
          %v5658 = vpack.c.b16 %v5616, %v5615
          %v5659 = vpack.c.b16 %v5618, %v5617
          %v5660 = vpack.c.b16 %v5620, %v5619
          %v5661 = vpack.c.b16 %v5622, %v5621
          %v5662 = vpack.c.b16 %v5624, %v5623
          %v5663 = vpack.c.b16 %v5626, %v5625
          %v5664 = vpack.c.b16 %v5628, %v5627
          %vm5701 = vcmask 523264
          %v5703 = vsel %vm5701, %v5345, 0
          %v5706 = vsel %vm5701, %v5350, 0
          %v5709 = vsel %vm5701, %v5355, 0
          %v5712 = vsel %vm5701, %v5360, 0
          %v5715 = vsel %vm5701, %v5365, 0
          %v5718 = vsel %vm5701, %v5370, 0
          %v5721 = vsel %vm5701, %v5375, 0
          %v5724 = vsel %vm5701, %v5380, 0
          %v5727 = vsel %vm5701, %v5385, 0
          %v5730 = vsel %vm5701, %v5390, 0
          %v5733 = vsel %vm5701, %v5395, 0
          %v5736 = vsel %vm5701, %v5400, 0
          %v5739 = vsel %vm5701, %v5405, 0
          %v5742 = vsel %vm5701, %v5410, 0
          %v5745 = vsel %vm5701, %v5415, 0
          %v5748 = vsel %vm5701, %v5420, 0
          %5750 = vmatpush.bf16.msra.mxu0 %v5636
          %5751 = vmatpush.bf16.msra.mxu0 %v5635
          %5752 = vmatpush.bf16.msra.mxu0 %v5634
          %5753 = vmatpush.bf16.msra.mxu0 %v5633
          %5754 = vmatpush.bf16.msra.mxu0 %v5632
          %5755 = vmatpush.bf16.msra.mxu0 %v5631
          %5756 = vmatpush.bf16.msra.mxu0 %v5630
          %5757 = vmatpush.bf16.msra.mxu0 %v5629
          %5758 = vmatmul.bf16.gmra.mxu0 %v5341
          %v5759 = vpop.f32.mrf.mxu0
          %v5760 = vadd.f32 0.0, %v5759
          %v5761 = vpop.f32.mrf.mxu0
          %v5762 = vadd.f32 0.0, %v5761
          %5763 = vmatmul.bf16.gmra.mxu0 %v5346
          %v5764 = vpop.f32.mrf.mxu0
          %v5765 = vadd.f32 0.0, %v5764
          %v5766 = vpop.f32.mrf.mxu0
          %v5767 = vadd.f32 0.0, %v5766
          %5768 = vmatmul.bf16.gmra.mxu0 %v5351
          %v5769 = vpop.f32.mrf.mxu0
          %v5770 = vadd.f32 0.0, %v5769
          %v5771 = vpop.f32.mrf.mxu0
          %v5772 = vadd.f32 0.0, %v5771
          %5773 = vmatmul.bf16.gmra.mxu0 %v5356
          %v5774 = vpop.f32.mrf.mxu0
          %v5775 = vadd.f32 0.0, %v5774
          %v5776 = vpop.f32.mrf.mxu0
          %v5777 = vadd.f32 0.0, %v5776
          %5778 = vmatmul.bf16.gmra.mxu0 %v5361
          %v5779 = vpop.f32.mrf.mxu0
          %v5780 = vadd.f32 0.0, %v5779
          %v5781 = vpop.f32.mrf.mxu0
          %v5782 = vadd.f32 0.0, %v5781
          %5783 = vmatmul.bf16.gmra.mxu0 %v5366
          %v5784 = vpop.f32.mrf.mxu0
          %v5785 = vadd.f32 0.0, %v5784
          %v5786 = vpop.f32.mrf.mxu0
          %v5787 = vadd.f32 0.0, %v5786
          %5788 = vmatmul.bf16.gmra.mxu0 %v5371
          %v5789 = vpop.f32.mrf.mxu0
          %v5790 = vadd.f32 0.0, %v5789
          %v5791 = vpop.f32.mrf.mxu0
          %v5792 = vadd.f32 0.0, %v5791
          %5793 = vmatmul.bf16.gmra.mxu0 %v5376
          %v5794 = vpop.f32.mrf.mxu0
          %v5795 = vadd.f32 0.0, %v5794
          %v5796 = vpop.f32.mrf.mxu0
          %v5797 = vadd.f32 0.0, %v5796
          %5798 = vmatmul.bf16.gmra.mxu0 %v5381
          %v5799 = vpop.f32.mrf.mxu0
          %v5800 = vadd.f32 0.0, %v5799
          %v5801 = vpop.f32.mrf.mxu0
          %v5802 = vadd.f32 0.0, %v5801
          %5803 = vmatmul.bf16.gmra.mxu0 %v5386
          %v5804 = vpop.f32.mrf.mxu0
          %v5805 = vadd.f32 0.0, %v5804
          %v5806 = vpop.f32.mrf.mxu0
          %v5807 = vadd.f32 0.0, %v5806
          %5808 = vmatmul.bf16.gmra.mxu0 %v5391
          %v5809 = vpop.f32.mrf.mxu0
          %v5810 = vadd.f32 0.0, %v5809
          %v5811 = vpop.f32.mrf.mxu0
          %v5812 = vadd.f32 0.0, %v5811
          %5813 = vmatmul.bf16.gmra.mxu0 %v5396
          %v5814 = vpop.f32.mrf.mxu0
          %v5815 = vadd.f32 0.0, %v5814
          %v5816 = vpop.f32.mrf.mxu0
          %v5817 = vadd.f32 0.0, %v5816
          %5818 = vmatmul.bf16.gmra.mxu0 %v5401
          %v5819 = vpop.f32.mrf.mxu0
          %v5820 = vadd.f32 0.0, %v5819
          %v5821 = vpop.f32.mrf.mxu0
          %v5822 = vadd.f32 0.0, %v5821
          %5823 = vmatmul.bf16.gmra.mxu0 %v5406
          %v5824 = vpop.f32.mrf.mxu0
          %v5825 = vadd.f32 0.0, %v5824
          %v5826 = vpop.f32.mrf.mxu0
          %v5827 = vadd.f32 0.0, %v5826
          %5828 = vmatmul.bf16.gmra.mxu0 %v5411
          %v5829 = vpop.f32.mrf.mxu0
          %v5830 = vadd.f32 0.0, %v5829
          %v5831 = vpop.f32.mrf.mxu0
          %v5832 = vadd.f32 0.0, %v5831
          %5833 = vmatmul.bf16.gmra.mxu0 %v5416
          %v5834 = vpop.f32.mrf.mxu0
          %v5835 = vadd.f32 0.0, %v5834
          %v5836 = vpop.f32.mrf.mxu0
          %v5837 = vadd.f32 0.0, %v5836
          %5838 = vdwg.mxu0
          %5839 = vmatpush.bf16.msra.mxu0 %v5644
          %5840 = vmatpush.bf16.msra.mxu0 %v5643
          %5841 = vmatpush.bf16.msra.mxu0 %v5642
          %5842 = vmatpush.bf16.msra.mxu0 %v5641
          %5843 = vmatpush.bf16.msra.mxu0 %v5640
          %5844 = vmatpush.bf16.msra.mxu0 %v5639
          %5845 = vmatpush.bf16.msra.mxu0 %v5638
          %5846 = vmatpush.bf16.msra.mxu0 %v5637
          %5847 = vmatmul.bf16.gmra.mxu0 %v5342
          %v5848 = vpop.f32.mrf.mxu0
          %v5849 = vadd.f32 %v5760, %v5848
          %v5850 = vpop.f32.mrf.mxu0
          %v5851 = vadd.f32 %v5762, %v5850
          %5852 = vmatmul.bf16.gmra.mxu0 %v5347
          %v5853 = vpop.f32.mrf.mxu0
          %v5854 = vadd.f32 %v5765, %v5853
          %v5855 = vpop.f32.mrf.mxu0
          %v5856 = vadd.f32 %v5767, %v5855
          %5857 = vmatmul.bf16.gmra.mxu0 %v5352
          %v5858 = vpop.f32.mrf.mxu0
          %v5859 = vadd.f32 %v5770, %v5858
          %v5860 = vpop.f32.mrf.mxu0
          %v5861 = vadd.f32 %v5772, %v5860
          %5862 = vmatmul.bf16.gmra.mxu0 %v5357
          %v5863 = vpop.f32.mrf.mxu0
          %v5864 = vadd.f32 %v5775, %v5863
          %v5865 = vpop.f32.mrf.mxu0
          %v5866 = vadd.f32 %v5777, %v5865
          %5867 = vmatmul.bf16.gmra.mxu0 %v5362
          %v5868 = vpop.f32.mrf.mxu0
          %v5869 = vadd.f32 %v5780, %v5868
          %v5870 = vpop.f32.mrf.mxu0
          %v5871 = vadd.f32 %v5782, %v5870
          %5872 = vmatmul.bf16.gmra.mxu0 %v5367
          %v5873 = vpop.f32.mrf.mxu0
          %v5874 = vadd.f32 %v5785, %v5873
          %v5875 = vpop.f32.mrf.mxu0
          %v5876 = vadd.f32 %v5787, %v5875
          %5877 = vmatmul.bf16.gmra.mxu0 %v5372
          %v5878 = vpop.f32.mrf.mxu0
          %v5879 = vadd.f32 %v5790, %v5878
          %v5880 = vpop.f32.mrf.mxu0
          %v5881 = vadd.f32 %v5792, %v5880
          %5882 = vmatmul.bf16.gmra.mxu0 %v5377
          %v5883 = vpop.f32.mrf.mxu0
          %v5884 = vadd.f32 %v5795, %v5883
          %v5885 = vpop.f32.mrf.mxu0
          %v5886 = vadd.f32 %v5797, %v5885
          %5887 = vmatmul.bf16.gmra.mxu0 %v5382
          %v5888 = vpop.f32.mrf.mxu0
          %v5889 = vadd.f32 %v5800, %v5888
          %v5890 = vpop.f32.mrf.mxu0
          %v5891 = vadd.f32 %v5802, %v5890
          %5892 = vmatmul.bf16.gmra.mxu0 %v5387
          %v5893 = vpop.f32.mrf.mxu0
          %v5894 = vadd.f32 %v5805, %v5893
          %v5895 = vpop.f32.mrf.mxu0
          %v5896 = vadd.f32 %v5807, %v5895
          %5897 = vmatmul.bf16.gmra.mxu0 %v5392
          %v5898 = vpop.f32.mrf.mxu0
          %v5899 = vadd.f32 %v5810, %v5898
          %v5900 = vpop.f32.mrf.mxu0
          %v5901 = vadd.f32 %v5812, %v5900
          %5902 = vmatmul.bf16.gmra.mxu0 %v5397
          %v5903 = vpop.f32.mrf.mxu0
          %v5904 = vadd.f32 %v5815, %v5903
          %v5905 = vpop.f32.mrf.mxu0
          %v5906 = vadd.f32 %v5817, %v5905
          %5907 = vmatmul.bf16.gmra.mxu0 %v5402
          %v5908 = vpop.f32.mrf.mxu0
          %v5909 = vadd.f32 %v5820, %v5908
          %v5910 = vpop.f32.mrf.mxu0
          %v5911 = vadd.f32 %v5822, %v5910
          %5912 = vmatmul.bf16.gmra.mxu0 %v5407
          %v5913 = vpop.f32.mrf.mxu0
          %v5914 = vadd.f32 %v5825, %v5913
          %v5915 = vpop.f32.mrf.mxu0
          %v5916 = vadd.f32 %v5827, %v5915
          %5917 = vmatmul.bf16.gmra.mxu0 %v5412
          %v5918 = vpop.f32.mrf.mxu0
          %v5919 = vadd.f32 %v5830, %v5918
          %v5920 = vpop.f32.mrf.mxu0
          %v5921 = vadd.f32 %v5832, %v5920
          %5922 = vmatmul.bf16.gmra.mxu0 %v5417
          %v5923 = vpop.f32.mrf.mxu0
          %v5924 = vadd.f32 %v5835, %v5923
          %v5925 = vpop.f32.mrf.mxu0
          %v5926 = vadd.f32 %v5837, %v5925
          %5927 = vdwg.mxu0
          %5928 = vmatpush.bf16.msra.mxu0 %v5652
          %5929 = vmatpush.bf16.msra.mxu0 %v5651
          %5930 = vmatpush.bf16.msra.mxu0 %v5650
          %5931 = vmatpush.bf16.msra.mxu0 %v5649
          %5932 = vmatpush.bf16.msra.mxu0 %v5648
          %5933 = vmatpush.bf16.msra.mxu0 %v5647
          %5934 = vmatpush.bf16.msra.mxu0 %v5646
          %5935 = vmatpush.bf16.msra.mxu0 %v5645
          %5936 = vmatmul.bf16.gmra.mxu0 %v5343
          %v5937 = vpop.f32.mrf.mxu0
          %v5938 = vadd.f32 %v5849, %v5937
          %v5939 = vpop.f32.mrf.mxu0
          %v5940 = vadd.f32 %v5851, %v5939
          %5941 = vmatmul.bf16.gmra.mxu0 %v5348
          %v5942 = vpop.f32.mrf.mxu0
          %v5943 = vadd.f32 %v5854, %v5942
          %v5944 = vpop.f32.mrf.mxu0
          %v5945 = vadd.f32 %v5856, %v5944
          %5946 = vmatmul.bf16.gmra.mxu0 %v5353
          %v5947 = vpop.f32.mrf.mxu0
          %v5948 = vadd.f32 %v5859, %v5947
          %v5949 = vpop.f32.mrf.mxu0
          %v5950 = vadd.f32 %v5861, %v5949
          %5951 = vmatmul.bf16.gmra.mxu0 %v5358
          %v5952 = vpop.f32.mrf.mxu0
          %v5953 = vadd.f32 %v5864, %v5952
          %v5954 = vpop.f32.mrf.mxu0
          %v5955 = vadd.f32 %v5866, %v5954
          %5956 = vmatmul.bf16.gmra.mxu0 %v5363
          %v5957 = vpop.f32.mrf.mxu0
          %v5958 = vadd.f32 %v5869, %v5957
          %v5959 = vpop.f32.mrf.mxu0
          %v5960 = vadd.f32 %v5871, %v5959
          %5961 = vmatmul.bf16.gmra.mxu0 %v5368
          %v5962 = vpop.f32.mrf.mxu0
          %v5963 = vadd.f32 %v5874, %v5962
          %v5964 = vpop.f32.mrf.mxu0
          %v5965 = vadd.f32 %v5876, %v5964
          %5966 = vmatmul.bf16.gmra.mxu0 %v5373
          %v5967 = vpop.f32.mrf.mxu0
          %v5968 = vadd.f32 %v5879, %v5967
          %v5969 = vpop.f32.mrf.mxu0
          %v5970 = vadd.f32 %v5881, %v5969
          %5971 = vmatmul.bf16.gmra.mxu0 %v5378
          %v5972 = vpop.f32.mrf.mxu0
          %v5973 = vadd.f32 %v5884, %v5972
          %v5974 = vpop.f32.mrf.mxu0
          %v5975 = vadd.f32 %v5886, %v5974
          %5976 = vmatmul.bf16.gmra.mxu0 %v5383
          %v5977 = vpop.f32.mrf.mxu0
          %v5978 = vadd.f32 %v5889, %v5977
          %v5979 = vpop.f32.mrf.mxu0
          %v5980 = vadd.f32 %v5891, %v5979
          %5981 = vmatmul.bf16.gmra.mxu0 %v5388
          %v5982 = vpop.f32.mrf.mxu0
          %v5983 = vadd.f32 %v5894, %v5982
          %v5984 = vpop.f32.mrf.mxu0
          %v5985 = vadd.f32 %v5896, %v5984
          %5986 = vmatmul.bf16.gmra.mxu0 %v5393
          %v5987 = vpop.f32.mrf.mxu0
          %v5988 = vadd.f32 %v5899, %v5987
          %v5989 = vpop.f32.mrf.mxu0
          %v5990 = vadd.f32 %v5901, %v5989
          %5991 = vmatmul.bf16.gmra.mxu0 %v5398
          %v5992 = vpop.f32.mrf.mxu0
          %v5993 = vadd.f32 %v5904, %v5992
          %v5994 = vpop.f32.mrf.mxu0
          %v5995 = vadd.f32 %v5906, %v5994
          %5996 = vmatmul.bf16.gmra.mxu0 %v5403
          %v5997 = vpop.f32.mrf.mxu0
          %v5998 = vadd.f32 %v5909, %v5997
          %v5999 = vpop.f32.mrf.mxu0
          %v6000 = vadd.f32 %v5911, %v5999
          %6001 = vmatmul.bf16.gmra.mxu0 %v5408
          %v6002 = vpop.f32.mrf.mxu0
          %v6003 = vadd.f32 %v5914, %v6002
          %v6004 = vpop.f32.mrf.mxu0
          %v6005 = vadd.f32 %v5916, %v6004
          %6006 = vmatmul.bf16.gmra.mxu0 %v5413
          %v6007 = vpop.f32.mrf.mxu0
          %v6008 = vadd.f32 %v5919, %v6007
          %v6009 = vpop.f32.mrf.mxu0
          %v6010 = vadd.f32 %v5921, %v6009
          %6011 = vmatmul.bf16.gmra.mxu0 %v5418
          %v6012 = vpop.f32.mrf.mxu0
          %v6013 = vadd.f32 %v5924, %v6012
          %v6014 = vpop.f32.mrf.mxu0
          %v6015 = vadd.f32 %v5926, %v6014
          %6016 = vdwg.mxu0
          %6017 = vmatpush.bf16.msra.mxu0 %v5660
          %6018 = vmatpush.bf16.msra.mxu0 %v5659
          %6019 = vmatpush.bf16.msra.mxu0 %v5658
          %6020 = vmatpush.bf16.msra.mxu0 %v5657
          %6021 = vmatpush.bf16.msra.mxu0 %v5656
          %6022 = vmatpush.bf16.msra.mxu0 %v5655
          %6023 = vmatpush.bf16.msra.mxu0 %v5654
          %6024 = vmatpush.bf16.msra.mxu0 %v5653
          %6025 = vmatmul.bf16.gmra.mxu0 %v5344
          %v6026 = vpop.f32.mrf.mxu0
          %v6027 = vadd.f32 %v5938, %v6026
          %v6028 = vpop.f32.mrf.mxu0
          %v6029 = vadd.f32 %v5940, %v6028
          %6030 = vmatmul.bf16.gmra.mxu0 %v5349
          %v6031 = vpop.f32.mrf.mxu0
          %v6032 = vadd.f32 %v5943, %v6031
          %v6033 = vpop.f32.mrf.mxu0
          %v6034 = vadd.f32 %v5945, %v6033
          %6035 = vmatmul.bf16.gmra.mxu0 %v5354
          %v6036 = vpop.f32.mrf.mxu0
          %v6037 = vadd.f32 %v5948, %v6036
          %v6038 = vpop.f32.mrf.mxu0
          %v6039 = vadd.f32 %v5950, %v6038
          %6040 = vmatmul.bf16.gmra.mxu0 %v5359
          %v6041 = vpop.f32.mrf.mxu0
          %v6042 = vadd.f32 %v5953, %v6041
          %v6043 = vpop.f32.mrf.mxu0
          %v6044 = vadd.f32 %v5955, %v6043
          %6045 = vmatmul.bf16.gmra.mxu0 %v5364
          %v6046 = vpop.f32.mrf.mxu0
          %v6047 = vadd.f32 %v5958, %v6046
          %v6048 = vpop.f32.mrf.mxu0
          %v6049 = vadd.f32 %v5960, %v6048
          %6050 = vmatmul.bf16.gmra.mxu0 %v5369
          %v6051 = vpop.f32.mrf.mxu0
          %v6052 = vadd.f32 %v5963, %v6051
          %v6053 = vpop.f32.mrf.mxu0
          %v6054 = vadd.f32 %v5965, %v6053
          %6055 = vmatmul.bf16.gmra.mxu0 %v5374
          %v6056 = vpop.f32.mrf.mxu0
          %v6057 = vadd.f32 %v5968, %v6056
          %v6058 = vpop.f32.mrf.mxu0
          %v6059 = vadd.f32 %v5970, %v6058
          %6060 = vmatmul.bf16.gmra.mxu0 %v5379
          %v6061 = vpop.f32.mrf.mxu0
          %v6062 = vadd.f32 %v5973, %v6061
          %v6063 = vpop.f32.mrf.mxu0
          %v6064 = vadd.f32 %v5975, %v6063
          %6065 = vmatmul.bf16.gmra.mxu0 %v5384
          %v6066 = vpop.f32.mrf.mxu0
          %v6067 = vadd.f32 %v5978, %v6066
          %v6068 = vpop.f32.mrf.mxu0
          %v6069 = vadd.f32 %v5980, %v6068
          %6070 = vmatmul.bf16.gmra.mxu0 %v5389
          %v6071 = vpop.f32.mrf.mxu0
          %v6072 = vadd.f32 %v5983, %v6071
          %v6073 = vpop.f32.mrf.mxu0
          %v6074 = vadd.f32 %v5985, %v6073
          %6075 = vmatmul.bf16.gmra.mxu0 %v5394
          %v6076 = vpop.f32.mrf.mxu0
          %v6077 = vadd.f32 %v5988, %v6076
          %v6078 = vpop.f32.mrf.mxu0
          %v6079 = vadd.f32 %v5990, %v6078
          %6080 = vmatmul.bf16.gmra.mxu0 %v5399
          %v6081 = vpop.f32.mrf.mxu0
          %v6082 = vadd.f32 %v5993, %v6081
          %v6083 = vpop.f32.mrf.mxu0
          %v6084 = vadd.f32 %v5995, %v6083
          %6085 = vmatmul.bf16.gmra.mxu0 %v5404
          %v6086 = vpop.f32.mrf.mxu0
          %v6087 = vadd.f32 %v5998, %v6086
          %v6088 = vpop.f32.mrf.mxu0
          %v6089 = vadd.f32 %v6000, %v6088
          %6090 = vmatmul.bf16.gmra.mxu0 %v5409
          %v6091 = vpop.f32.mrf.mxu0
          %v6092 = vadd.f32 %v6003, %v6091
          %v6093 = vpop.f32.mrf.mxu0
          %v6094 = vadd.f32 %v6005, %v6093
          %6095 = vmatmul.bf16.gmra.mxu0 %v5414
          %v6096 = vpop.f32.mrf.mxu0
          %v6097 = vadd.f32 %v6008, %v6096
          %v6098 = vpop.f32.mrf.mxu0
          %v6099 = vadd.f32 %v6010, %v6098
          %6100 = vmatmul.bf16.gmra.mxu0 %v5419
          %v6101 = vpop.f32.mrf.mxu0
          %v6102 = vadd.f32 %v6013, %v6101
          %v6103 = vpop.f32.mrf.mxu0
          %v6104 = vadd.f32 %v6015, %v6103
          %6105 = vdwg.mxu0
          %6106 = vmatpush.bf16.msra.mxu0 0
          %6107 = vmatpush.bf16.msra.mxu0 0
          %6108 = vmatpush.bf16.msra.mxu0 0
          %6109 = vmatpush.bf16.msra.mxu0 0
          %6110 = vmatpush.bf16.msra.mxu0 %v5664
          %6111 = vmatpush.bf16.msra.mxu0 %v5663
          %6112 = vmatpush.bf16.msra.mxu0 %v5662
          %6113 = vmatpush.bf16.msra.mxu0 %v5661
          %6114 = vmatmul.bf16.gmra.mxu0 %v5703
          %v6115 = vpop.f32.mrf.mxu0
          %v6116 = vadd.f32 %v6027, %v6115
          %v6117 = vpop.f32.mrf.mxu0
          %v6118 = vadd.f32 %v6029, %v6117
          %6119 = vmatmul.bf16.gmra.mxu0 %v5706
          %v6120 = vpop.f32.mrf.mxu0
          %v6121 = vadd.f32 %v6032, %v6120
          %v6122 = vpop.f32.mrf.mxu0
          %v6123 = vadd.f32 %v6034, %v6122
          %6124 = vmatmul.bf16.gmra.mxu0 %v5709
          %v6125 = vpop.f32.mrf.mxu0
          %v6126 = vadd.f32 %v6037, %v6125
          %v6127 = vpop.f32.mrf.mxu0
          %v6128 = vadd.f32 %v6039, %v6127
          %6129 = vmatmul.bf16.gmra.mxu0 %v5712
          %v6130 = vpop.f32.mrf.mxu0
          %v6131 = vadd.f32 %v6042, %v6130
          %v6132 = vpop.f32.mrf.mxu0
          %v6133 = vadd.f32 %v6044, %v6132
          %6134 = vmatmul.bf16.gmra.mxu0 %v5715
          %v6135 = vpop.f32.mrf.mxu0
          %v6136 = vadd.f32 %v6047, %v6135
          %v6137 = vpop.f32.mrf.mxu0
          %v6138 = vadd.f32 %v6049, %v6137
          %6139 = vmatmul.bf16.gmra.mxu0 %v5718
          %v6140 = vpop.f32.mrf.mxu0
          %v6141 = vadd.f32 %v6052, %v6140
          %v6142 = vpop.f32.mrf.mxu0
          %v6143 = vadd.f32 %v6054, %v6142
          %6144 = vmatmul.bf16.gmra.mxu0 %v5721
          %v6145 = vpop.f32.mrf.mxu0
          %v6146 = vadd.f32 %v6057, %v6145
          %v6147 = vpop.f32.mrf.mxu0
          %v6148 = vadd.f32 %v6059, %v6147
          %6149 = vmatmul.bf16.gmra.mxu0 %v5724
          %v6150 = vpop.f32.mrf.mxu0
          %v6151 = vadd.f32 %v6062, %v6150
          %v6152 = vpop.f32.mrf.mxu0
          %v6153 = vadd.f32 %v6064, %v6152
          %6154 = vmatmul.bf16.gmra.mxu0 %v5727
          %v6155 = vpop.f32.mrf.mxu0
          %v6156 = vadd.f32 %v6067, %v6155
          %v6157 = vpop.f32.mrf.mxu0
          %v6158 = vadd.f32 %v6069, %v6157
          %6159 = vmatmul.bf16.gmra.mxu0 %v5730
          %v6160 = vpop.f32.mrf.mxu0
          %v6161 = vadd.f32 %v6072, %v6160
          %v6162 = vpop.f32.mrf.mxu0
          %v6163 = vadd.f32 %v6074, %v6162
          %6164 = vmatmul.bf16.gmra.mxu0 %v5733
          %v6165 = vpop.f32.mrf.mxu0
          %v6166 = vadd.f32 %v6077, %v6165
          %v6167 = vpop.f32.mrf.mxu0
          %v6168 = vadd.f32 %v6079, %v6167
          %6169 = vmatmul.bf16.gmra.mxu0 %v5736
          %v6170 = vpop.f32.mrf.mxu0
          %v6171 = vadd.f32 %v6082, %v6170
          %v6172 = vpop.f32.mrf.mxu0
          %v6173 = vadd.f32 %v6084, %v6172
          %6174 = vmatmul.bf16.gmra.mxu0 %v5739
          %v6175 = vpop.f32.mrf.mxu0
          %v6176 = vadd.f32 %v6087, %v6175
          %v6177 = vpop.f32.mrf.mxu0
          %v6178 = vadd.f32 %v6089, %v6177
          %6179 = vmatmul.bf16.gmra.mxu0 %v5742
          %v6180 = vpop.f32.mrf.mxu0
          %v6181 = vadd.f32 %v6092, %v6180
          %v6182 = vpop.f32.mrf.mxu0
          %v6183 = vadd.f32 %v6094, %v6182
          %6184 = vmatmul.bf16.gmra.mxu0 %v5745
          %v6185 = vpop.f32.mrf.mxu0
          %v6186 = vadd.f32 %v6097, %v6185
          %v6187 = vpop.f32.mrf.mxu0
          %v6188 = vadd.f32 %v6099, %v6187
          %6189 = vmatmul.bf16.gmra.mxu0 %v5748
          %v6190 = vpop.f32.mrf.mxu0
          %v6191 = vadd.f32 %v6102, %v6190
          %v6192 = vpop.f32.mrf.mxu0
          %v6193 = vadd.f32 %v6104, %v6192
          %6194 = vdwg.mxu0
          %v6195 = vmax.f32 %v6116, 0.0
          %v6196 = vmax.f32 %v6118, 0.0
          %v6197 = vmax.f32 %v6121, 0.0
          %v6198 = vmax.f32 %v6123, 0.0
          %v6199 = vmax.f32 %v6126, 0.0
          %v6200 = vmax.f32 %v6128, 0.0
          %v6201 = vmax.f32 %v6131, 0.0
          %v6202 = vmax.f32 %v6133, 0.0
          %v6203 = vmax.f32 %v6136, 0.0
          %v6204 = vmax.f32 %v6138, 0.0
          %v6205 = vmax.f32 %v6141, 0.0
          %v6206 = vmax.f32 %v6143, 0.0
          %v6207 = vmax.f32 %v6146, 0.0
          %v6208 = vmax.f32 %v6148, 0.0
          %v6209 = vmax.f32 %v6151, 0.0
          %v6210 = vmax.f32 %v6153, 0.0
          %v6211 = vmax.f32 %v6156, 0.0
          %v6212 = vmax.f32 %v6158, 0.0
          %v6213 = vmax.f32 %v6161, 0.0
          %v6214 = vmax.f32 %v6163, 0.0
          %v6215 = vmax.f32 %v6166, 0.0
          %v6216 = vmax.f32 %v6168, 0.0
          %v6217 = vmax.f32 %v6171, 0.0
          %v6218 = vmax.f32 %v6173, 0.0
          %v6219 = vmax.f32 %v6176, 0.0
          %v6220 = vmax.f32 %v6178, 0.0
          %v6221 = vmax.f32 %v6181, 0.0
          %v6222 = vmax.f32 %v6183, 0.0
          %v6223 = vmax.f32 %v6186, 0.0
          %v6224 = vmax.f32 %v6188, 0.0
          %v6225 = vmax.f32 %v6191, 0.0
          %v6226 = vmax.f32 %v6193, 0.0
          %v6227 = vpack.c.bf16 %v6195, %v6195
          %v6228 = vpack.c.bf16 %v6196, %v6196
          %v6229 = vpack.c.bf16 %v6197, %v6197
          %v6230 = vpack.c.bf16 %v6198, %v6198
          %v6231 = vpack.c.bf16 %v6199, %v6199
          %v6232 = vpack.c.bf16 %v6200, %v6200
          %v6233 = vpack.c.bf16 %v6201, %v6201
          %v6234 = vpack.c.bf16 %v6202, %v6202
          %v6235 = vpack.c.bf16 %v6203, %v6203
          %v6236 = vpack.c.bf16 %v6204, %v6204
          %v6237 = vpack.c.bf16 %v6205, %v6205
          %v6238 = vpack.c.bf16 %v6206, %v6206
          %v6239 = vpack.c.bf16 %v6207, %v6207
          %v6240 = vpack.c.bf16 %v6208, %v6208
          %v6241 = vpack.c.bf16 %v6209, %v6209
          %v6242 = vpack.c.bf16 %v6210, %v6210
          %v6243 = vpack.c.bf16 %v6211, %v6211
          %v6244 = vpack.c.bf16 %v6212, %v6212
          %v6245 = vpack.c.bf16 %v6213, %v6213
          %v6246 = vpack.c.bf16 %v6214, %v6214
          %v6247 = vpack.c.bf16 %v6215, %v6215
          %v6248 = vpack.c.bf16 %v6216, %v6216
          %v6249 = vpack.c.bf16 %v6217, %v6217
          %v6250 = vpack.c.bf16 %v6218, %v6218
          %v6251 = vpack.c.bf16 %v6219, %v6219
          %v6252 = vpack.c.bf16 %v6220, %v6220
          %v6253 = vpack.c.bf16 %v6221, %v6221
          %v6254 = vpack.c.bf16 %v6222, %v6222
          %v6255 = vpack.c.bf16 %v6223, %v6223
          %v6256 = vpack.c.bf16 %v6224, %v6224
          %v6257 = vpack.c.bf16 %v6225, %v6225
          %v6258 = vpack.c.bf16 %v6226, %v6226
          %v6260 = vshrl.u32 %v6227, 16
          %v6262 = vrot.slane %v6260, 7
          %v6263 = vshll.u32 %v6227, 16
          %v6265 = vor.u32 %v6262, %v6263
          %v6266 = vrot.slane %v6262, 4
          %v6268 = vshrl.u32 %v6228, 16
          %v6270 = vrot.slane %v6268, 7
          %v6271 = vshll.u32 %v6228, 16
          %v6273 = vor.u32 %v6270, %v6271
          %v6274 = vsel %vm1648, %v6266, %v6273
          %v6275 = vrot.slane %v6270, 4
          %v6277 = vshrl.u32 %v6229, 16
          %v6279 = vrot.slane %v6277, 7
          %v6280 = vshll.u32 %v6229, 16
          %v6282 = vor.u32 %v6279, %v6280
          %v6283 = vrot.slane %v6279, 4
          %v6285 = vshrl.u32 %v6230, 16
          %v6287 = vrot.slane %v6285, 7
          %v6288 = vshll.u32 %v6230, 16
          %v6290 = vor.u32 %v6287, %v6288
          %v6291 = vsel %vm1648, %v6283, %v6290
          %v6292 = vrot.slane %v6287, 4
          %v6294 = vshrl.u32 %v6231, 16
          %v6296 = vrot.slane %v6294, 7
          %v6297 = vshll.u32 %v6231, 16
          %v6299 = vor.u32 %v6296, %v6297
          %v6300 = vrot.slane %v6296, 4
          %v6302 = vshrl.u32 %v6232, 16
          %v6304 = vrot.slane %v6302, 7
          %v6305 = vshll.u32 %v6232, 16
          %v6307 = vor.u32 %v6304, %v6305
          %v6308 = vsel %vm1648, %v6300, %v6307
          %v6309 = vrot.slane %v6304, 4
          %v6311 = vshrl.u32 %v6233, 16
          %v6313 = vrot.slane %v6311, 7
          %v6314 = vshll.u32 %v6233, 16
          %v6316 = vor.u32 %v6313, %v6314
          %v6317 = vrot.slane %v6313, 4
          %v6319 = vshrl.u32 %v6234, 16
          %v6321 = vrot.slane %v6319, 7
          %v6322 = vshll.u32 %v6234, 16
          %v6324 = vor.u32 %v6321, %v6322
          %v6325 = vsel %vm1648, %v6317, %v6324
          %v6326 = vrot.slane %v6321, 4
          %v6328 = vshrl.u32 %v6235, 16
          %v6330 = vrot.slane %v6328, 7
          %v6331 = vshll.u32 %v6235, 16
          %v6333 = vor.u32 %v6330, %v6331
          %v6334 = vrot.slane %v6330, 4
          %v6336 = vshrl.u32 %v6236, 16
          %v6338 = vrot.slane %v6336, 7
          %v6339 = vshll.u32 %v6236, 16
          %v6341 = vor.u32 %v6338, %v6339
          %v6342 = vsel %vm1648, %v6334, %v6341
          %v6343 = vrot.slane %v6338, 4
          %v6345 = vshrl.u32 %v6237, 16
          %v6347 = vrot.slane %v6345, 7
          %v6348 = vshll.u32 %v6237, 16
          %v6350 = vor.u32 %v6347, %v6348
          %v6351 = vrot.slane %v6347, 4
          %v6353 = vshrl.u32 %v6238, 16
          %v6355 = vrot.slane %v6353, 7
          %v6356 = vshll.u32 %v6238, 16
          %v6358 = vor.u32 %v6355, %v6356
          %v6359 = vsel %vm1648, %v6351, %v6358
          %v6360 = vrot.slane %v6355, 4
          %v6362 = vshrl.u32 %v6239, 16
          %v6364 = vrot.slane %v6362, 7
          %v6365 = vshll.u32 %v6239, 16
          %v6367 = vor.u32 %v6364, %v6365
          %v6368 = vrot.slane %v6364, 4
          %v6370 = vshrl.u32 %v6240, 16
          %v6372 = vrot.slane %v6370, 7
          %v6373 = vshll.u32 %v6240, 16
          %v6375 = vor.u32 %v6372, %v6373
          %v6376 = vsel %vm1648, %v6368, %v6375
          %v6377 = vrot.slane %v6372, 4
          %v6379 = vshrl.u32 %v6241, 16
          %v6381 = vrot.slane %v6379, 7
          %v6382 = vshll.u32 %v6241, 16
          %v6384 = vor.u32 %v6381, %v6382
          %v6385 = vrot.slane %v6381, 4
          %v6387 = vshrl.u32 %v6242, 16
          %v6389 = vrot.slane %v6387, 7
          %v6390 = vshll.u32 %v6242, 16
          %v6392 = vor.u32 %v6389, %v6390
          %v6393 = vsel %vm1648, %v6385, %v6392
          %v6394 = vrot.slane %v6389, 4
          %v6396 = vshrl.u32 %v6243, 16
          %v6398 = vrot.slane %v6396, 7
          %v6399 = vshll.u32 %v6243, 16
          %v6401 = vor.u32 %v6398, %v6399
          %v6402 = vrot.slane %v6398, 4
          %v6404 = vshrl.u32 %v6244, 16
          %v6406 = vrot.slane %v6404, 7
          %v6407 = vshll.u32 %v6244, 16
          %v6409 = vor.u32 %v6406, %v6407
          %v6410 = vsel %vm1648, %v6402, %v6409
          %v6411 = vrot.slane %v6406, 4
          %v6413 = vshrl.u32 %v6245, 16
          %v6415 = vrot.slane %v6413, 7
          %v6416 = vshll.u32 %v6245, 16
          %v6418 = vor.u32 %v6415, %v6416
          %v6419 = vrot.slane %v6415, 4
          %v6421 = vshrl.u32 %v6246, 16
          %v6423 = vrot.slane %v6421, 7
          %v6424 = vshll.u32 %v6246, 16
          %v6426 = vor.u32 %v6423, %v6424
          %v6427 = vsel %vm1648, %v6419, %v6426
          %v6428 = vrot.slane %v6423, 4
          %v6430 = vshrl.u32 %v6247, 16
          %v6432 = vrot.slane %v6430, 7
          %v6433 = vshll.u32 %v6247, 16
          %v6435 = vor.u32 %v6432, %v6433
          %v6436 = vrot.slane %v6432, 4
          %v6438 = vshrl.u32 %v6248, 16
          %v6440 = vrot.slane %v6438, 7
          %v6441 = vshll.u32 %v6248, 16
          %v6443 = vor.u32 %v6440, %v6441
          %v6444 = vsel %vm1648, %v6436, %v6443
          %v6445 = vrot.slane %v6440, 4
          %v6447 = vshrl.u32 %v6249, 16
          %v6449 = vrot.slane %v6447, 7
          %v6450 = vshll.u32 %v6249, 16
          %v6452 = vor.u32 %v6449, %v6450
          %v6453 = vrot.slane %v6449, 4
          %v6455 = vshrl.u32 %v6250, 16
          %v6457 = vrot.slane %v6455, 7
          %v6458 = vshll.u32 %v6250, 16
          %v6460 = vor.u32 %v6457, %v6458
          %v6461 = vsel %vm1648, %v6453, %v6460
          %v6462 = vrot.slane %v6457, 4
          %v6464 = vshrl.u32 %v6251, 16
          %v6466 = vrot.slane %v6464, 7
          %v6467 = vshll.u32 %v6251, 16
          %v6469 = vor.u32 %v6466, %v6467
          %v6470 = vrot.slane %v6466, 4
          %v6472 = vshrl.u32 %v6252, 16
          %v6474 = vrot.slane %v6472, 7
          %v6475 = vshll.u32 %v6252, 16
          %v6477 = vor.u32 %v6474, %v6475
          %v6478 = vsel %vm1648, %v6470, %v6477
          %v6479 = vrot.slane %v6474, 4
          %v6481 = vshrl.u32 %v6253, 16
          %v6483 = vrot.slane %v6481, 7
          %v6484 = vshll.u32 %v6253, 16
          %v6486 = vor.u32 %v6483, %v6484
          %v6487 = vrot.slane %v6483, 4
          %v6489 = vshrl.u32 %v6254, 16
          %v6491 = vrot.slane %v6489, 7
          %v6492 = vshll.u32 %v6254, 16
          %v6494 = vor.u32 %v6491, %v6492
          %v6495 = vsel %vm1648, %v6487, %v6494
          %v6496 = vrot.slane %v6491, 4
          %v6498 = vshrl.u32 %v6255, 16
          %v6500 = vrot.slane %v6498, 7
          %v6501 = vshll.u32 %v6255, 16
          %v6503 = vor.u32 %v6500, %v6501
          %v6504 = vrot.slane %v6500, 4
          %v6506 = vshrl.u32 %v6256, 16
          %v6508 = vrot.slane %v6506, 7
          %v6509 = vshll.u32 %v6256, 16
          %v6511 = vor.u32 %v6508, %v6509
          %v6512 = vsel %vm1648, %v6504, %v6511
          %v6513 = vrot.slane %v6508, 4
          %v6515 = vshrl.u32 %v6257, 16
          %v6517 = vrot.slane %v6515, 7
          %v6518 = vshll.u32 %v6257, 16
          %v6520 = vor.u32 %v6517, %v6518
          %v6521 = vrot.slane %v6517, 4
          %v6523 = vshrl.u32 %v6258, 16
          %v6525 = vrot.slane %v6523, 7
          %v6526 = vshll.u32 %v6258, 16
          %v6528 = vor.u32 %v6525, %v6526
          %v6529 = vsel %vm1648, %v6521, %v6528
          %v6530 = vrot.slane %v6525, 4
          %v6579 = vld [vmem:[%s1969] sm:$0xf]
          %v6580 = vsel %vm1971, %v6265, %v6579
          %6581 = vst [vmem:[%s1969] sm:$0xf] %v6580
          %6582 = vst.msk [vmem:[%s1969 + $0x4] sm:$0xf] %vm197, %v6274
          %v6583 = vld [vmem:[%s1969 + $0x8] sm:$0x1]
          %v6584 = vsel %vm208, %v6275, %v6583
          %6585 = vst [vmem:[%s1969 + $0x8] sm:$0x1] %v6584
          %v6586 = vld [vmem:[%s1969 + $0xc] sm:$0xf]
          %v6587 = vsel %vm1971, %v6282, %v6586
          %6588 = vst [vmem:[%s1969 + $0xc] sm:$0xf] %v6587
          %6589 = vst.msk [vmem:[%s1969 + $0x10] sm:$0xf] %vm197, %v6291
          %v6590 = vld [vmem:[%s1969 + $0x14] sm:$0x1]
          %v6591 = vsel %vm208, %v6292, %v6590
          %6592 = vst [vmem:[%s1969 + $0x14] sm:$0x1] %v6591
          %v6593 = vld [vmem:[%s1969 + $0x18] sm:$0xf]
          %v6594 = vsel %vm1971, %v6299, %v6593
          %6595 = vst [vmem:[%s1969 + $0x18] sm:$0xf] %v6594
          %6596 = vst.msk [vmem:[%s1969 + $0x1c] sm:$0xf] %vm197, %v6308
          %v6597 = vld [vmem:[%s1969 + $0x20] sm:$0x1]
          %v6598 = vsel %vm208, %v6309, %v6597
          %6599 = vst [vmem:[%s1969 + $0x20] sm:$0x1] %v6598
          %v6600 = vld [vmem:[%s1969 + $0x24] sm:$0xf]
          %v6601 = vsel %vm1971, %v6316, %v6600
          %6602 = vst [vmem:[%s1969 + $0x24] sm:$0xf] %v6601
          %6603 = vst.msk [vmem:[%s1969 + $0x28] sm:$0xf] %vm197, %v6325
          %v6604 = vld [vmem:[%s1969 + $0x2c] sm:$0x1]
          %v6605 = vsel %vm208, %v6326, %v6604
          %6606 = vst [vmem:[%s1969 + $0x2c] sm:$0x1] %v6605
          %v6607 = vld [vmem:[%s1969 + $0x30] sm:$0xf]
          %v6608 = vsel %vm1971, %v6333, %v6607
          %6609 = vst [vmem:[%s1969 + $0x30] sm:$0xf] %v6608
          %6610 = vst.msk [vmem:[%s1969 + $0x34] sm:$0xf] %vm197, %v6342
          %v6611 = vld [vmem:[%s1969 + $0x38] sm:$0x1]
          %v6612 = vsel %vm208, %v6343, %v6611
          %6613 = vst [vmem:[%s1969 + $0x38] sm:$0x1] %v6612
          %v6614 = vld [vmem:[%s1969 + $0x3c] sm:$0xf]
          %v6615 = vsel %vm1971, %v6350, %v6614
          %6616 = vst [vmem:[%s1969 + $0x3c] sm:$0xf] %v6615
          %6617 = vst.msk [vmem:[%s1969 + $0x40] sm:$0xf] %vm197, %v6359
          %v6618 = vld [vmem:[%s1969 + $0x44] sm:$0x1]
          %v6619 = vsel %vm208, %v6360, %v6618
          %6620 = vst [vmem:[%s1969 + $0x44] sm:$0x1] %v6619
          %v6621 = vld [vmem:[%s1969 + $0x48] sm:$0xf]
          %v6622 = vsel %vm1971, %v6367, %v6621
          %6623 = vst [vmem:[%s1969 + $0x48] sm:$0xf] %v6622
          %6624 = vst.msk [vmem:[%s1969 + $0x4c] sm:$0xf] %vm197, %v6376
          %v6625 = vld [vmem:[%s1969 + $0x50] sm:$0x1]
          %v6626 = vsel %vm208, %v6377, %v6625
          %6627 = vst [vmem:[%s1969 + $0x50] sm:$0x1] %v6626
          %v6628 = vld [vmem:[%s1969 + $0x54] sm:$0xf]
          %v6629 = vsel %vm1971, %v6384, %v6628
          %6630 = vst [vmem:[%s1969 + $0x54] sm:$0xf] %v6629
          %6631 = vst.msk [vmem:[%s1969 + $0x58] sm:$0xf] %vm197, %v6393
          %v6632 = vld [vmem:[%s1969 + $0x5c] sm:$0x1]
          %v6633 = vsel %vm208, %v6394, %v6632
          %6634 = vst [vmem:[%s1969 + $0x5c] sm:$0x1] %v6633
          %v6635 = vld [vmem:[%s1969 + $0x60] sm:$0xf]
          %v6636 = vsel %vm1971, %v6401, %v6635
          %6637 = vst [vmem:[%s1969 + $0x60] sm:$0xf] %v6636
          %6638 = vst.msk [vmem:[%s1969 + $0x64] sm:$0xf] %vm197, %v6410
          %v6639 = vld [vmem:[%s1969 + $0x68] sm:$0x1]
          %v6640 = vsel %vm208, %v6411, %v6639
          %6641 = vst [vmem:[%s1969 + $0x68] sm:$0x1] %v6640
          %v6642 = vld [vmem:[%s1969 + $0x6c] sm:$0xf]
          %v6643 = vsel %vm1971, %v6418, %v6642
          %6644 = vst [vmem:[%s1969 + $0x6c] sm:$0xf] %v6643
          %6645 = vst.msk [vmem:[%s1969 + $0x70] sm:$0xf] %vm197, %v6427
          %v6646 = vld [vmem:[%s1969 + $0x74] sm:$0x1]
          %v6647 = vsel %vm208, %v6428, %v6646
          %6648 = vst [vmem:[%s1969 + $0x74] sm:$0x1] %v6647
          %v6649 = vld [vmem:[%s1969 + $0x78] sm:$0xf]
          %v6650 = vsel %vm1971, %v6435, %v6649
          %6651 = vst [vmem:[%s1969 + $0x78] sm:$0xf] %v6650
          %6652 = vst.msk [vmem:[%s1969 + $0x7c] sm:$0xf] %vm197, %v6444
          %v6653 = vld [vmem:[%s1969 + $0x80] sm:$0x1]
          %v6654 = vsel %vm208, %v6445, %v6653
          %6655 = vst [vmem:[%s1969 + $0x80] sm:$0x1] %v6654
          %v6656 = vld [vmem:[%s1969 + $0x84] sm:$0xf]
          %v6657 = vsel %vm1971, %v6452, %v6656
          %6658 = vst [vmem:[%s1969 + $0x84] sm:$0xf] %v6657
          %6659 = vst.msk [vmem:[%s1969 + $0x88] sm:$0xf] %vm197, %v6461
          %v6660 = vld [vmem:[%s1969 + $0x8c] sm:$0x1]
          %v6661 = vsel %vm208, %v6462, %v6660
          %6662 = vst [vmem:[%s1969 + $0x8c] sm:$0x1] %v6661
          %v6663 = vld [vmem:[%s1969 + $0x90] sm:$0xf]
          %v6664 = vsel %vm1971, %v6469, %v6663
          %6665 = vst [vmem:[%s1969 + $0x90] sm:$0xf] %v6664
          %6666 = vst.msk [vmem:[%s1969 + $0x94] sm:$0xf] %vm197, %v6478
          %v6667 = vld [vmem:[%s1969 + $0x98] sm:$0x1]
          %v6668 = vsel %vm208, %v6479, %v6667
          %6669 = vst [vmem:[%s1969 + $0x98] sm:$0x1] %v6668
          %v6670 = vld [vmem:[%s1969 + $0x9c] sm:$0xf]
          %v6671 = vsel %vm1971, %v6486, %v6670
          %6672 = vst [vmem:[%s1969 + $0x9c] sm:$0xf] %v6671
          %6673 = vst.msk [vmem:[%s1969 + $0xa0] sm:$0xf] %vm197, %v6495
          %v6674 = vld [vmem:[%s1969 + $0xa4] sm:$0x1]
          %v6675 = vsel %vm208, %v6496, %v6674
          %6676 = vst [vmem:[%s1969 + $0xa4] sm:$0x1] %v6675
          %v6677 = vld [vmem:[%s1969 + $0xa8] sm:$0xf]
          %v6678 = vsel %vm1971, %v6503, %v6677
          %6679 = vst [vmem:[%s1969 + $0xa8] sm:$0xf] %v6678
          %6680 = vst.msk [vmem:[%s1969 + $0xac] sm:$0xf] %vm197, %v6512
          %v6681 = vld [vmem:[%s1969 + $0xb0] sm:$0x1]
          %v6682 = vsel %vm208, %v6513, %v6681
          %6683 = vst [vmem:[%s1969 + $0xb0] sm:$0x1] %v6682
          %v6684 = vld [vmem:[%s1969 + $0xb4] sm:$0xf]
          %v6685 = vsel %vm1971, %v6520, %v6684
          %6686 = vst [vmem:[%s1969 + $0xb4] sm:$0xf] %v6685
          %6687 = vst.msk [vmem:[%s1969 + $0xb8] sm:$0xf] %vm197, %v6529
          %v6688 = vld [vmem:[%s1969 + $0xbc] sm:$0x1]
          %v6689 = vsel %vm208, %v6530, %v6688
          %6690 = vst [vmem:[%s1969 + $0xbc] sm:$0x1] %v6689
        $region41: #{vdsr_forward.1} parent=35 // loop_footer
          %s2089 = sadd.s32 1, %s2085
        $region42: #{vdsr_forward.1} parent=35 // loop_footer_branch
          %2084 = sbr.rel target = $region38
        $region43: #{vdsr_forward.1} parent=35 // loop_exit
          _
        %v6691 = vld [vmem:[%s3] sm:$0xf]
        %v6692 = vld [vmem:[%s3 + $0x4] sm:$0x1]
        %v6693 = vunpack.c.l.bf16 %v6691
        %v6694 = vunpack.c.l.bf16 %v6692
        %v6695 = vld [vmem:[#allocation2] sm:$0xf]
        %v6696 = vld [vmem:[#allocation2 + $0x4] sm:$0xf]
        %v6697 = vld [vmem:[#allocation2 + $0xc] sm:$0xf]
        %v6698 = vld [vmem:[#allocation2 + $0x10] sm:$0xf]
        %v6699 = vld [vmem:[#allocation2 + $0x18] sm:$0xf]
        %v6700 = vld [vmem:[#allocation2 + $0x1c] sm:$0xf]
        %v6701 = vld [vmem:[#allocation2 + $0x24] sm:$0xf]
        %v6702 = vld [vmem:[#allocation2 + $0x28] sm:$0xf]
        %v6703 = vld [vmem:[#allocation2 + $0x30] sm:$0xf]
        %v6704 = vld [vmem:[#allocation2 + $0x34] sm:$0xf]
        %v6705 = vld [vmem:[#allocation2 + $0x3c] sm:$0xf]
        %v6706 = vld [vmem:[#allocation2 + $0x40] sm:$0xf]
        %v6707 = vld [vmem:[#allocation2 + $0x48] sm:$0xf]
        %v6708 = vld [vmem:[#allocation2 + $0x4c] sm:$0xf]
        %v6709 = vld [vmem:[#allocation2 + $0x54] sm:$0xf]
        %v6710 = vld [vmem:[#allocation2 + $0x58] sm:$0xf]
        %v6711 = vld [vmem:[#allocation2 + $0x60] sm:$0xf]
        %v6712 = vld [vmem:[#allocation2 + $0x64] sm:$0xf]
        %v6713 = vld [vmem:[#allocation2 + $0x6c] sm:$0xf]
        %v6714 = vld [vmem:[#allocation2 + $0x70] sm:$0xf]
        %v6715 = vld [vmem:[#allocation2 + $0x78] sm:$0xf]
        %v6716 = vld [vmem:[#allocation2 + $0x7c] sm:$0xf]
        %v6717 = vld [vmem:[#allocation2 + $0x84] sm:$0xf]
        %v6718 = vld [vmem:[#allocation2 + $0x88] sm:$0xf]
        %v6719 = vld [vmem:[#allocation2 + $0x90] sm:$0xf]
        %v6720 = vld [vmem:[#allocation2 + $0x94] sm:$0xf]
        %v6721 = vld [vmem:[#allocation2 + $0x9c] sm:$0xf]
        %v6722 = vld [vmem:[#allocation2 + $0xa0] sm:$0xf]
        %v6723 = vld [vmem:[#allocation2 + $0xa8] sm:$0xf]
        %v6724 = vld [vmem:[#allocation2 + $0xac] sm:$0xf]
        %v6725 = vld [vmem:[#allocation2 + $0xb4] sm:$0xf]
        %v6726 = vld [vmem:[#allocation2 + $0xb8] sm:$0xf]
        %v6727 = vunpack.c.l.bf16 %v6695
        %v6728 = vunpack.c.l.bf16 %v6696
        %v6729 = vunpack.c.l.bf16 %v6697
        %v6730 = vunpack.c.l.bf16 %v6698
        %v6731 = vunpack.c.l.bf16 %v6699
        %v6732 = vunpack.c.l.bf16 %v6700
        %v6733 = vunpack.c.l.bf16 %v6701
        %v6734 = vunpack.c.l.bf16 %v6702
        %v6735 = vunpack.c.l.bf16 %v6703
        %v6736 = vunpack.c.l.bf16 %v6704
        %v6737 = vunpack.c.l.bf16 %v6705
        %v6738 = vunpack.c.l.bf16 %v6706
        %v6739 = vunpack.c.l.bf16 %v6707
        %v6740 = vunpack.c.l.bf16 %v6708
        %v6741 = vunpack.c.l.bf16 %v6709
        %v6742 = vunpack.c.l.bf16 %v6710
        %v6743 = vunpack.c.l.bf16 %v6711
        %v6744 = vunpack.c.l.bf16 %v6712
        %v6745 = vunpack.c.l.bf16 %v6713
        %v6746 = vunpack.c.l.bf16 %v6714
        %v6747 = vunpack.c.l.bf16 %v6715
        %v6748 = vunpack.c.l.bf16 %v6716
        %v6749 = vunpack.c.l.bf16 %v6717
        %v6750 = vunpack.c.l.bf16 %v6718
        %v6751 = vunpack.c.l.bf16 %v6719
        %v6752 = vunpack.c.l.bf16 %v6720
        %v6753 = vunpack.c.l.bf16 %v6721
        %v6754 = vunpack.c.l.bf16 %v6722
        %v6755 = vunpack.c.l.bf16 %v6723
        %v6756 = vunpack.c.l.bf16 %v6724
        %v6757 = vunpack.c.l.bf16 %v6725
        %v6758 = vunpack.c.l.bf16 %v6726
        %v6759 = vperm.slane %v6693, 0
        %v6760 = vmul.f32 %v6727, %v6759
        %v6761 = vmul.f32 %v6728, %v6759
        %v6762 = vmul.f32 %v6729, %v6759
        %v6763 = vmul.f32 %v6730, %v6759
        %v6764 = vmul.f32 %v6731, %v6759
        %v6765 = vmul.f32 %v6732, %v6759
        %v6766 = vmul.f32 %v6733, %v6759
        %v6767 = vmul.f32 %v6734, %v6759
        %v6768 = vmul.f32 %v6735, %v6759
        %v6769 = vmul.f32 %v6736, %v6759
        %v6770 = vmul.f32 %v6737, %v6759
        %v6771 = vmul.f32 %v6738, %v6759
        %v6772 = vmul.f32 %v6739, %v6759
        %v6773 = vmul.f32 %v6740, %v6759
        %v6774 = vmul.f32 %v6741, %v6759
        %v6775 = vmul.f32 %v6742, %v6759
        %v6776 = vmul.f32 %v6743, %v6759
        %v6777 = vmul.f32 %v6744, %v6759
        %v6778 = vmul.f32 %v6745, %v6759
        %v6779 = vmul.f32 %v6746, %v6759
        %v6780 = vmul.f32 %v6747, %v6759
        %v6781 = vmul.f32 %v6748, %v6759
        %v6782 = vmul.f32 %v6749, %v6759
        %v6783 = vmul.f32 %v6750, %v6759
        %v6784 = vmul.f32 %v6751, %v6759
        %v6785 = vmul.f32 %v6752, %v6759
        %v6786 = vmul.f32 %v6753, %v6759
        %v6787 = vmul.f32 %v6754, %v6759
        %v6788 = vmul.f32 %v6755, %v6759
        %v6789 = vmul.f32 %v6756, %v6759
        %v6790 = vmul.f32 %v6757, %v6759
        %v6791 = vmul.f32 %v6758, %v6759
        %v6792 = vadd.f32 %v6760, 0.0
        %v6793 = vadd.f32 %v6761, 0.0
        %v6794 = vadd.f32 %v6762, 0.0
        %v6795 = vadd.f32 %v6763, 0.0
        %v6796 = vadd.f32 %v6764, 0.0
        %v6797 = vadd.f32 %v6765, 0.0
        %v6798 = vadd.f32 %v6766, 0.0
        %v6799 = vadd.f32 %v6767, 0.0
        %v6800 = vadd.f32 %v6768, 0.0
        %v6801 = vadd.f32 %v6769, 0.0
        %v6802 = vadd.f32 %v6770, 0.0
        %v6803 = vadd.f32 %v6771, 0.0
        %v6804 = vadd.f32 %v6772, 0.0
        %v6805 = vadd.f32 %v6773, 0.0
        %v6806 = vadd.f32 %v6774, 0.0
        %v6807 = vadd.f32 %v6775, 0.0
        %v6808 = vadd.f32 %v6776, 0.0
        %v6809 = vadd.f32 %v6777, 0.0
        %v6810 = vadd.f32 %v6778, 0.0
        %v6811 = vadd.f32 %v6779, 0.0
        %v6812 = vadd.f32 %v6780, 0.0
        %v6813 = vadd.f32 %v6781, 0.0
        %v6814 = vadd.f32 %v6782, 0.0
        %v6815 = vadd.f32 %v6783, 0.0
        %v6816 = vadd.f32 %v6784, 0.0
        %v6817 = vadd.f32 %v6785, 0.0
        %v6818 = vadd.f32 %v6786, 0.0
        %v6819 = vadd.f32 %v6787, 0.0
        %v6820 = vadd.f32 %v6788, 0.0
        %v6821 = vadd.f32 %v6789, 0.0
        %v6822 = vadd.f32 %v6790, 0.0
        %v6823 = vadd.f32 %v6791, 0.0
        %v6824 = vld [vmem:[#allocation2 + $0x8] sm:$0x1]
        %v6825 = vld [vmem:[#allocation2 + $0x14] sm:$0x1]
        %v6826 = vld [vmem:[#allocation2 + $0x20] sm:$0x1]
        %v6827 = vld [vmem:[#allocation2 + $0x2c] sm:$0x1]
        %v6828 = vld [vmem:[#allocation2 + $0x38] sm:$0x1]
        %v6829 = vld [vmem:[#allocation2 + $0x44] sm:$0x1]
        %v6830 = vld [vmem:[#allocation2 + $0x50] sm:$0x1]
        %v6831 = vld [vmem:[#allocation2 + $0x5c] sm:$0x1]
        %v6832 = vld [vmem:[#allocation2 + $0x68] sm:$0x1]
        %v6833 = vld [vmem:[#allocation2 + $0x74] sm:$0x1]
        %v6834 = vld [vmem:[#allocation2 + $0x80] sm:$0x1]
        %v6835 = vld [vmem:[#allocation2 + $0x8c] sm:$0x1]
        %v6836 = vld [vmem:[#allocation2 + $0x98] sm:$0x1]
        %v6837 = vld [vmem:[#allocation2 + $0xa4] sm:$0x1]
        %v6838 = vld [vmem:[#allocation2 + $0xb0] sm:$0x1]
        %v6839 = vld [vmem:[#allocation2 + $0xbc] sm:$0x1]
        %v6840 = vunpack.c.l.bf16 %v6824
        %v6841 = vunpack.c.l.bf16 %v6825
        %v6842 = vunpack.c.l.bf16 %v6826
        %v6843 = vunpack.c.l.bf16 %v6827
        %v6844 = vunpack.c.l.bf16 %v6828
        %v6845 = vunpack.c.l.bf16 %v6829
        %v6846 = vunpack.c.l.bf16 %v6830
        %v6847 = vunpack.c.l.bf16 %v6831
        %v6848 = vunpack.c.l.bf16 %v6832
        %v6849 = vunpack.c.l.bf16 %v6833
        %v6850 = vunpack.c.l.bf16 %v6834
        %v6851 = vunpack.c.l.bf16 %v6835
        %v6852 = vunpack.c.l.bf16 %v6836
        %v6853 = vunpack.c.l.bf16 %v6837
        %v6854 = vunpack.c.l.bf16 %v6838
        %v6855 = vunpack.c.l.bf16 %v6839
        %v6856 = vperm.slane %v6693, 1
        %v6857 = vmul.f32 %v6727, %v6856
        %v6858 = vmul.f32 %v6728, %v6856
        %v6859 = vmul.f32 %v6840, %v6856
        %v6860 = vmul.f32 %v6729, %v6856
        %v6861 = vmul.f32 %v6730, %v6856
        %v6862 = vmul.f32 %v6841, %v6856
        %v6863 = vmul.f32 %v6731, %v6856
        %v6864 = vmul.f32 %v6732, %v6856
        %v6865 = vmul.f32 %v6842, %v6856
        %v6866 = vmul.f32 %v6733, %v6856
        %v6867 = vmul.f32 %v6734, %v6856
        %v6868 = vmul.f32 %v6843, %v6856
        %v6869 = vmul.f32 %v6735, %v6856
        %v6870 = vmul.f32 %v6736, %v6856
        %v6871 = vmul.f32 %v6844, %v6856
        %v6872 = vmul.f32 %v6737, %v6856
        %v6873 = vmul.f32 %v6738, %v6856
        %v6874 = vmul.f32 %v6845, %v6856
        %v6875 = vmul.f32 %v6739, %v6856
        %v6876 = vmul.f32 %v6740, %v6856
        %v6877 = vmul.f32 %v6846, %v6856
        %v6878 = vmul.f32 %v6741, %v6856
        %v6879 = vmul.f32 %v6742, %v6856
        %v6880 = vmul.f32 %v6847, %v6856
        %v6881 = vmul.f32 %v6743, %v6856
        %v6882 = vmul.f32 %v6744, %v6856
        %v6883 = vmul.f32 %v6848, %v6856
        %v6884 = vmul.f32 %v6745, %v6856
        %v6885 = vmul.f32 %v6746, %v6856
        %v6886 = vmul.f32 %v6849, %v6856
        %v6887 = vmul.f32 %v6747, %v6856
        %v6888 = vmul.f32 %v6748, %v6856
        %v6889 = vmul.f32 %v6850, %v6856
        %v6890 = vmul.f32 %v6749, %v6856
        %v6891 = vmul.f32 %v6750, %v6856
        %v6892 = vmul.f32 %v6851, %v6856
        %v6893 = vmul.f32 %v6751, %v6856
        %v6894 = vmul.f32 %v6752, %v6856
        %v6895 = vmul.f32 %v6852, %v6856
        %v6896 = vmul.f32 %v6753, %v6856
        %v6897 = vmul.f32 %v6754, %v6856
        %v6898 = vmul.f32 %v6853, %v6856
        %v6899 = vmul.f32 %v6755, %v6856
        %v6900 = vmul.f32 %v6756, %v6856
        %v6901 = vmul.f32 %v6854, %v6856
        %v6902 = vmul.f32 %v6757, %v6856
        %v6903 = vmul.f32 %v6758, %v6856
        %v6904 = vmul.f32 %v6855, %v6856
        %vm6953 = vcmask 1046528
        %v6954 = vrot.slane %v6857, 1
        %v6955 = vrot.slane %v6858, 1
        %v6956 = vsel %vm6953, %v6954, %v6955
        %v6957 = vrot.slane %v6859, 1
        %v6958 = vsel %vm6953, %v6955, %v6957
        %v6959 = vrot.slane %v6860, 1
        %v6960 = vrot.slane %v6861, 1
        %v6961 = vsel %vm6953, %v6959, %v6960
        %v6962 = vrot.slane %v6862, 1
        %v6963 = vsel %vm6953, %v6960, %v6962
        %v6964 = vrot.slane %v6863, 1
        %v6965 = vrot.slane %v6864, 1
        %v6966 = vsel %vm6953, %v6964, %v6965
        %v6967 = vrot.slane %v6865, 1
        %v6968 = vsel %vm6953, %v6965, %v6967
        %v6969 = vrot.slane %v6866, 1
        %v6970 = vrot.slane %v6867, 1
        %v6971 = vsel %vm6953, %v6969, %v6970
        %v6972 = vrot.slane %v6868, 1
        %v6973 = vsel %vm6953, %v6970, %v6972
        %v6974 = vrot.slane %v6869, 1
        %v6975 = vrot.slane %v6870, 1
        %v6976 = vsel %vm6953, %v6974, %v6975
        %v6977 = vrot.slane %v6871, 1
        %v6978 = vsel %vm6953, %v6975, %v6977
        %v6979 = vrot.slane %v6872, 1
        %v6980 = vrot.slane %v6873, 1
        %v6981 = vsel %vm6953, %v6979, %v6980
        %v6982 = vrot.slane %v6874, 1
        %v6983 = vsel %vm6953, %v6980, %v6982
        %v6984 = vrot.slane %v6875, 1
        %v6985 = vrot.slane %v6876, 1
        %v6986 = vsel %vm6953, %v6984, %v6985
        %v6987 = vrot.slane %v6877, 1
        %v6988 = vsel %vm6953, %v6985, %v6987
        %v6989 = vrot.slane %v6878, 1
        %v6990 = vrot.slane %v6879, 1
        %v6991 = vsel %vm6953, %v6989, %v6990
        %v6992 = vrot.slane %v6880, 1
        %v6993 = vsel %vm6953, %v6990, %v6992
        %v6994 = vrot.slane %v6881, 1
        %v6995 = vrot.slane %v6882, 1
        %v6996 = vsel %vm6953, %v6994, %v6995
        %v6997 = vrot.slane %v6883, 1
        %v6998 = vsel %vm6953, %v6995, %v6997
        %v6999 = vrot.slane %v6884, 1
        %v7000 = vrot.slane %v6885, 1
        %v7001 = vsel %vm6953, %v6999, %v7000
        %v7002 = vrot.slane %v6886, 1
        %v7003 = vsel %vm6953, %v7000, %v7002
        %v7004 = vrot.slane %v6887, 1
        %v7005 = vrot.slane %v6888, 1
        %v7006 = vsel %vm6953, %v7004, %v7005
        %v7007 = vrot.slane %v6889, 1
        %v7008 = vsel %vm6953, %v7005, %v7007
        %v7009 = vrot.slane %v6890, 1
        %v7010 = vrot.slane %v6891, 1
        %v7011 = vsel %vm6953, %v7009, %v7010
        %v7012 = vrot.slane %v6892, 1
        %v7013 = vsel %vm6953, %v7010, %v7012
        %v7014 = vrot.slane %v6893, 1
        %v7015 = vrot.slane %v6894, 1
        %v7016 = vsel %vm6953, %v7014, %v7015
        %v7017 = vrot.slane %v6895, 1
        %v7018 = vsel %vm6953, %v7015, %v7017
        %v7019 = vrot.slane %v6896, 1
        %v7020 = vrot.slane %v6897, 1
        %v7021 = vsel %vm6953, %v7019, %v7020
        %v7022 = vrot.slane %v6898, 1
        %v7023 = vsel %vm6953, %v7020, %v7022
        %v7024 = vrot.slane %v6899, 1
        %v7025 = vrot.slane %v6900, 1
        %v7026 = vsel %vm6953, %v7024, %v7025
        %v7027 = vrot.slane %v6901, 1
        %v7028 = vsel %vm6953, %v7025, %v7027
        %v7029 = vrot.slane %v6902, 1
        %v7030 = vrot.slane %v6903, 1
        %v7031 = vsel %vm6953, %v7029, %v7030
        %v7032 = vrot.slane %v6904, 1
        %v7033 = vsel %vm6953, %v7030, %v7032
        %v7066 = vadd.f32 %v6792, %v6956
        %v7067 = vadd.f32 %v6793, %v6958
        %v7068 = vadd.f32 %v6794, %v6961
        %v7069 = vadd.f32 %v6795, %v6963
        %v7070 = vadd.f32 %v6796, %v6966
        %v7071 = vadd.f32 %v6797, %v6968
        %v7072 = vadd.f32 %v6798, %v6971
        %v7073 = vadd.f32 %v6799, %v6973
        %v7074 = vadd.f32 %v6800, %v6976
        %v7075 = vadd.f32 %v6801, %v6978
        %v7076 = vadd.f32 %v6802, %v6981
        %v7077 = vadd.f32 %v6803, %v6983
        %v7078 = vadd.f32 %v6804, %v6986
        %v7079 = vadd.f32 %v6805, %v6988
        %v7080 = vadd.f32 %v6806, %v6991
        %v7081 = vadd.f32 %v6807, %v6993
        %v7082 = vadd.f32 %v6808, %v6996
        %v7083 = vadd.f32 %v6809, %v6998
        %v7084 = vadd.f32 %v6810, %v7001
        %v7085 = vadd.f32 %v6811, %v7003
        %v7086 = vadd.f32 %v6812, %v7006
        %v7087 = vadd.f32 %v6813, %v7008
        %v7088 = vadd.f32 %v6814, %v7011
        %v7089 = vadd.f32 %v6815, %v7013
        %v7090 = vadd.f32 %v6816, %v7016
        %v7091 = vadd.f32 %v6817, %v7018
        %v7092 = vadd.f32 %v6818, %v7021
        %v7093 = vadd.f32 %v6819, %v7023
        %v7094 = vadd.f32 %v6820, %v7026
        %v7095 = vadd.f32 %v6821, %v7028
        %v7096 = vadd.f32 %v6822, %v7031
        %v7097 = vadd.f32 %v6823, %v7033
        %v7098 = vld [vmem:[#allocation2] sm:$0xe]
        %v7099 = vld [vmem:[#allocation2 + $0xc] sm:$0xe]
        %v7100 = vld [vmem:[#allocation2 + $0x18] sm:$0xe]
        %v7101 = vld [vmem:[#allocation2 + $0x24] sm:$0xe]
        %v7102 = vld [vmem:[#allocation2 + $0x30] sm:$0xe]
        %v7103 = vld [vmem:[#allocation2 + $0x3c] sm:$0xe]
        %v7104 = vld [vmem:[#allocation2 + $0x48] sm:$0xe]
        %v7105 = vld [vmem:[#allocation2 + $0x54] sm:$0xe]
        %v7106 = vld [vmem:[#allocation2 + $0x60] sm:$0xe]
        %v7107 = vld [vmem:[#allocation2 + $0x6c] sm:$0xe]
        %v7108 = vld [vmem:[#allocation2 + $0x78] sm:$0xe]
        %v7109 = vld [vmem:[#allocation2 + $0x84] sm:$0xe]
        %v7110 = vld [vmem:[#allocation2 + $0x90] sm:$0xe]
        %v7111 = vld [vmem:[#allocation2 + $0x9c] sm:$0xe]
        %v7112 = vld [vmem:[#allocation2 + $0xa8] sm:$0xe]
        %v7113 = vld [vmem:[#allocation2 + $0xb4] sm:$0xe]
        %v7114 = vunpack.c.l.bf16 %v7098
        %v7115 = vunpack.c.l.bf16 %v7099
        %v7116 = vunpack.c.l.bf16 %v7100
        %v7117 = vunpack.c.l.bf16 %v7101
        %v7118 = vunpack.c.l.bf16 %v7102
        %v7119 = vunpack.c.l.bf16 %v7103
        %v7120 = vunpack.c.l.bf16 %v7104
        %v7121 = vunpack.c.l.bf16 %v7105
        %v7122 = vunpack.c.l.bf16 %v7106
        %v7123 = vunpack.c.l.bf16 %v7107
        %v7124 = vunpack.c.l.bf16 %v7108
        %v7125 = vunpack.c.l.bf16 %v7109
        %v7126 = vunpack.c.l.bf16 %v7110
        %v7127 = vunpack.c.l.bf16 %v7111
        %v7128 = vunpack.c.l.bf16 %v7112
        %v7129 = vunpack.c.l.bf16 %v7113
        %v7130 = vperm.slane %v6693, 2
        %v7131 = vmul.f32 %v7114, %v7130
        %v7132 = vmul.f32 %v6728, %v7130
        %v7133 = vmul.f32 %v6840, %v7130
        %v7134 = vmul.f32 %v7115, %v7130
        %v7135 = vmul.f32 %v6730, %v7130
        %v7136 = vmul.f32 %v6841, %v7130
        %v7137 = vmul.f32 %v7116, %v7130
        %v7138 = vmul.f32 %v6732, %v7130
        %v7139 = vmul.f32 %v6842, %v7130
        %v7140 = vmul.f32 %v7117, %v7130
        %v7141 = vmul.f32 %v6734, %v7130
        %v7142 = vmul.f32 %v6843, %v7130
        %v7143 = vmul.f32 %v7118, %v7130
        %v7144 = vmul.f32 %v6736, %v7130
        %v7145 = vmul.f32 %v6844, %v7130
        %v7146 = vmul.f32 %v7119, %v7130
        %v7147 = vmul.f32 %v6738, %v7130
        %v7148 = vmul.f32 %v6845, %v7130
        %v7149 = vmul.f32 %v7120, %v7130
        %v7150 = vmul.f32 %v6740, %v7130
        %v7151 = vmul.f32 %v6846, %v7130
        %v7152 = vmul.f32 %v7121, %v7130
        %v7153 = vmul.f32 %v6742, %v7130
        %v7154 = vmul.f32 %v6847, %v7130
        %v7155 = vmul.f32 %v7122, %v7130
        %v7156 = vmul.f32 %v6744, %v7130
        %v7157 = vmul.f32 %v6848, %v7130
        %v7158 = vmul.f32 %v7123, %v7130
        %v7159 = vmul.f32 %v6746, %v7130
        %v7160 = vmul.f32 %v6849, %v7130
        %v7161 = vmul.f32 %v7124, %v7130
        %v7162 = vmul.f32 %v6748, %v7130
        %v7163 = vmul.f32 %v6850, %v7130
        %v7164 = vmul.f32 %v7125, %v7130
        %v7165 = vmul.f32 %v6750, %v7130
        %v7166 = vmul.f32 %v6851, %v7130
        %v7167 = vmul.f32 %v7126, %v7130
        %v7168 = vmul.f32 %v6752, %v7130
        %v7169 = vmul.f32 %v6852, %v7130
        %v7170 = vmul.f32 %v7127, %v7130
        %v7171 = vmul.f32 %v6754, %v7130
        %v7172 = vmul.f32 %v6853, %v7130
        %v7173 = vmul.f32 %v7128, %v7130
        %v7174 = vmul.f32 %v6756, %v7130
        %v7175 = vmul.f32 %v6854, %v7130
        %v7176 = vmul.f32 %v7129, %v7130
        %v7177 = vmul.f32 %v6758, %v7130
        %v7178 = vmul.f32 %v6855, %v7130
        %vm7227 = vcmask 1045504
        %v7228 = vrot.slane %v7131, 2
        %v7229 = vrot.slane %v7132, 2
        %v7230 = vsel %vm7227, %v7228, %v7229
        %v7231 = vrot.slane %v7133, 2
        %v7232 = vsel %vm7227, %v7229, %v7231
        %v7233 = vrot.slane %v7134, 2
        %v7234 = vrot.slane %v7135, 2
        %v7235 = vsel %vm7227, %v7233, %v7234
        %v7236 = vrot.slane %v7136, 2
        %v7237 = vsel %vm7227, %v7234, %v7236
        %v7238 = vrot.slane %v7137, 2
        %v7239 = vrot.slane %v7138, 2
        %v7240 = vsel %vm7227, %v7238, %v7239
        %v7241 = vrot.slane %v7139, 2
        %v7242 = vsel %vm7227, %v7239, %v7241
        %v7243 = vrot.slane %v7140, 2
        %v7244 = vrot.slane %v7141, 2
        %v7245 = vsel %vm7227, %v7243, %v7244
        %v7246 = vrot.slane %v7142, 2
        %v7247 = vsel %vm7227, %v7244, %v7246
        %v7248 = vrot.slane %v7143, 2
        %v7249 = vrot.slane %v7144, 2
        %v7250 = vsel %vm7227, %v7248, %v7249
        %v7251 = vrot.slane %v7145, 2
        %v7252 = vsel %vm7227, %v7249, %v7251
        %v7253 = vrot.slane %v7146, 2
        %v7254 = vrot.slane %v7147, 2
        %v7255 = vsel %vm7227, %v7253, %v7254
        %v7256 = vrot.slane %v7148, 2
        %v7257 = vsel %vm7227, %v7254, %v7256
        %v7258 = vrot.slane %v7149, 2
        %v7259 = vrot.slane %v7150, 2
        %v7260 = vsel %vm7227, %v7258, %v7259
        %v7261 = vrot.slane %v7151, 2
        %v7262 = vsel %vm7227, %v7259, %v7261
        %v7263 = vrot.slane %v7152, 2
        %v7264 = vrot.slane %v7153, 2
        %v7265 = vsel %vm7227, %v7263, %v7264
        %v7266 = vrot.slane %v7154, 2
        %v7267 = vsel %vm7227, %v7264, %v7266
        %v7268 = vrot.slane %v7155, 2
        %v7269 = vrot.slane %v7156, 2
        %v7270 = vsel %vm7227, %v7268, %v7269
        %v7271 = vrot.slane %v7157, 2
        %v7272 = vsel %vm7227, %v7269, %v7271
        %v7273 = vrot.slane %v7158, 2
        %v7274 = vrot.slane %v7159, 2
        %v7275 = vsel %vm7227, %v7273, %v7274
        %v7276 = vrot.slane %v7160, 2
        %v7277 = vsel %vm7227, %v7274, %v7276
        %v7278 = vrot.slane %v7161, 2
        %v7279 = vrot.slane %v7162, 2
        %v7280 = vsel %vm7227, %v7278, %v7279
        %v7281 = vrot.slane %v7163, 2
        %v7282 = vsel %vm7227, %v7279, %v7281
        %v7283 = vrot.slane %v7164, 2
        %v7284 = vrot.slane %v7165, 2
        %v7285 = vsel %vm7227, %v7283, %v7284
        %v7286 = vrot.slane %v7166, 2
        %v7287 = vsel %vm7227, %v7284, %v7286
        %v7288 = vrot.slane %v7167, 2
        %v7289 = vrot.slane %v7168, 2
        %v7290 = vsel %vm7227, %v7288, %v7289
        %v7291 = vrot.slane %v7169, 2
        %v7292 = vsel %vm7227, %v7289, %v7291
        %v7293 = vrot.slane %v7170, 2
        %v7294 = vrot.slane %v7171, 2
        %v7295 = vsel %vm7227, %v7293, %v7294
        %v7296 = vrot.slane %v7172, 2
        %v7297 = vsel %vm7227, %v7294, %v7296
        %v7298 = vrot.slane %v7173, 2
        %v7299 = vrot.slane %v7174, 2
        %v7300 = vsel %vm7227, %v7298, %v7299
        %v7301 = vrot.slane %v7175, 2
        %v7302 = vsel %vm7227, %v7299, %v7301
        %v7303 = vrot.slane %v7176, 2
        %v7304 = vrot.slane %v7177, 2
        %v7305 = vsel %vm7227, %v7303, %v7304
        %v7306 = vrot.slane %v7178, 2
        %v7307 = vsel %vm7227, %v7304, %v7306
        %v7340 = vadd.f32 %v7066, %v7230
        %v7341 = vadd.f32 %v7067, %v7232
        %v7342 = vadd.f32 %v7068, %v7235
        %v7343 = vadd.f32 %v7069, %v7237
        %v7344 = vadd.f32 %v7070, %v7240
        %v7345 = vadd.f32 %v7071, %v7242
        %v7346 = vadd.f32 %v7072, %v7245
        %v7347 = vadd.f32 %v7073, %v7247
        %v7348 = vadd.f32 %v7074, %v7250
        %v7349 = vadd.f32 %v7075, %v7252
        %v7350 = vadd.f32 %v7076, %v7255
        %v7351 = vadd.f32 %v7077, %v7257
        %v7352 = vadd.f32 %v7078, %v7260
        %v7353 = vadd.f32 %v7079, %v7262
        %v7354 = vadd.f32 %v7080, %v7265
        %v7355 = vadd.f32 %v7081, %v7267
        %v7356 = vadd.f32 %v7082, %v7270
        %v7357 = vadd.f32 %v7083, %v7272
        %v7358 = vadd.f32 %v7084, %v7275
        %v7359 = vadd.f32 %v7085, %v7277
        %v7360 = vadd.f32 %v7086, %v7280
        %v7361 = vadd.f32 %v7087, %v7282
        %v7362 = vadd.f32 %v7088, %v7285
        %v7363 = vadd.f32 %v7089, %v7287
        %v7364 = vadd.f32 %v7090, %v7290
        %v7365 = vadd.f32 %v7091, %v7292
        %v7366 = vadd.f32 %v7092, %v7295
        %v7367 = vadd.f32 %v7093, %v7297
        %v7368 = vadd.f32 %v7094, %v7300
        %v7369 = vadd.f32 %v7095, %v7302
        %v7370 = vadd.f32 %v7096, %v7305
        %v7371 = vadd.f32 %v7097, %v7307
        %v7372 = vld [vmem:[%s1969] sm:$0xf]
        %v7373 = vld [vmem:[%s1969 + $0x4] sm:$0xf]
        %v7374 = vld [vmem:[%s1969 + $0xc] sm:$0xf]
        %v7375 = vld [vmem:[%s1969 + $0x10] sm:$0xf]
        %v7376 = vld [vmem:[%s1969 + $0x18] sm:$0xf]
        %v7377 = vld [vmem:[%s1969 + $0x1c] sm:$0xf]
        %v7378 = vld [vmem:[%s1969 + $0x24] sm:$0xf]
        %v7379 = vld [vmem:[%s1969 + $0x28] sm:$0xf]
        %v7380 = vld [vmem:[%s1969 + $0x30] sm:$0xf]
        %v7381 = vld [vmem:[%s1969 + $0x34] sm:$0xf]
        %v7382 = vld [vmem:[%s1969 + $0x3c] sm:$0xf]
        %v7383 = vld [vmem:[%s1969 + $0x40] sm:$0xf]
        %v7384 = vld [vmem:[%s1969 + $0x48] sm:$0xf]
        %v7385 = vld [vmem:[%s1969 + $0x4c] sm:$0xf]
        %v7386 = vld [vmem:[%s1969 + $0x54] sm:$0xf]
        %v7387 = vld [vmem:[%s1969 + $0x58] sm:$0xf]
        %v7388 = vld [vmem:[%s1969 + $0x60] sm:$0xf]
        %v7389 = vld [vmem:[%s1969 + $0x64] sm:$0xf]
        %v7390 = vld [vmem:[%s1969 + $0x6c] sm:$0xf]
        %v7391 = vld [vmem:[%s1969 + $0x70] sm:$0xf]
        %v7392 = vld [vmem:[%s1969 + $0x78] sm:$0xf]
        %v7393 = vld [vmem:[%s1969 + $0x7c] sm:$0xf]
        %v7394 = vld [vmem:[%s1969 + $0x84] sm:$0xf]
        %v7395 = vld [vmem:[%s1969 + $0x88] sm:$0xf]
        %v7396 = vld [vmem:[%s1969 + $0x90] sm:$0xf]
        %v7397 = vld [vmem:[%s1969 + $0x94] sm:$0xf]
        %v7398 = vld [vmem:[%s1969 + $0x9c] sm:$0xf]
        %v7399 = vld [vmem:[%s1969 + $0xa0] sm:$0xf]
        %v7400 = vld [vmem:[%s1969 + $0xa8] sm:$0xf]
        %v7401 = vld [vmem:[%s1969 + $0xac] sm:$0xf]
        %v7402 = vld [vmem:[%s1969 + $0xb4] sm:$0xf]
        %v7403 = vld [vmem:[%s1969 + $0xb8] sm:$0xf]
        %v7404 = vunpack.c.l.bf16 %v7372
        %v7405 = vunpack.c.l.bf16 %v7373
        %v7406 = vunpack.c.l.bf16 %v7374
        %v7407 = vunpack.c.l.bf16 %v7375
        %v7408 = vunpack.c.l.bf16 %v7376
        %v7409 = vunpack.c.l.bf16 %v7377
        %v7410 = vunpack.c.l.bf16 %v7378
        %v7411 = vunpack.c.l.bf16 %v7379
        %v7412 = vunpack.c.l.bf16 %v7380
        %v7413 = vunpack.c.l.bf16 %v7381
        %v7414 = vunpack.c.l.bf16 %v7382
        %v7415 = vunpack.c.l.bf16 %v7383
        %v7416 = vunpack.c.l.bf16 %v7384
        %v7417 = vunpack.c.l.bf16 %v7385
        %v7418 = vunpack.c.l.bf16 %v7386
        %v7419 = vunpack.c.l.bf16 %v7387
        %v7420 = vunpack.c.l.bf16 %v7388
        %v7421 = vunpack.c.l.bf16 %v7389
        %v7422 = vunpack.c.l.bf16 %v7390
        %v7423 = vunpack.c.l.bf16 %v7391
        %v7424 = vunpack.c.l.bf16 %v7392
        %v7425 = vunpack.c.l.bf16 %v7393
        %v7426 = vunpack.c.l.bf16 %v7394
        %v7427 = vunpack.c.l.bf16 %v7395
        %v7428 = vunpack.c.l.bf16 %v7396
        %v7429 = vunpack.c.l.bf16 %v7397
        %v7430 = vunpack.c.l.bf16 %v7398
        %v7431 = vunpack.c.l.bf16 %v7399
        %v7432 = vunpack.c.l.bf16 %v7400
        %v7433 = vunpack.c.l.bf16 %v7401
        %v7434 = vunpack.c.l.bf16 %v7402
        %v7435 = vunpack.c.l.bf16 %v7403
        %v7436 = vperm.slane %v6693, 3
        %v7437 = vmul.f32 %v7404, %v7436
        %v7438 = vmul.f32 %v7405, %v7436
        %v7439 = vmul.f32 %v7406, %v7436
        %v7440 = vmul.f32 %v7407, %v7436
        %v7441 = vmul.f32 %v7408, %v7436
        %v7442 = vmul.f32 %v7409, %v7436
        %v7443 = vmul.f32 %v7410, %v7436
        %v7444 = vmul.f32 %v7411, %v7436
        %v7445 = vmul.f32 %v7412, %v7436
        %v7446 = vmul.f32 %v7413, %v7436
        %v7447 = vmul.f32 %v7414, %v7436
        %v7448 = vmul.f32 %v7415, %v7436
        %v7449 = vmul.f32 %v7416, %v7436
        %v7450 = vmul.f32 %v7417, %v7436
        %v7451 = vmul.f32 %v7418, %v7436
        %v7452 = vmul.f32 %v7419, %v7436
        %v7453 = vmul.f32 %v7420, %v7436
        %v7454 = vmul.f32 %v7421, %v7436
        %v7455 = vmul.f32 %v7422, %v7436
        %v7456 = vmul.f32 %v7423, %v7436
        %v7457 = vmul.f32 %v7424, %v7436
        %v7458 = vmul.f32 %v7425, %v7436
        %v7459 = vmul.f32 %v7426, %v7436
        %v7460 = vmul.f32 %v7427, %v7436
        %v7461 = vmul.f32 %v7428, %v7436
        %v7462 = vmul.f32 %v7429, %v7436
        %v7463 = vmul.f32 %v7430, %v7436
        %v7464 = vmul.f32 %v7431, %v7436
        %v7465 = vmul.f32 %v7432, %v7436
        %v7466 = vmul.f32 %v7433, %v7436
        %v7467 = vmul.f32 %v7434, %v7436
        %v7468 = vmul.f32 %v7435, %v7436
        %v7469 = vadd.f32 %v7340, %v7437
        %v7470 = vadd.f32 %v7341, %v7438
        %v7471 = vadd.f32 %v7342, %v7439
        %v7472 = vadd.f32 %v7343, %v7440
        %v7473 = vadd.f32 %v7344, %v7441
        %v7474 = vadd.f32 %v7345, %v7442
        %v7475 = vadd.f32 %v7346, %v7443
        %v7476 = vadd.f32 %v7347, %v7444
        %v7477 = vadd.f32 %v7348, %v7445
        %v7478 = vadd.f32 %v7349, %v7446
        %v7479 = vadd.f32 %v7350, %v7447
        %v7480 = vadd.f32 %v7351, %v7448
        %v7481 = vadd.f32 %v7352, %v7449
        %v7482 = vadd.f32 %v7353, %v7450
        %v7483 = vadd.f32 %v7354, %v7451
        %v7484 = vadd.f32 %v7355, %v7452
        %v7485 = vadd.f32 %v7356, %v7453
        %v7486 = vadd.f32 %v7357, %v7454
        %v7487 = vadd.f32 %v7358, %v7455
        %v7488 = vadd.f32 %v7359, %v7456
        %v7489 = vadd.f32 %v7360, %v7457
        %v7490 = vadd.f32 %v7361, %v7458
        %v7491 = vadd.f32 %v7362, %v7459
        %v7492 = vadd.f32 %v7363, %v7460
        %v7493 = vadd.f32 %v7364, %v7461
        %v7494 = vadd.f32 %v7365, %v7462
        %v7495 = vadd.f32 %v7366, %v7463
        %v7496 = vadd.f32 %v7367, %v7464
        %v7497 = vadd.f32 %v7368, %v7465
        %v7498 = vadd.f32 %v7369, %v7466
        %v7499 = vadd.f32 %v7370, %v7467
        %v7500 = vadd.f32 %v7371, %v7468
        %v7501 = vld [vmem:[%s1969 + $0x8] sm:$0x1]
        %v7502 = vld [vmem:[%s1969 + $0x14] sm:$0x1]
        %v7503 = vld [vmem:[%s1969 + $0x20] sm:$0x1]
        %v7504 = vld [vmem:[%s1969 + $0x2c] sm:$0x1]
        %v7505 = vld [vmem:[%s1969 + $0x38] sm:$0x1]
        %v7506 = vld [vmem:[%s1969 + $0x44] sm:$0x1]
        %v7507 = vld [vmem:[%s1969 + $0x50] sm:$0x1]
        %v7508 = vld [vmem:[%s1969 + $0x5c] sm:$0x1]
        %v7509 = vld [vmem:[%s1969 + $0x68] sm:$0x1]
        %v7510 = vld [vmem:[%s1969 + $0x74] sm:$0x1]
        %v7511 = vld [vmem:[%s1969 + $0x80] sm:$0x1]
        %v7512 = vld [vmem:[%s1969 + $0x8c] sm:$0x1]
        %v7513 = vld [vmem:[%s1969 + $0x98] sm:$0x1]
        %v7514 = vld [vmem:[%s1969 + $0xa4] sm:$0x1]
        %v7515 = vld [vmem:[%s1969 + $0xb0] sm:$0x1]
        %v7516 = vld [vmem:[%s1969 + $0xbc] sm:$0x1]
        %v7517 = vunpack.c.l.bf16 %v7501
        %v7518 = vunpack.c.l.bf16 %v7502
        %v7519 = vunpack.c.l.bf16 %v7503
        %v7520 = vunpack.c.l.bf16 %v7504
        %v7521 = vunpack.c.l.bf16 %v7505
        %v7522 = vunpack.c.l.bf16 %v7506
        %v7523 = vunpack.c.l.bf16 %v7507
        %v7524 = vunpack.c.l.bf16 %v7508
        %v7525 = vunpack.c.l.bf16 %v7509
        %v7526 = vunpack.c.l.bf16 %v7510
        %v7527 = vunpack.c.l.bf16 %v7511
        %v7528 = vunpack.c.l.bf16 %v7512
        %v7529 = vunpack.c.l.bf16 %v7513
        %v7530 = vunpack.c.l.bf16 %v7514
        %v7531 = vunpack.c.l.bf16 %v7515
        %v7532 = vunpack.c.l.bf16 %v7516
        %v7533 = vperm.slane %v6693, 4
        %v7534 = vmul.f32 %v7404, %v7533
        %v7535 = vmul.f32 %v7405, %v7533
        %v7536 = vmul.f32 %v7517, %v7533
        %v7537 = vmul.f32 %v7406, %v7533
        %v7538 = vmul.f32 %v7407, %v7533
        %v7539 = vmul.f32 %v7518, %v7533
        %v7540 = vmul.f32 %v7408, %v7533
        %v7541 = vmul.f32 %v7409, %v7533
        %v7542 = vmul.f32 %v7519, %v7533
        %v7543 = vmul.f32 %v7410, %v7533
        %v7544 = vmul.f32 %v7411, %v7533
        %v7545 = vmul.f32 %v7520, %v7533
        %v7546 = vmul.f32 %v7412, %v7533
        %v7547 = vmul.f32 %v7413, %v7533
        %v7548 = vmul.f32 %v7521, %v7533
        %v7549 = vmul.f32 %v7414, %v7533
        %v7550 = vmul.f32 %v7415, %v7533
        %v7551 = vmul.f32 %v7522, %v7533
        %v7552 = vmul.f32 %v7416, %v7533
        %v7553 = vmul.f32 %v7417, %v7533
        %v7554 = vmul.f32 %v7523, %v7533
        %v7555 = vmul.f32 %v7418, %v7533
        %v7556 = vmul.f32 %v7419, %v7533
        %v7557 = vmul.f32 %v7524, %v7533
        %v7558 = vmul.f32 %v7420, %v7533
        %v7559 = vmul.f32 %v7421, %v7533
        %v7560 = vmul.f32 %v7525, %v7533
        %v7561 = vmul.f32 %v7422, %v7533
        %v7562 = vmul.f32 %v7423, %v7533
        %v7563 = vmul.f32 %v7526, %v7533
        %v7564 = vmul.f32 %v7424, %v7533
        %v7565 = vmul.f32 %v7425, %v7533
        %v7566 = vmul.f32 %v7527, %v7533
        %v7567 = vmul.f32 %v7426, %v7533
        %v7568 = vmul.f32 %v7427, %v7533
        %v7569 = vmul.f32 %v7528, %v7533
        %v7570 = vmul.f32 %v7428, %v7533
        %v7571 = vmul.f32 %v7429, %v7533
        %v7572 = vmul.f32 %v7529, %v7533
        %v7573 = vmul.f32 %v7430, %v7533
        %v7574 = vmul.f32 %v7431, %v7533
        %v7575 = vmul.f32 %v7530, %v7533
        %v7576 = vmul.f32 %v7432, %v7533
        %v7577 = vmul.f32 %v7433, %v7533
        %v7578 = vmul.f32 %v7531, %v7533
        %v7579 = vmul.f32 %v7434, %v7533
        %v7580 = vmul.f32 %v7435, %v7533
        %v7581 = vmul.f32 %v7532, %v7533
        %v7630 = vrot.slane %v7534, 1
        %v7631 = vrot.slane %v7535, 1
        %v7632 = vsel %vm6953, %v7630, %v7631
        %v7633 = vrot.slane %v7536, 1
        %v7634 = vsel %vm6953, %v7631, %v7633
        %v7635 = vrot.slane %v7537, 1
        %v7636 = vrot.slane %v7538, 1
        %v7637 = vsel %vm6953, %v7635, %v7636
        %v7638 = vrot.slane %v7539, 1
        %v7639 = vsel %vm6953, %v7636, %v7638
        %v7640 = vrot.slane %v7540, 1
        %v7641 = vrot.slane %v7541, 1
        %v7642 = vsel %vm6953, %v7640, %v7641
        %v7643 = vrot.slane %v7542, 1
        %v7644 = vsel %vm6953, %v7641, %v7643
        %v7645 = vrot.slane %v7543, 1
        %v7646 = vrot.slane %v7544, 1
        %v7647 = vsel %vm6953, %v7645, %v7646
        %v7648 = vrot.slane %v7545, 1
        %v7649 = vsel %vm6953, %v7646, %v7648
        %v7650 = vrot.slane %v7546, 1
        %v7651 = vrot.slane %v7547, 1
        %v7652 = vsel %vm6953, %v7650, %v7651
        %v7653 = vrot.slane %v7548, 1
        %v7654 = vsel %vm6953, %v7651, %v7653
        %v7655 = vrot.slane %v7549, 1
        %v7656 = vrot.slane %v7550, 1
        %v7657 = vsel %vm6953, %v7655, %v7656
        %v7658 = vrot.slane %v7551, 1
        %v7659 = vsel %vm6953, %v7656, %v7658
        %v7660 = vrot.slane %v7552, 1
        %v7661 = vrot.slane %v7553, 1
        %v7662 = vsel %vm6953, %v7660, %v7661
        %v7663 = vrot.slane %v7554, 1
        %v7664 = vsel %vm6953, %v7661, %v7663
        %v7665 = vrot.slane %v7555, 1
        %v7666 = vrot.slane %v7556, 1
        %v7667 = vsel %vm6953, %v7665, %v7666
        %v7668 = vrot.slane %v7557, 1
        %v7669 = vsel %vm6953, %v7666, %v7668
        %v7670 = vrot.slane %v7558, 1
        %v7671 = vrot.slane %v7559, 1
        %v7672 = vsel %vm6953, %v7670, %v7671
        %v7673 = vrot.slane %v7560, 1
        %v7674 = vsel %vm6953, %v7671, %v7673
        %v7675 = vrot.slane %v7561, 1
        %v7676 = vrot.slane %v7562, 1
        %v7677 = vsel %vm6953, %v7675, %v7676
        %v7678 = vrot.slane %v7563, 1
        %v7679 = vsel %vm6953, %v7676, %v7678
        %v7680 = vrot.slane %v7564, 1
        %v7681 = vrot.slane %v7565, 1
        %v7682 = vsel %vm6953, %v7680, %v7681
        %v7683 = vrot.slane %v7566, 1
        %v7684 = vsel %vm6953, %v7681, %v7683
        %v7685 = vrot.slane %v7567, 1
        %v7686 = vrot.slane %v7568, 1
        %v7687 = vsel %vm6953, %v7685, %v7686
        %v7688 = vrot.slane %v7569, 1
        %v7689 = vsel %vm6953, %v7686, %v7688
        %v7690 = vrot.slane %v7570, 1
        %v7691 = vrot.slane %v7571, 1
        %v7692 = vsel %vm6953, %v7690, %v7691
        %v7693 = vrot.slane %v7572, 1
        %v7694 = vsel %vm6953, %v7691, %v7693
        %v7695 = vrot.slane %v7573, 1
        %v7696 = vrot.slane %v7574, 1
        %v7697 = vsel %vm6953, %v7695, %v7696
        %v7698 = vrot.slane %v7575, 1
        %v7699 = vsel %vm6953, %v7696, %v7698
        %v7700 = vrot.slane %v7576, 1
        %v7701 = vrot.slane %v7577, 1
        %v7702 = vsel %vm6953, %v7700, %v7701
        %v7703 = vrot.slane %v7578, 1
        %v7704 = vsel %vm6953, %v7701, %v7703
        %v7705 = vrot.slane %v7579, 1
        %v7706 = vrot.slane %v7580, 1
        %v7707 = vsel %vm6953, %v7705, %v7706
        %v7708 = vrot.slane %v7581, 1
        %v7709 = vsel %vm6953, %v7706, %v7708
        %v7742 = vadd.f32 %v7469, %v7632
        %v7743 = vadd.f32 %v7470, %v7634
        %v7744 = vadd.f32 %v7471, %v7637
        %v7745 = vadd.f32 %v7472, %v7639
        %v7746 = vadd.f32 %v7473, %v7642
        %v7747 = vadd.f32 %v7474, %v7644
        %v7748 = vadd.f32 %v7475, %v7647
        %v7749 = vadd.f32 %v7476, %v7649
        %v7750 = vadd.f32 %v7477, %v7652
        %v7751 = vadd.f32 %v7478, %v7654
        %v7752 = vadd.f32 %v7479, %v7657
        %v7753 = vadd.f32 %v7480, %v7659
        %v7754 = vadd.f32 %v7481, %v7662
        %v7755 = vadd.f32 %v7482, %v7664
        %v7756 = vadd.f32 %v7483, %v7667
        %v7757 = vadd.f32 %v7484, %v7669
        %v7758 = vadd.f32 %v7485, %v7672
        %v7759 = vadd.f32 %v7486, %v7674
        %v7760 = vadd.f32 %v7487, %v7677
        %v7761 = vadd.f32 %v7488, %v7679
        %v7762 = vadd.f32 %v7489, %v7682
        %v7763 = vadd.f32 %v7490, %v7684
        %v7764 = vadd.f32 %v7491, %v7687
        %v7765 = vadd.f32 %v7492, %v7689
        %v7766 = vadd.f32 %v7493, %v7692
        %v7767 = vadd.f32 %v7494, %v7694
        %v7768 = vadd.f32 %v7495, %v7697
        %v7769 = vadd.f32 %v7496, %v7699
        %v7770 = vadd.f32 %v7497, %v7702
        %v7771 = vadd.f32 %v7498, %v7704
        %v7772 = vadd.f32 %v7499, %v7707
        %v7773 = vadd.f32 %v7500, %v7709
        %v7774 = vld [vmem:[%s1969] sm:$0xe]
        %v7775 = vld [vmem:[%s1969 + $0xc] sm:$0xe]
        %v7776 = vld [vmem:[%s1969 + $0x18] sm:$0xe]
        %v7777 = vld [vmem:[%s1969 + $0x24] sm:$0xe]
        %v7778 = vld [vmem:[%s1969 + $0x30] sm:$0xe]
        %v7779 = vld [vmem:[%s1969 + $0x3c] sm:$0xe]
        %v7780 = vld [vmem:[%s1969 + $0x48] sm:$0xe]
        %v7781 = vld [vmem:[%s1969 + $0x54] sm:$0xe]
        %v7782 = vld [vmem:[%s1969 + $0x60] sm:$0xe]
        %v7783 = vld [vmem:[%s1969 + $0x6c] sm:$0xe]
        %v7784 = vld [vmem:[%s1969 + $0x78] sm:$0xe]
        %v7785 = vld [vmem:[%s1969 + $0x84] sm:$0xe]
        %v7786 = vld [vmem:[%s1969 + $0x90] sm:$0xe]
        %v7787 = vld [vmem:[%s1969 + $0x9c] sm:$0xe]
        %v7788 = vld [vmem:[%s1969 + $0xa8] sm:$0xe]
        %v7789 = vld [vmem:[%s1969 + $0xb4] sm:$0xe]
        %v7790 = vunpack.c.l.bf16 %v7774
        %v7791 = vunpack.c.l.bf16 %v7775
        %v7792 = vunpack.c.l.bf16 %v7776
        %v7793 = vunpack.c.l.bf16 %v7777
        %v7794 = vunpack.c.l.bf16 %v7778
        %v7795 = vunpack.c.l.bf16 %v7779
        %v7796 = vunpack.c.l.bf16 %v7780
        %v7797 = vunpack.c.l.bf16 %v7781
        %v7798 = vunpack.c.l.bf16 %v7782
        %v7799 = vunpack.c.l.bf16 %v7783
        %v7800 = vunpack.c.l.bf16 %v7784
        %v7801 = vunpack.c.l.bf16 %v7785
        %v7802 = vunpack.c.l.bf16 %v7786
        %v7803 = vunpack.c.l.bf16 %v7787
        %v7804 = vunpack.c.l.bf16 %v7788
        %v7805 = vunpack.c.l.bf16 %v7789
        %v7806 = vperm.slane %v6693, 5
        %v7807 = vmul.f32 %v7790, %v7806
        %v7808 = vmul.f32 %v7405, %v7806
        %v7809 = vmul.f32 %v7517, %v7806
        %v7810 = vmul.f32 %v7791, %v7806
        %v7811 = vmul.f32 %v7407, %v7806
        %v7812 = vmul.f32 %v7518, %v7806
        %v7813 = vmul.f32 %v7792, %v7806
        %v7814 = vmul.f32 %v7409, %v7806
        %v7815 = vmul.f32 %v7519, %v7806
        %v7816 = vmul.f32 %v7793, %v7806
        %v7817 = vmul.f32 %v7411, %v7806
        %v7818 = vmul.f32 %v7520, %v7806
        %v7819 = vmul.f32 %v7794, %v7806
        %v7820 = vmul.f32 %v7413, %v7806
        %v7821 = vmul.f32 %v7521, %v7806
        %v7822 = vmul.f32 %v7795, %v7806
        %v7823 = vmul.f32 %v7415, %v7806
        %v7824 = vmul.f32 %v7522, %v7806
        %v7825 = vmul.f32 %v7796, %v7806
        %v7826 = vmul.f32 %v7417, %v7806
        %v7827 = vmul.f32 %v7523, %v7806
        %v7828 = vmul.f32 %v7797, %v7806
        %v7829 = vmul.f32 %v7419, %v7806
        %v7830 = vmul.f32 %v7524, %v7806
        %v7831 = vmul.f32 %v7798, %v7806
        %v7832 = vmul.f32 %v7421, %v7806
        %v7833 = vmul.f32 %v7525, %v7806
        %v7834 = vmul.f32 %v7799, %v7806
        %v7835 = vmul.f32 %v7423, %v7806
        %v7836 = vmul.f32 %v7526, %v7806
        %v7837 = vmul.f32 %v7800, %v7806
        %v7838 = vmul.f32 %v7425, %v7806
        %v7839 = vmul.f32 %v7527, %v7806
        %v7840 = vmul.f32 %v7801, %v7806
        %v7841 = vmul.f32 %v7427, %v7806
        %v7842 = vmul.f32 %v7528, %v7806
        %v7843 = vmul.f32 %v7802, %v7806
        %v7844 = vmul.f32 %v7429, %v7806
        %v7845 = vmul.f32 %v7529, %v7806
        %v7846 = vmul.f32 %v7803, %v7806
        %v7847 = vmul.f32 %v7431, %v7806
        %v7848 = vmul.f32 %v7530, %v7806
        %v7849 = vmul.f32 %v7804, %v7806
        %v7850 = vmul.f32 %v7433, %v7806
        %v7851 = vmul.f32 %v7531, %v7806
        %v7852 = vmul.f32 %v7805, %v7806
        %v7853 = vmul.f32 %v7435, %v7806
        %v7854 = vmul.f32 %v7532, %v7806
        %v7903 = vrot.slane %v7807, 2
        %v7904 = vrot.slane %v7808, 2
        %v7905 = vsel %vm7227, %v7903, %v7904
        %v7906 = vrot.slane %v7809, 2
        %v7907 = vsel %vm7227, %v7904, %v7906
        %v7908 = vrot.slane %v7810, 2
        %v7909 = vrot.slane %v7811, 2
        %v7910 = vsel %vm7227, %v7908, %v7909
        %v7911 = vrot.slane %v7812, 2
        %v7912 = vsel %vm7227, %v7909, %v7911
        %v7913 = vrot.slane %v7813, 2
        %v7914 = vrot.slane %v7814, 2
        %v7915 = vsel %vm7227, %v7913, %v7914
        %v7916 = vrot.slane %v7815, 2
        %v7917 = vsel %vm7227, %v7914, %v7916
        %v7918 = vrot.slane %v7816, 2
        %v7919 = vrot.slane %v7817, 2
        %v7920 = vsel %vm7227, %v7918, %v7919
        %v7921 = vrot.slane %v7818, 2
        %v7922 = vsel %vm7227, %v7919, %v7921
        %v7923 = vrot.slane %v7819, 2
        %v7924 = vrot.slane %v7820, 2
        %v7925 = vsel %vm7227, %v7923, %v7924
        %v7926 = vrot.slane %v7821, 2
        %v7927 = vsel %vm7227, %v7924, %v7926
        %v7928 = vrot.slane %v7822, 2
        %v7929 = vrot.slane %v7823, 2
        %v7930 = vsel %vm7227, %v7928, %v7929
        %v7931 = vrot.slane %v7824, 2
        %v7932 = vsel %vm7227, %v7929, %v7931
        %v7933 = vrot.slane %v7825, 2
        %v7934 = vrot.slane %v7826, 2
        %v7935 = vsel %vm7227, %v7933, %v7934
        %v7936 = vrot.slane %v7827, 2
        %v7937 = vsel %vm7227, %v7934, %v7936
        %v7938 = vrot.slane %v7828, 2
        %v7939 = vrot.slane %v7829, 2
        %v7940 = vsel %vm7227, %v7938, %v7939
        %v7941 = vrot.slane %v7830, 2
        %v7942 = vsel %vm7227, %v7939, %v7941
        %v7943 = vrot.slane %v7831, 2
        %v7944 = vrot.slane %v7832, 2
        %v7945 = vsel %vm7227, %v7943, %v7944
        %v7946 = vrot.slane %v7833, 2
        %v7947 = vsel %vm7227, %v7944, %v7946
        %v7948 = vrot.slane %v7834, 2
        %v7949 = vrot.slane %v7835, 2
        %v7950 = vsel %vm7227, %v7948, %v7949
        %v7951 = vrot.slane %v7836, 2
        %v7952 = vsel %vm7227, %v7949, %v7951
        %v7953 = vrot.slane %v7837, 2
        %v7954 = vrot.slane %v7838, 2
        %v7955 = vsel %vm7227, %v7953, %v7954
        %v7956 = vrot.slane %v7839, 2
        %v7957 = vsel %vm7227, %v7954, %v7956
        %v7958 = vrot.slane %v7840, 2
        %v7959 = vrot.slane %v7841, 2
        %v7960 = vsel %vm7227, %v7958, %v7959
        %v7961 = vrot.slane %v7842, 2
        %v7962 = vsel %vm7227, %v7959, %v7961
        %v7963 = vrot.slane %v7843, 2
        %v7964 = vrot.slane %v7844, 2
        %v7965 = vsel %vm7227, %v7963, %v7964
        %v7966 = vrot.slane %v7845, 2
        %v7967 = vsel %vm7227, %v7964, %v7966
        %v7968 = vrot.slane %v7846, 2
        %v7969 = vrot.slane %v7847, 2
        %v7970 = vsel %vm7227, %v7968, %v7969
        %v7971 = vrot.slane %v7848, 2
        %v7972 = vsel %vm7227, %v7969, %v7971
        %v7973 = vrot.slane %v7849, 2
        %v7974 = vrot.slane %v7850, 2
        %v7975 = vsel %vm7227, %v7973, %v7974
        %v7976 = vrot.slane %v7851, 2
        %v7977 = vsel %vm7227, %v7974, %v7976
        %v7978 = vrot.slane %v7852, 2
        %v7979 = vrot.slane %v7853, 2
        %v7980 = vsel %vm7227, %v7978, %v7979
        %v7981 = vrot.slane %v7854, 2
        %v7982 = vsel %vm7227, %v7979, %v7981
        %v8015 = vadd.f32 %v7742, %v7905
        %v8016 = vadd.f32 %v7743, %v7907
        %v8017 = vadd.f32 %v7744, %v7910
        %v8018 = vadd.f32 %v7745, %v7912
        %v8019 = vadd.f32 %v7746, %v7915
        %v8020 = vadd.f32 %v7747, %v7917
        %v8021 = vadd.f32 %v7748, %v7920
        %v8022 = vadd.f32 %v7749, %v7922
        %v8023 = vadd.f32 %v7750, %v7925
        %v8024 = vadd.f32 %v7751, %v7927
        %v8025 = vadd.f32 %v7752, %v7930
        %v8026 = vadd.f32 %v7753, %v7932
        %v8027 = vadd.f32 %v7754, %v7935
        %v8028 = vadd.f32 %v7755, %v7937
        %v8029 = vadd.f32 %v7756, %v7940
        %v8030 = vadd.f32 %v7757, %v7942
        %v8031 = vadd.f32 %v7758, %v7945
        %v8032 = vadd.f32 %v7759, %v7947
        %v8033 = vadd.f32 %v7760, %v7950
        %v8034 = vadd.f32 %v7761, %v7952
        %v8035 = vadd.f32 %v7762, %v7955
        %v8036 = vadd.f32 %v7763, %v7957
        %v8037 = vadd.f32 %v7764, %v7960
        %v8038 = vadd.f32 %v7765, %v7962
        %v8039 = vadd.f32 %v7766, %v7965
        %v8040 = vadd.f32 %v7767, %v7967
        %v8041 = vadd.f32 %v7768, %v7970
        %v8042 = vadd.f32 %v7769, %v7972
        %v8043 = vadd.f32 %v7770, %v7975
        %v8044 = vadd.f32 %v7771, %v7977
        %v8045 = vadd.f32 %v7772, %v7980
        %v8046 = vadd.f32 %v7773, %v7982
        %s8047 = scalar_lea.vmem [#allocation2], 24
        %v8048 = vld [vmem:[%s8047] sm:$0xf]
        %v8049 = vld [vmem:[%s8047 + $0x4] sm:$0xf]
        %v8050 = vld [vmem:[%s8047 + $0xc] sm:$0xf]
        %v8051 = vld [vmem:[%s8047 + $0x10] sm:$0xf]
        %v8052 = vld [vmem:[%s8047 + $0x18] sm:$0xf]
        %v8053 = vld [vmem:[%s8047 + $0x1c] sm:$0xf]
        %v8054 = vld [vmem:[%s8047 + $0x24] sm:$0xf]
        %v8055 = vld [vmem:[%s8047 + $0x28] sm:$0xf]
        %v8056 = vld [vmem:[%s8047 + $0x30] sm:$0xf]
        %v8057 = vld [vmem:[%s8047 + $0x34] sm:$0xf]
        %v8058 = vld [vmem:[%s8047 + $0x3c] sm:$0xf]
        %v8059 = vld [vmem:[%s8047 + $0x40] sm:$0xf]
        %v8060 = vld [vmem:[%s8047 + $0x48] sm:$0xf]
        %v8061 = vld [vmem:[%s8047 + $0x4c] sm:$0xf]
        %v8062 = vld [vmem:[%s8047 + $0x54] sm:$0xf]
        %v8063 = vld [vmem:[%s8047 + $0x58] sm:$0xf]
        %v8064 = vld [vmem:[%s8047 + $0x60] sm:$0xf]
        %v8065 = vld [vmem:[%s8047 + $0x64] sm:$0xf]
        %v8066 = vld [vmem:[%s8047 + $0x6c] sm:$0xf]
        %v8067 = vld [vmem:[%s8047 + $0x70] sm:$0xf]
        %v8068 = vld [vmem:[%s8047 + $0x78] sm:$0xf]
        %v8069 = vld [vmem:[%s8047 + $0x7c] sm:$0xf]
        %v8070 = vld [vmem:[%s8047 + $0x84] sm:$0xf]
        %v8071 = vld [vmem:[%s8047 + $0x88] sm:$0xf]
        %v8072 = vld [vmem:[%s8047 + $0x90] sm:$0xf]
        %v8073 = vld [vmem:[%s8047 + $0x94] sm:$0xf]
        %v8074 = vld [vmem:[%s8047 + $0x9c] sm:$0xf]
        %v8075 = vld [vmem:[%s8047 + $0xa0] sm:$0xf]
        %v8076 = vld [vmem:[%s8047 + $0xa8] sm:$0xf]
        %v8077 = vld [vmem:[%s8047 + $0xac] sm:$0xf]
        %v8078 = vld [vmem:[%s8047 + $0xb4] sm:$0xf]
        %v8079 = vld [vmem:[%s8047 + $0xb8] sm:$0xf]
        %v8080 = vunpack.c.l.bf16 %v8048
        %v8081 = vunpack.c.l.bf16 %v8049
        %v8082 = vunpack.c.l.bf16 %v8050
        %v8083 = vunpack.c.l.bf16 %v8051
        %v8084 = vunpack.c.l.bf16 %v8052
        %v8085 = vunpack.c.l.bf16 %v8053
        %v8086 = vunpack.c.l.bf16 %v8054
        %v8087 = vunpack.c.l.bf16 %v8055
        %v8088 = vunpack.c.l.bf16 %v8056
        %v8089 = vunpack.c.l.bf16 %v8057
        %v8090 = vunpack.c.l.bf16 %v8058
        %v8091 = vunpack.c.l.bf16 %v8059
        %v8092 = vunpack.c.l.bf16 %v8060
        %v8093 = vunpack.c.l.bf16 %v8061
        %v8094 = vunpack.c.l.bf16 %v8062
        %v8095 = vunpack.c.l.bf16 %v8063
        %v8096 = vunpack.c.l.bf16 %v8064
        %v8097 = vunpack.c.l.bf16 %v8065
        %v8098 = vunpack.c.l.bf16 %v8066
        %v8099 = vunpack.c.l.bf16 %v8067
        %v8100 = vunpack.c.l.bf16 %v8068
        %v8101 = vunpack.c.l.bf16 %v8069
        %v8102 = vunpack.c.l.bf16 %v8070
        %v8103 = vunpack.c.l.bf16 %v8071
        %v8104 = vunpack.c.l.bf16 %v8072
        %v8105 = vunpack.c.l.bf16 %v8073
        %v8106 = vunpack.c.l.bf16 %v8074
        %v8107 = vunpack.c.l.bf16 %v8075
        %v8108 = vunpack.c.l.bf16 %v8076
        %v8109 = vunpack.c.l.bf16 %v8077
        %v8110 = vunpack.c.l.bf16 %v8078
        %v8111 = vunpack.c.l.bf16 %v8079
        %v8112 = vperm.slane %v6693, 6
        %v8113 = vmul.f32 %v8080, %v8112
        %v8114 = vmul.f32 %v8081, %v8112
        %v8115 = vmul.f32 %v8082, %v8112
        %v8116 = vmul.f32 %v8083, %v8112
        %v8117 = vmul.f32 %v8084, %v8112
        %v8118 = vmul.f32 %v8085, %v8112
        %v8119 = vmul.f32 %v8086, %v8112
        %v8120 = vmul.f32 %v8087, %v8112
        %v8121 = vmul.f32 %v8088, %v8112
        %v8122 = vmul.f32 %v8089, %v8112
        %v8123 = vmul.f32 %v8090, %v8112
        %v8124 = vmul.f32 %v8091, %v8112
        %v8125 = vmul.f32 %v8092, %v8112
        %v8126 = vmul.f32 %v8093, %v8112
        %v8127 = vmul.f32 %v8094, %v8112
        %v8128 = vmul.f32 %v8095, %v8112
        %v8129 = vmul.f32 %v8096, %v8112
        %v8130 = vmul.f32 %v8097, %v8112
        %v8131 = vmul.f32 %v8098, %v8112
        %v8132 = vmul.f32 %v8099, %v8112
        %v8133 = vmul.f32 %v8100, %v8112
        %v8134 = vmul.f32 %v8101, %v8112
        %v8135 = vmul.f32 %v8102, %v8112
        %v8136 = vmul.f32 %v8103, %v8112
        %v8137 = vmul.f32 %v8104, %v8112
        %v8138 = vmul.f32 %v8105, %v8112
        %v8139 = vmul.f32 %v8106, %v8112
        %v8140 = vmul.f32 %v8107, %v8112
        %v8141 = vmul.f32 %v8108, %v8112
        %v8142 = vmul.f32 %v8109, %v8112
        %v8143 = vmul.f32 %v8110, %v8112
        %v8144 = vmul.f32 %v8111, %v8112
        %v8145 = vadd.f32 %v8015, %v8113
        %v8146 = vadd.f32 %v8016, %v8114
        %v8147 = vadd.f32 %v8017, %v8115
        %v8148 = vadd.f32 %v8018, %v8116
        %v8149 = vadd.f32 %v8019, %v8117
        %v8150 = vadd.f32 %v8020, %v8118
        %v8151 = vadd.f32 %v8021, %v8119
        %v8152 = vadd.f32 %v8022, %v8120
        %v8153 = vadd.f32 %v8023, %v8121
        %v8154 = vadd.f32 %v8024, %v8122
        %v8155 = vadd.f32 %v8025, %v8123
        %v8156 = vadd.f32 %v8026, %v8124
        %v8157 = vadd.f32 %v8027, %v8125
        %v8158 = vadd.f32 %v8028, %v8126
        %v8159 = vadd.f32 %v8029, %v8127
        %v8160 = vadd.f32 %v8030, %v8128
        %v8161 = vadd.f32 %v8031, %v8129
        %v8162 = vadd.f32 %v8032, %v8130
        %v8163 = vadd.f32 %v8033, %v8131
        %v8164 = vadd.f32 %v8034, %v8132
        %v8165 = vadd.f32 %v8035, %v8133
        %v8166 = vadd.f32 %v8036, %v8134
        %v8167 = vadd.f32 %v8037, %v8135
        %v8168 = vadd.f32 %v8038, %v8136
        %v8169 = vadd.f32 %v8039, %v8137
        %v8170 = vadd.f32 %v8040, %v8138
        %v8171 = vadd.f32 %v8041, %v8139
        %v8172 = vadd.f32 %v8042, %v8140
        %v8173 = vadd.f32 %v8043, %v8141
        %v8174 = vadd.f32 %v8044, %v8142
        %v8175 = vadd.f32 %v8045, %v8143
        %v8176 = vadd.f32 %v8046, %v8144
        %v8177 = vld [vmem:[%s8047 + $0x8] sm:$0x1]
        %v8178 = vld [vmem:[%s8047 + $0x14] sm:$0x1]
        %v8179 = vld [vmem:[%s8047 + $0x20] sm:$0x1]
        %v8180 = vld [vmem:[%s8047 + $0x2c] sm:$0x1]
        %v8181 = vld [vmem:[%s8047 + $0x38] sm:$0x1]
        %v8182 = vld [vmem:[%s8047 + $0x44] sm:$0x1]
        %v8183 = vld [vmem:[%s8047 + $0x50] sm:$0x1]
        %v8184 = vld [vmem:[%s8047 + $0x5c] sm:$0x1]
        %v8185 = vld [vmem:[%s8047 + $0x68] sm:$0x1]
        %v8186 = vld [vmem:[%s8047 + $0x74] sm:$0x1]
        %v8187 = vld [vmem:[%s8047 + $0x80] sm:$0x1]
        %v8188 = vld [vmem:[%s8047 + $0x8c] sm:$0x1]
        %v8189 = vld [vmem:[%s8047 + $0x98] sm:$0x1]
        %v8190 = vld [vmem:[%s8047 + $0xa4] sm:$0x1]
        %v8191 = vld [vmem:[%s8047 + $0xb0] sm:$0x1]
        %v8192 = vld [vmem:[%s8047 + $0xbc] sm:$0x1]
        %v8193 = vunpack.c.l.bf16 %v8177
        %v8194 = vunpack.c.l.bf16 %v8178
        %v8195 = vunpack.c.l.bf16 %v8179
        %v8196 = vunpack.c.l.bf16 %v8180
        %v8197 = vunpack.c.l.bf16 %v8181
        %v8198 = vunpack.c.l.bf16 %v8182
        %v8199 = vunpack.c.l.bf16 %v8183
        %v8200 = vunpack.c.l.bf16 %v8184
        %v8201 = vunpack.c.l.bf16 %v8185
        %v8202 = vunpack.c.l.bf16 %v8186
        %v8203 = vunpack.c.l.bf16 %v8187
        %v8204 = vunpack.c.l.bf16 %v8188
        %v8205 = vunpack.c.l.bf16 %v8189
        %v8206 = vunpack.c.l.bf16 %v8190
        %v8207 = vunpack.c.l.bf16 %v8191
        %v8208 = vunpack.c.l.bf16 %v8192
        %v8209 = vperm.slane %v6693, 7
        %v8210 = vmul.f32 %v8080, %v8209
        %v8211 = vmul.f32 %v8081, %v8209
        %v8212 = vmul.f32 %v8193, %v8209
        %v8213 = vmul.f32 %v8082, %v8209
        %v8214 = vmul.f32 %v8083, %v8209
        %v8215 = vmul.f32 %v8194, %v8209
        %v8216 = vmul.f32 %v8084, %v8209
        %v8217 = vmul.f32 %v8085, %v8209
        %v8218 = vmul.f32 %v8195, %v8209
        %v8219 = vmul.f32 %v8086, %v8209
        %v8220 = vmul.f32 %v8087, %v8209
        %v8221 = vmul.f32 %v8196, %v8209
        %v8222 = vmul.f32 %v8088, %v8209
        %v8223 = vmul.f32 %v8089, %v8209
        %v8224 = vmul.f32 %v8197, %v8209
        %v8225 = vmul.f32 %v8090, %v8209
        %v8226 = vmul.f32 %v8091, %v8209
        %v8227 = vmul.f32 %v8198, %v8209
        %v8228 = vmul.f32 %v8092, %v8209
        %v8229 = vmul.f32 %v8093, %v8209
        %v8230 = vmul.f32 %v8199, %v8209
        %v8231 = vmul.f32 %v8094, %v8209
        %v8232 = vmul.f32 %v8095, %v8209
        %v8233 = vmul.f32 %v8200, %v8209
        %v8234 = vmul.f32 %v8096, %v8209
        %v8235 = vmul.f32 %v8097, %v8209
        %v8236 = vmul.f32 %v8201, %v8209
        %v8237 = vmul.f32 %v8098, %v8209
        %v8238 = vmul.f32 %v8099, %v8209
        %v8239 = vmul.f32 %v8202, %v8209
        %v8240 = vmul.f32 %v8100, %v8209
        %v8241 = vmul.f32 %v8101, %v8209
        %v8242 = vmul.f32 %v8203, %v8209
        %v8243 = vmul.f32 %v8102, %v8209
        %v8244 = vmul.f32 %v8103, %v8209
        %v8245 = vmul.f32 %v8204, %v8209
        %v8246 = vmul.f32 %v8104, %v8209
        %v8247 = vmul.f32 %v8105, %v8209
        %v8248 = vmul.f32 %v8205, %v8209
        %v8249 = vmul.f32 %v8106, %v8209
        %v8250 = vmul.f32 %v8107, %v8209
        %v8251 = vmul.f32 %v8206, %v8209
        %v8252 = vmul.f32 %v8108, %v8209
        %v8253 = vmul.f32 %v8109, %v8209
        %v8254 = vmul.f32 %v8207, %v8209
        %v8255 = vmul.f32 %v8110, %v8209
        %v8256 = vmul.f32 %v8111, %v8209
        %v8257 = vmul.f32 %v8208, %v8209
        %v8306 = vrot.slane %v8210, 1
        %v8307 = vrot.slane %v8211, 1
        %v8308 = vsel %vm6953, %v8306, %v8307
        %v8309 = vrot.slane %v8212, 1
        %v8310 = vsel %vm6953, %v8307, %v8309
        %v8311 = vrot.slane %v8213, 1
        %v8312 = vrot.slane %v8214, 1
        %v8313 = vsel %vm6953, %v8311, %v8312
        %v8314 = vrot.slane %v8215, 1
        %v8315 = vsel %vm6953, %v8312, %v8314
        %v8316 = vrot.slane %v8216, 1
        %v8317 = vrot.slane %v8217, 1
        %v8318 = vsel %vm6953, %v8316, %v8317
        %v8319 = vrot.slane %v8218, 1
        %v8320 = vsel %vm6953, %v8317, %v8319
        %v8321 = vrot.slane %v8219, 1
        %v8322 = vrot.slane %v8220, 1
        %v8323 = vsel %vm6953, %v8321, %v8322
        %v8324 = vrot.slane %v8221, 1
        %v8325 = vsel %vm6953, %v8322, %v8324
        %v8326 = vrot.slane %v8222, 1
        %v8327 = vrot.slane %v8223, 1
        %v8328 = vsel %vm6953, %v8326, %v8327
        %v8329 = vrot.slane %v8224, 1
        %v8330 = vsel %vm6953, %v8327, %v8329
        %v8331 = vrot.slane %v8225, 1
        %v8332 = vrot.slane %v8226, 1
        %v8333 = vsel %vm6953, %v8331, %v8332
        %v8334 = vrot.slane %v8227, 1
        %v8335 = vsel %vm6953, %v8332, %v8334
        %v8336 = vrot.slane %v8228, 1
        %v8337 = vrot.slane %v8229, 1
        %v8338 = vsel %vm6953, %v8336, %v8337
        %v8339 = vrot.slane %v8230, 1
        %v8340 = vsel %vm6953, %v8337, %v8339
        %v8341 = vrot.slane %v8231, 1
        %v8342 = vrot.slane %v8232, 1
        %v8343 = vsel %vm6953, %v8341, %v8342
        %v8344 = vrot.slane %v8233, 1
        %v8345 = vsel %vm6953, %v8342, %v8344
        %v8346 = vrot.slane %v8234, 1
        %v8347 = vrot.slane %v8235, 1
        %v8348 = vsel %vm6953, %v8346, %v8347
        %v8349 = vrot.slane %v8236, 1
        %v8350 = vsel %vm6953, %v8347, %v8349
        %v8351 = vrot.slane %v8237, 1
        %v8352 = vrot.slane %v8238, 1
        %v8353 = vsel %vm6953, %v8351, %v8352
        %v8354 = vrot.slane %v8239, 1
        %v8355 = vsel %vm6953, %v8352, %v8354
        %v8356 = vrot.slane %v8240, 1
        %v8357 = vrot.slane %v8241, 1
        %v8358 = vsel %vm6953, %v8356, %v8357
        %v8359 = vrot.slane %v8242, 1
        %v8360 = vsel %vm6953, %v8357, %v8359
        %v8361 = vrot.slane %v8243, 1
        %v8362 = vrot.slane %v8244, 1
        %v8363 = vsel %vm6953, %v8361, %v8362
        %v8364 = vrot.slane %v8245, 1
        %v8365 = vsel %vm6953, %v8362, %v8364
        %v8366 = vrot.slane %v8246, 1
        %v8367 = vrot.slane %v8247, 1
        %v8368 = vsel %vm6953, %v8366, %v8367
        %v8369 = vrot.slane %v8248, 1
        %v8370 = vsel %vm6953, %v8367, %v8369
        %v8371 = vrot.slane %v8249, 1
        %v8372 = vrot.slane %v8250, 1
        %v8373 = vsel %vm6953, %v8371, %v8372
        %v8374 = vrot.slane %v8251, 1
        %v8375 = vsel %vm6953, %v8372, %v8374
        %v8376 = vrot.slane %v8252, 1
        %v8377 = vrot.slane %v8253, 1
        %v8378 = vsel %vm6953, %v8376, %v8377
        %v8379 = vrot.slane %v8254, 1
        %v8380 = vsel %vm6953, %v8377, %v8379
        %v8381 = vrot.slane %v8255, 1
        %v8382 = vrot.slane %v8256, 1
        %v8383 = vsel %vm6953, %v8381, %v8382
        %v8384 = vrot.slane %v8257, 1
        %v8385 = vsel %vm6953, %v8382, %v8384
        %v8418 = vadd.f32 %v8145, %v8308
        %v8419 = vadd.f32 %v8146, %v8310
        %v8420 = vadd.f32 %v8147, %v8313
        %v8421 = vadd.f32 %v8148, %v8315
        %v8422 = vadd.f32 %v8149, %v8318
        %v8423 = vadd.f32 %v8150, %v8320
        %v8424 = vadd.f32 %v8151, %v8323
        %v8425 = vadd.f32 %v8152, %v8325
        %v8426 = vadd.f32 %v8153, %v8328
        %v8427 = vadd.f32 %v8154, %v8330
        %v8428 = vadd.f32 %v8155, %v8333
        %v8429 = vadd.f32 %v8156, %v8335
        %v8430 = vadd.f32 %v8157, %v8338
        %v8431 = vadd.f32 %v8158, %v8340
        %v8432 = vadd.f32 %v8159, %v8343
        %v8433 = vadd.f32 %v8160, %v8345
        %v8434 = vadd.f32 %v8161, %v8348
        %v8435 = vadd.f32 %v8162, %v8350
        %v8436 = vadd.f32 %v8163, %v8353
        %v8437 = vadd.f32 %v8164, %v8355
        %v8438 = vadd.f32 %v8165, %v8358
        %v8439 = vadd.f32 %v8166, %v8360
        %v8440 = vadd.f32 %v8167, %v8363
        %v8441 = vadd.f32 %v8168, %v8365
        %v8442 = vadd.f32 %v8169, %v8368
        %v8443 = vadd.f32 %v8170, %v8370
        %v8444 = vadd.f32 %v8171, %v8373
        %v8445 = vadd.f32 %v8172, %v8375
        %v8446 = vadd.f32 %v8173, %v8378
        %v8447 = vadd.f32 %v8174, %v8380
        %v8448 = vadd.f32 %v8175, %v8383
        %v8449 = vadd.f32 %v8176, %v8385
        %v8450 = vld [vmem:[%s8047] sm:$0xe]
        %v8451 = vld [vmem:[%s8047 + $0xc] sm:$0xe]
        %v8452 = vld [vmem:[%s8047 + $0x18] sm:$0xe]
        %v8453 = vld [vmem:[%s8047 + $0x24] sm:$0xe]
        %v8454 = vld [vmem:[%s8047 + $0x30] sm:$0xe]
        %v8455 = vld [vmem:[%s8047 + $0x3c] sm:$0xe]
        %v8456 = vld [vmem:[%s8047 + $0x48] sm:$0xe]
        %v8457 = vld [vmem:[%s8047 + $0x54] sm:$0xe]
        %v8458 = vld [vmem:[%s8047 + $0x60] sm:$0xe]
        %v8459 = vld [vmem:[%s8047 + $0x6c] sm:$0xe]
        %v8460 = vld [vmem:[%s8047 + $0x78] sm:$0xe]
        %v8461 = vld [vmem:[%s8047 + $0x84] sm:$0xe]
        %v8462 = vld [vmem:[%s8047 + $0x90] sm:$0xe]
        %v8463 = vld [vmem:[%s8047 + $0x9c] sm:$0xe]
        %v8464 = vld [vmem:[%s8047 + $0xa8] sm:$0xe]
        %v8465 = vld [vmem:[%s8047 + $0xb4] sm:$0xe]
        %v8466 = vunpack.c.l.bf16 %v8450
        %v8467 = vunpack.c.l.bf16 %v8451
        %v8468 = vunpack.c.l.bf16 %v8452
        %v8469 = vunpack.c.l.bf16 %v8453
        %v8470 = vunpack.c.l.bf16 %v8454
        %v8471 = vunpack.c.l.bf16 %v8455
        %v8472 = vunpack.c.l.bf16 %v8456
        %v8473 = vunpack.c.l.bf16 %v8457
        %v8474 = vunpack.c.l.bf16 %v8458
        %v8475 = vunpack.c.l.bf16 %v8459
        %v8476 = vunpack.c.l.bf16 %v8460
        %v8477 = vunpack.c.l.bf16 %v8461
        %v8478 = vunpack.c.l.bf16 %v8462
        %v8479 = vunpack.c.l.bf16 %v8463
        %v8480 = vunpack.c.l.bf16 %v8464
        %v8481 = vunpack.c.l.bf16 %v8465
        %v8482 = vperm.slane %v6694, 0
        %v8483 = vmul.f32 %v8466, %v8482
        %v8484 = vmul.f32 %v8081, %v8482
        %v8485 = vmul.f32 %v8193, %v8482
        %v8486 = vmul.f32 %v8467, %v8482
        %v8487 = vmul.f32 %v8083, %v8482
        %v8488 = vmul.f32 %v8194, %v8482
        %v8489 = vmul.f32 %v8468, %v8482
        %v8490 = vmul.f32 %v8085, %v8482
        %v8491 = vmul.f32 %v8195, %v8482
        %v8492 = vmul.f32 %v8469, %v8482
        %v8493 = vmul.f32 %v8087, %v8482
        %v8494 = vmul.f32 %v8196, %v8482
        %v8495 = vmul.f32 %v8470, %v8482
        %v8496 = vmul.f32 %v8089, %v8482
        %v8497 = vmul.f32 %v8197, %v8482
        %v8498 = vmul.f32 %v8471, %v8482
        %v8499 = vmul.f32 %v8091, %v8482
        %v8500 = vmul.f32 %v8198, %v8482
        %v8501 = vmul.f32 %v8472, %v8482
        %v8502 = vmul.f32 %v8093, %v8482
        %v8503 = vmul.f32 %v8199, %v8482
        %v8504 = vmul.f32 %v8473, %v8482
        %v8505 = vmul.f32 %v8095, %v8482
        %v8506 = vmul.f32 %v8200, %v8482
        %v8507 = vmul.f32 %v8474, %v8482
        %v8508 = vmul.f32 %v8097, %v8482
        %v8509 = vmul.f32 %v8201, %v8482
        %v8510 = vmul.f32 %v8475, %v8482
        %v8511 = vmul.f32 %v8099, %v8482
        %v8512 = vmul.f32 %v8202, %v8482
        %v8513 = vmul.f32 %v8476, %v8482
        %v8514 = vmul.f32 %v8101, %v8482
        %v8515 = vmul.f32 %v8203, %v8482
        %v8516 = vmul.f32 %v8477, %v8482
        %v8517 = vmul.f32 %v8103, %v8482
        %v8518 = vmul.f32 %v8204, %v8482
        %v8519 = vmul.f32 %v8478, %v8482
        %v8520 = vmul.f32 %v8105, %v8482
        %v8521 = vmul.f32 %v8205, %v8482
        %v8522 = vmul.f32 %v8479, %v8482
        %v8523 = vmul.f32 %v8107, %v8482
        %v8524 = vmul.f32 %v8206, %v8482
        %v8525 = vmul.f32 %v8480, %v8482
        %v8526 = vmul.f32 %v8109, %v8482
        %v8527 = vmul.f32 %v8207, %v8482
        %v8528 = vmul.f32 %v8481, %v8482
        %v8529 = vmul.f32 %v8111, %v8482
        %v8530 = vmul.f32 %v8208, %v8482
        %v8579 = vrot.slane %v8483, 2
        %v8580 = vrot.slane %v8484, 2
        %v8581 = vsel %vm7227, %v8579, %v8580
        %v8582 = vrot.slane %v8485, 2
        %v8583 = vsel %vm7227, %v8580, %v8582
        %v8584 = vrot.slane %v8486, 2
        %v8585 = vrot.slane %v8487, 2
        %v8586 = vsel %vm7227, %v8584, %v8585
        %v8587 = vrot.slane %v8488, 2
        %v8588 = vsel %vm7227, %v8585, %v8587
        %v8589 = vrot.slane %v8489, 2
        %v8590 = vrot.slane %v8490, 2
        %v8591 = vsel %vm7227, %v8589, %v8590
        %v8592 = vrot.slane %v8491, 2
        %v8593 = vsel %vm7227, %v8590, %v8592
        %v8594 = vrot.slane %v8492, 2
        %v8595 = vrot.slane %v8493, 2
        %v8596 = vsel %vm7227, %v8594, %v8595
        %v8597 = vrot.slane %v8494, 2
        %v8598 = vsel %vm7227, %v8595, %v8597
        %v8599 = vrot.slane %v8495, 2
        %v8600 = vrot.slane %v8496, 2
        %v8601 = vsel %vm7227, %v8599, %v8600
        %v8602 = vrot.slane %v8497, 2
        %v8603 = vsel %vm7227, %v8600, %v8602
        %v8604 = vrot.slane %v8498, 2
        %v8605 = vrot.slane %v8499, 2
        %v8606 = vsel %vm7227, %v8604, %v8605
        %v8607 = vrot.slane %v8500, 2
        %v8608 = vsel %vm7227, %v8605, %v8607
        %v8609 = vrot.slane %v8501, 2
        %v8610 = vrot.slane %v8502, 2
        %v8611 = vsel %vm7227, %v8609, %v8610
        %v8612 = vrot.slane %v8503, 2
        %v8613 = vsel %vm7227, %v8610, %v8612
        %v8614 = vrot.slane %v8504, 2
        %v8615 = vrot.slane %v8505, 2
        %v8616 = vsel %vm7227, %v8614, %v8615
        %v8617 = vrot.slane %v8506, 2
        %v8618 = vsel %vm7227, %v8615, %v8617
        %v8619 = vrot.slane %v8507, 2
        %v8620 = vrot.slane %v8508, 2
        %v8621 = vsel %vm7227, %v8619, %v8620
        %v8622 = vrot.slane %v8509, 2
        %v8623 = vsel %vm7227, %v8620, %v8622
        %v8624 = vrot.slane %v8510, 2
        %v8625 = vrot.slane %v8511, 2
        %v8626 = vsel %vm7227, %v8624, %v8625
        %v8627 = vrot.slane %v8512, 2
        %v8628 = vsel %vm7227, %v8625, %v8627
        %v8629 = vrot.slane %v8513, 2
        %v8630 = vrot.slane %v8514, 2
        %v8631 = vsel %vm7227, %v8629, %v8630
        %v8632 = vrot.slane %v8515, 2
        %v8633 = vsel %vm7227, %v8630, %v8632
        %v8634 = vrot.slane %v8516, 2
        %v8635 = vrot.slane %v8517, 2
        %v8636 = vsel %vm7227, %v8634, %v8635
        %v8637 = vrot.slane %v8518, 2
        %v8638 = vsel %vm7227, %v8635, %v8637
        %v8639 = vrot.slane %v8519, 2
        %v8640 = vrot.slane %v8520, 2
        %v8641 = vsel %vm7227, %v8639, %v8640
        %v8642 = vrot.slane %v8521, 2
        %v8643 = vsel %vm7227, %v8640, %v8642
        %v8644 = vrot.slane %v8522, 2
        %v8645 = vrot.slane %v8523, 2
        %v8646 = vsel %vm7227, %v8644, %v8645
        %v8647 = vrot.slane %v8524, 2
        %v8648 = vsel %vm7227, %v8645, %v8647
        %v8649 = vrot.slane %v8525, 2
        %v8650 = vrot.slane %v8526, 2
        %v8651 = vsel %vm7227, %v8649, %v8650
        %v8652 = vrot.slane %v8527, 2
        %v8653 = vsel %vm7227, %v8650, %v8652
        %v8654 = vrot.slane %v8528, 2
        %v8655 = vrot.slane %v8529, 2
        %v8656 = vsel %vm7227, %v8654, %v8655
        %v8657 = vrot.slane %v8530, 2
        %v8658 = vsel %vm7227, %v8655, %v8657
        %v8691 = vadd.f32 %v8418, %v8581
        %v8692 = vadd.f32 %v8419, %v8583
        %v8693 = vadd.f32 %v8420, %v8586
        %v8694 = vadd.f32 %v8421, %v8588
        %v8695 = vadd.f32 %v8422, %v8591
        %v8696 = vadd.f32 %v8423, %v8593
        %v8697 = vadd.f32 %v8424, %v8596
        %v8698 = vadd.f32 %v8425, %v8598
        %v8699 = vadd.f32 %v8426, %v8601
        %v8700 = vadd.f32 %v8427, %v8603
        %v8701 = vadd.f32 %v8428, %v8606
        %v8702 = vadd.f32 %v8429, %v8608
        %v8703 = vadd.f32 %v8430, %v8611
        %v8704 = vadd.f32 %v8431, %v8613
        %v8705 = vadd.f32 %v8432, %v8616
        %v8706 = vadd.f32 %v8433, %v8618
        %v8707 = vadd.f32 %v8434, %v8621
        %v8708 = vadd.f32 %v8435, %v8623
        %v8709 = vadd.f32 %v8436, %v8626
        %v8710 = vadd.f32 %v8437, %v8628
        %v8711 = vadd.f32 %v8438, %v8631
        %v8712 = vadd.f32 %v8439, %v8633
        %v8713 = vadd.f32 %v8440, %v8636
        %v8714 = vadd.f32 %v8441, %v8638
        %v8715 = vadd.f32 %v8442, %v8641
        %v8716 = vadd.f32 %v8443, %v8643
        %v8717 = vadd.f32 %v8444, %v8646
        %v8718 = vadd.f32 %v8445, %v8648
        %v8719 = vadd.f32 %v8446, %v8651
        %v8720 = vadd.f32 %v8447, %v8653
        %v8721 = vadd.f32 %v8448, %v8656
        %v8722 = vadd.f32 %v8449, %v8658
        %vm8723 = vcmask 523264
        %v8724 = vsel %vm8723, %v8691, 0.0
        %8725 = vadd.xlane.f32.xlu0 %v8724
        %v8726 = vpop.xlane.xlu0 %8725
        %v8727 = vsel %vm8723, %v8692, 0.0
        %8728 = vadd.xlane.f32.xlu0 %v8727
        %v8729 = vpop.xlane.xlu0 %8728
        %v8730 = vsel %vm8723, %v8693, 0.0
        %8731 = vadd.xlane.f32.xlu0 %v8730
        %v8732 = vpop.xlane.xlu0 %8731
        %v8733 = vsel %vm8723, %v8694, 0.0
        %8734 = vadd.xlane.f32.xlu0 %v8733
        %v8735 = vpop.xlane.xlu0 %8734
        %v8736 = vsel %vm8723, %v8695, 0.0
        %8737 = vadd.xlane.f32.xlu0 %v8736
        %v8738 = vpop.xlane.xlu0 %8737
        %v8739 = vsel %vm8723, %v8696, 0.0
        %8740 = vadd.xlane.f32.xlu0 %v8739
        %v8741 = vpop.xlane.xlu0 %8740
        %v8742 = vsel %vm8723, %v8697, 0.0
        %8743 = vadd.xlane.f32.xlu0 %v8742
        %v8744 = vpop.xlane.xlu0 %8743
        %v8745 = vsel %vm8723, %v8698, 0.0
        %8746 = vadd.xlane.f32.xlu0 %v8745
        %v8747 = vpop.xlane.xlu0 %8746
        %v8748 = vsel %vm8723, %v8699, 0.0
        %8749 = vadd.xlane.f32.xlu0 %v8748
        %v8750 = vpop.xlane.xlu0 %8749
        %v8751 = vsel %vm8723, %v8700, 0.0
        %8752 = vadd.xlane.f32.xlu0 %v8751
        %v8753 = vpop.xlane.xlu0 %8752
        %v8754 = vsel %vm8723, %v8701, 0.0
        %8755 = vadd.xlane.f32.xlu0 %v8754
        %v8756 = vpop.xlane.xlu0 %8755
        %v8757 = vsel %vm8723, %v8702, 0.0
        %8758 = vadd.xlane.f32.xlu0 %v8757
        %v8759 = vpop.xlane.xlu0 %8758
        %v8760 = vsel %vm8723, %v8703, 0.0
        %8761 = vadd.xlane.f32.xlu0 %v8760
        %v8762 = vpop.xlane.xlu0 %8761
        %v8763 = vsel %vm8723, %v8704, 0.0
        %8764 = vadd.xlane.f32.xlu0 %v8763
        %v8765 = vpop.xlane.xlu0 %8764
        %v8766 = vsel %vm8723, %v8705, 0.0
        %8767 = vadd.xlane.f32.xlu0 %v8766
        %v8768 = vpop.xlane.xlu0 %8767
        %v8769 = vsel %vm8723, %v8706, 0.0
        %8770 = vadd.xlane.f32.xlu0 %v8769
        %v8771 = vpop.xlane.xlu0 %8770
        %v8772 = vsel %vm8723, %v8707, 0.0
        %8773 = vadd.xlane.f32.xlu0 %v8772
        %v8774 = vpop.xlane.xlu0 %8773
        %v8775 = vsel %vm8723, %v8708, 0.0
        %8776 = vadd.xlane.f32.xlu0 %v8775
        %v8777 = vpop.xlane.xlu0 %8776
        %v8778 = vsel %vm8723, %v8709, 0.0
        %8779 = vadd.xlane.f32.xlu0 %v8778
        %v8780 = vpop.xlane.xlu0 %8779
        %v8781 = vsel %vm8723, %v8710, 0.0
        %8782 = vadd.xlane.f32.xlu0 %v8781
        %v8783 = vpop.xlane.xlu0 %8782
        %v8784 = vsel %vm8723, %v8711, 0.0
        %8785 = vadd.xlane.f32.xlu0 %v8784
        %v8786 = vpop.xlane.xlu0 %8785
        %v8787 = vsel %vm8723, %v8712, 0.0
        %8788 = vadd.xlane.f32.xlu0 %v8787
        %v8789 = vpop.xlane.xlu0 %8788
        %v8790 = vsel %vm8723, %v8713, 0.0
        %8791 = vadd.xlane.f32.xlu0 %v8790
        %v8792 = vpop.xlane.xlu0 %8791
        %v8793 = vsel %vm8723, %v8714, 0.0
        %8794 = vadd.xlane.f32.xlu0 %v8793
        %v8795 = vpop.xlane.xlu0 %8794
        %v8796 = vsel %vm8723, %v8715, 0.0
        %8797 = vadd.xlane.f32.xlu0 %v8796
        %v8798 = vpop.xlane.xlu0 %8797
        %v8799 = vsel %vm8723, %v8716, 0.0
        %8800 = vadd.xlane.f32.xlu0 %v8799
        %v8801 = vpop.xlane.xlu0 %8800
        %v8802 = vsel %vm8723, %v8717, 0.0
        %8803 = vadd.xlane.f32.xlu0 %v8802
        %v8804 = vpop.xlane.xlu0 %8803
        %v8805 = vsel %vm8723, %v8718, 0.0
        %8806 = vadd.xlane.f32.xlu0 %v8805
        %v8807 = vpop.xlane.xlu0 %8806
        %v8808 = vsel %vm8723, %v8719, 0.0
        %8809 = vadd.xlane.f32.xlu0 %v8808
        %v8810 = vpop.xlane.xlu0 %8809
        %v8811 = vsel %vm8723, %v8720, 0.0
        %8812 = vadd.xlane.f32.xlu0 %v8811
        %v8813 = vpop.xlane.xlu0 %8812
        %v8814 = vsel %vm8723, %v8721, 0.0
        %8815 = vadd.xlane.f32.xlu0 %v8814
        %v8816 = vpop.xlane.xlu0 %8815
        %v8817 = vsel %vm8723, %v8722, 0.0
        %8818 = vadd.xlane.f32.xlu0 %v8817
        %v8819 = vpop.xlane.xlu0 %8818
        %v8820 = vld [vmem:[%s195 + $0x1] sm:$0xff]
        %v8821 = vld [vmem:[%s195 + $0x9] sm:$0xff]
        %v8824 = vperm.slane %v8820, 0
        %v8825 = vlaneseq
        %v8826 = vshrl.u32 %v8825, 7
        %v8827 = vadd.s32 %v8826, 1
        %8828 = vset.pattern.permute.xlu0 %v8827
        %8829 = vperm.xlu0 %8828, %v8824
        %v8830 = vpop.permute.xlu0 %8829
        %v8831 = vlaneseq
        %v8832 = vshrl.u32 %v8831, 7
        %v8833 = vadd.s32 %v8832, 9
        %8834 = vset.pattern.permute.xlu0 %v8833
        %8835 = vperm.xlu0 %8834, %v8824
        %v8836 = vpop.permute.xlu0 %8835
        %v8837 = vperm.slane %v8820, 1
        %v8838 = vlaneseq
        %v8839 = vshrl.u32 %v8838, 7
        %v8840 = vadd.s32 %v8839, 1
        %8841 = vset.pattern.permute.xlu0 %v8840
        %8842 = vperm.xlu0 %8841, %v8837
        %v8843 = vpop.permute.xlu0 %8842
        %v8844 = vlaneseq
        %v8845 = vshrl.u32 %v8844, 7
        %v8846 = vadd.s32 %v8845, 9
        %8847 = vset.pattern.permute.xlu0 %v8846
        %8848 = vperm.xlu0 %8847, %v8837
        %v8849 = vpop.permute.xlu0 %8848
        %v8850 = vperm.slane %v8820, 2
        %v8851 = vlaneseq
        %v8852 = vshrl.u32 %v8851, 7
        %v8853 = vadd.s32 %v8852, 1
        %8854 = vset.pattern.permute.xlu0 %v8853
        %8855 = vperm.xlu0 %8854, %v8850
        %v8856 = vpop.permute.xlu0 %8855
        %v8857 = vlaneseq
        %v8858 = vshrl.u32 %v8857, 7
        %v8859 = vadd.s32 %v8858, 9
        %8860 = vset.pattern.permute.xlu0 %v8859
        %8861 = vperm.xlu0 %8860, %v8850
        %v8862 = vpop.permute.xlu0 %8861
        %v8863 = vperm.slane %v8820, 3
        %v8864 = vlaneseq
        %v8865 = vshrl.u32 %v8864, 7
        %v8866 = vadd.s32 %v8865, 1
        %8867 = vset.pattern.permute.xlu0 %v8866
        %8868 = vperm.xlu0 %8867, %v8863
        %v8869 = vpop.permute.xlu0 %8868
        %v8870 = vlaneseq
        %v8871 = vshrl.u32 %v8870, 7
        %v8872 = vadd.s32 %v8871, 9
        %8873 = vset.pattern.permute.xlu0 %v8872
        %8874 = vperm.xlu0 %8873, %v8863
        %v8875 = vpop.permute.xlu0 %8874
        %v8876 = vperm.slane %v8820, 4
        %v8877 = vlaneseq
        %v8878 = vshrl.u32 %v8877, 7
        %v8879 = vadd.s32 %v8878, 1
        %8880 = vset.pattern.permute.xlu0 %v8879
        %8881 = vperm.xlu0 %8880, %v8876
        %v8882 = vpop.permute.xlu0 %8881
        %v8883 = vlaneseq
        %v8884 = vshrl.u32 %v8883, 7
        %v8885 = vadd.s32 %v8884, 9
        %8886 = vset.pattern.permute.xlu0 %v8885
        %8887 = vperm.xlu0 %8886, %v8876
        %v8888 = vpop.permute.xlu0 %8887
        %v8889 = vperm.slane %v8820, 5
        %v8890 = vlaneseq
        %v8891 = vshrl.u32 %v8890, 7
        %v8892 = vadd.s32 %v8891, 1
        %8893 = vset.pattern.permute.xlu0 %v8892
        %8894 = vperm.xlu0 %8893, %v8889
        %v8895 = vpop.permute.xlu0 %8894
        %v8896 = vlaneseq
        %v8897 = vshrl.u32 %v8896, 7
        %v8898 = vadd.s32 %v8897, 9
        %8899 = vset.pattern.permute.xlu0 %v8898
        %8900 = vperm.xlu0 %8899, %v8889
        %v8901 = vpop.permute.xlu0 %8900
        %v8902 = vperm.slane %v8820, 6
        %v8903 = vlaneseq
        %v8904 = vshrl.u32 %v8903, 7
        %v8905 = vadd.s32 %v8904, 1
        %8906 = vset.pattern.permute.xlu0 %v8905
        %8907 = vperm.xlu0 %8906, %v8902
        %v8908 = vpop.permute.xlu0 %8907
        %v8909 = vlaneseq
        %v8910 = vshrl.u32 %v8909, 7
        %v8911 = vadd.s32 %v8910, 9
        %8912 = vset.pattern.permute.xlu0 %v8911
        %8913 = vperm.xlu0 %8912, %v8902
        %v8914 = vpop.permute.xlu0 %8913
        %v8915 = vperm.slane %v8820, 7
        %v8916 = vlaneseq
        %v8917 = vshrl.u32 %v8916, 7
        %v8918 = vadd.s32 %v8917, 1
        %8919 = vset.pattern.permute.xlu0 %v8918
        %8920 = vperm.xlu0 %8919, %v8915
        %v8921 = vpop.permute.xlu0 %8920
        %v8922 = vlaneseq
        %v8923 = vshrl.u32 %v8922, 7
        %v8924 = vadd.s32 %v8923, 9
        %8925 = vset.pattern.permute.xlu0 %v8924
        %8926 = vperm.xlu0 %8925, %v8915
        %v8927 = vpop.permute.xlu0 %8926
        %v8928 = vperm.slane %v8821, 0
        %v8929 = vlaneseq
        %v8930 = vshrl.u32 %v8929, 7
        %v8931 = vadd.s32 %v8930, 1
        %8932 = vset.pattern.permute.xlu0 %v8931
        %8933 = vperm.xlu0 %8932, %v8928
        %v8934 = vpop.permute.xlu0 %8933
        %v8935 = vlaneseq
        %v8936 = vshrl.u32 %v8935, 7
        %v8937 = vadd.s32 %v8936, 9
        %8938 = vset.pattern.permute.xlu0 %v8937
        %8939 = vperm.xlu0 %8938, %v8928
        %v8940 = vpop.permute.xlu0 %8939
        %v8941 = vperm.slane %v8821, 1
        %v8942 = vlaneseq
        %v8943 = vshrl.u32 %v8942, 7
        %v8944 = vadd.s32 %v8943, 1
        %8945 = vset.pattern.permute.xlu0 %v8944
        %8946 = vperm.xlu0 %8945, %v8941
        %v8947 = vpop.permute.xlu0 %8946
        %v8948 = vlaneseq
        %v8949 = vshrl.u32 %v8948, 7
        %v8950 = vadd.s32 %v8949, 9
        %8951 = vset.pattern.permute.xlu0 %v8950
        %8952 = vperm.xlu0 %8951, %v8941
        %v8953 = vpop.permute.xlu0 %8952
        %v8954 = vperm.slane %v8821, 2
        %v8955 = vlaneseq
        %v8956 = vshrl.u32 %v8955, 7
        %v8957 = vadd.s32 %v8956, 1
        %8958 = vset.pattern.permute.xlu0 %v8957
        %8959 = vperm.xlu0 %8958, %v8954
        %v8960 = vpop.permute.xlu0 %8959
        %v8961 = vlaneseq
        %v8962 = vshrl.u32 %v8961, 7
        %v8963 = vadd.s32 %v8962, 9
        %8964 = vset.pattern.permute.xlu0 %v8963
        %8965 = vperm.xlu0 %8964, %v8954
        %v8966 = vpop.permute.xlu0 %8965
        %v8967 = vperm.slane %v8821, 3
        %v8968 = vlaneseq
        %v8969 = vshrl.u32 %v8968, 7
        %v8970 = vadd.s32 %v8969, 1
        %8971 = vset.pattern.permute.xlu0 %v8970
        %8972 = vperm.xlu0 %8971, %v8967
        %v8973 = vpop.permute.xlu0 %8972
        %v8974 = vlaneseq
        %v8975 = vshrl.u32 %v8974, 7
        %v8976 = vadd.s32 %v8975, 9
        %8977 = vset.pattern.permute.xlu0 %v8976
        %8978 = vperm.xlu0 %8977, %v8967
        %v8979 = vpop.permute.xlu0 %8978
        %v8980 = vperm.slane %v8821, 4
        %v8981 = vlaneseq
        %v8982 = vshrl.u32 %v8981, 7
        %v8983 = vadd.s32 %v8982, 1
        %8984 = vset.pattern.permute.xlu0 %v8983
        %8985 = vperm.xlu0 %8984, %v8980
        %v8986 = vpop.permute.xlu0 %8985
        %v8987 = vlaneseq
        %v8988 = vshrl.u32 %v8987, 7
        %v8989 = vadd.s32 %v8988, 9
        %8990 = vset.pattern.permute.xlu0 %v8989
        %8991 = vperm.xlu0 %8990, %v8980
        %v8992 = vpop.permute.xlu0 %8991
        %v8993 = vperm.slane %v8821, 5
        %v8994 = vlaneseq
        %v8995 = vshrl.u32 %v8994, 7
        %v8996 = vadd.s32 %v8995, 1
        %8997 = vset.pattern.permute.xlu0 %v8996
        %8998 = vperm.xlu0 %8997, %v8993
        %v8999 = vpop.permute.xlu0 %8998
        %v9000 = vlaneseq
        %v9001 = vshrl.u32 %v9000, 7
        %v9002 = vadd.s32 %v9001, 9
        %9003 = vset.pattern.permute.xlu0 %v9002
        %9004 = vperm.xlu0 %9003, %v8993
        %v9005 = vpop.permute.xlu0 %9004
        %v9006 = vperm.slane %v8821, 6
        %v9007 = vlaneseq
        %v9008 = vshrl.u32 %v9007, 7
        %v9009 = vadd.s32 %v9008, 1
        %9010 = vset.pattern.permute.xlu0 %v9009
        %9011 = vperm.xlu0 %9010, %v9006
        %v9012 = vpop.permute.xlu0 %9011
        %v9013 = vlaneseq
        %v9014 = vshrl.u32 %v9013, 7
        %v9015 = vadd.s32 %v9014, 9
        %9016 = vset.pattern.permute.xlu0 %v9015
        %9017 = vperm.xlu0 %9016, %v9006
        %v9018 = vpop.permute.xlu0 %9017
        %v9019 = vperm.slane %v8821, 7
        %v9020 = vlaneseq
        %v9021 = vshrl.u32 %v9020, 7
        %v9022 = vadd.s32 %v9021, 1
        %9023 = vset.pattern.permute.xlu0 %v9022
        %9024 = vperm.xlu0 %9023, %v9019
        %v9025 = vpop.permute.xlu0 %9024
        %v9026 = vlaneseq
        %v9027 = vshrl.u32 %v9026, 7
        %v9028 = vadd.s32 %v9027, 9
        %9029 = vset.pattern.permute.xlu0 %v9028
        %9030 = vperm.xlu0 %9029, %v9019
        %v9031 = vpop.permute.xlu0 %9030
        %v9064 = vadd.f32 %v8726, %v8830
        %v9065 = vadd.f32 %v8729, %v8836
        %v9066 = vadd.f32 %v8732, %v8843
        %v9067 = vadd.f32 %v8735, %v8849
        %v9068 = vadd.f32 %v8738, %v8856
        %v9069 = vadd.f32 %v8741, %v8862
        %v9070 = vadd.f32 %v8744, %v8869
        %v9071 = vadd.f32 %v8747, %v8875
        %v9072 = vadd.f32 %v8750, %v8882
        %v9073 = vadd.f32 %v8753, %v8888
        %v9074 = vadd.f32 %v8756, %v8895
        %v9075 = vadd.f32 %v8759, %v8901
        %v9076 = vadd.f32 %v8762, %v8908
        %v9077 = vadd.f32 %v8765, %v8914
        %v9078 = vadd.f32 %v8768, %v8921
        %v9079 = vadd.f32 %v8771, %v8927
        %v9080 = vadd.f32 %v8774, %v8934
        %v9081 = vadd.f32 %v8777, %v8940
        %v9082 = vadd.f32 %v8780, %v8947
        %v9083 = vadd.f32 %v8783, %v8953
        %v9084 = vadd.f32 %v8786, %v8960
        %v9085 = vadd.f32 %v8789, %v8966
        %v9086 = vadd.f32 %v8792, %v8973
        %v9087 = vadd.f32 %v8795, %v8979
        %v9088 = vadd.f32 %v8798, %v8986
        %v9089 = vadd.f32 %v8801, %v8992
        %v9090 = vadd.f32 %v8804, %v8999
        %v9091 = vadd.f32 %v8807, %v9005
        %v9092 = vadd.f32 %v8810, %v9012
        %v9093 = vadd.f32 %v8813, %v9018
        %v9094 = vadd.f32 %v8816, %v9025
        %v9095 = vadd.f32 %v8819, %v9031
        %9128 = vset.pattern.permute.xlu0 0
        %9129 = vperm.xlu0 %9128, %v9064
        %v9130 = vpop.permute.xlu0 %9129
        %9131 = vset.pattern.permute.xlu0 0
        %9132 = vperm.xlu0 %9131, %v9065
        %v9133 = vpop.permute.xlu0 %9132
        %9134 = vset.pattern.permute.xlu0 0
        %9135 = vperm.xlu0 %9134, %v9066
        %v9136 = vpop.permute.xlu0 %9135
        %9137 = vset.pattern.permute.xlu0 0
        %9138 = vperm.xlu0 %9137, %v9067
        %v9139 = vpop.permute.xlu0 %9138
        %9140 = vset.pattern.permute.xlu0 0
        %9141 = vperm.xlu0 %9140, %v9068
        %v9142 = vpop.permute.xlu0 %9141
        %9143 = vset.pattern.permute.xlu0 0
        %9144 = vperm.xlu0 %9143, %v9069
        %v9145 = vpop.permute.xlu0 %9144
        %9146 = vset.pattern.permute.xlu0 0
        %9147 = vperm.xlu0 %9146, %v9070
        %v9148 = vpop.permute.xlu0 %9147
        %9149 = vset.pattern.permute.xlu0 0
        %9150 = vperm.xlu0 %9149, %v9071
        %v9151 = vpop.permute.xlu0 %9150
        %9152 = vset.pattern.permute.xlu0 0
        %9153 = vperm.xlu0 %9152, %v9072
        %v9154 = vpop.permute.xlu0 %9153
        %9155 = vset.pattern.permute.xlu0 0
        %9156 = vperm.xlu0 %9155, %v9073
        %v9157 = vpop.permute.xlu0 %9156
        %9158 = vset.pattern.permute.xlu0 0
        %9159 = vperm.xlu0 %9158, %v9074
        %v9160 = vpop.permute.xlu0 %9159
        %9161 = vset.pattern.permute.xlu0 0
        %9162 = vperm.xlu0 %9161, %v9075
        %v9163 = vpop.permute.xlu0 %9162
        %9164 = vset.pattern.permute.xlu0 0
        %9165 = vperm.xlu0 %9164, %v9076
        %v9166 = vpop.permute.xlu0 %9165
        %9167 = vset.pattern.permute.xlu0 0
        %9168 = vperm.xlu0 %9167, %v9077
        %v9169 = vpop.permute.xlu0 %9168
        %9170 = vset.pattern.permute.xlu0 0
        %9171 = vperm.xlu0 %9170, %v9078
        %v9172 = vpop.permute.xlu0 %9171
        %9173 = vset.pattern.permute.xlu0 0
        %9174 = vperm.xlu0 %9173, %v9079
        %v9175 = vpop.permute.xlu0 %9174
        %9176 = vset.pattern.permute.xlu0 0
        %9177 = vperm.xlu0 %9176, %v9080
        %v9178 = vpop.permute.xlu0 %9177
        %9179 = vset.pattern.permute.xlu0 0
        %9180 = vperm.xlu0 %9179, %v9081
        %v9181 = vpop.permute.xlu0 %9180
        %9182 = vset.pattern.permute.xlu0 0
        %9183 = vperm.xlu0 %9182, %v9082
        %v9184 = vpop.permute.xlu0 %9183
        %9185 = vset.pattern.permute.xlu0 0
        %9186 = vperm.xlu0 %9185, %v9083
        %v9187 = vpop.permute.xlu0 %9186
        %9188 = vset.pattern.permute.xlu0 0
        %9189 = vperm.xlu0 %9188, %v9084
        %v9190 = vpop.permute.xlu0 %9189
        %9191 = vset.pattern.permute.xlu0 0
        %9192 = vperm.xlu0 %9191, %v9085
        %v9193 = vpop.permute.xlu0 %9192
        %9194 = vset.pattern.permute.xlu0 0
        %9195 = vperm.xlu0 %9194, %v9086
        %v9196 = vpop.permute.xlu0 %9195
        %9197 = vset.pattern.permute.xlu0 0
        %9198 = vperm.xlu0 %9197, %v9087
        %v9199 = vpop.permute.xlu0 %9198
        %9200 = vset.pattern.permute.xlu0 0
        %9201 = vperm.xlu0 %9200, %v9088
        %v9202 = vpop.permute.xlu0 %9201
        %9203 = vset.pattern.permute.xlu0 0
        %9204 = vperm.xlu0 %9203, %v9089
        %v9205 = vpop.permute.xlu0 %9204
        %9206 = vset.pattern.permute.xlu0 0
        %9207 = vperm.xlu0 %9206, %v9090
        %v9208 = vpop.permute.xlu0 %9207
        %9209 = vset.pattern.permute.xlu0 0
        %9210 = vperm.xlu0 %9209, %v9091
        %v9211 = vpop.permute.xlu0 %9210
        %9212 = vset.pattern.permute.xlu0 0
        %9213 = vperm.xlu0 %9212, %v9092
        %v9214 = vpop.permute.xlu0 %9213
        %9215 = vset.pattern.permute.xlu0 0
        %9216 = vperm.xlu0 %9215, %v9093
        %v9217 = vpop.permute.xlu0 %9216
        %9218 = vset.pattern.permute.xlu0 0
        %9219 = vperm.xlu0 %9218, %v9094
        %v9220 = vpop.permute.xlu0 %9219
        %9221 = vset.pattern.permute.xlu0 0
        %9222 = vperm.xlu0 %9221, %v9095
        %v9223 = vpop.permute.xlu0 %9222
        %v9224 = vlaneseq
        %v9225 = vand.u32 %v9224, 127
        %v9226 = vperm.slane %v9130, %v9225
        %v9227 = vadd.s32 %v9225, 4294967288
        %v9228 = vperm.slane %v9133, %v9227
        %vm9229 = vcmask 130112
        %v9230 = vsel %vm9229, %v9228, %v9226
        %v9231 = vperm.slane %v9136, %v9225
        %v9232 = vperm.slane %v9139, %v9227
        %v9233 = vsel %vm9229, %v9232, %v9231
        %v9234 = vperm.slane %v9142, %v9225
        %v9235 = vperm.slane %v9145, %v9227
        %v9236 = vsel %vm9229, %v9235, %v9234
        %v9237 = vperm.slane %v9148, %v9225
        %v9238 = vperm.slane %v9151, %v9227
        %v9239 = vsel %vm9229, %v9238, %v9237
        %v9240 = vperm.slane %v9154, %v9225
        %v9241 = vperm.slane %v9157, %v9227
        %v9242 = vsel %vm9229, %v9241, %v9240
        %v9243 = vperm.slane %v9160, %v9225
        %v9244 = vperm.slane %v9163, %v9227
        %v9245 = vsel %vm9229, %v9244, %v9243
        %v9246 = vperm.slane %v9166, %v9225
        %v9247 = vperm.slane %v9169, %v9227
        %v9248 = vsel %vm9229, %v9247, %v9246
        %v9249 = vperm.slane %v9172, %v9225
        %v9250 = vperm.slane %v9175, %v9227
        %v9251 = vsel %vm9229, %v9250, %v9249
        %v9252 = vperm.slane %v9178, %v9225
        %v9253 = vperm.slane %v9181, %v9227
        %v9254 = vsel %vm9229, %v9253, %v9252
        %v9255 = vperm.slane %v9184, %v9225
        %v9256 = vperm.slane %v9187, %v9227
        %v9257 = vsel %vm9229, %v9256, %v9255
        %v9258 = vperm.slane %v9190, %v9225
        %v9259 = vperm.slane %v9193, %v9227
        %v9260 = vsel %vm9229, %v9259, %v9258
        %v9261 = vperm.slane %v9196, %v9225
        %v9262 = vperm.slane %v9199, %v9227
        %v9263 = vsel %vm9229, %v9262, %v9261
        %v9264 = vperm.slane %v9202, %v9225
        %v9265 = vperm.slane %v9205, %v9227
        %v9266 = vsel %vm9229, %v9265, %v9264
        %v9267 = vperm.slane %v9208, %v9225
        %v9268 = vperm.slane %v9211, %v9227
        %v9269 = vsel %vm9229, %v9268, %v9267
        %v9270 = vperm.slane %v9214, %v9225
        %v9271 = vperm.slane %v9217, %v9227
        %v9272 = vsel %vm9229, %v9271, %v9270
        %v9273 = vperm.slane %v9220, %v9225
        %v9274 = vperm.slane %v9223, %v9227
        %v9275 = vsel %vm9229, %v9274, %v9273
        %vm9276 = vcmask 1041409
        %v9277 = vsel %vm9276, %v9233, %v9230
        %vm9278 = vcmask 1042434
        %v9279 = vsel %vm9278, %v9236, %v9277
        %vm9280 = vcmask 1043459
        %v9281 = vsel %vm9280, %v9239, %v9279
        %vm9282 = vcmask 1044484
        %v9283 = vsel %vm9282, %v9242, %v9281
        %vm9284 = vcmask 1045509
        %v9285 = vsel %vm9284, %v9245, %v9283
        %vm9286 = vcmask 1046534
        %v9287 = vsel %vm9286, %v9248, %v9285
        %vm9288 = vcmask 1047559
        %v9289 = vsel %vm9288, %v9251, %v9287
        %v9290 = vsel %vm9276, %v9257, %v9254
        %v9291 = vsel %vm9278, %v9260, %v9290
        %v9292 = vsel %vm9280, %v9263, %v9291
        %v9293 = vsel %vm9282, %v9266, %v9292
        %v9294 = vsel %vm9284, %v9269, %v9293
        %v9295 = vsel %vm9286, %v9272, %v9294
        %v9296 = vsel %vm9288, %v9275, %v9295
        %vm9299 = vcmask 130048
        %9300 = vst.msk [vmem:[%s190] sm:$0xff] %vm9299, %v9289
        %9301 = vst.msk [vmem:[%s190 + $0x8] sm:$0xff] %vm9299, %v9296
        %s9302 = sand.u32 %s115, 1
        %s9303 = scalar_lea.sflag [#allocation5], %s9302
        %s9304 = sand.u32 %s115, 1
        %s9305 = smul.addr %s9304, 16
        %s9306 = scalar_lea.vmem [#allocation4], %s9305
        // Predicated region
        $region44: #{vdsr_forward.1} parent=35 // pred_check
          %p9307 = pneg %p125
        $region45: #{vdsr_forward.1} parent=35 // pred_check_branch
          %9309 = sbr.rel (%p9307) target = $region47
        $region46: #{vdsr_forward.1} parent=35 // pred_region
          %9311 = vsyncadd %s9303, 0
          %s9312 = smul.addr %s18, 2
          %s9313 = smul.addr %s9312, 8
          %s9314 = scalar_lea.hbm %s4, %s9313
          %s9315 = sshll.u32 %s9306, 4
          %s9316 = int_to_ptr.vmem [resolvable:$true] %s9315
          %s9317 = sshll.u32 %s9314, 4
          %s9318 = int_to_ptr.hbm [resolvable:$true] %s9317
          %9323 = dma.vmem_to_hbm [thread:$0]  %s9316, 256, %s9318, %s9303, 128, 128, 8
        $region47: #{vdsr_forward.1} parent=35 // pred_fallthru
          _
      $region36: #{vdsr_forward.1} parent=5 // pred_fallthru
        _
      %p9324 = scmp.le.s32.totalorder 2, %s13
      // Predicated region
      $region48: #{vdsr_forward.1} parent=5 // pred_check
        %p9325 = pneg %p9324
      $region49: #{vdsr_forward.1} parent=5 // pred_check_branch
        %9327 = sbr.rel (%p9325) target = $region51
      $region50: #{vdsr_forward.1} parent=5 // pred_region
        %s9328 = ssub.s32 %s13, 2
        // Predicated region
        $region52: #{vdsr_forward.1} parent=50 // pred_check
          %p9329 = pneg %p131
        $region53: #{vdsr_forward.1} parent=50 // pred_check_branch
          %9331 = sbr.rel (%p9329) target = $region55
        $region54: #{vdsr_forward.1} parent=50 // pred_region
          %s9332 = sand.u32 %s116, 1
          %s9333 = scalar_lea.sflag [#allocation5], %s9332
          %s9334 = sand.u32 %s116, 1
          %s9335 = smul.addr %s9334, 16
          %s9336 = scalar_lea.vmem [#allocation4], %s9335
          %9338 = dma.done %s9333, 256
        $region55: #{vdsr_forward.1} parent=50 // pred_fallthru
          _
      $region51: #{vdsr_forward.1} parent=5 // pred_fallthru
        _
    $region6: #{vdsr_forward.1} parent=1 // loop_footer
      %s17 = sadd.s32 1, %s13
    $region7: #{vdsr_forward.1} parent=1 // loop_footer_branch
      %12 = sbr.rel target = $region3
    $region8: #{vdsr_forward.1} parent=1 // loop_exit
      _
    %9339 = vsyncpa [#allocation5], 1
    %s9340 = scalar_lea.sflag [#allocation5], 1
    %9341 = vsyncpa %s9340, 1

</llo_original>
